<compile_context>
chip_gen: v7x
topology: tpu7x:2x2x1
jax: 0.10.0
libtpu: 0.0.40
codegen_flags: <defaults>
</compile_context>

<pallas_src>
import functools

import jax
import jax.numpy as jnp
from jax import lax
from jax.experimental import pallas as pl
from jax.experimental.pallas import tpu as pltpu


# ----------------------------------------------------------------------------
# One fused Pallas kernel: batched matmul + bias + residual + BatchNorm + act
# ----------------------------------------------------------------------------
def _fused_matmul_kernel(*refs, has_bias, has_res, has_bn, act, relu_in, bn_eps):
    idx = 0
    a_ref = refs[idx]; idx += 1            # (P, M, K)   bf16/f32
    w_ref = refs[idx]; idx += 1            # (P, K, N)   bf16/f32
    bias_ref = res_ref = gamma_ref = beta_ref = None
    if has_bias:
        bias_ref = refs[idx]; idx += 1     # (1, 1, N)   f32
    if has_res:
        res_ref = refs[idx]; idx += 1      # (P, M, N)   f32
    if has_bn:
        gamma_ref = refs[idx]; idx += 1    # (1, 1, N)   f32
        beta_ref = refs[idx]; idx += 1     # (1, 1, N)   f32
    o_ref = refs[idx]                      # (P, M, N)   f32

    P, M, _ = a_ref.shape

    # MXU matmuls (f32 accumulation), statically unrolled over the phase axis.
    outs = []
    for p in range(P):                     # P <= 4
        ap = a_ref[p]
        if relu_in:                        # ReLU prologue (commutes with im2col)
            ap = jnp.maximum(ap, 0)
        outs.append(jnp.dot(ap, w_ref[p], preferred_element_type=jnp.float32))
    y = jnp.stack(outs, axis=0)            # (P, M, N) f32

    if has_bias:
        y = y + bias_ref[...]
    if has_res:
        y = y + res_ref[...]
    if has_bn:
        # Training-mode BatchNorm2d: biased batch statistics over all rows.
        inv_n = 1.0 / float(P * M)
        mean = jnp.sum(jnp.sum(y, axis=1, keepdims=True),
                       axis=0, keepdims=True) * inv_n
        diff = y - mean
        var = jnp.sum(jnp.sum(diff * diff, axis=1, keepdims=True),
                      axis=0, keepdims=True) * inv_n
        y = diff * (gamma_ref[...] * lax.rsqrt(var + bn_eps)) + beta_ref[...]
    if act == "relu":
        y = jnp.maximum(y, 0.0)
    elif act == "tanh":
        y = jnp.tanh(y)

    o_ref[...] = y.astype(o_ref.dtype)


def fused_matmul(a, w, *, bias=None, residual=None, bn=None, act="none",
                 relu_in=False, compute_dtype=jnp.bfloat16, bn_eps=1e-5):
    """act( BN( a @ w + bias + residual ) ), batched over a leading phase axis.

    a: (P, M, K), w: (P, K, N) -> (P, M, N) f32.  Single-block (grid-free) call:
    every tensor in this model is tiny, so whole arrays live in VMEM and no
    padding / tiling / multi-step pipelining is used.
    """
    P, M, K = a.shape
    N = w.shape[-1]
    inputs = [a.astype(compute_dtype), w.astype(compute_dtype)]
    if bias is not None:
        inputs.append(bias.astype(jnp.float32).reshape(1, 1, N))
    if residual is not None:
        inputs.append(residual.astype(jnp.float32).reshape(P, M, N))
    if bn is not None:
        gamma, beta = bn
        inputs.append(gamma.astype(jnp.float32).reshape(1, 1, N))
        inputs.append(beta.astype(jnp.float32).reshape(1, 1, N))

    kernel = functools.partial(
        _fused_matmul_kernel,
        has_bias=bias is not None, has_res=residual is not None,
        has_bn=bn is not None, act=act, relu_in=relu_in, bn_eps=bn_eps)

    return pl.pallas_call(
        kernel,
        out_shape=jax.ShapeDtypeStruct((P, M, N), jnp.float32),
        in_specs=[pl.BlockSpec(memory_space=pltpu.MemorySpace.VMEM)] * len(inputs),
        out_specs=pl.BlockSpec(memory_space=pltpu.MemorySpace.VMEM),
    )(*inputs)


# ----------------------------------------------------------------------------
# Conv / ConvTranspose layers built on the fused kernel (im2col glue in XLA)
# ----------------------------------------------------------------------------
def _im2col(x, kh, kw, stride, pad):
    B, H, W, C = x.shape
    xp = jnp.pad(x, ((0, 0), (pad, pad), (pad, pad), (0, 0)))
    Ho = (H + 2 * pad - kh) // stride + 1
    Wo = (W + 2 * pad - kw) // stride + 1
    cols = []
    for i in range(kh):
        for j in range(kw):
            cols.append(xp[:, i:i + stride * Ho:stride,
                           j:j + stride * Wo:stride, :])
    patches = jnp.concatenate(cols, axis=-1)        # (B,Ho,Wo,kh*kw*C), (i,j,c)
    return patches.reshape(B * Ho * Wo, kh * kw * C), (B, Ho, Wo)


def conv2d_fused(x, w, *, bias=None, stride=1, pad=0, bn=None, act="none",
                 relu_in=False, residual=None):
    # x: NHWC ; w: (Cout, Cin, kh, kw)  (PyTorch Conv2d layout)
    Cout, Cin, kh, kw = w.shape
    cols, (B, Ho, Wo) = _im2col(x.astype(jnp.bfloat16), kh, kw, stride, pad)
    w_mat = jnp.transpose(w, (2, 3, 1, 0)).reshape(kh * kw * Cin, Cout)
    res = None if residual is None else residual.reshape(1, B * Ho * Wo, Cout)
    out = fused_matmul(cols[None], w_mat[None], bias=bias, residual=res,
                       bn=bn, act=act, relu_in=relu_in)
    return out.reshape(B, Ho, Wo, Cout)


def conv_transpose2d_fused(x, w, *, bn=None, act="none"):
    # x: NHWC ; w: (Cin, Cout, 4, 4)  (PyTorch ConvTranspose2d layout)
    # stride=2, padding=1 fixed.  Decomposed into 4 output-parity phases, each a
    # 2x2 stride-1 conv on the (non-dilated) input; all phases run in ONE kernel
    # so the fused BatchNorm uses global batch statistics.
    Cin, Cout, kh, kw = w.shape
    assert kh == 4 and kw == 4
    B, H, W, _ = x.shape
    xp = jnp.pad(x.astype(jnp.bfloat16), ((0, 0), (1, 1), (1, 1), (0, 0)))
    patch_list, weight_list = [], []
    for ph in range(2):
        sh, kh_idx = (0, (3, 1)) if ph == 0 else (1, (2, 0))
        for pw in range(2):
            sw, kw_idx = (0, (3, 1)) if pw == 0 else (1, (2, 0))
            cols, wsub = [], []
            for a in range(2):
                for b in range(2):
                    cols.append(xp[:, sh + a:sh + a + H, sw + b:sw + b + W, :])
                    wsub.append(w[:, :, kh_idx[a], kw_idx[b]])     # (Cin, Cout)
            patch_list.append(
                jnp.concatenate(cols, axis=-1).reshape(B * H * W, 4 * Cin))
            weight_list.append(jnp.concatenate(wsub, axis=0))      # (4*Cin, Cout)
    a4 = jnp.stack(patch_list, axis=0)                             # (4, M, 4*Cin)
    w4 = jnp.stack(weight_list, axis=0)                            # (4, 4*Cin, Cout)
    out = fused_matmul(a4, w4, bn=bn, act=act)                     # (4, M, Cout)
    out = out.reshape(2, 2, B, H, W, Cout)
    out = jnp.transpose(out, (2, 3, 0, 4, 1, 5)).reshape(B, 2 * H, 2 * W, Cout)
    return out


def resblock_fused(x, p, post_bn=None, post_act="none"):
    # ResBlock(bn=True): out = x + Conv1x1( ReLU( BN( Conv3x3( ReLU(x) ) ) ) )
    # The leading ReLU is a kernel prologue; the residual add and the optional
    # module-level BatchNorm that follows the block are fused into the 1x1-conv
    # kernel's epilogue.
    h = conv2d_fused(x, p["w1"], bias=p["b1"], stride=1, pad=1,
                     bn=(p["bn_g"], p["bn_b"]), act="relu", relu_in=True)
    return conv2d_fused(h, p["w2"], bias=p["b2"], stride=1, pad=0,
                        residual=x, bn=post_bn, act=post_act)


# ----------------------------------------------------------------------------
# CVAE forward (training mode: BN batch stats, reparameterize with N(0,1) eps)
# ----------------------------------------------------------------------------
def encoder_fwd(x, p):
    h = conv2d_fused(x, p["ec1_w"], stride=2, pad=1,
                     bn=(p["ebn1_g"], p["ebn1_b"]), act="relu")    # (B,16,16,d/2)
    h = conv2d_fused(h, p["ec2_w"], stride=2, pad=1,
                     bn=(p["ebn2_g"], p["ebn2_b"]), act="relu")    # (B,8,8,d)
    h = resblock_fused(h, p["eres1"], post_bn=(p["ebn3_g"], p["ebn3_b"]))
    h = resblock_fused(h, p["eres2"])
    return h


def decoder_fwd(z, p):
    h = resblock_fused(z, p["dres1"], post_bn=(p["dbn1_g"], p["dbn1_b"]))
    h = resblock_fused(h, p["dres2"], post_bn=(p["dbn2_g"], p["dbn2_b"]))
    h = conv_transpose2d_fused(h, p["dct1_w"],
                               bn=(p["dbn3_g"], p["dbn3_b"]), act="relu")
    h = conv_transpose2d_fused(h, p["dct2_w"], act="tanh")         # (B,32,32,3)
    return h


def cvae_forward(params, x_nchw, d, key):
    B = x_nchw.shape[0]
    x = jnp.transpose(x_nchw.astype(jnp.float32), (0, 2, 3, 1))    # NCHW -> NHWC
    h = encoder_fwd(x, params)                                     # (B,8,8,d)

    # torch: h1 = encoder(x).view(-1, d*f*f)  (view taken on the NCHW tensor)
    dd = d * 64
    h1 = jnp.transpose(h, (0, 3, 1, 2)).reshape(B, dd)

    # mu and logvar in a single fused FC matmul (kept in f32 so exp(0.5*logvar)
    # is not perturbed by bf16 input rounding).
    w_cat = jnp.concatenate([params["fc11_w"].T, params["fc12_w"].T], axis=1)
    b_cat = jnp.concatenate([params["fc11_b"], params["fc12_b"]])
    fc = fused_matmul(h1[None], w_cat[None], bias=b_cat,
                      compute_dtype=jnp.float32)[0]                # (B, 2*dd)
    mu, logvar = fc[:, :dd], fc[:, dd:]

    # reparameterize (training mode): z = eps * std + mu  (JAX glue, tiny)
    std = jnp.exp(0.5 * logvar)
    eps = jax.random.normal(key, std.shape, std.dtype)
    z = eps * std + mu

    z_nhwc = jnp.transpose(z.reshape(B, d, 8, 8), (0, 2, 3, 1))
    recon = decoder_fwd(z_nhwc, params)                            # tanh fused
    recon = jnp.transpose(recon, (0, 3, 1, 2))                     # -> NCHW
    return recon, mu, logvar


# ----------------------------------------------------------------------------
# Deterministic parameter init (shapes from CVAE.__init__, d = latent width)
# ----------------------------------------------------------------------------
def init_params(key, d):
    keys = iter(jax.random.split(key, 32))

    def nrm(shape, scale=0.05):
        return scale * jax.random.normal(next(keys), shape, jnp.float32)

    def resblock_params(c):
        return dict(w1=nrm((c, c, 3, 3)), b1=nrm((c,)),
                    bn_g=jnp.ones((c,), jnp.float32),
                    bn_b=jnp.zeros((c,), jnp.float32),
                    w2=nrm((c, c, 1, 1)), b2=nrm((c,)))

    dd = d * 64
    return dict(
        ec1_w=nrm((d // 2, 3, 4, 4)),
        ebn1_g=jnp.ones((d // 2,), jnp.float32), ebn1_b=jnp.zeros((d // 2,), jnp.float32),
        ec2_w=nrm((d, d // 2, 4, 4)),
        ebn2_g=jnp.ones((d,), jnp.float32), ebn2_b=jnp.zeros((d,), jnp.float32),
        eres1=resblock_params(d),
        ebn3_g=jnp.ones((d,), jnp.float32), ebn3_b=jnp.zeros((d,), jnp.float32),
        eres2=resblock_params(d),
        fc11_w=nrm((dd, dd)), fc11_b=nrm((dd,)),
        fc12_w=nrm((dd, dd)), fc12_b=nrm((dd,)),
        dres1=resblock_params(d),
        dbn1_g=jnp.ones((d,), jnp.float32), dbn1_b=jnp.zeros((d,), jnp.float32),
        dres2=resblock_params(d),
        dbn2_g=jnp.ones((d,), jnp.float32), dbn2_b=jnp.zeros((d,), jnp.float32),
        dct1_w=nrm((d, d // 2, 4, 4)),
        dbn3_g=jnp.ones((d // 2,), jnp.float32), dbn3_b=jnp.zeros((d // 2,), jnp.float32),
        dct2_w=nrm((d // 2, 3, 4, 4)),
    )


if __name__ == "__main__":
    d = 8          # latent width (d//2 = 4); f = 8 is fixed by the module
    B = 2
    key = jax.random.PRNGKey(0)
    k_param, k_x, k_eps = jax.random.split(key, 3)

    params = init_params(k_param, d)
    # encoder downsamples 4x and f = 8, so the input spatial size is 32x32
    x = jax.random.normal(k_x, (B, 3, 32, 32), jnp.float32)

    fwd = jax.jit(functools.partial(cvae_forward, d=d))
    recon, mu, logvar = fwd(params, x, key=k_eps)
    jax.block_until_ready((recon, mu, logvar))

    assert recon.shape == (B, 3, 32, 32)
    assert mu.shape == (B, d * 64) and logvar.shape == (B, d * 64)
    assert bool(jnp.all(jnp.isfinite(recon)))
    print("KERNEL_OK")
</pallas_src>

<mosaic_0001>
module attributes {stable_mosaic.version = 11 : i64} {
  func.func @_fused_matmul_kernel(%arg0: memref<1x512x48xbf16, #tpu.memory_space<vmem>>, %arg1: memref<1x48x4xbf16, #tpu.memory_space<vmem>>, %arg2: memref<1x1x4xf32, #tpu.memory_space<vmem>>, %arg3: memref<1x1x4xf32, #tpu.memory_space<vmem>>, %arg4: memref<1x512x4xf32, #tpu.memory_space<vmem>>) attributes {dimension_semantics = [], scalar_prefetch = 0 : i64, scratch_operands = 0 : i64, tpu.core_type = #tpu.core_type<tc>} {
    %c0 = arith.constant 0 : index
    %c0_0 = arith.constant 0 : index
    %c0_1 = arith.constant 0 : index
    %0 = vector.load %arg0[%c0, %c0_0, %c0_1] : memref<1x512x48xbf16, #tpu.memory_space<vmem>>, vector<1x512x48xbf16>
    %1 = vector.shape_cast %0 : vector<1x512x48xbf16> to vector<512x48xbf16>
    %c0_2 = arith.constant 0 : index
    %c0_3 = arith.constant 0 : index
    %c0_4 = arith.constant 0 : index
    %2 = vector.load %arg1[%c0_2, %c0_3, %c0_4] : memref<1x48x4xbf16, #tpu.memory_space<vmem>>, vector<1x48x4xbf16>
    %3 = vector.shape_cast %2 : vector<1x48x4xbf16> to vector<48x4xbf16>
    %cst = arith.constant dense<0.000000e+00> : vector<512x4xf32>
    %4 = tpu.matmul %1, %3, %cst {dimension_numbers = #tpu.dot_dimension_numbers<[1], [0], [0], [1], [0, 0, 1, 1], [], []>} : vector<512x48xbf16>, vector<48x4xbf16>, vector<512x4xf32> -> vector<512x4xf32>
    %5 = vector.shape_cast %4 : vector<512x4xf32> to vector<1x512x4xf32>
    %cst_5 = arith.constant dense<0.000000e+00> : vector<1x4xf32>
    %6 = vector.multi_reduction <add>, %5, %cst_5 [1] : vector<1x512x4xf32> to vector<1x4xf32>
    %7 = vector.shape_cast %6 : vector<1x4xf32> to vector<1x1x4xf32>
    %cst_6 = arith.constant dense<0.000000e+00> : vector<1x4xf32>
    %8 = vector.multi_reduction <add>, %7, %cst_6 [0] : vector<1x1x4xf32> to vector<1x4xf32>
    %9 = vector.shape_cast %8 : vector<1x4xf32> to vector<1x1x4xf32>
    %cst_7 = arith.constant 0.001953125 : f32
    %10 = vector.broadcast %cst_7 : f32 to vector<1x1x4xf32>
    %11 = arith.mulf %9, %10 : vector<1x1x4xf32>
    %12 = vector.broadcast %11 : vector<1x1x4xf32> to vector<1x512x4xf32>
    %13 = arith.subf %5, %12 : vector<1x512x4xf32>
    %14 = arith.mulf %13, %13 : vector<1x512x4xf32>
    %cst_8 = arith.constant dense<0.000000e+00> : vector<1x4xf32>
    %15 = vector.multi_reduction <add>, %14, %cst_8 [1] : vector<1x512x4xf32> to vector<1x4xf32>
    %16 = vector.shape_cast %15 : vector<1x4xf32> to vector<1x1x4xf32>
    %cst_9 = arith.constant dense<0.000000e+00> : vector<1x4xf32>
    %17 = vector.multi_reduction <add>, %16, %cst_9 [0] : vector<1x1x4xf32> to vector<1x4xf32>
    %18 = vector.shape_cast %17 : vector<1x4xf32> to vector<1x1x4xf32>
    %cst_10 = arith.constant 0.001953125 : f32
    %19 = vector.broadcast %cst_10 : f32 to vector<1x1x4xf32>
    %20 = arith.mulf %18, %19 : vector<1x1x4xf32>
    %c0_11 = arith.constant 0 : index
    %c0_12 = arith.constant 0 : index
    %c0_13 = arith.constant 0 : index
    %21 = vector.load %arg2[%c0_11, %c0_12, %c0_13] : memref<1x1x4xf32, #tpu.memory_space<vmem>>, vector<1x1x4xf32>
    %cst_14 = arith.constant 9.99999974E-6 : f32
    %22 = vector.broadcast %cst_14 : f32 to vector<1x1x4xf32>
    %23 = arith.addf %20, %22 : vector<1x1x4xf32>
    %24 = math.rsqrt %23 : vector<1x1x4xf32>
    %25 = arith.mulf %21, %24 : vector<1x1x4xf32>
    %26 = vector.broadcast %25 : vector<1x1x4xf32> to vector<1x512x4xf32>
    %27 = arith.mulf %13, %26 : vector<1x512x4xf32>
    %c0_15 = arith.constant 0 : index
    %c0_16 = arith.constant 0 : index
    %c0_17 = arith.constant 0 : index
    %28 = vector.load %arg3[%c0_15, %c0_16, %c0_17] : memref<1x1x4xf32, #tpu.memory_space<vmem>>, vector<1x1x4xf32>
    %29 = vector.broadcast %28 : vector<1x1x4xf32> to vector<1x512x4xf32>
    %30 = arith.addf %27, %29 : vector<1x512x4xf32>
    %cst_18 = arith.constant 0.000000e+00 : f32
    %31 = vector.broadcast %cst_18 : f32 to vector<1x512x4xf32>
    %32 = arith.maximumf %30, %31 : vector<1x512x4xf32>
    %c0_19 = arith.constant 0 : index
    %c0_20 = arith.constant 0 : index
    %c0_21 = arith.constant 0 : index
    %33 = vector.load %arg4[%c0_19, %c0_20, %c0_21] : memref<1x512x4xf32, #tpu.memory_space<vmem>>, vector<1x512x4xf32>
    tpu.vector_store %arg4[%c0_19, %c0_20, %c0_21], %32 {strides = array<i32>} : memref<1x512x4xf32, #tpu.memory_space<vmem>>, vector<1x512x4xf32>,
    return
  }
}

module attributes {stable_mosaic.version = 11 : i64} {
  func.func @_fused_matmul_kernel(%arg0: memref<1x128x64xbf16, #tpu.memory_space<vmem>>, %arg1: memref<1x64x8xbf16, #tpu.memory_space<vmem>>, %arg2: memref<1x1x8xf32, #tpu.memory_space<vmem>>, %arg3: memref<1x1x8xf32, #tpu.memory_space<vmem>>, %arg4: memref<1x128x8xf32, #tpu.memory_space<vmem>>) attributes {dimension_semantics = [], scalar_prefetch = 0 : i64, scratch_operands = 0 : i64, tpu.core_type = #tpu.core_type<tc>} {
    %c0 = arith.constant 0 : index
    %c0_0 = arith.constant 0 : index
    %c0_1 = arith.constant 0 : index
    %0 = vector.load %arg0[%c0, %c0_0, %c0_1] : memref<1x128x64xbf16, #tpu.memory_space<vmem>>, vector<1x128x64xbf16>
    %1 = vector.shape_cast %0 : vector<1x128x64xbf16> to vector<128x64xbf16>
    %c0_2 = arith.constant 0 : index
    %c0_3 = arith.constant 0 : index
    %c0_4 = arith.constant 0 : index
    %2 = vector.load %arg1[%c0_2, %c0_3, %c0_4] : memref<1x64x8xbf16, #tpu.memory_space<vmem>>, vector<1x64x8xbf16>
    %3 = vector.shape_cast %2 : vector<1x64x8xbf16> to vector<64x8xbf16>
    %cst = arith.constant dense<0.000000e+00> : vector<128x8xf32>
    %4 = tpu.matmul %1, %3, %cst {dimension_numbers = #tpu.dot_dimension_numbers<[1], [0], [0], [1], [0, 0, 1, 1], [], []>} : vector<128x64xbf16>, vector<64x8xbf16>, vector<128x8xf32> -> vector<128x8xf32>
    %5 = vector.shape_cast %4 : vector<128x8xf32> to vector<1x128x8xf32>
    %cst_5 = arith.constant dense<0.000000e+00> : vector<1x8xf32>
    %6 = vector.multi_reduction <add>, %5, %cst_5 [1] : vector<1x128x8xf32> to vector<1x8xf32>
    %7 = vector.shape_cast %6 : vector<1x8xf32> to vector<1x1x8xf32>
    %cst_6 = arith.constant dense<0.000000e+00> : vector<1x8xf32>
    %8 = vector.multi_reduction <add>, %7, %cst_6 [0] : vector<1x1x8xf32> to vector<1x8xf32>
    %9 = vector.shape_cast %8 : vector<1x8xf32> to vector<1x1x8xf32>
    %cst_7 = arith.constant 7.812500e-03 : f32
    %10 = vector.broadcast %cst_7 : f32 to vector<1x1x8xf32>
    %11 = arith.mulf %9, %10 : vector<1x1x8xf32>
    %12 = vector.broadcast %11 : vector<1x1x8xf32> to vector<1x128x8xf32>
    %13 = arith.subf %5, %12 : vector<1x128x8xf32>
    %14 = arith.mulf %13, %13 : vector<1x128x8xf32>
    %cst_8 = arith.constant dense<0.000000e+00> : vector<1x8xf32>
    %15 = vector.multi_reduction <add>, %14, %cst_8 [1] : vector<1x128x8xf32> to vector<1x8xf32>
    %16 = vector.shape_cast %15 : vector<1x8xf32> to vector<1x1x8xf32>
    %cst_9 = arith.constant dense<0.000000e+00> : vector<1x8xf32>
    %17 = vector.multi_reduction <add>, %16, %cst_9 [0] : vector<1x1x8xf32> to vector<1x8xf32>
    %18 = vector.shape_cast %17 : vector<1x8xf32> to vector<1x1x8xf32>
    %cst_10 = arith.constant 7.812500e-03 : f32
    %19 = vector.broadcast %cst_10 : f32 to vector<1x1x8xf32>
    %20 = arith.mulf %18, %19 : vector<1x1x8xf32>
    %c0_11 = arith.constant 0 : index
    %c0_12 = arith.constant 0 : index
    %c0_13 = arith.constant 0 : index
    %21 = vector.load %arg2[%c0_11, %c0_12, %c0_13] : memref<1x1x8xf32, #tpu.memory_space<vmem>>, vector<1x1x8xf32>
    %cst_14 = arith.constant 9.99999974E-6 : f32
    %22 = vector.broadcast %cst_14 : f32 to vector<1x1x8xf32>
    %23 = arith.addf %20, %22 : vector<1x1x8xf32>
    %24 = math.rsqrt %23 : vector<1x1x8xf32>
    %25 = arith.mulf %21, %24 : vector<1x1x8xf32>
    %26 = vector.broadcast %25 : vector<1x1x8xf32> to vector<1x128x8xf32>
    %27 = arith.mulf %13, %26 : vector<1x128x8xf32>
    %c0_15 = arith.constant 0 : index
    %c0_16 = arith.constant 0 : index
    %c0_17 = arith.constant 0 : index
    %28 = vector.load %arg3[%c0_15, %c0_16, %c0_17] : memref<1x1x8xf32, #tpu.memory_space<vmem>>, vector<1x1x8xf32>
    %29 = vector.broadcast %28 : vector<1x1x8xf32> to vector<1x128x8xf32>
    %30 = arith.addf %27, %29 : vector<1x128x8xf32>
    %cst_18 = arith.constant 0.000000e+00 : f32
    %31 = vector.broadcast %cst_18 : f32 to vector<1x128x8xf32>
    %32 = arith.maximumf %30, %31 : vector<1x128x8xf32>
    %c0_19 = arith.constant 0 : index
    %c0_20 = arith.constant 0 : index
    %c0_21 = arith.constant 0 : index
    %33 = vector.load %arg4[%c0_19, %c0_20, %c0_21] : memref<1x128x8xf32, #tpu.memory_space<vmem>>, vector<1x128x8xf32>
    tpu.vector_store %arg4[%c0_19, %c0_20, %c0_21], %32 {strides = array<i32>} : memref<1x128x8xf32, #tpu.memory_space<vmem>>, vector<1x128x8xf32>,
    return
  }
}

module attributes {stable_mosaic.version = 11 : i64} {
  func.func @_fused_matmul_kernel(%arg0: memref<1x128x72xbf16, #tpu.memory_space<vmem>>, %arg1: memref<1x72x8xbf16, #tpu.memory_space<vmem>>, %arg2: memref<1x1x8xf32, #tpu.memory_space<vmem>>, %arg3: memref<1x1x8xf32, #tpu.memory_space<vmem>>, %arg4: memref<1x1x8xf32, #tpu.memory_space<vmem>>, %arg5: memref<1x128x8xf32, #tpu.memory_space<vmem>>) attributes {dimension_semantics = [], scalar_prefetch = 0 : i64, scratch_operands = 0 : i64, tpu.core_type = #tpu.core_type<tc>} {
    %c0 = arith.constant 0 : index
    %c0_0 = arith.constant 0 : index
    %c0_1 = arith.constant 0 : index
    %0 = vector.load %arg0[%c0, %c0_0, %c0_1] : memref<1x128x72xbf16, #tpu.memory_space<vmem>>, vector<1x128x72xbf16>
    %1 = vector.shape_cast %0 : vector<1x128x72xbf16> to vector<128x72xbf16>
    %cst = arith.constant 0.000000e+00 : bf16
    %2 = vector.broadcast %cst : bf16 to vector<128x72xbf16>
    %3 = arith.maximumf %1, %2 : vector<128x72xbf16>
    %c0_2 = arith.constant 0 : index
    %c0_3 = arith.constant 0 : index
    %c0_4 = arith.constant 0 : index
    %4 = vector.load %arg1[%c0_2, %c0_3, %c0_4] : memref<1x72x8xbf16, #tpu.memory_space<vmem>>, vector<1x72x8xbf16>
    %5 = vector.shape_cast %4 : vector<1x72x8xbf16> to vector<72x8xbf16>
    %cst_5 = arith.constant dense<0.000000e+00> : vector<128x8xf32>
    %6 = tpu.matmul %3, %5, %cst_5 {dimension_numbers = #tpu.dot_dimension_numbers<[1], [0], [0], [1], [0, 0, 1, 1], [], []>} : vector<128x72xbf16>, vector<72x8xbf16>, vector<128x8xf32> -> vector<128x8xf32>
    %7 = vector.shape_cast %6 : vector<128x8xf32> to vector<1x128x8xf32>
    %c0_6 = arith.constant 0 : index
    %c0_7 = arith.constant 0 : index
    %c0_8 = arith.constant 0 : index
    %8 = vector.load %arg2[%c0_6, %c0_7, %c0_8] : memref<1x1x8xf32, #tpu.memory_space<vmem>>, vector<1x1x8xf32>
    %9 = vector.broadcast %8 : vector<1x1x8xf32> to vector<1x128x8xf32>
    %10 = arith.addf %7, %9 : vector<1x128x8xf32>
    %cst_9 = arith.constant dense<0.000000e+00> : vector<1x8xf32>
    %11 = vector.multi_reduction <add>, %10, %cst_9 [1] : vector<1x128x8xf32> to vector<1x8xf32>
    %12 = vector.shape_cast %11 : vector<1x8xf32> to vector<1x1x8xf32>
    %cst_10 = arith.constant dense<0.000000e+00> : vector<1x8xf32>
    %13 = vector.multi_reduction <add>, %12, %cst_10 [0] : vector<1x1x8xf32> to vector<1x8xf32>
    %14 = vector.shape_cast %13 : vector<1x8xf32> to vector<1x1x8xf32>
    %cst_11 = arith.constant 7.812500e-03 : f32
    %15 = vector.broadcast %cst_11 : f32 to vector<1x1x8xf32>
    %16 = arith.mulf %14, %15 : vector<1x1x8xf32>
    %17 = vector.broadcast %16 : vector<1x1x8xf32> to vector<1x128x8xf32>
    %18 = arith.subf %10, %17 : vector<1x128x8xf32>
    %19 = arith.mulf %18, %18 : vector<1x128x8xf32>
    %cst_12 = arith.constant dense<0.000000e+00> : vector<1x8xf32>
    %20 = vector.multi_reduction <add>, %19, %cst_12 [1] : vector<1x128x8xf32> to vector<1x8xf32>
    %21 = vector.shape_cast %20 : vector<1x8xf32> to vector<1x1x8xf32>
    %cst_13 = arith.constant dense<0.000000e+00> : vector<1x8xf32>
    %22 = vector.multi_reduction <add>, %21, %cst_13 [0] : vector<1x1x8xf32> to vector<1x8xf32>
    %23 = vector.shape_cast %22 : vector<1x8xf32> to vector<1x1x8xf32>
    %cst_14 = arith.constant 7.812500e-03 : f32
    %24 = vector.broadcast %cst_14 : f32 to vector<1x1x8xf32>
    %25 = arith.mulf %23, %24 : vector<1x1x8xf32>
    %c0_15 = arith.constant 0 : index
    %c0_16 = arith.constant 0 : index
    %c0_17 = arith.constant 0 : index
    %26 = vector.load %arg3[%c0_15, %c0_16, %c0_17] : memref<1x1x8xf32, #tpu.memory_space<vmem>>, vector<1x1x8xf32>
    %cst_18 = arith.constant 9.99999974E-6 : f32
    %27 = vector.broadcast %cst_18 : f32 to vector<1x1x8xf32>
    %28 = arith.addf %25, %27 : vector<1x1x8xf32>
    %29 = math.rsqrt %28 : vector<1x1x8xf32>
    %30 = arith.mulf %26, %29 : vector<1x1x8xf32>
    %31 = vector.broadcast %30 : vector<1x1x8xf32> to vector<1x128x8xf32>
    %32 = arith.mulf %18, %31 : vector<1x128x8xf32>
    %c0_19 = arith.constant 0 : index
    %c0_20 = arith.constant 0 : index
    %c0_21 = arith.constant 0 : index
    %33 = vector.load %arg4[%c0_19, %c0_20, %c0_21] : memref<1x1x8xf32, #tpu.memory_space<vmem>>, vector<1x1x8xf32>
    %34 = vector.broadcast %33 : vector<1x1x8xf32> to vector<1x128x8xf32>
    %35 = arith.addf %32, %34 : vector<1x128x8xf32>
    %cst_22 = arith.constant 0.000000e+00 : f32
    %36 = vector.broadcast %cst_22 : f32 to vector<1x128x8xf32>
    %37 = arith.maximumf %35, %36 : vector<1x128x8xf32>
    %c0_23 = arith.constant 0 : index
    %c0_24 = arith.constant 0 : index
    %c0_25 = arith.constant 0 : index
    %38 = vector.load %arg5[%c0_23, %c0_24, %c0_25] : memref<1x128x8xf32, #tpu.memory_space<vmem>>, vector<1x128x8xf32>
    tpu.vector_store %arg5[%c0_23, %c0_24, %c0_25], %37 {strides = array<i32>} : memref<1x128x8xf32, #tpu.memory_space<vmem>>, vector<1x128x8xf32>,
    return
  }
}

module attributes {stable_mosaic.version = 11 : i64} {
  func.func @_fused_matmul_kernel(%arg0: memref<1x128x8xbf16, #tpu.memory_space<vmem>>, %arg1: memref<1x8x8xbf16, #tpu.memory_space<vmem>>, %arg2: memref<1x1x8xf32, #tpu.memory_space<vmem>>, %arg3: memref<1x128x8xf32, #tpu.memory_space<vmem>>, %arg4: memref<1x1x8xf32, #tpu.memory_space<vmem>>, %arg5: memref<1x1x8xf32, #tpu.memory_space<vmem>>, %arg6: memref<1x128x8xf32, #tpu.memory_space<vmem>>) attributes {dimension_semantics = [], scalar_prefetch = 0 : i64, scratch_operands = 0 : i64, tpu.core_type = #tpu.core_type<tc>} {
    %c0 = arith.constant 0 : index
    %c0_0 = arith.constant 0 : index
    %c0_1 = arith.constant 0 : index
    %0 = vector.load %arg0[%c0, %c0_0, %c0_1] : memref<1x128x8xbf16, #tpu.memory_space<vmem>>, vector<1x128x8xbf16>
    %1 = vector.shape_cast %0 : vector<1x128x8xbf16> to vector<128x8xbf16>
    %c0_2 = arith.constant 0 : index
    %c0_3 = arith.constant 0 : index
    %c0_4 = arith.constant 0 : index
    %2 = vector.load %arg1[%c0_2, %c0_3, %c0_4] : memref<1x8x8xbf16, #tpu.memory_space<vmem>>, vector<1x8x8xbf16>
    %3 = vector.shape_cast %2 : vector<1x8x8xbf16> to vector<8x8xbf16>
    %cst = arith.constant dense<0.000000e+00> : vector<128x8xf32>
    %4 = tpu.matmul %1, %3, %cst {dimension_numbers = #tpu.dot_dimension_numbers<[1], [0], [0], [1], [0, 0, 1, 1], [], []>} : vector<128x8xbf16>, vector<8x8xbf16>, vector<128x8xf32> -> vector<128x8xf32>
    %5 = vector.shape_cast %4 : vector<128x8xf32> to vector<1x128x8xf32>
    %c0_5 = arith.constant 0 : index
    %c0_6 = arith.constant 0 : index
    %c0_7 = arith.constant 0 : index
    %6 = vector.load %arg2[%c0_5, %c0_6, %c0_7] : memref<1x1x8xf32, #tpu.memory_space<vmem>>, vector<1x1x8xf32>
    %7 = vector.broadcast %6 : vector<1x1x8xf32> to vector<1x128x8xf32>
    %8 = arith.addf %5, %7 : vector<1x128x8xf32>
    %c0_8 = arith.constant 0 : index
    %c0_9 = arith.constant 0 : index
    %c0_10 = arith.constant 0 : index
    %9 = vector.load %arg3[%c0_8, %c0_9, %c0_10] : memref<1x128x8xf32, #tpu.memory_space<vmem>>, vector<1x128x8xf32>
    %10 = arith.addf %8, %9 : vector<1x128x8xf32>
    %cst_11 = arith.constant dense<0.000000e+00> : vector<1x8xf32>
    %11 = vector.multi_reduction <add>, %10, %cst_11 [1] : vector<1x128x8xf32> to vector<1x8xf32>
    %12 = vector.shape_cast %11 : vector<1x8xf32> to vector<1x1x8xf32>
    %cst_12 = arith.constant dense<0.000000e+00> : vector<1x8xf32>
    %13 = vector.multi_reduction <add>, %12, %cst_12 [0] : vector<1x1x8xf32> to vector<1x8xf32>
    %14 = vector.shape_cast %13 : vector<1x8xf32> to vector<1x1x8xf32>
    %cst_13 = arith.constant 7.812500e-03 : f32
    %15 = vector.broadcast %cst_13 : f32 to vector<1x1x8xf32>
    %16 = arith.mulf %14, %15 : vector<1x1x8xf32>
    %17 = vector.broadcast %16 : vector<1x1x8xf32> to vector<1x128x8xf32>
    %18 = arith.subf %10, %17 : vector<1x128x8xf32>
    %19 = arith.mulf %18, %18 : vector<1x128x8xf32>
    %cst_14 = arith.constant dense<0.000000e+00> : vector<1x8xf32>
    %20 = vector.multi_reduction <add>, %19, %cst_14 [1] : vector<1x128x8xf32> to vector<1x8xf32>
    %21 = vector.shape_cast %20 : vector<1x8xf32> to vector<1x1x8xf32>
    %cst_15 = arith.constant dense<0.000000e+00> : vector<1x8xf32>
    %22 = vector.multi_reduction <add>, %21, %cst_15 [0] : vector<1x1x8xf32> to vector<1x8xf32>
    %23 = vector.shape_cast %22 : vector<1x8xf32> to vector<1x1x8xf32>
    %cst_16 = arith.constant 7.812500e-03 : f32
    %24 = vector.broadcast %cst_16 : f32 to vector<1x1x8xf32>
    %25 = arith.mulf %23, %24 : vector<1x1x8xf32>
    %c0_17 = arith.constant 0 : index
    %c0_18 = arith.constant 0 : index
    %c0_19 = arith.constant 0 : index
    %26 = vector.load %arg4[%c0_17, %c0_18, %c0_19] : memref<1x1x8xf32, #tpu.memory_space<vmem>>, vector<1x1x8xf32>
    %cst_20 = arith.constant 9.99999974E-6 : f32
    %27 = vector.broadcast %cst_20 : f32 to vector<1x1x8xf32>
    %28 = arith.addf %25, %27 : vector<1x1x8xf32>
    %29 = math.rsqrt %28 : vector<1x1x8xf32>
    %30 = arith.mulf %26, %29 : vector<1x1x8xf32>
    %31 = vector.broadcast %30 : vector<1x1x8xf32> to vector<1x128x8xf32>
    %32 = arith.mulf %18, %31 : vector<1x128x8xf32>
    %c0_21 = arith.constant 0 : index
    %c0_22 = arith.constant 0 : index
    %c0_23 = arith.constant 0 : index
    %33 = vector.load %arg5[%c0_21, %c0_22, %c0_23] : memref<1x1x8xf32, #tpu.memory_space<vmem>>, vector<1x1x8xf32>
    %34 = vector.broadcast %33 : vector<1x1x8xf32> to vector<1x128x8xf32>
    %35 = arith.addf %32, %34 : vector<1x128x8xf32>
    %c0_24 = arith.constant 0 : index
    %c0_25 = arith.constant 0 : index
    %c0_26 = arith.constant 0 : index
    %36 = vector.load %arg6[%c0_24, %c0_25, %c0_26] : memref<1x128x8xf32, #tpu.memory_space<vmem>>, vector<1x128x8xf32>
    tpu.vector_store %arg6[%c0_24, %c0_25, %c0_26], %35 {strides = array<i32>} : memref<1x128x8xf32, #tpu.memory_space<vmem>>, vector<1x128x8xf32>,
    return
  }
}

module attributes {stable_mosaic.version = 11 : i64} {
  func.func @_fused_matmul_kernel(%arg0: memref<1x128x8xbf16, #tpu.memory_space<vmem>>, %arg1: memref<1x8x8xbf16, #tpu.memory_space<vmem>>, %arg2: memref<1x1x8xf32, #tpu.memory_space<vmem>>, %arg3: memref<1x128x8xf32, #tpu.memory_space<vmem>>, %arg4: memref<1x128x8xf32, #tpu.memory_space<vmem>>) attributes {dimension_semantics = [], scalar_prefetch = 0 : i64, scratch_operands = 0 : i64, tpu.core_type = #tpu.core_type<tc>} {
    %c0 = arith.constant 0 : index
    %c0_0 = arith.constant 0 : index
    %c0_1 = arith.constant 0 : index
    %0 = vector.load %arg0[%c0, %c0_0, %c0_1] : memref<1x128x8xbf16, #tpu.memory_space<vmem>>, vector<1x128x8xbf16>
    %1 = vector.shape_cast %0 : vector<1x128x8xbf16> to vector<128x8xbf16>
    %c0_2 = arith.constant 0 : index
    %c0_3 = arith.constant 0 : index
    %c0_4 = arith.constant 0 : index
    %2 = vector.load %arg1[%c0_2, %c0_3, %c0_4] : memref<1x8x8xbf16, #tpu.memory_space<vmem>>, vector<1x8x8xbf16>
    %3 = vector.shape_cast %2 : vector<1x8x8xbf16> to vector<8x8xbf16>
    %cst = arith.constant dense<0.000000e+00> : vector<128x8xf32>
    %4 = tpu.matmul %1, %3, %cst {dimension_numbers = #tpu.dot_dimension_numbers<[1], [0], [0], [1], [0, 0, 1, 1], [], []>} : vector<128x8xbf16>, vector<8x8xbf16>, vector<128x8xf32> -> vector<128x8xf32>
    %5 = vector.shape_cast %4 : vector<128x8xf32> to vector<1x128x8xf32>
    %c0_5 = arith.constant 0 : index
    %c0_6 = arith.constant 0 : index
    %c0_7 = arith.constant 0 : index
    %6 = vector.load %arg2[%c0_5, %c0_6, %c0_7] : memref<1x1x8xf32, #tpu.memory_space<vmem>>, vector<1x1x8xf32>
    %7 = vector.broadcast %6 : vector<1x1x8xf32> to vector<1x128x8xf32>
    %8 = arith.addf %5, %7 : vector<1x128x8xf32>
    %c0_8 = arith.constant 0 : index
    %c0_9 = arith.constant 0 : index
    %c0_10 = arith.constant 0 : index
    %9 = vector.load %arg3[%c0_8, %c0_9, %c0_10] : memref<1x128x8xf32, #tpu.memory_space<vmem>>, vector<1x128x8xf32>
    %10 = arith.addf %8, %9 : vector<1x128x8xf32>
    %c0_11 = arith.constant 0 : index
    %c0_12 = arith.constant 0 : index
    %c0_13 = arith.constant 0 : index
    %11 = vector.load %arg4[%c0_11, %c0_12, %c0_13] : memref<1x128x8xf32, #tpu.memory_space<vmem>>, vector<1x128x8xf32>
    tpu.vector_store %arg4[%c0_11, %c0_12, %c0_13], %10 {strides = array<i32>} : memref<1x128x8xf32, #tpu.memory_space<vmem>>, vector<1x128x8xf32>,
    return
  }
}

module attributes {stable_mosaic.version = 11 : i64} {
  func.func @_fused_matmul_kernel(%arg0: memref<1x2x512xf32, #tpu.memory_space<vmem>>, %arg1: memref<1x512x1024xf32, #tpu.memory_space<vmem>>, %arg2: memref<1x1x1024xf32, #tpu.memory_space<vmem>>, %arg3: memref<1x2x1024xf32, #tpu.memory_space<vmem>>) attributes {dimension_semantics = [], scalar_prefetch = 0 : i64, scratch_operands = 0 : i64, tpu.core_type = #tpu.core_type<tc>} {
    %c0 = arith.constant 0 : index
    %c0_0 = arith.constant 0 : index
    %c0_1 = arith.constant 0 : index
    %0 = vector.load %arg0[%c0, %c0_0, %c0_1] : memref<1x2x512xf32, #tpu.memory_space<vmem>>, vector<1x2x512xf32>
    %1 = vector.shape_cast %0 : vector<1x2x512xf32> to vector<2x512xf32>
    %c0_2 = arith.constant 0 : index
    %c0_3 = arith.constant 0 : index
    %c0_4 = arith.constant 0 : index
    %2 = vector.load %arg1[%c0_2, %c0_3, %c0_4] : memref<1x512x1024xf32, #tpu.memory_space<vmem>>, vector<1x512x1024xf32>
    %3 = vector.shape_cast %2 : vector<1x512x1024xf32> to vector<512x1024xf32>
    %cst = arith.constant dense<0.000000e+00> : vector<2x1024xf32>
    %4 = tpu.matmul %1, %3, %cst {dimension_numbers = #tpu.dot_dimension_numbers<[1], [0], [0], [1], [0, 0, 1, 1], [], []>} : vector<2x512xf32>, vector<512x1024xf32>, vector<2x1024xf32> -> vector<2x1024xf32>
    %5 = vector.shape_cast %4 : vector<2x1024xf32> to vector<1x2x1024xf32>
    %c0_5 = arith.constant 0 : index
    %c0_6 = arith.constant 0 : index
    %c0_7 = arith.constant 0 : index
    %6 = vector.load %arg2[%c0_5, %c0_6, %c0_7] : memref<1x1x1024xf32, #tpu.memory_space<vmem>>, vector<1x1x1024xf32>
    %7 = vector.broadcast %6 : vector<1x1x1024xf32> to vector<1x2x1024xf32>
    %8 = arith.addf %5, %7 : vector<1x2x1024xf32>
    %c0_8 = arith.constant 0 : index
    %c0_9 = arith.constant 0 : index
    %c0_10 = arith.constant 0 : index
    %9 = vector.load %arg3[%c0_8, %c0_9, %c0_10] : memref<1x2x1024xf32, #tpu.memory_space<vmem>>, vector<1x2x1024xf32>
    tpu.vector_store %arg3[%c0_8, %c0_9, %c0_10], %8 {strides = array<i32>} : memref<1x2x1024xf32, #tpu.memory_space<vmem>>, vector<1x2x1024xf32>,
    return
  }
}

module attributes {stable_mosaic.version = 11 : i64} {
  func.func @_fused_matmul_kernel(%arg0: memref<4x128x32xbf16, #tpu.memory_space<vmem>>, %arg1: memref<4x32x4xbf16, #tpu.memory_space<vmem>>, %arg2: memref<1x1x4xf32, #tpu.memory_space<vmem>>, %arg3: memref<1x1x4xf32, #tpu.memory_space<vmem>>, %arg4: memref<4x128x4xf32, #tpu.memory_space<vmem>>) attributes {dimension_semantics = [], scalar_prefetch = 0 : i64, scratch_operands = 0 : i64, tpu.core_type = #tpu.core_type<tc>} {
    %c0 = arith.constant 0 : index
    %c0_0 = arith.constant 0 : index
    %c0_1 = arith.constant 0 : index
    %0 = vector.load %arg0[%c0, %c0_0, %c0_1] : memref<4x128x32xbf16, #tpu.memory_space<vmem>>, vector<1x128x32xbf16>
    %1 = vector.shape_cast %0 : vector<1x128x32xbf16> to vector<128x32xbf16>
    %c0_2 = arith.constant 0 : index
    %c0_3 = arith.constant 0 : index
    %c0_4 = arith.constant 0 : index
    %2 = vector.load %arg1[%c0_2, %c0_3, %c0_4] : memref<4x32x4xbf16, #tpu.memory_space<vmem>>, vector<1x32x4xbf16>
    %3 = vector.shape_cast %2 : vector<1x32x4xbf16> to vector<32x4xbf16>
    %cst = arith.constant dense<0.000000e+00> : vector<128x4xf32>
    %4 = tpu.matmul %1, %3, %cst {dimension_numbers = #tpu.dot_dimension_numbers<[1], [0], [0], [1], [0, 0, 1, 1], [], []>} : vector<128x32xbf16>, vector<32x4xbf16>, vector<128x4xf32> -> vector<128x4xf32>
    %c1 = arith.constant 1 : index
    %c0_5 = arith.constant 0 : index
    %c0_6 = arith.constant 0 : index
    %5 = vector.load %arg0[%c1, %c0_5, %c0_6] : memref<4x128x32xbf16, #tpu.memory_space<vmem>>, vector<1x128x32xbf16>
    %6 = vector.shape_cast %5 : vector<1x128x32xbf16> to vector<128x32xbf16>
    %c1_7 = arith.constant 1 : index
    %c0_8 = arith.constant 0 : index
    %c0_9 = arith.constant 0 : index
    %7 = vector.load %arg1[%c1_7, %c0_8, %c0_9] : memref<4x32x4xbf16, #tpu.memory_space<vmem>>, vector<1x32x4xbf16>
    %8 = vector.shape_cast %7 : vector<1x32x4xbf16> to vector<32x4xbf16>
    %cst_10 = arith.constant dense<0.000000e+00> : vector<128x4xf32>
    %9 = tpu.matmul %6, %8, %cst_10 {dimension_numbers = #tpu.dot_dimension_numbers<[1], [0], [0], [1], [0, 0, 1, 1], [], []>} : vector<128x32xbf16>, vector<32x4xbf16>, vector<128x4xf32> -> vector<128x4xf32>
    %c2 = arith.constant 2 : index
    %c0_11 = arith.constant 0 : index
    %c0_12 = arith.constant 0 : index
    %10 = vector.load %arg0[%c2, %c0_11, %c0_12] : memref<4x128x32xbf16, #tpu.memory_space<vmem>>, vector<1x128x32xbf16>
    %11 = vector.shape_cast %10 : vector<1x128x32xbf16> to vector<128x32xbf16>
    %c2_13 = arith.constant 2 : index
    %c0_14 = arith.constant 0 : index
    %c0_15 = arith.constant 0 : index
    %12 = vector.load %arg1[%c2_13, %c0_14, %c0_15] : memref<4x32x4xbf16, #tpu.memory_space<vmem>>, vector<1x32x4xbf16>
    %13 = vector.shape_cast %12 : vector<1x32x4xbf16> to vector<32x4xbf16>
    %cst_16 = arith.constant dense<0.000000e+00> : vector<128x4xf32>
    %14 = tpu.matmul %11, %13, %cst_16 {dimension_numbers = #tpu.dot_dimension_numbers<[1], [0], [0], [1], [0, 0, 1, 1], [], []>} : vector<128x32xbf16>, vector<32x4xbf16>, vector<128x4xf32> -> vector<128x4xf32>
    %c3 = arith.constant 3 : index
    %c0_17 = arith.constant 0 : index
    %c0_18 = arith.constant 0 : index
    %15 = vector.load %arg0[%c3, %c0_17, %c0_18] : memref<4x128x32xbf16, #tpu.memory_space<vmem>>, vector<1x128x32xbf16>
    %16 = vector.shape_cast %15 : vector<1x128x32xbf16> to vector<128x32xbf16>
    %c3_19 = arith.constant 3 : index
    %c0_20 = arith.constant 0 : index
    %c0_21 = arith.constant 0 : index
    %17 = vector.load %arg1[%c3_19, %c0_20, %c0_21] : memref<4x32x4xbf16, #tpu.memory_space<vmem>>, vector<1x32x4xbf16>
    %18 = vector.shape_cast %17 : vector<1x32x4xbf16> to vector<32x4xbf16>
    %cst_22 = arith.constant dense<0.000000e+00> : vector<128x4xf32>
    %19 = tpu.matmul %16, %18, %cst_22 {dimension_numbers = #tpu.dot_dimension_numbers<[1], [0], [0], [1], [0, 0, 1, 1], [], []>} : vector<128x32xbf16>, vector<32x4xbf16>, vector<128x4xf32> -> vector<128x4xf32>
    %20 = vector.shape_cast %4 : vector<128x4xf32> to vector<1x128x4xf32>
    %21 = vector.shape_cast %9 : vector<128x4xf32> to vector<1x128x4xf32>
    %22 = vector.shape_cast %14 : vector<128x4xf32> to vector<1x128x4xf32>
    %23 = vector.shape_cast %19 : vector<128x4xf32> to vector<1x128x4xf32>
    %24 = tpu.concatenate %20, %21, %22, %23 in 0 : vector<1x128x4xf32>, vector<1x128x4xf32>, vector<1x128x4xf32>, vector<1x128x4xf32> -> vector<4x128x4xf32>
    %cst_23 = arith.constant dense<0.000000e+00> : vector<4x4xf32>
    %25 = vector.multi_reduction <add>, %24, %cst_23 [1] : vector<4x128x4xf32> to vector<4x4xf32>
    %26 = vector.shape_cast %25 : vector<4x4xf32> to vector<4x1x4xf32>
    %cst_24 = arith.constant dense<0.000000e+00> : vector<1x4xf32>
    %27 = vector.multi_reduction <add>, %26, %cst_24 [0] : vector<4x1x4xf32> to vector<1x4xf32>
    %28 = vector.shape_cast %27 : vector<1x4xf32> to vector<1x1x4xf32>
    %cst_25 = arith.constant 0.001953125 : f32
    %29 = vector.broadcast %cst_25 : f32 to vector<1x1x4xf32>
    %30 = arith.mulf %28, %29 : vector<1x1x4xf32>
    %31 = vector.broadcast %30 : vector<1x1x4xf32> to vector<4x128x4xf32>
    %32 = arith.subf %24, %31 : vector<4x128x4xf32>
    %33 = arith.mulf %32, %32 : vector<4x128x4xf32>
    %cst_26 = arith.constant dense<0.000000e+00> : vector<4x4xf32>
    %34 = vector.multi_reduction <add>, %33, %cst_26 [1] : vector<4x128x4xf32> to vector<4x4xf32>
    %35 = vector.shape_cast %34 : vector<4x4xf32> to vector<4x1x4xf32>
    %cst_27 = arith.constant dense<0.000000e+00> : vector<1x4xf32>
    %36 = vector.multi_reduction <add>, %35, %cst_27 [0] : vector<4x1x4xf32> to vector<1x4xf32>
    %37 = vector.shape_cast %36 : vector<1x4xf32> to vector<1x1x4xf32>
    %cst_28 = arith.constant 0.001953125 : f32
    %38 = vector.broadcast %cst_28 : f32 to vector<1x1x4xf32>
    %39 = arith.mulf %37, %38 : vector<1x1x4xf32>
    %c0_29 = arith.constant 0 : index
    %c0_30 = arith.constant 0 : index
    %c0_31 = arith.constant 0 : index
    %40 = vector.load %arg2[%c0_29, %c0_30, %c0_31] : memref<1x1x4xf32, #tpu.memory_space<vmem>>, vector<1x1x4xf32>
    %cst_32 = arith.constant 9.99999974E-6 : f32
    %41 = vector.broadcast %cst_32 : f32 to vector<1x1x4xf32>
    %42 = arith.addf %39, %41 : vector<1x1x4xf32>
    %43 = math.rsqrt %42 : vector<1x1x4xf32>
    %44 = arith.mulf %40, %43 : vector<1x1x4xf32>
    %45 = vector.broadcast %44 : vector<1x1x4xf32> to vector<4x128x4xf32>
    %46 = arith.mulf %32, %45 : vector<4x128x4xf32>
    %c0_33 = arith.constant 0 : index
    %c0_34 = arith.constant 0 : index
    %c0_35 = arith.constant 0 : index
    %47 = vector.load %arg3[%c0_33, %c0_34, %c0_35] : memref<1x1x4xf32, #tpu.memory_space<vmem>>, vector<1x1x4xf32>
    %48 = vector.broadcast %47 : vector<1x1x4xf32> to vector<4x128x4xf32>
    %49 = arith.addf %46, %48 : vector<4x128x4xf32>
    %cst_36 = arith.constant 0.000000e+00 : f32
    %50 = vector.broadcast %cst_36 : f32 to vector<4x128x4xf32>
    %51 = arith.maximumf %49, %50 : vector<4x128x4xf32>
    %c0_37 = arith.constant 0 : index
    %c0_38 = arith.constant 0 : index
    %c0_39 = arith.constant 0 : index
    %52 = vector.load %arg4[%c0_37, %c0_38, %c0_39] : memref<4x128x4xf32, #tpu.memory_space<vmem>>, vector<4x128x4xf32>
    tpu.vector_store %arg4[%c0_37, %c0_38, %c0_39], %51 {strides = array<i32>} : memref<4x128x4xf32, #tpu.memory_space<vmem>>, vector<4x128x4xf32>,
    return
  }
}

module attributes {stable_mosaic.version = 11 : i64} {
  func.func @_fused_matmul_kernel(%arg0: memref<4x512x16xbf16, #tpu.memory_space<vmem>>, %arg1: memref<4x16x3xbf16, #tpu.memory_space<vmem>>, %arg2: memref<4x512x3xf32, #tpu.memory_space<vmem>>) attributes {dimension_semantics = [], scalar_prefetch = 0 : i64, scratch_operands = 0 : i64, tpu.core_type = #tpu.core_type<tc>} {
    %c0 = arith.constant 0 : index
    %c0_0 = arith.constant 0 : index
    %c0_1 = arith.constant 0 : index
    %0 = vector.load %arg0[%c0, %c0_0, %c0_1] : memref<4x512x16xbf16, #tpu.memory_space<vmem>>, vector<1x512x16xbf16>
    %1 = vector.shape_cast %0 : vector<1x512x16xbf16> to vector<512x16xbf16>
    %c0_2 = arith.constant 0 : index
    %c0_3 = arith.constant 0 : index
    %c0_4 = arith.constant 0 : index
    %2 = vector.load %arg1[%c0_2, %c0_3, %c0_4] : memref<4x16x3xbf16, #tpu.memory_space<vmem>>, vector<1x16x3xbf16>
    %3 = vector.shape_cast %2 : vector<1x16x3xbf16> to vector<16x3xbf16>
    %cst = arith.constant dense<0.000000e+00> : vector<512x3xf32>
    %4 = tpu.matmul %1, %3, %cst {dimension_numbers = #tpu.dot_dimension_numbers<[1], [0], [0], [1], [0, 0, 1, 1], [], []>} : vector<512x16xbf16>, vector<16x3xbf16>, vector<512x3xf32> -> vector<512x3xf32>
    %c1 = arith.constant 1 : index
    %c0_5 = arith.constant 0 : index
    %c0_6 = arith.constant 0 : index
    %5 = vector.load %arg0[%c1, %c0_5, %c0_6] : memref<4x512x16xbf16, #tpu.memory_space<vmem>>, vector<1x512x16xbf16>
    %6 = vector.shape_cast %5 : vector<1x512x16xbf16> to vector<512x16xbf16>
    %c1_7 = arith.constant 1 : index
    %c0_8 = arith.constant 0 : index
    %c0_9 = arith.constant 0 : index
    %7 = vector.load %arg1[%c1_7, %c0_8, %c0_9] : memref<4x16x3xbf16, #tpu.memory_space<vmem>>, vector<1x16x3xbf16>
    %8 = vector.shape_cast %7 : vector<1x16x3xbf16> to vector<16x3xbf16>
    %cst_10 = arith.constant dense<0.000000e+00> : vector<512x3xf32>
    %9 = tpu.matmul %6, %8, %cst_10 {dimension_numbers = #tpu.dot_dimension_numbers<[1], [0], [0], [1], [0, 0, 1, 1], [], []>} : vector<512x16xbf16>, vector<16x3xbf16>, vector<512x3xf32> -> vector<512x3xf32>
    %c2 = arith.constant 2 : index
    %c0_11 = arith.constant 0 : index
    %c0_12 = arith.constant 0 : index
    %10 = vector.load %arg0[%c2, %c0_11, %c0_12] : memref<4x512x16xbf16, #tpu.memory_space<vmem>>, vector<1x512x16xbf16>
    %11 = vector.shape_cast %10 : vector<1x512x16xbf16> to vector<512x16xbf16>
    %c2_13 = arith.constant 2 : index
    %c0_14 = arith.constant 0 : index
    %c0_15 = arith.constant 0 : index
    %12 = vector.load %arg1[%c2_13, %c0_14, %c0_15] : memref<4x16x3xbf16, #tpu.memory_space<vmem>>, vector<1x16x3xbf16>
    %13 = vector.shape_cast %12 : vector<1x16x3xbf16> to vector<16x3xbf16>
    %cst_16 = arith.constant dense<0.000000e+00> : vector<512x3xf32>
    %14 = tpu.matmul %11, %13, %cst_16 {dimension_numbers = #tpu.dot_dimension_numbers<[1], [0], [0], [1], [0, 0, 1, 1], [], []>} : vector<512x16xbf16>, vector<16x3xbf16>, vector<512x3xf32> -> vector<512x3xf32>
    %c3 = arith.constant 3 : index
    %c0_17 = arith.constant 0 : index
    %c0_18 = arith.constant 0 : index
    %15 = vector.load %arg0[%c3, %c0_17, %c0_18] : memref<4x512x16xbf16, #tpu.memory_space<vmem>>, vector<1x512x16xbf16>
    %16 = vector.shape_cast %15 : vector<1x512x16xbf16> to vector<512x16xbf16>
    %c3_19 = arith.constant 3 : index
    %c0_20 = arith.constant 0 : index
    %c0_21 = arith.constant 0 : index
    %17 = vector.load %arg1[%c3_19, %c0_20, %c0_21] : memref<4x16x3xbf16, #tpu.memory_space<vmem>>, vector<1x16x3xbf16>
    %18 = vector.shape_cast %17 : vector<1x16x3xbf16> to vector<16x3xbf16>
    %cst_22 = arith.constant dense<0.000000e+00> : vector<512x3xf32>
    %19 = tpu.matmul %16, %18, %cst_22 {dimension_numbers = #tpu.dot_dimension_numbers<[1], [0], [0], [1], [0, 0, 1, 1], [], []>} : vector<512x16xbf16>, vector<16x3xbf16>, vector<512x3xf32> -> vector<512x3xf32>
    %20 = vector.shape_cast %4 : vector<512x3xf32> to vector<1x512x3xf32>
    %21 = vector.shape_cast %9 : vector<512x3xf32> to vector<1x512x3xf32>
    %22 = vector.shape_cast %14 : vector<512x3xf32> to vector<1x512x3xf32>
    %23 = vector.shape_cast %19 : vector<512x3xf32> to vector<1x512x3xf32>
    %24 = tpu.concatenate %20, %21, %22, %23 in 0 : vector<1x512x3xf32>, vector<1x512x3xf32>, vector<1x512x3xf32>, vector<1x512x3xf32> -> vector<4x512x3xf32>
    %25 = math.tanh %24 : vector<4x512x3xf32>
    %c0_23 = arith.constant 0 : index
    %c0_24 = arith.constant 0 : index
    %c0_25 = arith.constant 0 : index
    %26 = vector.load %arg2[%c0_23, %c0_24, %c0_25] : memref<4x512x3xf32, #tpu.memory_space<vmem>>, vector<4x512x3xf32>
    tpu.vector_store %arg2[%c0_23, %c0_24, %c0_25], %25 {strides = array<i32>} : memref<4x512x3xf32, #tpu.memory_space<vmem>>, vector<4x512x3xf32>,
    return
  }
}

</mosaic_0001>

<llo_original>
// kernel: cvae_forward.13
$region0: #{cvae_forward.13}
  #allocation0 [shape = 'u32[]', space=smem, size = 0x4, offset = 0x4, fixed_abs, tag = 'smem constant byte address 0x4 - core index']
  #allocation1 [shape = 'u32[144,128]{1,0:T(1,128)}', space=vmem, size = 0x12000, scoped, tag = 'internal scratch']
  %s0 = inlined_call_operand.vmem [shape: bf16[1,512,48], index: 0, kind: input, shape index: {}]
  %s1 = inlined_call_operand.vmem [shape: bf16[1,48,4], index: 1, kind: input, shape index: {}]
  %s2 = inlined_call_operand.vmem [shape: f32[1,1,4], index: 2, kind: input, shape index: {}]
  %s3 = inlined_call_operand.vmem [shape: f32[1,1,4], index: 3, kind: input, shape index: {}]
  %s4 = inlined_call_operand.vmem [shape: f32[1,512,4], index: 4, kind: output, shape index: {}]
  %s5 = sld [smem:[#allocation0]]
  $region26: #{cvae_forward.13} parent=0
    _
  %s7 = ssub.s32 1, %s5
  %s8 = scalar_select 0, %s7, %s5
  // Predicated region
  $region2: #{cvae_forward.13} parent=0 // pred_check
    _
  $region3: #{cvae_forward.13} parent=0 // pred_check_branch
    %10 = sbr.rel (0) target = $region5
  $region4: #{cvae_forward.13} parent=0 // pred_region
    _
  $region5: #{cvae_forward.13} parent=0 // pred_fallthru
    _
  // Predicated region
  $region6: #{cvae_forward.13} parent=0 // pred_check
    _
  $region7: #{cvae_forward.13} parent=0 // pred_check_branch
    %12 = sbr.rel (0) target = $region9
  $region8: #{cvae_forward.13} parent=0 // pred_region
    _
  $region9: #{cvae_forward.13} parent=0 // pred_fallthru
    _
  // Predicated region
  $region10: #{cvae_forward.13} parent=0 // pred_check
    _
  $region11: #{cvae_forward.13} parent=0 // pred_check_branch
    %14 = sbr.rel (0) target = $region13
  $region12: #{cvae_forward.13} parent=0 // pred_region
    _
  $region13: #{cvae_forward.13} parent=0 // pred_fallthru
    _
  // Predicated region
  $region14: #{cvae_forward.13} parent=0 // pred_check
    _
  $region15: #{cvae_forward.13} parent=0 // pred_check_branch
    %16 = sbr.rel (0) target = $region17
  $region16: #{cvae_forward.13} parent=0 // pred_region
    _
  $region17: #{cvae_forward.13} parent=0 // pred_fallthru
    _
  %v18 = vld [vmem:[%s0] sm:$0xf]
  %v19 = vld [vmem:[%s0 + $0x4] sm:$0xf]
  %v20 = vld [vmem:[%s0 + $0x8] sm:$0xf]
  %v21 = vld [vmem:[%s0 + $0xc] sm:$0xf]
  %v22 = vld [vmem:[%s0 + $0x10] sm:$0xf]
  %v23 = vld [vmem:[%s0 + $0x14] sm:$0xf]
  %v24 = vld [vmem:[%s0 + $0x18] sm:$0xf]
  %v25 = vld [vmem:[%s0 + $0x1c] sm:$0xf]
  %v26 = vld [vmem:[%s0 + $0x20] sm:$0xf]
  %v27 = vld [vmem:[%s0 + $0x24] sm:$0xf]
  %v28 = vld [vmem:[%s0 + $0x28] sm:$0xf]
  %v29 = vld [vmem:[%s0 + $0x2c] sm:$0xf]
  %v30 = vld [vmem:[%s0 + $0x30] sm:$0xf]
  %v31 = vld [vmem:[%s0 + $0x34] sm:$0xf]
  %v32 = vld [vmem:[%s0 + $0x38] sm:$0xf]
  %v33 = vld [vmem:[%s0 + $0x3c] sm:$0xf]
  %v34 = vld [vmem:[%s0 + $0x40] sm:$0xf]
  %v35 = vld [vmem:[%s0 + $0x44] sm:$0xf]
  %v36 = vld [vmem:[%s0 + $0x48] sm:$0xf]
  %v37 = vld [vmem:[%s0 + $0x4c] sm:$0xf]
  %v38 = vld [vmem:[%s0 + $0x50] sm:$0xf]
  %v39 = vld [vmem:[%s0 + $0x54] sm:$0xf]
  %v40 = vld [vmem:[%s0 + $0x58] sm:$0xf]
  %v41 = vld [vmem:[%s0 + $0x5c] sm:$0xf]
  %v42 = vld [vmem:[%s0 + $0x60] sm:$0xf]
  %v43 = vld [vmem:[%s0 + $0x64] sm:$0xf]
  %v44 = vld [vmem:[%s0 + $0x68] sm:$0xf]
  %v45 = vld [vmem:[%s0 + $0x6c] sm:$0xf]
  %v46 = vld [vmem:[%s0 + $0x70] sm:$0xf]
  %v47 = vld [vmem:[%s0 + $0x74] sm:$0xf]
  %v48 = vld [vmem:[%s0 + $0x78] sm:$0xf]
  %v49 = vld [vmem:[%s0 + $0x7c] sm:$0xf]
  %v50 = vld [vmem:[%s0 + $0x80] sm:$0xf]
  %v51 = vld [vmem:[%s0 + $0x84] sm:$0xf]
  %v52 = vld [vmem:[%s0 + $0x88] sm:$0xf]
  %v53 = vld [vmem:[%s0 + $0x8c] sm:$0xf]
  %v54 = vld [vmem:[%s0 + $0x90] sm:$0xf]
  %v55 = vld [vmem:[%s0 + $0x94] sm:$0xf]
  %v56 = vld [vmem:[%s0 + $0x98] sm:$0xf]
  %v57 = vld [vmem:[%s0 + $0x9c] sm:$0xf]
  %v58 = vld [vmem:[%s0 + $0xa0] sm:$0xf]
  %v59 = vld [vmem:[%s0 + $0xa4] sm:$0xf]
  %v60 = vld [vmem:[%s0 + $0xa8] sm:$0xf]
  %v61 = vld [vmem:[%s0 + $0xac] sm:$0xf]
  %v62 = vld [vmem:[%s0 + $0xb0] sm:$0xf]
  %v63 = vld [vmem:[%s0 + $0xb4] sm:$0xf]
  %v64 = vld [vmem:[%s0 + $0xb8] sm:$0xf]
  %v65 = vld [vmem:[%s0 + $0xbc] sm:$0xf]
  %v66 = vld [vmem:[%s0 + $0xc0] sm:$0xf]
  %v67 = vld [vmem:[%s0 + $0xc4] sm:$0xf]
  %v68 = vld [vmem:[%s0 + $0xc8] sm:$0xf]
  %v69 = vld [vmem:[%s0 + $0xcc] sm:$0xf]
  %v70 = vld [vmem:[%s0 + $0xd0] sm:$0xf]
  %v71 = vld [vmem:[%s0 + $0xd4] sm:$0xf]
  %v72 = vld [vmem:[%s0 + $0xd8] sm:$0xf]
  %v73 = vld [vmem:[%s0 + $0xdc] sm:$0xf]
  %v74 = vld [vmem:[%s0 + $0xe0] sm:$0xf]
  %v75 = vld [vmem:[%s0 + $0xe4] sm:$0xf]
  %v76 = vld [vmem:[%s0 + $0xe8] sm:$0xf]
  %v77 = vld [vmem:[%s0 + $0xec] sm:$0xf]
  %v78 = vld [vmem:[%s0 + $0xf0] sm:$0xf]
  %v79 = vld [vmem:[%s0 + $0xf4] sm:$0xf]
  %v80 = vld [vmem:[%s0 + $0xf8] sm:$0xf]
  %v81 = vld [vmem:[%s0 + $0xfc] sm:$0xf]
  %v82 = vld [vmem:[%s1] sm:$0xf]
  %v83 = vld [vmem:[%s1 + $0x4] sm:$0xf]
  %v84 = vld [vmem:[%s1 + $0x8] sm:$0xf]
  %v85 = vld [vmem:[%s1 + $0xc] sm:$0xf]
  %v86 = vld [vmem:[%s1 + $0x10] sm:$0xf]
  %v87 = vld [vmem:[%s1 + $0x14] sm:$0xf]
  %v152 = vunpack.c.l.b16 %v18
  %v153 = vunpack.c.l.b16 %v19
  %v154 = vunpack.c.l.b16 %v20
  %v155 = vunpack.c.l.b16 %v21
  %v156 = vunpack.c.l.b16 %v22
  %v157 = vunpack.c.l.b16 %v23
  %v158 = vunpack.c.l.b16 %v24
  %v159 = vunpack.c.l.b16 %v25
  %v160 = vunpack.c.l.b16 %v26
  %v161 = vunpack.c.l.b16 %v27
  %v162 = vunpack.c.l.b16 %v28
  %v163 = vunpack.c.l.b16 %v29
  %v164 = vunpack.c.l.b16 %v30
  %v165 = vunpack.c.l.b16 %v31
  %v166 = vunpack.c.l.b16 %v32
  %v167 = vunpack.c.l.b16 %v33
  %v168 = vunpack.c.l.b16 %v34
  %v169 = vunpack.c.l.b16 %v35
  %v170 = vunpack.c.l.b16 %v36
  %v171 = vunpack.c.l.b16 %v37
  %v172 = vunpack.c.l.b16 %v38
  %v173 = vunpack.c.l.b16 %v39
  %v174 = vunpack.c.l.b16 %v40
  %v175 = vunpack.c.l.b16 %v41
  %v176 = vunpack.c.l.b16 %v42
  %v177 = vunpack.c.l.b16 %v43
  %v178 = vunpack.c.l.b16 %v44
  %v179 = vunpack.c.l.b16 %v45
  %v180 = vunpack.c.l.b16 %v46
  %v181 = vunpack.c.l.b16 %v47
  %v182 = vunpack.c.l.b16 %v48
  %v183 = vunpack.c.l.b16 %v49
  %v184 = vunpack.c.l.b16 %v50
  %v185 = vunpack.c.l.b16 %v51
  %v186 = vunpack.c.l.b16 %v52
  %v187 = vunpack.c.l.b16 %v53
  %v188 = vunpack.c.l.b16 %v54
  %v189 = vunpack.c.l.b16 %v55
  %v190 = vunpack.c.l.b16 %v56
  %v191 = vunpack.c.l.b16 %v57
  %v192 = vunpack.c.l.b16 %v58
  %v193 = vunpack.c.l.b16 %v59
  %v194 = vunpack.c.l.b16 %v60
  %v195 = vunpack.c.l.b16 %v61
  %v196 = vunpack.c.l.b16 %v62
  %v197 = vunpack.c.l.b16 %v63
  %v198 = vunpack.c.l.b16 %v64
  %v199 = vunpack.c.l.b16 %v65
  %v200 = vunpack.c.l.b16 %v66
  %v201 = vunpack.c.l.b16 %v67
  %v202 = vunpack.c.l.b16 %v68
  %v203 = vunpack.c.l.b16 %v69
  %v204 = vunpack.c.l.b16 %v70
  %v205 = vunpack.c.l.b16 %v71
  %v206 = vunpack.c.l.b16 %v72
  %v207 = vunpack.c.l.b16 %v73
  %v208 = vunpack.c.l.b16 %v74
  %v209 = vunpack.c.l.b16 %v75
  %v210 = vunpack.c.l.b16 %v76
  %v211 = vunpack.c.l.b16 %v77
  %v212 = vunpack.c.l.b16 %v78
  %v213 = vunpack.c.l.b16 %v79
  %v214 = vunpack.c.l.b16 %v80
  %v215 = vunpack.c.l.b16 %v81
  %v216 = vpack.c.b16 %v153, %v152
  %v217 = vpack.c.b16 %v155, %v154
  %v218 = vpack.c.b16 %v157, %v156
  %v219 = vpack.c.b16 %v159, %v158
  %v220 = vpack.c.b16 %v161, %v160
  %v221 = vpack.c.b16 %v163, %v162
  %v222 = vpack.c.b16 %v165, %v164
  %v223 = vpack.c.b16 %v167, %v166
  %v224 = vpack.c.b16 %v169, %v168
  %v225 = vpack.c.b16 %v171, %v170
  %v226 = vpack.c.b16 %v173, %v172
  %v227 = vpack.c.b16 %v175, %v174
  %v228 = vpack.c.b16 %v177, %v176
  %v229 = vpack.c.b16 %v179, %v178
  %v230 = vpack.c.b16 %v181, %v180
  %v231 = vpack.c.b16 %v183, %v182
  %v232 = vpack.c.b16 %v185, %v184
  %v233 = vpack.c.b16 %v187, %v186
  %v234 = vpack.c.b16 %v189, %v188
  %v235 = vpack.c.b16 %v191, %v190
  %v236 = vpack.c.b16 %v193, %v192
  %v237 = vpack.c.b16 %v195, %v194
  %v238 = vpack.c.b16 %v197, %v196
  %v239 = vpack.c.b16 %v199, %v198
  %v240 = vpack.c.b16 %v201, %v200
  %v241 = vpack.c.b16 %v203, %v202
  %v242 = vpack.c.b16 %v205, %v204
  %v243 = vpack.c.b16 %v207, %v206
  %v244 = vpack.c.b16 %v209, %v208
  %v245 = vpack.c.b16 %v211, %v210
  %v246 = vpack.c.b16 %v213, %v212
  %v247 = vpack.c.b16 %v215, %v214
  %v254 = vunpack.c.l.b16 %v82
  %v255 = vunpack.c.l.b16 %v83
  %v256 = vunpack.c.l.b16 %v84
  %v257 = vunpack.c.l.b16 %v85
  %v258 = vunpack.c.l.b16 %v86
  %v259 = vunpack.c.l.b16 %v87
  %v260 = vpack.c.b16 %v255, %v254
  %v261 = vpack.c.b16 %v257, %v256
  %v262 = vpack.c.b16 %v259, %v258
  %vm266 = vcmask 392192
  %v268 = vsel %vm266, %v216, 0
  %v271 = vsel %vm266, %v217, 0
  %v274 = vsel %vm266, %v218, 0
  %v277 = vsel %vm266, %v219, 0
  %v280 = vsel %vm266, %v220, 0
  %v283 = vsel %vm266, %v221, 0
  %v286 = vsel %vm266, %v222, 0
  %v289 = vsel %vm266, %v223, 0
  %v292 = vsel %vm266, %v224, 0
  %v295 = vsel %vm266, %v225, 0
  %v298 = vsel %vm266, %v226, 0
  %v301 = vsel %vm266, %v227, 0
  %v304 = vsel %vm266, %v228, 0
  %v307 = vsel %vm266, %v229, 0
  %v310 = vsel %vm266, %v230, 0
  %v313 = vsel %vm266, %v231, 0
  %v316 = vsel %vm266, %v232, 0
  %v319 = vsel %vm266, %v233, 0
  %v322 = vsel %vm266, %v234, 0
  %v325 = vsel %vm266, %v235, 0
  %v328 = vsel %vm266, %v236, 0
  %v331 = vsel %vm266, %v237, 0
  %v334 = vsel %vm266, %v238, 0
  %v337 = vsel %vm266, %v239, 0
  %v340 = vsel %vm266, %v240, 0
  %v343 = vsel %vm266, %v241, 0
  %v346 = vsel %vm266, %v242, 0
  %v349 = vsel %vm266, %v243, 0
  %v352 = vsel %vm266, %v244, 0
  %v355 = vsel %vm266, %v245, 0
  %v358 = vsel %vm266, %v246, 0
  %v361 = vsel %vm266, %v247, 0
  %363 = vmatprep.subr.bf16.mxu0 0
  %364 = vmatpush1.bf16.msra.mxu0 %v260
  %365 = vmatprep.subr.bf16.mxu0 0
  %366 = vmatpush1.bf16.msra.mxu0 %v261
  %367 = vmatprep.subr.bf16.mxu0 0
  %368 = vmatpush1.bf16.msra.mxu0 %v262
  %369 = vmatprep.subr.bf16.mxu0 0
  %370 = vmatpush1.bf16.msra.mxu0 0
  %371 = vmatprep.subr.bf16.mxu0 0
  %372 = vmatpush1.bf16.msra.mxu0 0
  %373 = vmatprep.subr.bf16.mxu0 0
  %374 = vmatpush1.bf16.msra.mxu0 0
  %375 = vmatprep.subr.bf16.mxu0 0
  %376 = vmatpush1.bf16.msra.mxu0 0
  %377 = vmatprep.subr.bf16.mxu0 0
  %378 = vmatpush1.bf16.msra.mxu0 0
  %379 = vmatprep.subr.bf16.mxu0 0
  %380 = vmatpush1.bf16.msra.mxu0 0
  %381 = vmatprep.subr.bf16.mxu0 0
  %382 = vmatpush1.bf16.msra.mxu0 0
  %383 = vmatprep.subr.bf16.mxu0 0
  %384 = vmatpush1.bf16.msra.mxu0 0
  %385 = vmatprep.subr.bf16.mxu0 0
  %386 = vmatpush1.bf16.msra.mxu0 0
  %387 = vmatprep.subr.bf16.mxu0 0
  %388 = vmatpush1.bf16.msra.mxu0 0
  %389 = vmatprep.subr.bf16.mxu0 0
  %390 = vmatpush1.bf16.msra.mxu0 0
  %391 = vmatprep.subr.bf16.mxu0 0
  %392 = vmatpush1.bf16.msra.mxu0 0
  %393 = vmatprep.subr.bf16.mxu0 0
  %394 = vmatpush1.bf16.msra.mxu0 0
  %395 = vmatprep.mubr.bf16.mxu0 0
  %396 = vmatmul.mubr.bf16.gmra.mrb[0].mxu0 %v268
  %v397 = vpop.f32.mrb[0].mxu0
  %v398 = vadd.f32 0.0, %v397
  %v399 = vpop.f32.mrb[0].mxu0
  %v400 = vpop.f32.mrb[0].mxu0
  %v401 = vadd.f32 0.0, %v400
  %v402 = vpop.f32.mrb[0].mxu0
  %403 = vmatprep.mubr.bf16.mxu0 0
  %404 = vmatmul.mubr.bf16.gmra.mrb[0].mxu0 %v271
  %v405 = vpop.f32.mrb[0].mxu0
  %v406 = vadd.f32 0.0, %v405
  %v407 = vpop.f32.mrb[0].mxu0
  %v408 = vpop.f32.mrb[0].mxu0
  %v409 = vadd.f32 0.0, %v408
  %v410 = vpop.f32.mrb[0].mxu0
  %411 = vmatprep.mubr.bf16.mxu0 0
  %412 = vmatmul.mubr.bf16.gmra.mrb[0].mxu0 %v274
  %v413 = vpop.f32.mrb[0].mxu0
  %v414 = vadd.f32 0.0, %v413
  %v415 = vpop.f32.mrb[0].mxu0
  %v416 = vpop.f32.mrb[0].mxu0
  %v417 = vadd.f32 0.0, %v416
  %v418 = vpop.f32.mrb[0].mxu0
  %419 = vmatprep.mubr.bf16.mxu0 0
  %420 = vmatmul.mubr.bf16.gmra.mrb[0].mxu0 %v277
  %v421 = vpop.f32.mrb[0].mxu0
  %v422 = vadd.f32 0.0, %v421
  %v423 = vpop.f32.mrb[0].mxu0
  %v424 = vpop.f32.mrb[0].mxu0
  %v425 = vadd.f32 0.0, %v424
  %v426 = vpop.f32.mrb[0].mxu0
  %427 = vmatprep.mubr.bf16.mxu0 0
  %428 = vmatmul.mubr.bf16.gmra.mrb[0].mxu0 %v280
  %v429 = vpop.f32.mrb[0].mxu0
  %v430 = vadd.f32 0.0, %v429
  %v431 = vpop.f32.mrb[0].mxu0
  %v432 = vpop.f32.mrb[0].mxu0
  %v433 = vadd.f32 0.0, %v432
  %v434 = vpop.f32.mrb[0].mxu0
  %435 = vmatprep.mubr.bf16.mxu0 0
  %436 = vmatmul.mubr.bf16.gmra.mrb[0].mxu0 %v283
  %v437 = vpop.f32.mrb[0].mxu0
  %v438 = vadd.f32 0.0, %v437
  %v439 = vpop.f32.mrb[0].mxu0
  %v440 = vpop.f32.mrb[0].mxu0
  %v441 = vadd.f32 0.0, %v440
  %v442 = vpop.f32.mrb[0].mxu0
  %443 = vmatprep.mubr.bf16.mxu0 0
  %444 = vmatmul.mubr.bf16.gmra.mrb[0].mxu0 %v286
  %v445 = vpop.f32.mrb[0].mxu0
  %v446 = vadd.f32 0.0, %v445
  %v447 = vpop.f32.mrb[0].mxu0
  %v448 = vpop.f32.mrb[0].mxu0
  %v449 = vadd.f32 0.0, %v448
  %v450 = vpop.f32.mrb[0].mxu0
  %451 = vmatprep.mubr.bf16.mxu0 0
  %452 = vmatmul.mubr.bf16.gmra.mrb[0].mxu0 %v289
  %v453 = vpop.f32.mrb[0].mxu0
  %v454 = vadd.f32 0.0, %v453
  %v455 = vpop.f32.mrb[0].mxu0
  %v456 = vpop.f32.mrb[0].mxu0
  %v457 = vadd.f32 0.0, %v456
  %v458 = vpop.f32.mrb[0].mxu0
  %459 = vmatprep.mubr.bf16.mxu0 0
  %460 = vmatmul.mubr.bf16.gmra.mrb[0].mxu0 %v292
  %v461 = vpop.f32.mrb[0].mxu0
  %v462 = vadd.f32 0.0, %v461
  %v463 = vpop.f32.mrb[0].mxu0
  %v464 = vpop.f32.mrb[0].mxu0
  %v465 = vadd.f32 0.0, %v464
  %v466 = vpop.f32.mrb[0].mxu0
  %467 = vmatprep.mubr.bf16.mxu0 0
  %468 = vmatmul.mubr.bf16.gmra.mrb[0].mxu0 %v295
  %v469 = vpop.f32.mrb[0].mxu0
  %v470 = vadd.f32 0.0, %v469
  %v471 = vpop.f32.mrb[0].mxu0
  %v472 = vpop.f32.mrb[0].mxu0
  %v473 = vadd.f32 0.0, %v472
  %v474 = vpop.f32.mrb[0].mxu0
  %475 = vmatprep.mubr.bf16.mxu0 0
  %476 = vmatmul.mubr.bf16.gmra.mrb[0].mxu0 %v298
  %v477 = vpop.f32.mrb[0].mxu0
  %v478 = vadd.f32 0.0, %v477
  %v479 = vpop.f32.mrb[0].mxu0
  %v480 = vpop.f32.mrb[0].mxu0
  %v481 = vadd.f32 0.0, %v480
  %v482 = vpop.f32.mrb[0].mxu0
  %483 = vmatprep.mubr.bf16.mxu0 0
  %484 = vmatmul.mubr.bf16.gmra.mrb[0].mxu0 %v301
  %v485 = vpop.f32.mrb[0].mxu0
  %v486 = vadd.f32 0.0, %v485
  %v487 = vpop.f32.mrb[0].mxu0
  %v488 = vpop.f32.mrb[0].mxu0
  %v489 = vadd.f32 0.0, %v488
  %v490 = vpop.f32.mrb[0].mxu0
  %491 = vmatprep.mubr.bf16.mxu0 0
  %492 = vmatmul.mubr.bf16.gmra.mrb[0].mxu0 %v304
  %v493 = vpop.f32.mrb[0].mxu0
  %v494 = vadd.f32 0.0, %v493
  %v495 = vpop.f32.mrb[0].mxu0
  %v496 = vpop.f32.mrb[0].mxu0
  %v497 = vadd.f32 0.0, %v496
  %v498 = vpop.f32.mrb[0].mxu0
  %499 = vmatprep.mubr.bf16.mxu0 0
  %500 = vmatmul.mubr.bf16.gmra.mrb[0].mxu0 %v307
  %v501 = vpop.f32.mrb[0].mxu0
  %v502 = vadd.f32 0.0, %v501
  %v503 = vpop.f32.mrb[0].mxu0
  %v504 = vpop.f32.mrb[0].mxu0
  %v505 = vadd.f32 0.0, %v504
  %v506 = vpop.f32.mrb[0].mxu0
  %507 = vmatprep.mubr.bf16.mxu0 0
  %508 = vmatmul.mubr.bf16.gmra.mrb[0].mxu0 %v310
  %v509 = vpop.f32.mrb[0].mxu0
  %v510 = vadd.f32 0.0, %v509
  %v511 = vpop.f32.mrb[0].mxu0
  %v512 = vpop.f32.mrb[0].mxu0
  %v513 = vadd.f32 0.0, %v512
  %v514 = vpop.f32.mrb[0].mxu0
  %515 = vmatprep.mubr.bf16.mxu0 0
  %516 = vmatmul.mubr.bf16.gmra.mrb[0].mxu0 %v313
  %v517 = vpop.f32.mrb[0].mxu0
  %v518 = vadd.f32 0.0, %v517
  %v519 = vpop.f32.mrb[0].mxu0
  %v520 = vpop.f32.mrb[0].mxu0
  %v521 = vadd.f32 0.0, %v520
  %v522 = vpop.f32.mrb[0].mxu0
  %523 = vmatprep.mubr.bf16.mxu0 0
  %524 = vmatmul.mubr.bf16.gmra.mrb[0].mxu0 %v316
  %v525 = vpop.f32.mrb[0].mxu0
  %v526 = vadd.f32 0.0, %v525
  %v527 = vpop.f32.mrb[0].mxu0
  %v528 = vpop.f32.mrb[0].mxu0
  %v529 = vadd.f32 0.0, %v528
  %v530 = vpop.f32.mrb[0].mxu0
  %531 = vmatprep.mubr.bf16.mxu0 0
  %532 = vmatmul.mubr.bf16.gmra.mrb[0].mxu0 %v319
  %v533 = vpop.f32.mrb[0].mxu0
  %v534 = vadd.f32 0.0, %v533
  %v535 = vpop.f32.mrb[0].mxu0
  %v536 = vpop.f32.mrb[0].mxu0
  %v537 = vadd.f32 0.0, %v536
  %v538 = vpop.f32.mrb[0].mxu0
  %539 = vmatprep.mubr.bf16.mxu0 0
  %540 = vmatmul.mubr.bf16.gmra.mrb[0].mxu0 %v322
  %v541 = vpop.f32.mrb[0].mxu0
  %v542 = vadd.f32 0.0, %v541
  %v543 = vpop.f32.mrb[0].mxu0
  %v544 = vpop.f32.mrb[0].mxu0
  %v545 = vadd.f32 0.0, %v544
  %v546 = vpop.f32.mrb[0].mxu0
  %547 = vmatprep.mubr.bf16.mxu0 0
  %548 = vmatmul.mubr.bf16.gmra.mrb[0].mxu0 %v325
  %v549 = vpop.f32.mrb[0].mxu0
  %v550 = vadd.f32 0.0, %v549
  %v551 = vpop.f32.mrb[0].mxu0
  %v552 = vpop.f32.mrb[0].mxu0
  %v553 = vadd.f32 0.0, %v552
  %v554 = vpop.f32.mrb[0].mxu0
  %555 = vmatprep.mubr.bf16.mxu0 0
  %556 = vmatmul.mubr.bf16.gmra.mrb[0].mxu0 %v328
  %v557 = vpop.f32.mrb[0].mxu0
  %v558 = vadd.f32 0.0, %v557
  %v559 = vpop.f32.mrb[0].mxu0
  %v560 = vpop.f32.mrb[0].mxu0
  %v561 = vadd.f32 0.0, %v560
  %v562 = vpop.f32.mrb[0].mxu0
  %563 = vmatprep.mubr.bf16.mxu0 0
  %564 = vmatmul.mubr.bf16.gmra.mrb[0].mxu0 %v331
  %v565 = vpop.f32.mrb[0].mxu0
  %v566 = vadd.f32 0.0, %v565
  %v567 = vpop.f32.mrb[0].mxu0
  %v568 = vpop.f32.mrb[0].mxu0
  %v569 = vadd.f32 0.0, %v568
  %v570 = vpop.f32.mrb[0].mxu0
  %571 = vmatprep.mubr.bf16.mxu0 0
  %572 = vmatmul.mubr.bf16.gmra.mrb[0].mxu0 %v334
  %v573 = vpop.f32.mrb[0].mxu0
  %v574 = vadd.f32 0.0, %v573
  %v575 = vpop.f32.mrb[0].mxu0
  %v576 = vpop.f32.mrb[0].mxu0
  %v577 = vadd.f32 0.0, %v576
  %v578 = vpop.f32.mrb[0].mxu0
  %579 = vmatprep.mubr.bf16.mxu0 0
  %580 = vmatmul.mubr.bf16.gmra.mrb[0].mxu0 %v337
  %v581 = vpop.f32.mrb[0].mxu0
  %v582 = vadd.f32 0.0, %v581
  %v583 = vpop.f32.mrb[0].mxu0
  %v584 = vpop.f32.mrb[0].mxu0
  %v585 = vadd.f32 0.0, %v584
  %v586 = vpop.f32.mrb[0].mxu0
  %587 = vmatprep.mubr.bf16.mxu0 0
  %588 = vmatmul.mubr.bf16.gmra.mrb[0].mxu0 %v340
  %v589 = vpop.f32.mrb[0].mxu0
  %v590 = vadd.f32 0.0, %v589
  %v591 = vpop.f32.mrb[0].mxu0
  %v592 = vpop.f32.mrb[0].mxu0
  %v593 = vadd.f32 0.0, %v592
  %v594 = vpop.f32.mrb[0].mxu0
  %595 = vmatprep.mubr.bf16.mxu0 0
  %596 = vmatmul.mubr.bf16.gmra.mrb[0].mxu0 %v343
  %v597 = vpop.f32.mrb[0].mxu0
  %v598 = vadd.f32 0.0, %v597
  %v599 = vpop.f32.mrb[0].mxu0
  %v600 = vpop.f32.mrb[0].mxu0
  %v601 = vadd.f32 0.0, %v600
  %v602 = vpop.f32.mrb[0].mxu0
  %603 = vmatprep.mubr.bf16.mxu0 0
  %604 = vmatmul.mubr.bf16.gmra.mrb[0].mxu0 %v346
  %v605 = vpop.f32.mrb[0].mxu0
  %v606 = vadd.f32 0.0, %v605
  %v607 = vpop.f32.mrb[0].mxu0
  %v608 = vpop.f32.mrb[0].mxu0
  %v609 = vadd.f32 0.0, %v608
  %v610 = vpop.f32.mrb[0].mxu0
  %611 = vmatprep.mubr.bf16.mxu0 0
  %612 = vmatmul.mubr.bf16.gmra.mrb[0].mxu0 %v349
  %v613 = vpop.f32.mrb[0].mxu0
  %v614 = vadd.f32 0.0, %v613
  %v615 = vpop.f32.mrb[0].mxu0
  %v616 = vpop.f32.mrb[0].mxu0
  %v617 = vadd.f32 0.0, %v616
  %v618 = vpop.f32.mrb[0].mxu0
  %619 = vmatprep.mubr.bf16.mxu0 0
  %620 = vmatmul.mubr.bf16.gmra.mrb[0].mxu0 %v352
  %v621 = vpop.f32.mrb[0].mxu0
  %v622 = vadd.f32 0.0, %v621
  %v623 = vpop.f32.mrb[0].mxu0
  %v624 = vpop.f32.mrb[0].mxu0
  %v625 = vadd.f32 0.0, %v624
  %v626 = vpop.f32.mrb[0].mxu0
  %627 = vmatprep.mubr.bf16.mxu0 0
  %628 = vmatmul.mubr.bf16.gmra.mrb[0].mxu0 %v355
  %v629 = vpop.f32.mrb[0].mxu0
  %v630 = vadd.f32 0.0, %v629
  %v631 = vpop.f32.mrb[0].mxu0
  %v632 = vpop.f32.mrb[0].mxu0
  %v633 = vadd.f32 0.0, %v632
  %v634 = vpop.f32.mrb[0].mxu0
  %635 = vmatprep.mubr.bf16.mxu0 0
  %636 = vmatmul.mubr.bf16.gmra.mrb[0].mxu0 %v358
  %v637 = vpop.f32.mrb[0].mxu0
  %v638 = vadd.f32 0.0, %v637
  %v639 = vpop.f32.mrb[0].mxu0
  %v640 = vpop.f32.mrb[0].mxu0
  %v641 = vadd.f32 0.0, %v640
  %v642 = vpop.f32.mrb[0].mxu0
  %643 = vmatprep.mubr.bf16.mxu0 0
  %644 = vmatmul.mubr.bf16.gmra.mrb[0].mxu0 %v361
  %v645 = vpop.f32.mrb[0].mxu0
  %v646 = vadd.f32 0.0, %v645
  %v647 = vpop.f32.mrb[0].mxu0
  %v648 = vpop.f32.mrb[0].mxu0
  %v649 = vadd.f32 0.0, %v648
  %v650 = vpop.f32.mrb[0].mxu0
  %651 = vdwg.mxu0
  %vm652 = vcmask 31744
  %v653 = vsel %vm652, %v398, 0.0
  %v654 = vsel %vm652, %v401, 0.0
  %v655 = vadd.f32 %v653, %v654
  %v656 = vsel %vm652, %v406, 0.0
  %v657 = vadd.f32 %v655, %v656
  %v658 = vsel %vm652, %v409, 0.0
  %v659 = vadd.f32 %v657, %v658
  %v660 = vsel %vm652, %v414, 0.0
  %v661 = vadd.f32 %v659, %v660
  %v662 = vsel %vm652, %v417, 0.0
  %v663 = vadd.f32 %v661, %v662
  %v664 = vsel %vm652, %v422, 0.0
  %v665 = vadd.f32 %v663, %v664
  %v666 = vsel %vm652, %v425, 0.0
  %v667 = vadd.f32 %v665, %v666
  %v668 = vsel %vm652, %v430, 0.0
  %v669 = vadd.f32 %v667, %v668
  %v670 = vsel %vm652, %v433, 0.0
  %v671 = vadd.f32 %v669, %v670
  %v672 = vsel %vm652, %v438, 0.0
  %v673 = vadd.f32 %v671, %v672
  %v674 = vsel %vm652, %v441, 0.0
  %v675 = vadd.f32 %v673, %v674
  %v676 = vsel %vm652, %v446, 0.0
  %v677 = vadd.f32 %v675, %v676
  %v678 = vsel %vm652, %v449, 0.0
  %v679 = vadd.f32 %v677, %v678
  %v680 = vsel %vm652, %v454, 0.0
  %v681 = vadd.f32 %v679, %v680
  %v682 = vsel %vm652, %v457, 0.0
  %v683 = vadd.f32 %v681, %v682
  %v684 = vsel %vm652, %v462, 0.0
  %v685 = vadd.f32 %v683, %v684
  %v686 = vsel %vm652, %v465, 0.0
  %v687 = vadd.f32 %v685, %v686
  %v688 = vsel %vm652, %v470, 0.0
  %v689 = vadd.f32 %v687, %v688
  %v690 = vsel %vm652, %v473, 0.0
  %v691 = vadd.f32 %v689, %v690
  %v692 = vsel %vm652, %v478, 0.0
  %v693 = vadd.f32 %v691, %v692
  %v694 = vsel %vm652, %v481, 0.0
  %v695 = vadd.f32 %v693, %v694
  %v696 = vsel %vm652, %v486, 0.0
  %v697 = vadd.f32 %v695, %v696
  %v698 = vsel %vm652, %v489, 0.0
  %v699 = vadd.f32 %v697, %v698
  %v700 = vsel %vm652, %v494, 0.0
  %v701 = vadd.f32 %v699, %v700
  %v702 = vsel %vm652, %v497, 0.0
  %v703 = vadd.f32 %v701, %v702
  %v704 = vsel %vm652, %v502, 0.0
  %v705 = vadd.f32 %v703, %v704
  %v706 = vsel %vm652, %v505, 0.0
  %v707 = vadd.f32 %v705, %v706
  %v708 = vsel %vm652, %v510, 0.0
  %v709 = vadd.f32 %v707, %v708
  %v710 = vsel %vm652, %v513, 0.0
  %v711 = vadd.f32 %v709, %v710
  %v712 = vsel %vm652, %v518, 0.0
  %v713 = vadd.f32 %v711, %v712
  %v714 = vsel %vm652, %v521, 0.0
  %v715 = vadd.f32 %v713, %v714
  %v716 = vsel %vm652, %v526, 0.0
  %v717 = vadd.f32 %v715, %v716
  %v718 = vsel %vm652, %v529, 0.0
  %v719 = vadd.f32 %v717, %v718
  %v720 = vsel %vm652, %v534, 0.0
  %v721 = vadd.f32 %v719, %v720
  %v722 = vsel %vm652, %v537, 0.0
  %v723 = vadd.f32 %v721, %v722
  %v724 = vsel %vm652, %v542, 0.0
  %v725 = vadd.f32 %v723, %v724
  %v726 = vsel %vm652, %v545, 0.0
  %v727 = vadd.f32 %v725, %v726
  %v728 = vsel %vm652, %v550, 0.0
  %v729 = vadd.f32 %v727, %v728
  %v730 = vsel %vm652, %v553, 0.0
  %v731 = vadd.f32 %v729, %v730
  %v732 = vsel %vm652, %v558, 0.0
  %v733 = vadd.f32 %v731, %v732
  %v734 = vsel %vm652, %v561, 0.0
  %v735 = vadd.f32 %v733, %v734
  %v736 = vsel %vm652, %v566, 0.0
  %v737 = vadd.f32 %v735, %v736
  %v738 = vsel %vm652, %v569, 0.0
  %v739 = vadd.f32 %v737, %v738
  %v740 = vsel %vm652, %v574, 0.0
  %v741 = vadd.f32 %v739, %v740
  %v742 = vsel %vm652, %v577, 0.0
  %v743 = vadd.f32 %v741, %v742
  %v744 = vsel %vm652, %v582, 0.0
  %v745 = vadd.f32 %v743, %v744
  %v746 = vsel %vm652, %v585, 0.0
  %v747 = vadd.f32 %v745, %v746
  %v748 = vsel %vm652, %v590, 0.0
  %v749 = vadd.f32 %v747, %v748
  %v750 = vsel %vm652, %v593, 0.0
  %v751 = vadd.f32 %v749, %v750
  %v752 = vsel %vm652, %v598, 0.0
  %v753 = vadd.f32 %v751, %v752
  %v754 = vsel %vm652, %v601, 0.0
  %v755 = vadd.f32 %v753, %v754
  %v756 = vsel %vm652, %v606, 0.0
  %v757 = vadd.f32 %v755, %v756
  %v758 = vsel %vm652, %v609, 0.0
  %v759 = vadd.f32 %v757, %v758
  %v760 = vsel %vm652, %v614, 0.0
  %v761 = vadd.f32 %v759, %v760
  %v762 = vsel %vm652, %v617, 0.0
  %v763 = vadd.f32 %v761, %v762
  %v764 = vsel %vm652, %v622, 0.0
  %v765 = vadd.f32 %v763, %v764
  %v766 = vsel %vm652, %v625, 0.0
  %v767 = vadd.f32 %v765, %v766
  %v768 = vsel %vm652, %v630, 0.0
  %v769 = vadd.f32 %v767, %v768
  %v770 = vsel %vm652, %v633, 0.0
  %v771 = vadd.f32 %v769, %v770
  %v772 = vsel %vm652, %v638, 0.0
  %v773 = vadd.f32 %v771, %v772
  %v774 = vsel %vm652, %v641, 0.0
  %v775 = vadd.f32 %v773, %v774
  %v776 = vsel %vm652, %v646, 0.0
  %v777 = vadd.f32 %v775, %v776
  %v778 = vsel %vm652, %v649, 0.0
  %v779 = vadd.f32 %v777, %v778
  %v780 = vrot.slane %v779, 4
  %v781 = vadd.f32 %v779, %v780
  %v782 = vrot.slane %v781, 2
  %v783 = vadd.f32 %v781, %v782
  %v784 = vrot.slane %v783, 1
  %v785 = vadd.f32 %v783, %v784
  %v786 = vadd.f32 %v785, 0.0
  %v787 = vmul.f32 %v786, 0.001953125
  %v788 = vsub.f32 %v398, %v787
  %v789 = vsub.f32 %v401, %v787
  %v790 = vsub.f32 %v406, %v787
  %v791 = vsub.f32 %v409, %v787
  %v792 = vsub.f32 %v414, %v787
  %v793 = vsub.f32 %v417, %v787
  %v794 = vsub.f32 %v422, %v787
  %v795 = vsub.f32 %v425, %v787
  %v796 = vsub.f32 %v430, %v787
  %v797 = vsub.f32 %v433, %v787
  %v798 = vsub.f32 %v438, %v787
  %v799 = vsub.f32 %v441, %v787
  %v800 = vsub.f32 %v446, %v787
  %v801 = vsub.f32 %v449, %v787
  %v802 = vsub.f32 %v454, %v787
  %v803 = vsub.f32 %v457, %v787
  %v804 = vsub.f32 %v462, %v787
  %v805 = vsub.f32 %v465, %v787
  %v806 = vsub.f32 %v470, %v787
  %v807 = vsub.f32 %v473, %v787
  %v808 = vsub.f32 %v478, %v787
  %v809 = vsub.f32 %v481, %v787
  %v810 = vsub.f32 %v486, %v787
  %v811 = vsub.f32 %v489, %v787
  %v812 = vsub.f32 %v494, %v787
  %v813 = vsub.f32 %v497, %v787
  %v814 = vsub.f32 %v502, %v787
  %v815 = vsub.f32 %v505, %v787
  %v816 = vsub.f32 %v510, %v787
  %v817 = vsub.f32 %v513, %v787
  %v818 = vsub.f32 %v518, %v787
  %v819 = vsub.f32 %v521, %v787
  %v820 = vsub.f32 %v526, %v787
  %v821 = vsub.f32 %v529, %v787
  %v822 = vsub.f32 %v534, %v787
  %v823 = vsub.f32 %v537, %v787
  %v824 = vsub.f32 %v542, %v787
  %v825 = vsub.f32 %v545, %v787
  %v826 = vsub.f32 %v550, %v787
  %v827 = vsub.f32 %v553, %v787
  %v828 = vsub.f32 %v558, %v787
  %v829 = vsub.f32 %v561, %v787
  %v830 = vsub.f32 %v566, %v787
  %v831 = vsub.f32 %v569, %v787
  %v832 = vsub.f32 %v574, %v787
  %v833 = vsub.f32 %v577, %v787
  %v834 = vsub.f32 %v582, %v787
  %v835 = vsub.f32 %v585, %v787
  %v836 = vsub.f32 %v590, %v787
  %v837 = vsub.f32 %v593, %v787
  %v838 = vsub.f32 %v598, %v787
  %v839 = vsub.f32 %v601, %v787
  %v840 = vsub.f32 %v606, %v787
  %v841 = vsub.f32 %v609, %v787
  %v842 = vsub.f32 %v614, %v787
  %v843 = vsub.f32 %v617, %v787
  %v844 = vsub.f32 %v622, %v787
  %v845 = vsub.f32 %v625, %v787
  %v846 = vsub.f32 %v630, %v787
  %v847 = vsub.f32 %v633, %v787
  %v848 = vsub.f32 %v638, %v787
  %v849 = vsub.f32 %v641, %v787
  %v850 = vsub.f32 %v646, %v787
  %v851 = vsub.f32 %v649, %v787
  %v852 = vmul.f32 %v788, %v788
  %v853 = vmul.f32 %v789, %v789
  %v854 = vmul.f32 %v790, %v790
  %v855 = vmul.f32 %v791, %v791
  %v856 = vmul.f32 %v792, %v792
  %v857 = vmul.f32 %v793, %v793
  %v858 = vmul.f32 %v794, %v794
  %v859 = vmul.f32 %v795, %v795
  %v860 = vmul.f32 %v796, %v796
  %v861 = vmul.f32 %v797, %v797
  %v862 = vmul.f32 %v798, %v798
  %v863 = vmul.f32 %v799, %v799
  %v864 = vmul.f32 %v800, %v800
  %v865 = vmul.f32 %v801, %v801
  %v866 = vmul.f32 %v802, %v802
  %v867 = vmul.f32 %v803, %v803
  %v868 = vmul.f32 %v804, %v804
  %v869 = vmul.f32 %v805, %v805
  %v870 = vmul.f32 %v806, %v806
  %v871 = vmul.f32 %v807, %v807
  %v872 = vmul.f32 %v808, %v808
  %v873 = vmul.f32 %v809, %v809
  %v874 = vmul.f32 %v810, %v810
  %v875 = vmul.f32 %v811, %v811
  %v876 = vmul.f32 %v812, %v812
  %v877 = vmul.f32 %v813, %v813
  %v878 = vmul.f32 %v814, %v814
  %v879 = vmul.f32 %v815, %v815
  %v880 = vmul.f32 %v816, %v816
  %v881 = vmul.f32 %v817, %v817
  %v882 = vmul.f32 %v818, %v818
  %v883 = vmul.f32 %v819, %v819
  %v884 = vmul.f32 %v820, %v820
  %v885 = vmul.f32 %v821, %v821
  %v886 = vmul.f32 %v822, %v822
  %v887 = vmul.f32 %v823, %v823
  %v888 = vmul.f32 %v824, %v824
  %v889 = vmul.f32 %v825, %v825
  %v890 = vmul.f32 %v826, %v826
  %v891 = vmul.f32 %v827, %v827
  %v892 = vmul.f32 %v828, %v828
  %v893 = vmul.f32 %v829, %v829
  %v894 = vmul.f32 %v830, %v830
  %v895 = vmul.f32 %v831, %v831
  %v896 = vmul.f32 %v832, %v832
  %v897 = vmul.f32 %v833, %v833
  %v898 = vmul.f32 %v834, %v834
  %v899 = vmul.f32 %v835, %v835
  %v900 = vmul.f32 %v836, %v836
  %v901 = vmul.f32 %v837, %v837
  %v902 = vmul.f32 %v838, %v838
  %v903 = vmul.f32 %v839, %v839
  %v904 = vmul.f32 %v840, %v840
  %v905 = vmul.f32 %v841, %v841
  %v906 = vmul.f32 %v842, %v842
  %v907 = vmul.f32 %v843, %v843
  %v908 = vmul.f32 %v844, %v844
  %v909 = vmul.f32 %v845, %v845
  %v910 = vmul.f32 %v846, %v846
  %v911 = vmul.f32 %v847, %v847
  %v912 = vmul.f32 %v848, %v848
  %v913 = vmul.f32 %v849, %v849
  %v914 = vmul.f32 %v850, %v850
  %v915 = vmul.f32 %v851, %v851
  %v916 = vsel %vm652, %v852, 0.0
  %v917 = vsel %vm652, %v853, 0.0
  %v918 = vadd.f32 %v916, %v917
  %v919 = vsel %vm652, %v854, 0.0
  %v920 = vadd.f32 %v918, %v919
  %v921 = vsel %vm652, %v855, 0.0
  %v922 = vadd.f32 %v920, %v921
  %v923 = vsel %vm652, %v856, 0.0
  %v924 = vadd.f32 %v922, %v923
  %v925 = vsel %vm652, %v857, 0.0
  %v926 = vadd.f32 %v924, %v925
  %v927 = vsel %vm652, %v858, 0.0
  %v928 = vadd.f32 %v926, %v927
  %v929 = vsel %vm652, %v859, 0.0
  %v930 = vadd.f32 %v928, %v929
  %v931 = vsel %vm652, %v860, 0.0
  %v932 = vadd.f32 %v930, %v931
  %v933 = vsel %vm652, %v861, 0.0
  %v934 = vadd.f32 %v932, %v933
  %v935 = vsel %vm652, %v862, 0.0
  %v936 = vadd.f32 %v934, %v935
  %v937 = vsel %vm652, %v863, 0.0
  %v938 = vadd.f32 %v936, %v937
  %v939 = vsel %vm652, %v864, 0.0
  %v940 = vadd.f32 %v938, %v939
  %v941 = vsel %vm652, %v865, 0.0
  %v942 = vadd.f32 %v940, %v941
  %v943 = vsel %vm652, %v866, 0.0
  %v944 = vadd.f32 %v942, %v943
  %v945 = vsel %vm652, %v867, 0.0
  %v946 = vadd.f32 %v944, %v945
  %v947 = vsel %vm652, %v868, 0.0
  %v948 = vadd.f32 %v946, %v947
  %v949 = vsel %vm652, %v869, 0.0
  %v950 = vadd.f32 %v948, %v949
  %v951 = vsel %vm652, %v870, 0.0
  %v952 = vadd.f32 %v950, %v951
  %v953 = vsel %vm652, %v871, 0.0
  %v954 = vadd.f32 %v952, %v953
  %v955 = vsel %vm652, %v872, 0.0
  %v956 = vadd.f32 %v954, %v955
  %v957 = vsel %vm652, %v873, 0.0
  %v958 = vadd.f32 %v956, %v957
  %v959 = vsel %vm652, %v874, 0.0
  %v960 = vadd.f32 %v958, %v959
  %v961 = vsel %vm652, %v875, 0.0
  %v962 = vadd.f32 %v960, %v961
  %v963 = vsel %vm652, %v876, 0.0
  %v964 = vadd.f32 %v962, %v963
  %v965 = vsel %vm652, %v877, 0.0
  %v966 = vadd.f32 %v964, %v965
  %v967 = vsel %vm652, %v878, 0.0
  %v968 = vadd.f32 %v966, %v967
  %v969 = vsel %vm652, %v879, 0.0
  %v970 = vadd.f32 %v968, %v969
  %v971 = vsel %vm652, %v880, 0.0
  %v972 = vadd.f32 %v970, %v971
  %v973 = vsel %vm652, %v881, 0.0
  %v974 = vadd.f32 %v972, %v973
  %v975 = vsel %vm652, %v882, 0.0
  %v976 = vadd.f32 %v974, %v975
  %v977 = vsel %vm652, %v883, 0.0
  %v978 = vadd.f32 %v976, %v977
  %v979 = vsel %vm652, %v884, 0.0
  %v980 = vadd.f32 %v978, %v979
  %v981 = vsel %vm652, %v885, 0.0
  %v982 = vadd.f32 %v980, %v981
  %v983 = vsel %vm652, %v886, 0.0
  %v984 = vadd.f32 %v982, %v983
  %v985 = vsel %vm652, %v887, 0.0
  %v986 = vadd.f32 %v984, %v985
  %v987 = vsel %vm652, %v888, 0.0
  %v988 = vadd.f32 %v986, %v987
  %v989 = vsel %vm652, %v889, 0.0
  %v990 = vadd.f32 %v988, %v989
  %v991 = vsel %vm652, %v890, 0.0
  %v992 = vadd.f32 %v990, %v991
  %v993 = vsel %vm652, %v891, 0.0
  %v994 = vadd.f32 %v992, %v993
  %v995 = vsel %vm652, %v892, 0.0
  %v996 = vadd.f32 %v994, %v995
  %v997 = vsel %vm652, %v893, 0.0
  %v998 = vadd.f32 %v996, %v997
  %v999 = vsel %vm652, %v894, 0.0
  %v1000 = vadd.f32 %v998, %v999
  %v1001 = vsel %vm652, %v895, 0.0
  %v1002 = vadd.f32 %v1000, %v1001
  %v1003 = vsel %vm652, %v896, 0.0
  %v1004 = vadd.f32 %v1002, %v1003
  %v1005 = vsel %vm652, %v897, 0.0
  %v1006 = vadd.f32 %v1004, %v1005
  %v1007 = vsel %vm652, %v898, 0.0
  %v1008 = vadd.f32 %v1006, %v1007
  %v1009 = vsel %vm652, %v899, 0.0
  %v1010 = vadd.f32 %v1008, %v1009
  %v1011 = vsel %vm652, %v900, 0.0
  %v1012 = vadd.f32 %v1010, %v1011
  %v1013 = vsel %vm652, %v901, 0.0
  %v1014 = vadd.f32 %v1012, %v1013
  %v1015 = vsel %vm652, %v902, 0.0
  %v1016 = vadd.f32 %v1014, %v1015
  %v1017 = vsel %vm652, %v903, 0.0
  %v1018 = vadd.f32 %v1016, %v1017
  %v1019 = vsel %vm652, %v904, 0.0
  %v1020 = vadd.f32 %v1018, %v1019
  %v1021 = vsel %vm652, %v905, 0.0
  %v1022 = vadd.f32 %v1020, %v1021
  %v1023 = vsel %vm652, %v906, 0.0
  %v1024 = vadd.f32 %v1022, %v1023
  %v1025 = vsel %vm652, %v907, 0.0
  %v1026 = vadd.f32 %v1024, %v1025
  %v1027 = vsel %vm652, %v908, 0.0
  %v1028 = vadd.f32 %v1026, %v1027
  %v1029 = vsel %vm652, %v909, 0.0
  %v1030 = vadd.f32 %v1028, %v1029
  %v1031 = vsel %vm652, %v910, 0.0
  %v1032 = vadd.f32 %v1030, %v1031
  %v1033 = vsel %vm652, %v911, 0.0
  %v1034 = vadd.f32 %v1032, %v1033
  %v1035 = vsel %vm652, %v912, 0.0
  %v1036 = vadd.f32 %v1034, %v1035
  %v1037 = vsel %vm652, %v913, 0.0
  %v1038 = vadd.f32 %v1036, %v1037
  %v1039 = vsel %vm652, %v914, 0.0
  %v1040 = vadd.f32 %v1038, %v1039
  %v1041 = vsel %vm652, %v915, 0.0
  %v1042 = vadd.f32 %v1040, %v1041
  %v1043 = vrot.slane %v1042, 4
  %v1044 = vadd.f32 %v1042, %v1043
  %v1045 = vrot.slane %v1044, 2
  %v1046 = vadd.f32 %v1044, %v1045
  %v1047 = vrot.slane %v1046, 1
  %v1048 = vadd.f32 %v1046, %v1047
  %v1049 = vadd.f32 %v1048, 0.0
  %v1050 = vmul.f32 %v1049, 0.001953125
  %v1051 = vld [vmem:[%s2] sm:$0x1]
  %v1052 = vadd.f32 %v1050, 1e-05
  %v1053 = vrsqrt.pop %v1052
  %v1054 = vmul.f32 %v1051, %v1053
  %v1056 = vlaneseq
  %v1057 = vshrl.u32 %v1056, 7
  %v1058 = vsub.s32 0, %v1057
  %v1059 = vrot.slane %v1054, %v1058
  %v1061 = vmul.f32 %v788, %v1059
  %v1062 = vmul.f32 %v789, %v1059
  %v1063 = vmul.f32 %v790, %v1059
  %v1064 = vmul.f32 %v791, %v1059
  %v1065 = vmul.f32 %v792, %v1059
  %v1066 = vmul.f32 %v793, %v1059
  %v1067 = vmul.f32 %v794, %v1059
  %v1068 = vmul.f32 %v795, %v1059
  %v1069 = vmul.f32 %v796, %v1059
  %v1070 = vmul.f32 %v797, %v1059
  %v1071 = vmul.f32 %v798, %v1059
  %v1072 = vmul.f32 %v799, %v1059
  %v1073 = vmul.f32 %v800, %v1059
  %v1074 = vmul.f32 %v801, %v1059
  %v1075 = vmul.f32 %v802, %v1059
  %v1076 = vmul.f32 %v803, %v1059
  %v1077 = vmul.f32 %v804, %v1059
  %v1078 = vmul.f32 %v805, %v1059
  %v1079 = vmul.f32 %v806, %v1059
  %v1080 = vmul.f32 %v807, %v1059
  %v1081 = vmul.f32 %v808, %v1059
  %v1082 = vmul.f32 %v809, %v1059
  %v1083 = vmul.f32 %v810, %v1059
  %v1084 = vmul.f32 %v811, %v1059
  %v1085 = vmul.f32 %v812, %v1059
  %v1086 = vmul.f32 %v813, %v1059
  %v1087 = vmul.f32 %v814, %v1059
  %v1088 = vmul.f32 %v815, %v1059
  %v1089 = vmul.f32 %v816, %v1059
  %v1090 = vmul.f32 %v817, %v1059
  %v1091 = vmul.f32 %v818, %v1059
  %v1092 = vmul.f32 %v819, %v1059
  %v1093 = vmul.f32 %v820, %v1059
  %v1094 = vmul.f32 %v821, %v1059
  %v1095 = vmul.f32 %v822, %v1059
  %v1096 = vmul.f32 %v823, %v1059
  %v1097 = vmul.f32 %v824, %v1059
  %v1098 = vmul.f32 %v825, %v1059
  %v1099 = vmul.f32 %v826, %v1059
  %v1100 = vmul.f32 %v827, %v1059
  %v1101 = vmul.f32 %v828, %v1059
  %v1102 = vmul.f32 %v829, %v1059
  %v1103 = vmul.f32 %v830, %v1059
  %v1104 = vmul.f32 %v831, %v1059
  %v1105 = vmul.f32 %v832, %v1059
  %v1106 = vmul.f32 %v833, %v1059
  %v1107 = vmul.f32 %v834, %v1059
  %v1108 = vmul.f32 %v835, %v1059
  %v1109 = vmul.f32 %v836, %v1059
  %v1110 = vmul.f32 %v837, %v1059
  %v1111 = vmul.f32 %v838, %v1059
  %v1112 = vmul.f32 %v839, %v1059
  %v1113 = vmul.f32 %v840, %v1059
  %v1114 = vmul.f32 %v841, %v1059
  %v1115 = vmul.f32 %v842, %v1059
  %v1116 = vmul.f32 %v843, %v1059
  %v1117 = vmul.f32 %v844, %v1059
  %v1118 = vmul.f32 %v845, %v1059
  %v1119 = vmul.f32 %v846, %v1059
  %v1120 = vmul.f32 %v847, %v1059
  %v1121 = vmul.f32 %v848, %v1059
  %v1122 = vmul.f32 %v849, %v1059
  %v1123 = vmul.f32 %v850, %v1059
  %v1124 = vmul.f32 %v851, %v1059
  %v1125 = vld [vmem:[%s3] sm:$0x1]
  %v1127 = vlaneseq
  %v1128 = vshrl.u32 %v1127, 7
  %v1129 = vsub.s32 0, %v1128
  %v1130 = vrot.slane %v1125, %v1129
  %v1132 = vadd.f32 %v1061, %v1130
  %v1133 = vadd.f32 %v1062, %v1130
  %v1134 = vadd.f32 %v1063, %v1130
  %v1135 = vadd.f32 %v1064, %v1130
  %v1136 = vadd.f32 %v1065, %v1130
  %v1137 = vadd.f32 %v1066, %v1130
  %v1138 = vadd.f32 %v1067, %v1130
  %v1139 = vadd.f32 %v1068, %v1130
  %v1140 = vadd.f32 %v1069, %v1130
  %v1141 = vadd.f32 %v1070, %v1130
  %v1142 = vadd.f32 %v1071, %v1130
  %v1143 = vadd.f32 %v1072, %v1130
  %v1144 = vadd.f32 %v1073, %v1130
  %v1145 = vadd.f32 %v1074, %v1130
  %v1146 = vadd.f32 %v1075, %v1130
  %v1147 = vadd.f32 %v1076, %v1130
  %v1148 = vadd.f32 %v1077, %v1130
  %v1149 = vadd.f32 %v1078, %v1130
  %v1150 = vadd.f32 %v1079, %v1130
  %v1151 = vadd.f32 %v1080, %v1130
  %v1152 = vadd.f32 %v1081, %v1130
  %v1153 = vadd.f32 %v1082, %v1130
  %v1154 = vadd.f32 %v1083, %v1130
  %v1155 = vadd.f32 %v1084, %v1130
  %v1156 = vadd.f32 %v1085, %v1130
  %v1157 = vadd.f32 %v1086, %v1130
  %v1158 = vadd.f32 %v1087, %v1130
  %v1159 = vadd.f32 %v1088, %v1130
  %v1160 = vadd.f32 %v1089, %v1130
  %v1161 = vadd.f32 %v1090, %v1130
  %v1162 = vadd.f32 %v1091, %v1130
  %v1163 = vadd.f32 %v1092, %v1130
  %v1164 = vadd.f32 %v1093, %v1130
  %v1165 = vadd.f32 %v1094, %v1130
  %v1166 = vadd.f32 %v1095, %v1130
  %v1167 = vadd.f32 %v1096, %v1130
  %v1168 = vadd.f32 %v1097, %v1130
  %v1169 = vadd.f32 %v1098, %v1130
  %v1170 = vadd.f32 %v1099, %v1130
  %v1171 = vadd.f32 %v1100, %v1130
  %v1172 = vadd.f32 %v1101, %v1130
  %v1173 = vadd.f32 %v1102, %v1130
  %v1174 = vadd.f32 %v1103, %v1130
  %v1175 = vadd.f32 %v1104, %v1130
  %v1176 = vadd.f32 %v1105, %v1130
  %v1177 = vadd.f32 %v1106, %v1130
  %v1178 = vadd.f32 %v1107, %v1130
  %v1179 = vadd.f32 %v1108, %v1130
  %v1180 = vadd.f32 %v1109, %v1130
  %v1181 = vadd.f32 %v1110, %v1130
  %v1182 = vadd.f32 %v1111, %v1130
  %v1183 = vadd.f32 %v1112, %v1130
  %v1184 = vadd.f32 %v1113, %v1130
  %v1185 = vadd.f32 %v1114, %v1130
  %v1186 = vadd.f32 %v1115, %v1130
  %v1187 = vadd.f32 %v1116, %v1130
  %v1188 = vadd.f32 %v1117, %v1130
  %v1189 = vadd.f32 %v1118, %v1130
  %v1190 = vadd.f32 %v1119, %v1130
  %v1191 = vadd.f32 %v1120, %v1130
  %v1192 = vadd.f32 %v1121, %v1130
  %v1193 = vadd.f32 %v1122, %v1130
  %v1194 = vadd.f32 %v1123, %v1130
  %v1195 = vadd.f32 %v1124, %v1130
  %v1196 = vmax.f32 %v1132, 0.0
  %v1197 = vmax.f32 %v1133, 0.0
  %v1198 = vmax.f32 %v1134, 0.0
  %v1199 = vmax.f32 %v1135, 0.0
  %v1200 = vmax.f32 %v1136, 0.0
  %v1201 = vmax.f32 %v1137, 0.0
  %v1202 = vmax.f32 %v1138, 0.0
  %v1203 = vmax.f32 %v1139, 0.0
  %v1204 = vmax.f32 %v1140, 0.0
  %v1205 = vmax.f32 %v1141, 0.0
  %v1206 = vmax.f32 %v1142, 0.0
  %v1207 = vmax.f32 %v1143, 0.0
  %v1208 = vmax.f32 %v1144, 0.0
  %v1209 = vmax.f32 %v1145, 0.0
  %v1210 = vmax.f32 %v1146, 0.0
  %v1211 = vmax.f32 %v1147, 0.0
  %v1212 = vmax.f32 %v1148, 0.0
  %v1213 = vmax.f32 %v1149, 0.0
  %v1214 = vmax.f32 %v1150, 0.0
  %v1215 = vmax.f32 %v1151, 0.0
  %v1216 = vmax.f32 %v1152, 0.0
  %v1217 = vmax.f32 %v1153, 0.0
  %v1218 = vmax.f32 %v1154, 0.0
  %v1219 = vmax.f32 %v1155, 0.0
  %v1220 = vmax.f32 %v1156, 0.0
  %v1221 = vmax.f32 %v1157, 0.0
  %v1222 = vmax.f32 %v1158, 0.0
  %v1223 = vmax.f32 %v1159, 0.0
  %v1224 = vmax.f32 %v1160, 0.0
  %v1225 = vmax.f32 %v1161, 0.0
  %v1226 = vmax.f32 %v1162, 0.0
  %v1227 = vmax.f32 %v1163, 0.0
  %v1228 = vmax.f32 %v1164, 0.0
  %v1229 = vmax.f32 %v1165, 0.0
  %v1230 = vmax.f32 %v1166, 0.0
  %v1231 = vmax.f32 %v1167, 0.0
  %v1232 = vmax.f32 %v1168, 0.0
  %v1233 = vmax.f32 %v1169, 0.0
  %v1234 = vmax.f32 %v1170, 0.0
  %v1235 = vmax.f32 %v1171, 0.0
  %v1236 = vmax.f32 %v1172, 0.0
  %v1237 = vmax.f32 %v1173, 0.0
  %v1238 = vmax.f32 %v1174, 0.0
  %v1239 = vmax.f32 %v1175, 0.0
  %v1240 = vmax.f32 %v1176, 0.0
  %v1241 = vmax.f32 %v1177, 0.0
  %v1242 = vmax.f32 %v1178, 0.0
  %v1243 = vmax.f32 %v1179, 0.0
  %v1244 = vmax.f32 %v1180, 0.0
  %v1245 = vmax.f32 %v1181, 0.0
  %v1246 = vmax.f32 %v1182, 0.0
  %v1247 = vmax.f32 %v1183, 0.0
  %v1248 = vmax.f32 %v1184, 0.0
  %v1249 = vmax.f32 %v1185, 0.0
  %v1250 = vmax.f32 %v1186, 0.0
  %v1251 = vmax.f32 %v1187, 0.0
  %v1252 = vmax.f32 %v1188, 0.0
  %v1253 = vmax.f32 %v1189, 0.0
  %v1254 = vmax.f32 %v1190, 0.0
  %v1255 = vmax.f32 %v1191, 0.0
  %v1256 = vmax.f32 %v1192, 0.0
  %v1257 = vmax.f32 %v1193, 0.0
  %v1258 = vmax.f32 %v1194, 0.0
  %v1259 = vmax.f32 %v1195, 0.0
  %1260 = vst.msk [vmem:[%s4] sm:$0xff] %vm652, %v1196
  %1261 = vst.msk [vmem:[%s4 + $0x8] sm:$0xff] %vm652, %v1197
  %1262 = vst.msk [vmem:[%s4 + $0x10] sm:$0xff] %vm652, %v1198
  %1263 = vst.msk [vmem:[%s4 + $0x18] sm:$0xff] %vm652, %v1199
  %1264 = vst.msk [vmem:[%s4 + $0x20] sm:$0xff] %vm652, %v1200
  %1265 = vst.msk [vmem:[%s4 + $0x28] sm:$0xff] %vm652, %v1201
  %1266 = vst.msk [vmem:[%s4 + $0x30] sm:$0xff] %vm652, %v1202
  %1267 = vst.msk [vmem:[%s4 + $0x38] sm:$0xff] %vm652, %v1203
  %1268 = vst.msk [vmem:[%s4 + $0x40] sm:$0xff] %vm652, %v1204
  %1269 = vst.msk [vmem:[%s4 + $0x48] sm:$0xff] %vm652, %v1205
  %1270 = vst.msk [vmem:[%s4 + $0x50] sm:$0xff] %vm652, %v1206
  %1271 = vst.msk [vmem:[%s4 + $0x58] sm:$0xff] %vm652, %v1207
  %1272 = vst.msk [vmem:[%s4 + $0x60] sm:$0xff] %vm652, %v1208
  %1273 = vst.msk [vmem:[%s4 + $0x68] sm:$0xff] %vm652, %v1209
  %1274 = vst.msk [vmem:[%s4 + $0x70] sm:$0xff] %vm652, %v1210
  %1275 = vst.msk [vmem:[%s4 + $0x78] sm:$0xff] %vm652, %v1211
  %1276 = vst.msk [vmem:[%s4 + $0x80] sm:$0xff] %vm652, %v1212
  %1277 = vst.msk [vmem:[%s4 + $0x88] sm:$0xff] %vm652, %v1213
  %1278 = vst.msk [vmem:[%s4 + $0x90] sm:$0xff] %vm652, %v1214
  %1279 = vst.msk [vmem:[%s4 + $0x98] sm:$0xff] %vm652, %v1215
  %1280 = vst.msk [vmem:[%s4 + $0xa0] sm:$0xff] %vm652, %v1216
  %1281 = vst.msk [vmem:[%s4 + $0xa8] sm:$0xff] %vm652, %v1217
  %1282 = vst.msk [vmem:[%s4 + $0xb0] sm:$0xff] %vm652, %v1218
  %1283 = vst.msk [vmem:[%s4 + $0xb8] sm:$0xff] %vm652, %v1219
  %1284 = vst.msk [vmem:[%s4 + $0xc0] sm:$0xff] %vm652, %v1220
  %1285 = vst.msk [vmem:[%s4 + $0xc8] sm:$0xff] %vm652, %v1221
  %1286 = vst.msk [vmem:[%s4 + $0xd0] sm:$0xff] %vm652, %v1222
  %1287 = vst.msk [vmem:[%s4 + $0xd8] sm:$0xff] %vm652, %v1223
  %1288 = vst.msk [vmem:[%s4 + $0xe0] sm:$0xff] %vm652, %v1224
  %1289 = vst.msk [vmem:[%s4 + $0xe8] sm:$0xff] %vm652, %v1225
  %1290 = vst.msk [vmem:[%s4 + $0xf0] sm:$0xff] %vm652, %v1226
  %1291 = vst.msk [vmem:[%s4 + $0xf8] sm:$0xff] %vm652, %v1227
  %1292 = vst.msk [vmem:[%s4 + $0x100] sm:$0xff] %vm652, %v1228
  %1293 = vst.msk [vmem:[%s4 + $0x108] sm:$0xff] %vm652, %v1229
  %1294 = vst.msk [vmem:[%s4 + $0x110] sm:$0xff] %vm652, %v1230
  %1295 = vst.msk [vmem:[%s4 + $0x118] sm:$0xff] %vm652, %v1231
  %1296 = vst.msk [vmem:[%s4 + $0x120] sm:$0xff] %vm652, %v1232
  %1297 = vst.msk [vmem:[%s4 + $0x128] sm:$0xff] %vm652, %v1233
  %1298 = vst.msk [vmem:[%s4 + $0x130] sm:$0xff] %vm652, %v1234
  %1299 = vst.msk [vmem:[%s4 + $0x138] sm:$0xff] %vm652, %v1235
  %1300 = vst.msk [vmem:[%s4 + $0x140] sm:$0xff] %vm652, %v1236
  %1301 = vst.msk [vmem:[%s4 + $0x148] sm:$0xff] %vm652, %v1237
  %1302 = vst.msk [vmem:[%s4 + $0x150] sm:$0xff] %vm652, %v1238
  %1303 = vst.msk [vmem:[%s4 + $0x158] sm:$0xff] %vm652, %v1239
  %1304 = vst.msk [vmem:[%s4 + $0x160] sm:$0xff] %vm652, %v1240
  %1305 = vst.msk [vmem:[%s4 + $0x168] sm:$0xff] %vm652, %v1241
  %1306 = vst.msk [vmem:[%s4 + $0x170] sm:$0xff] %vm652, %v1242
  %1307 = vst.msk [vmem:[%s4 + $0x178] sm:$0xff] %vm652, %v1243
  %1308 = vst.msk [vmem:[%s4 + $0x180] sm:$0xff] %vm652, %v1244
  %1309 = vst.msk [vmem:[%s4 + $0x188] sm:$0xff] %vm652, %v1245
  %1310 = vst.msk [vmem:[%s4 + $0x190] sm:$0xff] %vm652, %v1246
  %1311 = vst.msk [vmem:[%s4 + $0x198] sm:$0xff] %vm652, %v1247
  %1312 = vst.msk [vmem:[%s4 + $0x1a0] sm:$0xff] %vm652, %v1248
  %1313 = vst.msk [vmem:[%s4 + $0x1a8] sm:$0xff] %vm652, %v1249
  %1314 = vst.msk [vmem:[%s4 + $0x1b0] sm:$0xff] %vm652, %v1250
  %1315 = vst.msk [vmem:[%s4 + $0x1b8] sm:$0xff] %vm652, %v1251
  %1316 = vst.msk [vmem:[%s4 + $0x1c0] sm:$0xff] %vm652, %v1252
  %1317 = vst.msk [vmem:[%s4 + $0x1c8] sm:$0xff] %vm652, %v1253
  %1318 = vst.msk [vmem:[%s4 + $0x1d0] sm:$0xff] %vm652, %v1254
  %1319 = vst.msk [vmem:[%s4 + $0x1d8] sm:$0xff] %vm652, %v1255
  %1320 = vst.msk [vmem:[%s4 + $0x1e0] sm:$0xff] %vm652, %v1256
  %1321 = vst.msk [vmem:[%s4 + $0x1e8] sm:$0xff] %vm652, %v1257
  %1322 = vst.msk [vmem:[%s4 + $0x1f0] sm:$0xff] %vm652, %v1258
  %1323 = vst.msk [vmem:[%s4 + $0x1f8] sm:$0xff] %vm652, %v1259
  // Predicated region
  $region18: #{cvae_forward.13} parent=0 // pred_check
    _
  $region19: #{cvae_forward.13} parent=0 // pred_check_branch
    %1325 = sbr.rel (0) target = $region21
  $region20: #{cvae_forward.13} parent=0 // pred_region
    _
  $region21: #{cvae_forward.13} parent=0 // pred_fallthru
    _
  // Predicated region
  $region22: #{cvae_forward.13} parent=0 // pred_check
    _
  $region23: #{cvae_forward.13} parent=0 // pred_check_branch
    %1327 = sbr.rel (0) target = $region25
  $region24: #{cvae_forward.13} parent=0 // pred_region
    _
  $region25: #{cvae_forward.13} parent=0 // pred_fallthru
    _

// kernel: cvae_forward.14
$region0: #{cvae_forward.14}
  #allocation0 [shape = 'u32[]', space=smem, size = 0x4, offset = 0x4, fixed_abs, tag = 'smem constant byte address 0x4 - core index']
  #allocation1 [shape = 'u32[144,128]{1,0:T(1,128)}', space=vmem, size = 0x12000, scoped, tag = 'internal scratch']
  %s0 = inlined_call_operand.vmem [shape: bf16[1,128,64], index: 0, kind: input, shape index: {}]
  %s1 = inlined_call_operand.vmem [shape: bf16[1,64,8], index: 1, kind: input, shape index: {}]
  %s2 = inlined_call_operand.vmem [shape: f32[1,1,8], index: 2, kind: input, shape index: {}]
  %s3 = inlined_call_operand.vmem [shape: f32[1,1,8], index: 3, kind: input, shape index: {}]
  %s4 = inlined_call_operand.vmem [shape: f32[1,128,8], index: 4, kind: output, shape index: {}]
  %s5 = sld [smem:[#allocation0]]
  $region26: #{cvae_forward.14} parent=0
    _
  %s7 = ssub.s32 1, %s5
  %s8 = scalar_select 0, %s7, %s5
  // Predicated region
  $region2: #{cvae_forward.14} parent=0 // pred_check
    _
  $region3: #{cvae_forward.14} parent=0 // pred_check_branch
    %10 = sbr.rel (0) target = $region5
  $region4: #{cvae_forward.14} parent=0 // pred_region
    _
  $region5: #{cvae_forward.14} parent=0 // pred_fallthru
    _
  // Predicated region
  $region6: #{cvae_forward.14} parent=0 // pred_check
    _
  $region7: #{cvae_forward.14} parent=0 // pred_check_branch
    %12 = sbr.rel (0) target = $region9
  $region8: #{cvae_forward.14} parent=0 // pred_region
    _
  $region9: #{cvae_forward.14} parent=0 // pred_fallthru
    _
  // Predicated region
  $region10: #{cvae_forward.14} parent=0 // pred_check
    _
  $region11: #{cvae_forward.14} parent=0 // pred_check_branch
    %14 = sbr.rel (0) target = $region13
  $region12: #{cvae_forward.14} parent=0 // pred_region
    _
  $region13: #{cvae_forward.14} parent=0 // pred_fallthru
    _
  // Predicated region
  $region14: #{cvae_forward.14} parent=0 // pred_check
    _
  $region15: #{cvae_forward.14} parent=0 // pred_check_branch
    %16 = sbr.rel (0) target = $region17
  $region16: #{cvae_forward.14} parent=0 // pred_region
    _
  $region17: #{cvae_forward.14} parent=0 // pred_fallthru
    _
  %v18 = vld [vmem:[%s0] sm:$0xf]
  %v19 = vld [vmem:[%s0 + $0x4] sm:$0xf]
  %v20 = vld [vmem:[%s0 + $0x8] sm:$0xf]
  %v21 = vld [vmem:[%s0 + $0xc] sm:$0xf]
  %v22 = vld [vmem:[%s0 + $0x10] sm:$0xf]
  %v23 = vld [vmem:[%s0 + $0x14] sm:$0xf]
  %v24 = vld [vmem:[%s0 + $0x18] sm:$0xf]
  %v25 = vld [vmem:[%s0 + $0x1c] sm:$0xf]
  %v26 = vld [vmem:[%s0 + $0x20] sm:$0xf]
  %v27 = vld [vmem:[%s0 + $0x24] sm:$0xf]
  %v28 = vld [vmem:[%s0 + $0x28] sm:$0xf]
  %v29 = vld [vmem:[%s0 + $0x2c] sm:$0xf]
  %v30 = vld [vmem:[%s0 + $0x30] sm:$0xf]
  %v31 = vld [vmem:[%s0 + $0x34] sm:$0xf]
  %v32 = vld [vmem:[%s0 + $0x38] sm:$0xf]
  %v33 = vld [vmem:[%s0 + $0x3c] sm:$0xf]
  %v34 = vld [vmem:[%s1] sm:$0xf]
  %v35 = vld [vmem:[%s1 + $0x4] sm:$0xf]
  %v36 = vld [vmem:[%s1 + $0x8] sm:$0xf]
  %v37 = vld [vmem:[%s1 + $0xc] sm:$0xf]
  %v38 = vld [vmem:[%s1 + $0x10] sm:$0xf]
  %v39 = vld [vmem:[%s1 + $0x14] sm:$0xf]
  %v40 = vld [vmem:[%s1 + $0x18] sm:$0xf]
  %v41 = vld [vmem:[%s1 + $0x1c] sm:$0xf]
  %v58 = vunpack.c.l.b16 %v18
  %v59 = vunpack.c.l.b16 %v19
  %v60 = vunpack.c.l.b16 %v20
  %v61 = vunpack.c.l.b16 %v21
  %v62 = vunpack.c.l.b16 %v22
  %v63 = vunpack.c.l.b16 %v23
  %v64 = vunpack.c.l.b16 %v24
  %v65 = vunpack.c.l.b16 %v25
  %v66 = vunpack.c.l.b16 %v26
  %v67 = vunpack.c.l.b16 %v27
  %v68 = vunpack.c.l.b16 %v28
  %v69 = vunpack.c.l.b16 %v29
  %v70 = vunpack.c.l.b16 %v30
  %v71 = vunpack.c.l.b16 %v31
  %v72 = vunpack.c.l.b16 %v32
  %v73 = vunpack.c.l.b16 %v33
  %v74 = vpack.c.b16 %v59, %v58
  %v75 = vpack.c.b16 %v61, %v60
  %v76 = vpack.c.b16 %v63, %v62
  %v77 = vpack.c.b16 %v65, %v64
  %v78 = vpack.c.b16 %v67, %v66
  %v79 = vpack.c.b16 %v69, %v68
  %v80 = vpack.c.b16 %v71, %v70
  %v81 = vpack.c.b16 %v73, %v72
  %v90 = vunpack.c.l.b16 %v34
  %v91 = vunpack.c.l.b16 %v35
  %v92 = vunpack.c.l.b16 %v36
  %v93 = vunpack.c.l.b16 %v37
  %v94 = vunpack.c.l.b16 %v38
  %v95 = vunpack.c.l.b16 %v39
  %v96 = vunpack.c.l.b16 %v40
  %v97 = vunpack.c.l.b16 %v41
  %v98 = vpack.c.b16 %v91, %v90
  %v99 = vpack.c.b16 %v93, %v92
  %v100 = vpack.c.b16 %v95, %v94
  %v101 = vpack.c.b16 %v97, %v96
  %vm106 = vcmask 523264
  %v108 = vsel %vm106, %v74, 0
  %v111 = vsel %vm106, %v75, 0
  %v114 = vsel %vm106, %v76, 0
  %v117 = vsel %vm106, %v77, 0
  %v120 = vsel %vm106, %v78, 0
  %v123 = vsel %vm106, %v79, 0
  %v126 = vsel %vm106, %v80, 0
  %v129 = vsel %vm106, %v81, 0
  %131 = vmatprep.subr.bf16.mxu0 0
  %132 = vmatpush1.bf16.msra.mxu0 %v98
  %133 = vmatprep.subr.bf16.mxu0 0
  %134 = vmatpush1.bf16.msra.mxu0 %v99
  %135 = vmatprep.subr.bf16.mxu0 0
  %136 = vmatpush1.bf16.msra.mxu0 %v100
  %137 = vmatprep.subr.bf16.mxu0 0
  %138 = vmatpush1.bf16.msra.mxu0 %v101
  %139 = vmatprep.subr.bf16.mxu0 0
  %140 = vmatpush1.bf16.msra.mxu0 0
  %141 = vmatprep.subr.bf16.mxu0 0
  %142 = vmatpush1.bf16.msra.mxu0 0
  %143 = vmatprep.subr.bf16.mxu0 0
  %144 = vmatpush1.bf16.msra.mxu0 0
  %145 = vmatprep.subr.bf16.mxu0 0
  %146 = vmatpush1.bf16.msra.mxu0 0
  %147 = vmatprep.subr.bf16.mxu0 0
  %148 = vmatpush1.bf16.msra.mxu0 0
  %149 = vmatprep.subr.bf16.mxu0 0
  %150 = vmatpush1.bf16.msra.mxu0 0
  %151 = vmatprep.subr.bf16.mxu0 0
  %152 = vmatpush1.bf16.msra.mxu0 0
  %153 = vmatprep.subr.bf16.mxu0 0
  %154 = vmatpush1.bf16.msra.mxu0 0
  %155 = vmatprep.subr.bf16.mxu0 0
  %156 = vmatpush1.bf16.msra.mxu0 0
  %157 = vmatprep.subr.bf16.mxu0 0
  %158 = vmatpush1.bf16.msra.mxu0 0
  %159 = vmatprep.subr.bf16.mxu0 0
  %160 = vmatpush1.bf16.msra.mxu0 0
  %161 = vmatprep.subr.bf16.mxu0 0
  %162 = vmatpush1.bf16.msra.mxu0 0
  %163 = vmatprep.mubr.bf16.mxu0 0
  %164 = vmatmul.mubr.bf16.gmra.mrb[0].mxu0 %v108
  %v165 = vpop.f32.mrb[0].mxu0
  %v166 = vadd.f32 0.0, %v165
  %v167 = vpop.f32.mrb[0].mxu0
  %v168 = vpop.f32.mrb[0].mxu0
  %v169 = vadd.f32 0.0, %v168
  %v170 = vpop.f32.mrb[0].mxu0
  %171 = vmatprep.mubr.bf16.mxu0 0
  %172 = vmatmul.mubr.bf16.gmra.mrb[0].mxu0 %v111
  %v173 = vpop.f32.mrb[0].mxu0
  %v174 = vadd.f32 0.0, %v173
  %v175 = vpop.f32.mrb[0].mxu0
  %v176 = vpop.f32.mrb[0].mxu0
  %v177 = vadd.f32 0.0, %v176
  %v178 = vpop.f32.mrb[0].mxu0
  %179 = vmatprep.mubr.bf16.mxu0 0
  %180 = vmatmul.mubr.bf16.gmra.mrb[0].mxu0 %v114
  %v181 = vpop.f32.mrb[0].mxu0
  %v182 = vadd.f32 0.0, %v181
  %v183 = vpop.f32.mrb[0].mxu0
  %v184 = vpop.f32.mrb[0].mxu0
  %v185 = vadd.f32 0.0, %v184
  %v186 = vpop.f32.mrb[0].mxu0
  %187 = vmatprep.mubr.bf16.mxu0 0
  %188 = vmatmul.mubr.bf16.gmra.mrb[0].mxu0 %v117
  %v189 = vpop.f32.mrb[0].mxu0
  %v190 = vadd.f32 0.0, %v189
  %v191 = vpop.f32.mrb[0].mxu0
  %v192 = vpop.f32.mrb[0].mxu0
  %v193 = vadd.f32 0.0, %v192
  %v194 = vpop.f32.mrb[0].mxu0
  %195 = vmatprep.mubr.bf16.mxu0 0
  %196 = vmatmul.mubr.bf16.gmra.mrb[0].mxu0 %v120
  %v197 = vpop.f32.mrb[0].mxu0
  %v198 = vadd.f32 0.0, %v197
  %v199 = vpop.f32.mrb[0].mxu0
  %v200 = vpop.f32.mrb[0].mxu0
  %v201 = vadd.f32 0.0, %v200
  %v202 = vpop.f32.mrb[0].mxu0
  %203 = vmatprep.mubr.bf16.mxu0 0
  %204 = vmatmul.mubr.bf16.gmra.mrb[0].mxu0 %v123
  %v205 = vpop.f32.mrb[0].mxu0
  %v206 = vadd.f32 0.0, %v205
  %v207 = vpop.f32.mrb[0].mxu0
  %v208 = vpop.f32.mrb[0].mxu0
  %v209 = vadd.f32 0.0, %v208
  %v210 = vpop.f32.mrb[0].mxu0
  %211 = vmatprep.mubr.bf16.mxu0 0
  %212 = vmatmul.mubr.bf16.gmra.mrb[0].mxu0 %v126
  %v213 = vpop.f32.mrb[0].mxu0
  %v214 = vadd.f32 0.0, %v213
  %v215 = vpop.f32.mrb[0].mxu0
  %v216 = vpop.f32.mrb[0].mxu0
  %v217 = vadd.f32 0.0, %v216
  %v218 = vpop.f32.mrb[0].mxu0
  %219 = vmatprep.mubr.bf16.mxu0 0
  %220 = vmatmul.mubr.bf16.gmra.mrb[0].mxu0 %v129
  %v221 = vpop.f32.mrb[0].mxu0
  %v222 = vadd.f32 0.0, %v221
  %v223 = vpop.f32.mrb[0].mxu0
  %v224 = vpop.f32.mrb[0].mxu0
  %v225 = vadd.f32 0.0, %v224
  %v226 = vpop.f32.mrb[0].mxu0
  %227 = vdwg.mxu0
  %vm228 = vcmask 64512
  %v229 = vsel %vm228, %v166, 0.0
  %v230 = vsel %vm228, %v169, 0.0
  %v231 = vadd.f32 %v229, %v230
  %v232 = vsel %vm228, %v174, 0.0
  %v233 = vadd.f32 %v231, %v232
  %v234 = vsel %vm228, %v177, 0.0
  %v235 = vadd.f32 %v233, %v234
  %v236 = vsel %vm228, %v182, 0.0
  %v237 = vadd.f32 %v235, %v236
  %v238 = vsel %vm228, %v185, 0.0
  %v239 = vadd.f32 %v237, %v238
  %v240 = vsel %vm228, %v190, 0.0
  %v241 = vadd.f32 %v239, %v240
  %v242 = vsel %vm228, %v193, 0.0
  %v243 = vadd.f32 %v241, %v242
  %v244 = vsel %vm228, %v198, 0.0
  %v245 = vadd.f32 %v243, %v244
  %v246 = vsel %vm228, %v201, 0.0
  %v247 = vadd.f32 %v245, %v246
  %v248 = vsel %vm228, %v206, 0.0
  %v249 = vadd.f32 %v247, %v248
  %v250 = vsel %vm228, %v209, 0.0
  %v251 = vadd.f32 %v249, %v250
  %v252 = vsel %vm228, %v214, 0.0
  %v253 = vadd.f32 %v251, %v252
  %v254 = vsel %vm228, %v217, 0.0
  %v255 = vadd.f32 %v253, %v254
  %v256 = vsel %vm228, %v222, 0.0
  %v257 = vadd.f32 %v255, %v256
  %v258 = vsel %vm228, %v225, 0.0
  %v259 = vadd.f32 %v257, %v258
  %v260 = vrot.slane %v259, 4
  %v261 = vadd.f32 %v259, %v260
  %v262 = vrot.slane %v261, 2
  %v263 = vadd.f32 %v261, %v262
  %v264 = vrot.slane %v263, 1
  %v265 = vadd.f32 %v263, %v264
  %v266 = vadd.f32 %v265, 0.0
  %v267 = vmul.f32 %v266, 0.0078125
  %v268 = vsub.f32 %v166, %v267
  %v269 = vsub.f32 %v169, %v267
  %v270 = vsub.f32 %v174, %v267
  %v271 = vsub.f32 %v177, %v267
  %v272 = vsub.f32 %v182, %v267
  %v273 = vsub.f32 %v185, %v267
  %v274 = vsub.f32 %v190, %v267
  %v275 = vsub.f32 %v193, %v267
  %v276 = vsub.f32 %v198, %v267
  %v277 = vsub.f32 %v201, %v267
  %v278 = vsub.f32 %v206, %v267
  %v279 = vsub.f32 %v209, %v267
  %v280 = vsub.f32 %v214, %v267
  %v281 = vsub.f32 %v217, %v267
  %v282 = vsub.f32 %v222, %v267
  %v283 = vsub.f32 %v225, %v267
  %v284 = vmul.f32 %v268, %v268
  %v285 = vmul.f32 %v269, %v269
  %v286 = vmul.f32 %v270, %v270
  %v287 = vmul.f32 %v271, %v271
  %v288 = vmul.f32 %v272, %v272
  %v289 = vmul.f32 %v273, %v273
  %v290 = vmul.f32 %v274, %v274
  %v291 = vmul.f32 %v275, %v275
  %v292 = vmul.f32 %v276, %v276
  %v293 = vmul.f32 %v277, %v277
  %v294 = vmul.f32 %v278, %v278
  %v295 = vmul.f32 %v279, %v279
  %v296 = vmul.f32 %v280, %v280
  %v297 = vmul.f32 %v281, %v281
  %v298 = vmul.f32 %v282, %v282
  %v299 = vmul.f32 %v283, %v283
  %v300 = vsel %vm228, %v284, 0.0
  %v301 = vsel %vm228, %v285, 0.0
  %v302 = vadd.f32 %v300, %v301
  %v303 = vsel %vm228, %v286, 0.0
  %v304 = vadd.f32 %v302, %v303
  %v305 = vsel %vm228, %v287, 0.0
  %v306 = vadd.f32 %v304, %v305
  %v307 = vsel %vm228, %v288, 0.0
  %v308 = vadd.f32 %v306, %v307
  %v309 = vsel %vm228, %v289, 0.0
  %v310 = vadd.f32 %v308, %v309
  %v311 = vsel %vm228, %v290, 0.0
  %v312 = vadd.f32 %v310, %v311
  %v313 = vsel %vm228, %v291, 0.0
  %v314 = vadd.f32 %v312, %v313
  %v315 = vsel %vm228, %v292, 0.0
  %v316 = vadd.f32 %v314, %v315
  %v317 = vsel %vm228, %v293, 0.0
  %v318 = vadd.f32 %v316, %v317
  %v319 = vsel %vm228, %v294, 0.0
  %v320 = vadd.f32 %v318, %v319
  %v321 = vsel %vm228, %v295, 0.0
  %v322 = vadd.f32 %v320, %v321
  %v323 = vsel %vm228, %v296, 0.0
  %v324 = vadd.f32 %v322, %v323
  %v325 = vsel %vm228, %v297, 0.0
  %v326 = vadd.f32 %v324, %v325
  %v327 = vsel %vm228, %v298, 0.0
  %v328 = vadd.f32 %v326, %v327
  %v329 = vsel %vm228, %v299, 0.0
  %v330 = vadd.f32 %v328, %v329
  %v331 = vrot.slane %v330, 4
  %v332 = vadd.f32 %v330, %v331
  %v333 = vrot.slane %v332, 2
  %v334 = vadd.f32 %v332, %v333
  %v335 = vrot.slane %v334, 1
  %v336 = vadd.f32 %v334, %v335
  %v337 = vadd.f32 %v336, 0.0
  %v338 = vmul.f32 %v337, 0.0078125
  %v339 = vld [vmem:[%s2] sm:$0x1]
  %v340 = vadd.f32 %v338, 1e-05
  %v341 = vrsqrt.pop %v340
  %v342 = vmul.f32 %v339, %v341
  %v344 = vlaneseq
  %v345 = vshrl.u32 %v344, 7
  %v346 = vsub.s32 0, %v345
  %v347 = vrot.slane %v342, %v346
  %v349 = vmul.f32 %v268, %v347
  %v350 = vmul.f32 %v269, %v347
  %v351 = vmul.f32 %v270, %v347
  %v352 = vmul.f32 %v271, %v347
  %v353 = vmul.f32 %v272, %v347
  %v354 = vmul.f32 %v273, %v347
  %v355 = vmul.f32 %v274, %v347
  %v356 = vmul.f32 %v275, %v347
  %v357 = vmul.f32 %v276, %v347
  %v358 = vmul.f32 %v277, %v347
  %v359 = vmul.f32 %v278, %v347
  %v360 = vmul.f32 %v279, %v347
  %v361 = vmul.f32 %v280, %v347
  %v362 = vmul.f32 %v281, %v347
  %v363 = vmul.f32 %v282, %v347
  %v364 = vmul.f32 %v283, %v347
  %v365 = vld [vmem:[%s3] sm:$0x1]
  %v367 = vlaneseq
  %v368 = vshrl.u32 %v367, 7
  %v369 = vsub.s32 0, %v368
  %v370 = vrot.slane %v365, %v369
  %v372 = vadd.f32 %v349, %v370
  %v373 = vadd.f32 %v350, %v370
  %v374 = vadd.f32 %v351, %v370
  %v375 = vadd.f32 %v352, %v370
  %v376 = vadd.f32 %v353, %v370
  %v377 = vadd.f32 %v354, %v370
  %v378 = vadd.f32 %v355, %v370
  %v379 = vadd.f32 %v356, %v370
  %v380 = vadd.f32 %v357, %v370
  %v381 = vadd.f32 %v358, %v370
  %v382 = vadd.f32 %v359, %v370
  %v383 = vadd.f32 %v360, %v370
  %v384 = vadd.f32 %v361, %v370
  %v385 = vadd.f32 %v362, %v370
  %v386 = vadd.f32 %v363, %v370
  %v387 = vadd.f32 %v364, %v370
  %v388 = vmax.f32 %v372, 0.0
  %v389 = vmax.f32 %v373, 0.0
  %v390 = vmax.f32 %v374, 0.0
  %v391 = vmax.f32 %v375, 0.0
  %v392 = vmax.f32 %v376, 0.0
  %v393 = vmax.f32 %v377, 0.0
  %v394 = vmax.f32 %v378, 0.0
  %v395 = vmax.f32 %v379, 0.0
  %v396 = vmax.f32 %v380, 0.0
  %v397 = vmax.f32 %v381, 0.0
  %v398 = vmax.f32 %v382, 0.0
  %v399 = vmax.f32 %v383, 0.0
  %v400 = vmax.f32 %v384, 0.0
  %v401 = vmax.f32 %v385, 0.0
  %v402 = vmax.f32 %v386, 0.0
  %v403 = vmax.f32 %v387, 0.0
  %404 = vst.msk [vmem:[%s4] sm:$0xff] %vm228, %v388
  %405 = vst.msk [vmem:[%s4 + $0x8] sm:$0xff] %vm228, %v389
  %406 = vst.msk [vmem:[%s4 + $0x10] sm:$0xff] %vm228, %v390
  %407 = vst.msk [vmem:[%s4 + $0x18] sm:$0xff] %vm228, %v391
  %408 = vst.msk [vmem:[%s4 + $0x20] sm:$0xff] %vm228, %v392
  %409 = vst.msk [vmem:[%s4 + $0x28] sm:$0xff] %vm228, %v393
  %410 = vst.msk [vmem:[%s4 + $0x30] sm:$0xff] %vm228, %v394
  %411 = vst.msk [vmem:[%s4 + $0x38] sm:$0xff] %vm228, %v395
  %412 = vst.msk [vmem:[%s4 + $0x40] sm:$0xff] %vm228, %v396
  %413 = vst.msk [vmem:[%s4 + $0x48] sm:$0xff] %vm228, %v397
  %414 = vst.msk [vmem:[%s4 + $0x50] sm:$0xff] %vm228, %v398
  %415 = vst.msk [vmem:[%s4 + $0x58] sm:$0xff] %vm228, %v399
  %416 = vst.msk [vmem:[%s4 + $0x60] sm:$0xff] %vm228, %v400
  %417 = vst.msk [vmem:[%s4 + $0x68] sm:$0xff] %vm228, %v401
  %418 = vst.msk [vmem:[%s4 + $0x70] sm:$0xff] %vm228, %v402
  %419 = vst.msk [vmem:[%s4 + $0x78] sm:$0xff] %vm228, %v403
  // Predicated region
  $region18: #{cvae_forward.14} parent=0 // pred_check
    _
  $region19: #{cvae_forward.14} parent=0 // pred_check_branch
    %421 = sbr.rel (0) target = $region21
  $region20: #{cvae_forward.14} parent=0 // pred_region
    _
  $region21: #{cvae_forward.14} parent=0 // pred_fallthru
    _
  // Predicated region
  $region22: #{cvae_forward.14} parent=0 // pred_check
    _
  $region23: #{cvae_forward.14} parent=0 // pred_check_branch
    %423 = sbr.rel (0) target = $region25
  $region24: #{cvae_forward.14} parent=0 // pred_region
    _
  $region25: #{cvae_forward.14} parent=0 // pred_fallthru
    _

// kernel: cvae_forward.15
$region0: #{cvae_forward.15}
  #allocation0 [shape = 'u32[]', space=smem, size = 0x4, offset = 0x4, fixed_abs, tag = 'smem constant byte address 0x4 - core index']
  #allocation1 [shape = 'u32[144,128]{1,0:T(1,128)}', space=vmem, size = 0x12000, scoped, tag = 'internal scratch']
  %s0 = inlined_call_operand.vmem [shape: bf16[1,128,72], index: 0, kind: input, shape index: {}]
  %s1 = inlined_call_operand.vmem [shape: bf16[1,72,8], index: 1, kind: input, shape index: {}]
  %s2 = inlined_call_operand.vmem [shape: f32[1,1,8], index: 2, kind: input, shape index: {}]
  %s3 = inlined_call_operand.vmem [shape: f32[1,1,8], index: 3, kind: input, shape index: {}]
  %s4 = inlined_call_operand.vmem [shape: f32[1,1,8], index: 4, kind: input, shape index: {}]
  %s5 = inlined_call_operand.vmem [shape: f32[1,128,8], index: 5, kind: output, shape index: {}]
  %s6 = sld [smem:[#allocation0]]
  $region30: #{cvae_forward.15} parent=0
    _
  %s8 = ssub.s32 1, %s6
  %s9 = scalar_select 0, %s8, %s6
  // Predicated region
  $region2: #{cvae_forward.15} parent=0 // pred_check
    _
  $region3: #{cvae_forward.15} parent=0 // pred_check_branch
    %11 = sbr.rel (0) target = $region5
  $region4: #{cvae_forward.15} parent=0 // pred_region
    _
  $region5: #{cvae_forward.15} parent=0 // pred_fallthru
    _
  // Predicated region
  $region6: #{cvae_forward.15} parent=0 // pred_check
    _
  $region7: #{cvae_forward.15} parent=0 // pred_check_branch
    %13 = sbr.rel (0) target = $region9
  $region8: #{cvae_forward.15} parent=0 // pred_region
    _
  $region9: #{cvae_forward.15} parent=0 // pred_fallthru
    _
  // Predicated region
  $region10: #{cvae_forward.15} parent=0 // pred_check
    _
  $region11: #{cvae_forward.15} parent=0 // pred_check_branch
    %15 = sbr.rel (0) target = $region13
  $region12: #{cvae_forward.15} parent=0 // pred_region
    _
  $region13: #{cvae_forward.15} parent=0 // pred_fallthru
    _
  // Predicated region
  $region14: #{cvae_forward.15} parent=0 // pred_check
    _
  $region15: #{cvae_forward.15} parent=0 // pred_check_branch
    %17 = sbr.rel (0) target = $region17
  $region16: #{cvae_forward.15} parent=0 // pred_region
    _
  $region17: #{cvae_forward.15} parent=0 // pred_fallthru
    _
  // Predicated region
  $region18: #{cvae_forward.15} parent=0 // pred_check
    _
  $region19: #{cvae_forward.15} parent=0 // pred_check_branch
    %19 = sbr.rel (0) target = $region21
  $region20: #{cvae_forward.15} parent=0 // pred_region
    _
  $region21: #{cvae_forward.15} parent=0 // pred_fallthru
    _
  %v21 = vld [vmem:[%s0] sm:$0xf]
  %v22 = vld [vmem:[%s0 + $0x4] sm:$0xf]
  %v23 = vld [vmem:[%s0 + $0x8] sm:$0xf]
  %v24 = vld [vmem:[%s0 + $0xc] sm:$0xf]
  %v25 = vld [vmem:[%s0 + $0x10] sm:$0xf]
  %v26 = vld [vmem:[%s0 + $0x14] sm:$0xf]
  %v27 = vld [vmem:[%s0 + $0x18] sm:$0xf]
  %v28 = vld [vmem:[%s0 + $0x1c] sm:$0xf]
  %v29 = vld [vmem:[%s0 + $0x20] sm:$0xf]
  %v30 = vld [vmem:[%s0 + $0x24] sm:$0xf]
  %v31 = vld [vmem:[%s0 + $0x28] sm:$0xf]
  %v32 = vld [vmem:[%s0 + $0x2c] sm:$0xf]
  %v33 = vld [vmem:[%s0 + $0x30] sm:$0xf]
  %v34 = vld [vmem:[%s0 + $0x34] sm:$0xf]
  %v35 = vld [vmem:[%s0 + $0x38] sm:$0xf]
  %v36 = vld [vmem:[%s0 + $0x3c] sm:$0xf]
  %v37 = vmax.bf16 %v21, 0
  %v38 = vmax.bf16 %v22, 0
  %v39 = vmax.bf16 %v23, 0
  %v40 = vmax.bf16 %v24, 0
  %v41 = vmax.bf16 %v25, 0
  %v42 = vmax.bf16 %v26, 0
  %v43 = vmax.bf16 %v27, 0
  %v44 = vmax.bf16 %v28, 0
  %v45 = vmax.bf16 %v29, 0
  %v46 = vmax.bf16 %v30, 0
  %v47 = vmax.bf16 %v31, 0
  %v48 = vmax.bf16 %v32, 0
  %v49 = vmax.bf16 %v33, 0
  %v50 = vmax.bf16 %v34, 0
  %v51 = vmax.bf16 %v35, 0
  %v52 = vmax.bf16 %v36, 0
  %v53 = vld [vmem:[%s1] sm:$0xf]
  %v54 = vld [vmem:[%s1 + $0x4] sm:$0xf]
  %v55 = vld [vmem:[%s1 + $0x8] sm:$0xf]
  %v56 = vld [vmem:[%s1 + $0xc] sm:$0xf]
  %v57 = vld [vmem:[%s1 + $0x10] sm:$0xf]
  %v58 = vld [vmem:[%s1 + $0x14] sm:$0xf]
  %v59 = vld [vmem:[%s1 + $0x18] sm:$0xf]
  %v60 = vld [vmem:[%s1 + $0x1c] sm:$0xf]
  %v61 = vld [vmem:[%s1 + $0x20] sm:$0xf]
  %v78 = vunpack.c.l.b16 %v37
  %v79 = vunpack.c.l.b16 %v38
  %v80 = vunpack.c.l.b16 %v39
  %v81 = vunpack.c.l.b16 %v40
  %v82 = vunpack.c.l.b16 %v41
  %v83 = vunpack.c.l.b16 %v42
  %v84 = vunpack.c.l.b16 %v43
  %v85 = vunpack.c.l.b16 %v44
  %v86 = vunpack.c.l.b16 %v45
  %v87 = vunpack.c.l.b16 %v46
  %v88 = vunpack.c.l.b16 %v47
  %v89 = vunpack.c.l.b16 %v48
  %v90 = vunpack.c.l.b16 %v49
  %v91 = vunpack.c.l.b16 %v50
  %v92 = vunpack.c.l.b16 %v51
  %v93 = vunpack.c.l.b16 %v52
  %v94 = vpack.c.b16 %v79, %v78
  %v95 = vpack.c.b16 %v81, %v80
  %v96 = vpack.c.b16 %v83, %v82
  %v97 = vpack.c.b16 %v85, %v84
  %v98 = vpack.c.b16 %v87, %v86
  %v99 = vpack.c.b16 %v89, %v88
  %v100 = vpack.c.b16 %v91, %v90
  %v101 = vpack.c.b16 %v93, %v92
  %v111 = vunpack.c.l.b16 %v53
  %v112 = vunpack.c.l.b16 %v54
  %v113 = vunpack.c.l.b16 %v55
  %v114 = vunpack.c.l.b16 %v56
  %v115 = vunpack.c.l.b16 %v57
  %v116 = vunpack.c.l.b16 %v58
  %v117 = vunpack.c.l.b16 %v59
  %v118 = vunpack.c.l.b16 %v60
  %v119 = vunpack.c.l.b16 %v61
  %v120 = vpack.c.b16 %v112, %v111
  %v121 = vpack.c.b16 %v114, %v113
  %v122 = vpack.c.b16 %v116, %v115
  %v123 = vpack.c.b16 %v118, %v117
  %v124 = vpack.c.b16 %v119, %v119
  %vm129 = vcmask 588800
  %v131 = vsel %vm129, %v94, 0
  %v134 = vsel %vm129, %v95, 0
  %v137 = vsel %vm129, %v96, 0
  %v140 = vsel %vm129, %v97, 0
  %v143 = vsel %vm129, %v98, 0
  %v146 = vsel %vm129, %v99, 0
  %v149 = vsel %vm129, %v100, 0
  %v152 = vsel %vm129, %v101, 0
  %vm154 = vcmask 1043456
  %v156 = vsel %vm154, %v124, 0
  %158 = vmatprep.subr.bf16.mxu0 0
  %159 = vmatpush1.bf16.msra.mxu0 %v120
  %160 = vmatprep.subr.bf16.mxu0 0
  %161 = vmatpush1.bf16.msra.mxu0 %v121
  %162 = vmatprep.subr.bf16.mxu0 0
  %163 = vmatpush1.bf16.msra.mxu0 %v122
  %164 = vmatprep.subr.bf16.mxu0 0
  %165 = vmatpush1.bf16.msra.mxu0 %v123
  %166 = vmatprep.subr.bf16.mxu0 0
  %167 = vmatpush1.bf16.msra.mxu0 %v156
  %168 = vmatprep.subr.bf16.mxu0 0
  %169 = vmatpush1.bf16.msra.mxu0 0
  %170 = vmatprep.subr.bf16.mxu0 0
  %171 = vmatpush1.bf16.msra.mxu0 0
  %172 = vmatprep.subr.bf16.mxu0 0
  %173 = vmatpush1.bf16.msra.mxu0 0
  %174 = vmatprep.subr.bf16.mxu0 0
  %175 = vmatpush1.bf16.msra.mxu0 0
  %176 = vmatprep.subr.bf16.mxu0 0
  %177 = vmatpush1.bf16.msra.mxu0 0
  %178 = vmatprep.subr.bf16.mxu0 0
  %179 = vmatpush1.bf16.msra.mxu0 0
  %180 = vmatprep.subr.bf16.mxu0 0
  %181 = vmatpush1.bf16.msra.mxu0 0
  %182 = vmatprep.subr.bf16.mxu0 0
  %183 = vmatpush1.bf16.msra.mxu0 0
  %184 = vmatprep.subr.bf16.mxu0 0
  %185 = vmatpush1.bf16.msra.mxu0 0
  %186 = vmatprep.subr.bf16.mxu0 0
  %187 = vmatpush1.bf16.msra.mxu0 0
  %188 = vmatprep.subr.bf16.mxu0 0
  %189 = vmatpush1.bf16.msra.mxu0 0
  %190 = vmatprep.mubr.bf16.mxu0 0
  %191 = vmatmul.mubr.bf16.gmra.mrb[0].mxu0 %v131
  %v192 = vpop.f32.mrb[0].mxu0
  %v193 = vadd.f32 0.0, %v192
  %v194 = vpop.f32.mrb[0].mxu0
  %v195 = vpop.f32.mrb[0].mxu0
  %v196 = vadd.f32 0.0, %v195
  %v197 = vpop.f32.mrb[0].mxu0
  %198 = vmatprep.mubr.bf16.mxu0 0
  %199 = vmatmul.mubr.bf16.gmra.mrb[0].mxu0 %v134
  %v200 = vpop.f32.mrb[0].mxu0
  %v201 = vadd.f32 0.0, %v200
  %v202 = vpop.f32.mrb[0].mxu0
  %v203 = vpop.f32.mrb[0].mxu0
  %v204 = vadd.f32 0.0, %v203
  %v205 = vpop.f32.mrb[0].mxu0
  %206 = vmatprep.mubr.bf16.mxu0 0
  %207 = vmatmul.mubr.bf16.gmra.mrb[0].mxu0 %v137
  %v208 = vpop.f32.mrb[0].mxu0
  %v209 = vadd.f32 0.0, %v208
  %v210 = vpop.f32.mrb[0].mxu0
  %v211 = vpop.f32.mrb[0].mxu0
  %v212 = vadd.f32 0.0, %v211
  %v213 = vpop.f32.mrb[0].mxu0
  %214 = vmatprep.mubr.bf16.mxu0 0
  %215 = vmatmul.mubr.bf16.gmra.mrb[0].mxu0 %v140
  %v216 = vpop.f32.mrb[0].mxu0
  %v217 = vadd.f32 0.0, %v216
  %v218 = vpop.f32.mrb[0].mxu0
  %v219 = vpop.f32.mrb[0].mxu0
  %v220 = vadd.f32 0.0, %v219
  %v221 = vpop.f32.mrb[0].mxu0
  %222 = vmatprep.mubr.bf16.mxu0 0
  %223 = vmatmul.mubr.bf16.gmra.mrb[0].mxu0 %v143
  %v224 = vpop.f32.mrb[0].mxu0
  %v225 = vadd.f32 0.0, %v224
  %v226 = vpop.f32.mrb[0].mxu0
  %v227 = vpop.f32.mrb[0].mxu0
  %v228 = vadd.f32 0.0, %v227
  %v229 = vpop.f32.mrb[0].mxu0
  %230 = vmatprep.mubr.bf16.mxu0 0
  %231 = vmatmul.mubr.bf16.gmra.mrb[0].mxu0 %v146
  %v232 = vpop.f32.mrb[0].mxu0
  %v233 = vadd.f32 0.0, %v232
  %v234 = vpop.f32.mrb[0].mxu0
  %v235 = vpop.f32.mrb[0].mxu0
  %v236 = vadd.f32 0.0, %v235
  %v237 = vpop.f32.mrb[0].mxu0
  %238 = vmatprep.mubr.bf16.mxu0 0
  %239 = vmatmul.mubr.bf16.gmra.mrb[0].mxu0 %v149
  %v240 = vpop.f32.mrb[0].mxu0
  %v241 = vadd.f32 0.0, %v240
  %v242 = vpop.f32.mrb[0].mxu0
  %v243 = vpop.f32.mrb[0].mxu0
  %v244 = vadd.f32 0.0, %v243
  %v245 = vpop.f32.mrb[0].mxu0
  %246 = vmatprep.mubr.bf16.mxu0 0
  %247 = vmatmul.mubr.bf16.gmra.mrb[0].mxu0 %v152
  %v248 = vpop.f32.mrb[0].mxu0
  %v249 = vadd.f32 0.0, %v248
  %v250 = vpop.f32.mrb[0].mxu0
  %v251 = vpop.f32.mrb[0].mxu0
  %v252 = vadd.f32 0.0, %v251
  %v253 = vpop.f32.mrb[0].mxu0
  %254 = vdwg.mxu0
  %v255 = vld [vmem:[%s2] sm:$0x1]
  %v257 = vlaneseq
  %v258 = vshrl.u32 %v257, 7
  %v259 = vsub.s32 0, %v258
  %v260 = vrot.slane %v255, %v259
  %v262 = vadd.f32 %v193, %v260
  %v263 = vadd.f32 %v196, %v260
  %v264 = vadd.f32 %v201, %v260
  %v265 = vadd.f32 %v204, %v260
  %v266 = vadd.f32 %v209, %v260
  %v267 = vadd.f32 %v212, %v260
  %v268 = vadd.f32 %v217, %v260
  %v269 = vadd.f32 %v220, %v260
  %v270 = vadd.f32 %v225, %v260
  %v271 = vadd.f32 %v228, %v260
  %v272 = vadd.f32 %v233, %v260
  %v273 = vadd.f32 %v236, %v260
  %v274 = vadd.f32 %v241, %v260
  %v275 = vadd.f32 %v244, %v260
  %v276 = vadd.f32 %v249, %v260
  %v277 = vadd.f32 %v252, %v260
  %vm278 = vcmask 64512
  %v279 = vsel %vm278, %v262, 0.0
  %v280 = vsel %vm278, %v263, 0.0
  %v281 = vadd.f32 %v279, %v280
  %v282 = vsel %vm278, %v264, 0.0
  %v283 = vadd.f32 %v281, %v282
  %v284 = vsel %vm278, %v265, 0.0
  %v285 = vadd.f32 %v283, %v284
  %v286 = vsel %vm278, %v266, 0.0
  %v287 = vadd.f32 %v285, %v286
  %v288 = vsel %vm278, %v267, 0.0
  %v289 = vadd.f32 %v287, %v288
  %v290 = vsel %vm278, %v268, 0.0
  %v291 = vadd.f32 %v289, %v290
  %v292 = vsel %vm278, %v269, 0.0
  %v293 = vadd.f32 %v291, %v292
  %v294 = vsel %vm278, %v270, 0.0
  %v295 = vadd.f32 %v293, %v294
  %v296 = vsel %vm278, %v271, 0.0
  %v297 = vadd.f32 %v295, %v296
  %v298 = vsel %vm278, %v272, 0.0
  %v299 = vadd.f32 %v297, %v298
  %v300 = vsel %vm278, %v273, 0.0
  %v301 = vadd.f32 %v299, %v300
  %v302 = vsel %vm278, %v274, 0.0
  %v303 = vadd.f32 %v301, %v302
  %v304 = vsel %vm278, %v275, 0.0
  %v305 = vadd.f32 %v303, %v304
  %v306 = vsel %vm278, %v276, 0.0
  %v307 = vadd.f32 %v305, %v306
  %v308 = vsel %vm278, %v277, 0.0
  %v309 = vadd.f32 %v307, %v308
  %v310 = vrot.slane %v309, 4
  %v311 = vadd.f32 %v309, %v310
  %v312 = vrot.slane %v311, 2
  %v313 = vadd.f32 %v311, %v312
  %v314 = vrot.slane %v313, 1
  %v315 = vadd.f32 %v313, %v314
  %v316 = vadd.f32 %v315, 0.0
  %v317 = vmul.f32 %v316, 0.0078125
  %v318 = vsub.f32 %v262, %v317
  %v319 = vsub.f32 %v263, %v317
  %v320 = vsub.f32 %v264, %v317
  %v321 = vsub.f32 %v265, %v317
  %v322 = vsub.f32 %v266, %v317
  %v323 = vsub.f32 %v267, %v317
  %v324 = vsub.f32 %v268, %v317
  %v325 = vsub.f32 %v269, %v317
  %v326 = vsub.f32 %v270, %v317
  %v327 = vsub.f32 %v271, %v317
  %v328 = vsub.f32 %v272, %v317
  %v329 = vsub.f32 %v273, %v317
  %v330 = vsub.f32 %v274, %v317
  %v331 = vsub.f32 %v275, %v317
  %v332 = vsub.f32 %v276, %v317
  %v333 = vsub.f32 %v277, %v317
  %v334 = vmul.f32 %v318, %v318
  %v335 = vmul.f32 %v319, %v319
  %v336 = vmul.f32 %v320, %v320
  %v337 = vmul.f32 %v321, %v321
  %v338 = vmul.f32 %v322, %v322
  %v339 = vmul.f32 %v323, %v323
  %v340 = vmul.f32 %v324, %v324
  %v341 = vmul.f32 %v325, %v325
  %v342 = vmul.f32 %v326, %v326
  %v343 = vmul.f32 %v327, %v327
  %v344 = vmul.f32 %v328, %v328
  %v345 = vmul.f32 %v329, %v329
  %v346 = vmul.f32 %v330, %v330
  %v347 = vmul.f32 %v331, %v331
  %v348 = vmul.f32 %v332, %v332
  %v349 = vmul.f32 %v333, %v333
  %v350 = vsel %vm278, %v334, 0.0
  %v351 = vsel %vm278, %v335, 0.0
  %v352 = vadd.f32 %v350, %v351
  %v353 = vsel %vm278, %v336, 0.0
  %v354 = vadd.f32 %v352, %v353
  %v355 = vsel %vm278, %v337, 0.0
  %v356 = vadd.f32 %v354, %v355
  %v357 = vsel %vm278, %v338, 0.0
  %v358 = vadd.f32 %v356, %v357
  %v359 = vsel %vm278, %v339, 0.0
  %v360 = vadd.f32 %v358, %v359
  %v361 = vsel %vm278, %v340, 0.0
  %v362 = vadd.f32 %v360, %v361
  %v363 = vsel %vm278, %v341, 0.0
  %v364 = vadd.f32 %v362, %v363
  %v365 = vsel %vm278, %v342, 0.0
  %v366 = vadd.f32 %v364, %v365
  %v367 = vsel %vm278, %v343, 0.0
  %v368 = vadd.f32 %v366, %v367
  %v369 = vsel %vm278, %v344, 0.0
  %v370 = vadd.f32 %v368, %v369
  %v371 = vsel %vm278, %v345, 0.0
  %v372 = vadd.f32 %v370, %v371
  %v373 = vsel %vm278, %v346, 0.0
  %v374 = vadd.f32 %v372, %v373
  %v375 = vsel %vm278, %v347, 0.0
  %v376 = vadd.f32 %v374, %v375
  %v377 = vsel %vm278, %v348, 0.0
  %v378 = vadd.f32 %v376, %v377
  %v379 = vsel %vm278, %v349, 0.0
  %v380 = vadd.f32 %v378, %v379
  %v381 = vrot.slane %v380, 4
  %v382 = vadd.f32 %v380, %v381
  %v383 = vrot.slane %v382, 2
  %v384 = vadd.f32 %v382, %v383
  %v385 = vrot.slane %v384, 1
  %v386 = vadd.f32 %v384, %v385
  %v387 = vadd.f32 %v386, 0.0
  %v388 = vmul.f32 %v387, 0.0078125
  %v389 = vld [vmem:[%s3] sm:$0x1]
  %v390 = vadd.f32 %v388, 1e-05
  %v391 = vrsqrt.pop %v390
  %v392 = vmul.f32 %v389, %v391
  %v394 = vlaneseq
  %v395 = vshrl.u32 %v394, 7
  %v396 = vsub.s32 0, %v395
  %v397 = vrot.slane %v392, %v396
  %v399 = vmul.f32 %v318, %v397
  %v400 = vmul.f32 %v319, %v397
  %v401 = vmul.f32 %v320, %v397
  %v402 = vmul.f32 %v321, %v397
  %v403 = vmul.f32 %v322, %v397
  %v404 = vmul.f32 %v323, %v397
  %v405 = vmul.f32 %v324, %v397
  %v406 = vmul.f32 %v325, %v397
  %v407 = vmul.f32 %v326, %v397
  %v408 = vmul.f32 %v327, %v397
  %v409 = vmul.f32 %v328, %v397
  %v410 = vmul.f32 %v329, %v397
  %v411 = vmul.f32 %v330, %v397
  %v412 = vmul.f32 %v331, %v397
  %v413 = vmul.f32 %v332, %v397
  %v414 = vmul.f32 %v333, %v397
  %v415 = vld [vmem:[%s4] sm:$0x1]
  %v417 = vlaneseq
  %v418 = vshrl.u32 %v417, 7
  %v419 = vsub.s32 0, %v418
  %v420 = vrot.slane %v415, %v419
  %v422 = vadd.f32 %v399, %v420
  %v423 = vadd.f32 %v400, %v420
  %v424 = vadd.f32 %v401, %v420
  %v425 = vadd.f32 %v402, %v420
  %v426 = vadd.f32 %v403, %v420
  %v427 = vadd.f32 %v404, %v420
  %v428 = vadd.f32 %v405, %v420
  %v429 = vadd.f32 %v406, %v420
  %v430 = vadd.f32 %v407, %v420
  %v431 = vadd.f32 %v408, %v420
  %v432 = vadd.f32 %v409, %v420
  %v433 = vadd.f32 %v410, %v420
  %v434 = vadd.f32 %v411, %v420
  %v435 = vadd.f32 %v412, %v420
  %v436 = vadd.f32 %v413, %v420
  %v437 = vadd.f32 %v414, %v420
  %v438 = vmax.f32 %v422, 0.0
  %v439 = vmax.f32 %v423, 0.0
  %v440 = vmax.f32 %v424, 0.0
  %v441 = vmax.f32 %v425, 0.0
  %v442 = vmax.f32 %v426, 0.0
  %v443 = vmax.f32 %v427, 0.0
  %v444 = vmax.f32 %v428, 0.0
  %v445 = vmax.f32 %v429, 0.0
  %v446 = vmax.f32 %v430, 0.0
  %v447 = vmax.f32 %v431, 0.0
  %v448 = vmax.f32 %v432, 0.0
  %v449 = vmax.f32 %v433, 0.0
  %v450 = vmax.f32 %v434, 0.0
  %v451 = vmax.f32 %v435, 0.0
  %v452 = vmax.f32 %v436, 0.0
  %v453 = vmax.f32 %v437, 0.0
  %454 = vst.msk [vmem:[%s5] sm:$0xff] %vm278, %v438
  %455 = vst.msk [vmem:[%s5 + $0x8] sm:$0xff] %vm278, %v439
  %456 = vst.msk [vmem:[%s5 + $0x10] sm:$0xff] %vm278, %v440
  %457 = vst.msk [vmem:[%s5 + $0x18] sm:$0xff] %vm278, %v441
  %458 = vst.msk [vmem:[%s5 + $0x20] sm:$0xff] %vm278, %v442
  %459 = vst.msk [vmem:[%s5 + $0x28] sm:$0xff] %vm278, %v443
  %460 = vst.msk [vmem:[%s5 + $0x30] sm:$0xff] %vm278, %v444
  %461 = vst.msk [vmem:[%s5 + $0x38] sm:$0xff] %vm278, %v445
  %462 = vst.msk [vmem:[%s5 + $0x40] sm:$0xff] %vm278, %v446
  %463 = vst.msk [vmem:[%s5 + $0x48] sm:$0xff] %vm278, %v447
  %464 = vst.msk [vmem:[%s5 + $0x50] sm:$0xff] %vm278, %v448
  %465 = vst.msk [vmem:[%s5 + $0x58] sm:$0xff] %vm278, %v449
  %466 = vst.msk [vmem:[%s5 + $0x60] sm:$0xff] %vm278, %v450
  %467 = vst.msk [vmem:[%s5 + $0x68] sm:$0xff] %vm278, %v451
  %468 = vst.msk [vmem:[%s5 + $0x70] sm:$0xff] %vm278, %v452
  %469 = vst.msk [vmem:[%s5 + $0x78] sm:$0xff] %vm278, %v453
  // Predicated region
  $region22: #{cvae_forward.15} parent=0 // pred_check
    _
  $region23: #{cvae_forward.15} parent=0 // pred_check_branch
    %471 = sbr.rel (0) target = $region25
  $region24: #{cvae_forward.15} parent=0 // pred_region
    _
  $region25: #{cvae_forward.15} parent=0 // pred_fallthru
    _
  // Predicated region
  $region26: #{cvae_forward.15} parent=0 // pred_check
    _
  $region27: #{cvae_forward.15} parent=0 // pred_check_branch
    %473 = sbr.rel (0) target = $region29
  $region28: #{cvae_forward.15} parent=0 // pred_region
    _
  $region29: #{cvae_forward.15} parent=0 // pred_fallthru
    _

// kernel: cvae_forward.16
$region0: #{cvae_forward.16}
  #allocation0 [shape = 'u32[]', space=smem, size = 0x4, offset = 0x4, fixed_abs, tag = 'smem constant byte address 0x4 - core index']
  #allocation1 [shape = 'u32[144,128]{1,0:T(1,128)}', space=vmem, size = 0x12000, scoped, tag = 'internal scratch']
  %s0 = inlined_call_operand.vmem [shape: bf16[1,128,8], index: 0, kind: input, shape index: {}]
  %s1 = inlined_call_operand.vmem [shape: bf16[1,8,8], index: 1, kind: input, shape index: {}]
  %s2 = inlined_call_operand.vmem [shape: f32[1,1,8], index: 2, kind: input, shape index: {}]
  %s3 = inlined_call_operand.vmem [shape: f32[1,128,8], index: 3, kind: input, shape index: {}]
  %s4 = inlined_call_operand.vmem [shape: f32[1,1,8], index: 4, kind: input, shape index: {}]
  %s5 = inlined_call_operand.vmem [shape: f32[1,1,8], index: 5, kind: input, shape index: {}]
  %s6 = inlined_call_operand.vmem [shape: f32[1,128,8], index: 6, kind: output, shape index: {}]
  %s7 = sld [smem:[#allocation0]]
  $region34: #{cvae_forward.16} parent=0
    _
  %s9 = ssub.s32 1, %s7
  %s10 = scalar_select 0, %s9, %s7
  // Predicated region
  $region2: #{cvae_forward.16} parent=0 // pred_check
    _
  $region3: #{cvae_forward.16} parent=0 // pred_check_branch
    %12 = sbr.rel (0) target = $region5
  $region4: #{cvae_forward.16} parent=0 // pred_region
    _
  $region5: #{cvae_forward.16} parent=0 // pred_fallthru
    _
  // Predicated region
  $region6: #{cvae_forward.16} parent=0 // pred_check
    _
  $region7: #{cvae_forward.16} parent=0 // pred_check_branch
    %14 = sbr.rel (0) target = $region9
  $region8: #{cvae_forward.16} parent=0 // pred_region
    _
  $region9: #{cvae_forward.16} parent=0 // pred_fallthru
    _
  // Predicated region
  $region10: #{cvae_forward.16} parent=0 // pred_check
    _
  $region11: #{cvae_forward.16} parent=0 // pred_check_branch
    %16 = sbr.rel (0) target = $region13
  $region12: #{cvae_forward.16} parent=0 // pred_region
    _
  $region13: #{cvae_forward.16} parent=0 // pred_fallthru
    _
  // Predicated region
  $region14: #{cvae_forward.16} parent=0 // pred_check
    _
  $region15: #{cvae_forward.16} parent=0 // pred_check_branch
    %18 = sbr.rel (0) target = $region17
  $region16: #{cvae_forward.16} parent=0 // pred_region
    _
  $region17: #{cvae_forward.16} parent=0 // pred_fallthru
    _
  // Predicated region
  $region18: #{cvae_forward.16} parent=0 // pred_check
    _
  $region19: #{cvae_forward.16} parent=0 // pred_check_branch
    %20 = sbr.rel (0) target = $region21
  $region20: #{cvae_forward.16} parent=0 // pred_region
    _
  $region21: #{cvae_forward.16} parent=0 // pred_fallthru
    _
  // Predicated region
  $region22: #{cvae_forward.16} parent=0 // pred_check
    _
  $region23: #{cvae_forward.16} parent=0 // pred_check_branch
    %22 = sbr.rel (0) target = $region25
  $region24: #{cvae_forward.16} parent=0 // pred_region
    _
  $region25: #{cvae_forward.16} parent=0 // pred_fallthru
    _
  %v24 = vld [vmem:[%s0] sm:$0xf]
  %v25 = vld [vmem:[%s0 + $0x4] sm:$0xf]
  %v26 = vld [vmem:[%s0 + $0x8] sm:$0xf]
  %v27 = vld [vmem:[%s0 + $0xc] sm:$0xf]
  %v28 = vld [vmem:[%s0 + $0x10] sm:$0xf]
  %v29 = vld [vmem:[%s0 + $0x14] sm:$0xf]
  %v30 = vld [vmem:[%s0 + $0x18] sm:$0xf]
  %v31 = vld [vmem:[%s0 + $0x1c] sm:$0xf]
  %v32 = vld [vmem:[%s0 + $0x20] sm:$0xf]
  %v33 = vld [vmem:[%s0 + $0x24] sm:$0xf]
  %v34 = vld [vmem:[%s0 + $0x28] sm:$0xf]
  %v35 = vld [vmem:[%s0 + $0x2c] sm:$0xf]
  %v36 = vld [vmem:[%s0 + $0x30] sm:$0xf]
  %v37 = vld [vmem:[%s0 + $0x34] sm:$0xf]
  %v38 = vld [vmem:[%s0 + $0x38] sm:$0xf]
  %v39 = vld [vmem:[%s0 + $0x3c] sm:$0xf]
  %v40 = vld [vmem:[%s1] sm:$0xf]
  %v57 = vunpack.c.l.b16 %v24
  %v58 = vunpack.c.l.b16 %v25
  %v59 = vunpack.c.l.b16 %v26
  %v60 = vunpack.c.l.b16 %v27
  %v61 = vunpack.c.l.b16 %v28
  %v62 = vunpack.c.l.b16 %v29
  %v63 = vunpack.c.l.b16 %v30
  %v64 = vunpack.c.l.b16 %v31
  %v65 = vunpack.c.l.b16 %v32
  %v66 = vunpack.c.l.b16 %v33
  %v67 = vunpack.c.l.b16 %v34
  %v68 = vunpack.c.l.b16 %v35
  %v69 = vunpack.c.l.b16 %v36
  %v70 = vunpack.c.l.b16 %v37
  %v71 = vunpack.c.l.b16 %v38
  %v72 = vunpack.c.l.b16 %v39
  %v73 = vpack.c.b16 %v58, %v57
  %v74 = vpack.c.b16 %v60, %v59
  %v75 = vpack.c.b16 %v62, %v61
  %v76 = vpack.c.b16 %v64, %v63
  %v77 = vpack.c.b16 %v66, %v65
  %v78 = vpack.c.b16 %v68, %v67
  %v79 = vpack.c.b16 %v70, %v69
  %v80 = vpack.c.b16 %v72, %v71
  %vm81 = vcmask 64512
  %v83 = vsel %vm81, %v73, 0
  %v86 = vsel %vm81, %v74, 0
  %v89 = vsel %vm81, %v75, 0
  %v92 = vsel %vm81, %v76, 0
  %v95 = vsel %vm81, %v77, 0
  %v98 = vsel %vm81, %v78, 0
  %v101 = vsel %vm81, %v79, 0
  %v104 = vsel %vm81, %v80, 0
  %vm106 = vcmask 1043456
  %v108 = vsel %vm106, %v40, 0
  %110 = vmatprep.subr.bf16.mxu0 0
  %111 = vmatpush1.bf16.msra.mxu0 %v108
  %112 = vmatprep.subr.bf16.mxu0 0
  %113 = vmatpush1.bf16.msra.mxu0 0
  %114 = vmatprep.subr.bf16.mxu0 0
  %115 = vmatpush1.bf16.msra.mxu0 0
  %116 = vmatprep.subr.bf16.mxu0 0
  %117 = vmatpush1.bf16.msra.mxu0 0
  %118 = vmatprep.subr.bf16.mxu0 0
  %119 = vmatpush1.bf16.msra.mxu0 0
  %120 = vmatprep.subr.bf16.mxu0 0
  %121 = vmatpush1.bf16.msra.mxu0 0
  %122 = vmatprep.subr.bf16.mxu0 0
  %123 = vmatpush1.bf16.msra.mxu0 0
  %124 = vmatprep.subr.bf16.mxu0 0
  %125 = vmatpush1.bf16.msra.mxu0 0
  %126 = vmatprep.subr.bf16.mxu0 0
  %127 = vmatpush1.bf16.msra.mxu0 0
  %128 = vmatprep.subr.bf16.mxu0 0
  %129 = vmatpush1.bf16.msra.mxu0 0
  %130 = vmatprep.subr.bf16.mxu0 0
  %131 = vmatpush1.bf16.msra.mxu0 0
  %132 = vmatprep.subr.bf16.mxu0 0
  %133 = vmatpush1.bf16.msra.mxu0 0
  %134 = vmatprep.subr.bf16.mxu0 0
  %135 = vmatpush1.bf16.msra.mxu0 0
  %136 = vmatprep.subr.bf16.mxu0 0
  %137 = vmatpush1.bf16.msra.mxu0 0
  %138 = vmatprep.subr.bf16.mxu0 0
  %139 = vmatpush1.bf16.msra.mxu0 0
  %140 = vmatprep.subr.bf16.mxu0 0
  %141 = vmatpush1.bf16.msra.mxu0 0
  %142 = vmatprep.mubr.bf16.mxu0 0
  %143 = vmatmul.mubr.bf16.gmra.mrb[0].mxu0 %v83
  %v144 = vpop.f32.mrb[0].mxu0
  %v145 = vadd.f32 0.0, %v144
  %v146 = vpop.f32.mrb[0].mxu0
  %v147 = vpop.f32.mrb[0].mxu0
  %v148 = vadd.f32 0.0, %v147
  %v149 = vpop.f32.mrb[0].mxu0
  %150 = vmatprep.mubr.bf16.mxu0 0
  %151 = vmatmul.mubr.bf16.gmra.mrb[0].mxu0 %v86
  %v152 = vpop.f32.mrb[0].mxu0
  %v153 = vadd.f32 0.0, %v152
  %v154 = vpop.f32.mrb[0].mxu0
  %v155 = vpop.f32.mrb[0].mxu0
  %v156 = vadd.f32 0.0, %v155
  %v157 = vpop.f32.mrb[0].mxu0
  %158 = vmatprep.mubr.bf16.mxu0 0
  %159 = vmatmul.mubr.bf16.gmra.mrb[0].mxu0 %v89
  %v160 = vpop.f32.mrb[0].mxu0
  %v161 = vadd.f32 0.0, %v160
  %v162 = vpop.f32.mrb[0].mxu0
  %v163 = vpop.f32.mrb[0].mxu0
  %v164 = vadd.f32 0.0, %v163
  %v165 = vpop.f32.mrb[0].mxu0
  %166 = vmatprep.mubr.bf16.mxu0 0
  %167 = vmatmul.mubr.bf16.gmra.mrb[0].mxu0 %v92
  %v168 = vpop.f32.mrb[0].mxu0
  %v169 = vadd.f32 0.0, %v168
  %v170 = vpop.f32.mrb[0].mxu0
  %v171 = vpop.f32.mrb[0].mxu0
  %v172 = vadd.f32 0.0, %v171
  %v173 = vpop.f32.mrb[0].mxu0
  %174 = vmatprep.mubr.bf16.mxu0 0
  %175 = vmatmul.mubr.bf16.gmra.mrb[0].mxu0 %v95
  %v176 = vpop.f32.mrb[0].mxu0
  %v177 = vadd.f32 0.0, %v176
  %v178 = vpop.f32.mrb[0].mxu0
  %v179 = vpop.f32.mrb[0].mxu0
  %v180 = vadd.f32 0.0, %v179
  %v181 = vpop.f32.mrb[0].mxu0
  %182 = vmatprep.mubr.bf16.mxu0 0
  %183 = vmatmul.mubr.bf16.gmra.mrb[0].mxu0 %v98
  %v184 = vpop.f32.mrb[0].mxu0
  %v185 = vadd.f32 0.0, %v184
  %v186 = vpop.f32.mrb[0].mxu0
  %v187 = vpop.f32.mrb[0].mxu0
  %v188 = vadd.f32 0.0, %v187
  %v189 = vpop.f32.mrb[0].mxu0
  %190 = vmatprep.mubr.bf16.mxu0 0
  %191 = vmatmul.mubr.bf16.gmra.mrb[0].mxu0 %v101
  %v192 = vpop.f32.mrb[0].mxu0
  %v193 = vadd.f32 0.0, %v192
  %v194 = vpop.f32.mrb[0].mxu0
  %v195 = vpop.f32.mrb[0].mxu0
  %v196 = vadd.f32 0.0, %v195
  %v197 = vpop.f32.mrb[0].mxu0
  %198 = vmatprep.mubr.bf16.mxu0 0
  %199 = vmatmul.mubr.bf16.gmra.mrb[0].mxu0 %v104
  %v200 = vpop.f32.mrb[0].mxu0
  %v201 = vadd.f32 0.0, %v200
  %v202 = vpop.f32.mrb[0].mxu0
  %v203 = vpop.f32.mrb[0].mxu0
  %v204 = vadd.f32 0.0, %v203
  %v205 = vpop.f32.mrb[0].mxu0
  %206 = vdwg.mxu0
  %v207 = vld [vmem:[%s2] sm:$0x1]
  %v209 = vlaneseq
  %v210 = vshrl.u32 %v209, 7
  %v211 = vsub.s32 0, %v210
  %v212 = vrot.slane %v207, %v211
  %v214 = vadd.f32 %v145, %v212
  %v215 = vadd.f32 %v148, %v212
  %v216 = vadd.f32 %v153, %v212
  %v217 = vadd.f32 %v156, %v212
  %v218 = vadd.f32 %v161, %v212
  %v219 = vadd.f32 %v164, %v212
  %v220 = vadd.f32 %v169, %v212
  %v221 = vadd.f32 %v172, %v212
  %v222 = vadd.f32 %v177, %v212
  %v223 = vadd.f32 %v180, %v212
  %v224 = vadd.f32 %v185, %v212
  %v225 = vadd.f32 %v188, %v212
  %v226 = vadd.f32 %v193, %v212
  %v227 = vadd.f32 %v196, %v212
  %v228 = vadd.f32 %v201, %v212
  %v229 = vadd.f32 %v204, %v212
  %v230 = vld [vmem:[%s3] sm:$0xff]
  %v231 = vld [vmem:[%s3 + $0x8] sm:$0xff]
  %v232 = vld [vmem:[%s3 + $0x10] sm:$0xff]
  %v233 = vld [vmem:[%s3 + $0x18] sm:$0xff]
  %v234 = vld [vmem:[%s3 + $0x20] sm:$0xff]
  %v235 = vld [vmem:[%s3 + $0x28] sm:$0xff]
  %v236 = vld [vmem:[%s3 + $0x30] sm:$0xff]
  %v237 = vld [vmem:[%s3 + $0x38] sm:$0xff]
  %v238 = vld [vmem:[%s3 + $0x40] sm:$0xff]
  %v239 = vld [vmem:[%s3 + $0x48] sm:$0xff]
  %v240 = vld [vmem:[%s3 + $0x50] sm:$0xff]
  %v241 = vld [vmem:[%s3 + $0x58] sm:$0xff]
  %v242 = vld [vmem:[%s3 + $0x60] sm:$0xff]
  %v243 = vld [vmem:[%s3 + $0x68] sm:$0xff]
  %v244 = vld [vmem:[%s3 + $0x70] sm:$0xff]
  %v245 = vld [vmem:[%s3 + $0x78] sm:$0xff]
  %v246 = vadd.f32 %v214, %v230
  %v247 = vadd.f32 %v215, %v231
  %v248 = vadd.f32 %v216, %v232
  %v249 = vadd.f32 %v217, %v233
  %v250 = vadd.f32 %v218, %v234
  %v251 = vadd.f32 %v219, %v235
  %v252 = vadd.f32 %v220, %v236
  %v253 = vadd.f32 %v221, %v237
  %v254 = vadd.f32 %v222, %v238
  %v255 = vadd.f32 %v223, %v239
  %v256 = vadd.f32 %v224, %v240
  %v257 = vadd.f32 %v225, %v241
  %v258 = vadd.f32 %v226, %v242
  %v259 = vadd.f32 %v227, %v243
  %v260 = vadd.f32 %v228, %v244
  %v261 = vadd.f32 %v229, %v245
  %v262 = vsel %vm81, %v246, 0.0
  %v263 = vsel %vm81, %v247, 0.0
  %v264 = vadd.f32 %v262, %v263
  %v265 = vsel %vm81, %v248, 0.0
  %v266 = vadd.f32 %v264, %v265
  %v267 = vsel %vm81, %v249, 0.0
  %v268 = vadd.f32 %v266, %v267
  %v269 = vsel %vm81, %v250, 0.0
  %v270 = vadd.f32 %v268, %v269
  %v271 = vsel %vm81, %v251, 0.0
  %v272 = vadd.f32 %v270, %v271
  %v273 = vsel %vm81, %v252, 0.0
  %v274 = vadd.f32 %v272, %v273
  %v275 = vsel %vm81, %v253, 0.0
  %v276 = vadd.f32 %v274, %v275
  %v277 = vsel %vm81, %v254, 0.0
  %v278 = vadd.f32 %v276, %v277
  %v279 = vsel %vm81, %v255, 0.0
  %v280 = vadd.f32 %v278, %v279
  %v281 = vsel %vm81, %v256, 0.0
  %v282 = vadd.f32 %v280, %v281
  %v283 = vsel %vm81, %v257, 0.0
  %v284 = vadd.f32 %v282, %v283
  %v285 = vsel %vm81, %v258, 0.0
  %v286 = vadd.f32 %v284, %v285
  %v287 = vsel %vm81, %v259, 0.0
  %v288 = vadd.f32 %v286, %v287
  %v289 = vsel %vm81, %v260, 0.0
  %v290 = vadd.f32 %v288, %v289
  %v291 = vsel %vm81, %v261, 0.0
  %v292 = vadd.f32 %v290, %v291
  %v293 = vrot.slane %v292, 4
  %v294 = vadd.f32 %v292, %v293
  %v295 = vrot.slane %v294, 2
  %v296 = vadd.f32 %v294, %v295
  %v297 = vrot.slane %v296, 1
  %v298 = vadd.f32 %v296, %v297
  %v299 = vadd.f32 %v298, 0.0
  %v300 = vmul.f32 %v299, 0.0078125
  %v301 = vsub.f32 %v246, %v300
  %v302 = vsub.f32 %v247, %v300
  %v303 = vsub.f32 %v248, %v300
  %v304 = vsub.f32 %v249, %v300
  %v305 = vsub.f32 %v250, %v300
  %v306 = vsub.f32 %v251, %v300
  %v307 = vsub.f32 %v252, %v300
  %v308 = vsub.f32 %v253, %v300
  %v309 = vsub.f32 %v254, %v300
  %v310 = vsub.f32 %v255, %v300
  %v311 = vsub.f32 %v256, %v300
  %v312 = vsub.f32 %v257, %v300
  %v313 = vsub.f32 %v258, %v300
  %v314 = vsub.f32 %v259, %v300
  %v315 = vsub.f32 %v260, %v300
  %v316 = vsub.f32 %v261, %v300
  %v317 = vmul.f32 %v301, %v301
  %v318 = vmul.f32 %v302, %v302
  %v319 = vmul.f32 %v303, %v303
  %v320 = vmul.f32 %v304, %v304
  %v321 = vmul.f32 %v305, %v305
  %v322 = vmul.f32 %v306, %v306
  %v323 = vmul.f32 %v307, %v307
  %v324 = vmul.f32 %v308, %v308
  %v325 = vmul.f32 %v309, %v309
  %v326 = vmul.f32 %v310, %v310
  %v327 = vmul.f32 %v311, %v311
  %v328 = vmul.f32 %v312, %v312
  %v329 = vmul.f32 %v313, %v313
  %v330 = vmul.f32 %v314, %v314
  %v331 = vmul.f32 %v315, %v315
  %v332 = vmul.f32 %v316, %v316
  %v333 = vsel %vm81, %v317, 0.0
  %v334 = vsel %vm81, %v318, 0.0
  %v335 = vadd.f32 %v333, %v334
  %v336 = vsel %vm81, %v319, 0.0
  %v337 = vadd.f32 %v335, %v336
  %v338 = vsel %vm81, %v320, 0.0
  %v339 = vadd.f32 %v337, %v338
  %v340 = vsel %vm81, %v321, 0.0
  %v341 = vadd.f32 %v339, %v340
  %v342 = vsel %vm81, %v322, 0.0
  %v343 = vadd.f32 %v341, %v342
  %v344 = vsel %vm81, %v323, 0.0
  %v345 = vadd.f32 %v343, %v344
  %v346 = vsel %vm81, %v324, 0.0
  %v347 = vadd.f32 %v345, %v346
  %v348 = vsel %vm81, %v325, 0.0
  %v349 = vadd.f32 %v347, %v348
  %v350 = vsel %vm81, %v326, 0.0
  %v351 = vadd.f32 %v349, %v350
  %v352 = vsel %vm81, %v327, 0.0
  %v353 = vadd.f32 %v351, %v352
  %v354 = vsel %vm81, %v328, 0.0
  %v355 = vadd.f32 %v353, %v354
  %v356 = vsel %vm81, %v329, 0.0
  %v357 = vadd.f32 %v355, %v356
  %v358 = vsel %vm81, %v330, 0.0
  %v359 = vadd.f32 %v357, %v358
  %v360 = vsel %vm81, %v331, 0.0
  %v361 = vadd.f32 %v359, %v360
  %v362 = vsel %vm81, %v332, 0.0
  %v363 = vadd.f32 %v361, %v362
  %v364 = vrot.slane %v363, 4
  %v365 = vadd.f32 %v363, %v364
  %v366 = vrot.slane %v365, 2
  %v367 = vadd.f32 %v365, %v366
  %v368 = vrot.slane %v367, 1
  %v369 = vadd.f32 %v367, %v368
  %v370 = vadd.f32 %v369, 0.0
  %v371 = vmul.f32 %v370, 0.0078125
  %v372 = vld [vmem:[%s4] sm:$0x1]
  %v373 = vadd.f32 %v371, 1e-05
  %v374 = vrsqrt.pop %v373
  %v375 = vmul.f32 %v372, %v374
  %v377 = vlaneseq
  %v378 = vshrl.u32 %v377, 7
  %v379 = vsub.s32 0, %v378
  %v380 = vrot.slane %v375, %v379
  %v382 = vmul.f32 %v301, %v380
  %v383 = vmul.f32 %v302, %v380
  %v384 = vmul.f32 %v303, %v380
  %v385 = vmul.f32 %v304, %v380
  %v386 = vmul.f32 %v305, %v380
  %v387 = vmul.f32 %v306, %v380
  %v388 = vmul.f32 %v307, %v380
  %v389 = vmul.f32 %v308, %v380
  %v390 = vmul.f32 %v309, %v380
  %v391 = vmul.f32 %v310, %v380
  %v392 = vmul.f32 %v311, %v380
  %v393 = vmul.f32 %v312, %v380
  %v394 = vmul.f32 %v313, %v380
  %v395 = vmul.f32 %v314, %v380
  %v396 = vmul.f32 %v315, %v380
  %v397 = vmul.f32 %v316, %v380
  %v398 = vld [vmem:[%s5] sm:$0x1]
  %v400 = vlaneseq
  %v401 = vshrl.u32 %v400, 7
  %v402 = vsub.s32 0, %v401
  %v403 = vrot.slane %v398, %v402
  %v405 = vadd.f32 %v382, %v403
  %v406 = vadd.f32 %v383, %v403
  %v407 = vadd.f32 %v384, %v403
  %v408 = vadd.f32 %v385, %v403
  %v409 = vadd.f32 %v386, %v403
  %v410 = vadd.f32 %v387, %v403
  %v411 = vadd.f32 %v388, %v403
  %v412 = vadd.f32 %v389, %v403
  %v413 = vadd.f32 %v390, %v403
  %v414 = vadd.f32 %v391, %v403
  %v415 = vadd.f32 %v392, %v403
  %v416 = vadd.f32 %v393, %v403
  %v417 = vadd.f32 %v394, %v403
  %v418 = vadd.f32 %v395, %v403
  %v419 = vadd.f32 %v396, %v403
  %v420 = vadd.f32 %v397, %v403
  %421 = vst.msk [vmem:[%s6] sm:$0xff] %vm81, %v405
  %422 = vst.msk [vmem:[%s6 + $0x8] sm:$0xff] %vm81, %v406
  %423 = vst.msk [vmem:[%s6 + $0x10] sm:$0xff] %vm81, %v407
  %424 = vst.msk [vmem:[%s6 + $0x18] sm:$0xff] %vm81, %v408
  %425 = vst.msk [vmem:[%s6 + $0x20] sm:$0xff] %vm81, %v409
  %426 = vst.msk [vmem:[%s6 + $0x28] sm:$0xff] %vm81, %v410
  %427 = vst.msk [vmem:[%s6 + $0x30] sm:$0xff] %vm81, %v411
  %428 = vst.msk [vmem:[%s6 + $0x38] sm:$0xff] %vm81, %v412
  %429 = vst.msk [vmem:[%s6 + $0x40] sm:$0xff] %vm81, %v413
  %430 = vst.msk [vmem:[%s6 + $0x48] sm:$0xff] %vm81, %v414
  %431 = vst.msk [vmem:[%s6 + $0x50] sm:$0xff] %vm81, %v415
  %432 = vst.msk [vmem:[%s6 + $0x58] sm:$0xff] %vm81, %v416
  %433 = vst.msk [vmem:[%s6 + $0x60] sm:$0xff] %vm81, %v417
  %434 = vst.msk [vmem:[%s6 + $0x68] sm:$0xff] %vm81, %v418
  %435 = vst.msk [vmem:[%s6 + $0x70] sm:$0xff] %vm81, %v419
  %436 = vst.msk [vmem:[%s6 + $0x78] sm:$0xff] %vm81, %v420
  // Predicated region
  $region26: #{cvae_forward.16} parent=0 // pred_check
    _
  $region27: #{cvae_forward.16} parent=0 // pred_check_branch
    %438 = sbr.rel (0) target = $region29
  $region28: #{cvae_forward.16} parent=0 // pred_region
    _
  $region29: #{cvae_forward.16} parent=0 // pred_fallthru
    _
  // Predicated region
  $region30: #{cvae_forward.16} parent=0 // pred_check
    _
  $region31: #{cvae_forward.16} parent=0 // pred_check_branch
    %440 = sbr.rel (0) target = $region33
  $region32: #{cvae_forward.16} parent=0 // pred_region
    _
  $region33: #{cvae_forward.16} parent=0 // pred_fallthru
    _

// kernel: cvae_forward.18
$region0: #{cvae_forward.18}
  #allocation0 [shape = 'u32[]', space=smem, size = 0x4, offset = 0x4, fixed_abs, tag = 'smem constant byte address 0x4 - core index']
  #allocation1 [shape = 'u32[144,128]{1,0:T(1,128)}', space=vmem, size = 0x12000, scoped, tag = 'internal scratch']
  %s0 = inlined_call_operand.vmem [shape: bf16[1,128,8], index: 0, kind: input, shape index: {}]
  %s1 = inlined_call_operand.vmem [shape: bf16[1,8,8], index: 1, kind: input, shape index: {}]
  %s2 = inlined_call_operand.vmem [shape: f32[1,1,8], index: 2, kind: input, shape index: {}]
  %s3 = inlined_call_operand.vmem [shape: f32[1,128,8], index: 3, kind: input, shape index: {}]
  %s4 = inlined_call_operand.vmem [shape: f32[1,128,8], index: 4, kind: output, shape index: {}]
  %s5 = sld [smem:[#allocation0]]
  $region26: #{cvae_forward.18} parent=0
    _
  %s7 = ssub.s32 1, %s5
  %s8 = scalar_select 0, %s7, %s5
  // Predicated region
  $region2: #{cvae_forward.18} parent=0 // pred_check
    _
  $region3: #{cvae_forward.18} parent=0 // pred_check_branch
    %10 = sbr.rel (0) target = $region5
  $region4: #{cvae_forward.18} parent=0 // pred_region
    _
  $region5: #{cvae_forward.18} parent=0 // pred_fallthru
    _
  // Predicated region
  $region6: #{cvae_forward.18} parent=0 // pred_check
    _
  $region7: #{cvae_forward.18} parent=0 // pred_check_branch
    %12 = sbr.rel (0) target = $region9
  $region8: #{cvae_forward.18} parent=0 // pred_region
    _
  $region9: #{cvae_forward.18} parent=0 // pred_fallthru
    _
  // Predicated region
  $region10: #{cvae_forward.18} parent=0 // pred_check
    _
  $region11: #{cvae_forward.18} parent=0 // pred_check_branch
    %14 = sbr.rel (0) target = $region13
  $region12: #{cvae_forward.18} parent=0 // pred_region
    _
  $region13: #{cvae_forward.18} parent=0 // pred_fallthru
    _
  // Predicated region
  $region14: #{cvae_forward.18} parent=0 // pred_check
    _
  $region15: #{cvae_forward.18} parent=0 // pred_check_branch
    %16 = sbr.rel (0) target = $region17
  $region16: #{cvae_forward.18} parent=0 // pred_region
    _
  $region17: #{cvae_forward.18} parent=0 // pred_fallthru
    _
  %v18 = vld [vmem:[%s0] sm:$0xf]
  %v19 = vld [vmem:[%s0 + $0x4] sm:$0xf]
  %v20 = vld [vmem:[%s0 + $0x8] sm:$0xf]
  %v21 = vld [vmem:[%s0 + $0xc] sm:$0xf]
  %v22 = vld [vmem:[%s0 + $0x10] sm:$0xf]
  %v23 = vld [vmem:[%s0 + $0x14] sm:$0xf]
  %v24 = vld [vmem:[%s0 + $0x18] sm:$0xf]
  %v25 = vld [vmem:[%s0 + $0x1c] sm:$0xf]
  %v26 = vld [vmem:[%s0 + $0x20] sm:$0xf]
  %v27 = vld [vmem:[%s0 + $0x24] sm:$0xf]
  %v28 = vld [vmem:[%s0 + $0x28] sm:$0xf]
  %v29 = vld [vmem:[%s0 + $0x2c] sm:$0xf]
  %v30 = vld [vmem:[%s0 + $0x30] sm:$0xf]
  %v31 = vld [vmem:[%s0 + $0x34] sm:$0xf]
  %v32 = vld [vmem:[%s0 + $0x38] sm:$0xf]
  %v33 = vld [vmem:[%s0 + $0x3c] sm:$0xf]
  %v34 = vld [vmem:[%s1] sm:$0xf]
  %v51 = vunpack.c.l.b16 %v18
  %v52 = vunpack.c.l.b16 %v19
  %v53 = vunpack.c.l.b16 %v20
  %v54 = vunpack.c.l.b16 %v21
  %v55 = vunpack.c.l.b16 %v22
  %v56 = vunpack.c.l.b16 %v23
  %v57 = vunpack.c.l.b16 %v24
  %v58 = vunpack.c.l.b16 %v25
  %v59 = vunpack.c.l.b16 %v26
  %v60 = vunpack.c.l.b16 %v27
  %v61 = vunpack.c.l.b16 %v28
  %v62 = vunpack.c.l.b16 %v29
  %v63 = vunpack.c.l.b16 %v30
  %v64 = vunpack.c.l.b16 %v31
  %v65 = vunpack.c.l.b16 %v32
  %v66 = vunpack.c.l.b16 %v33
  %v67 = vpack.c.b16 %v52, %v51
  %v68 = vpack.c.b16 %v54, %v53
  %v69 = vpack.c.b16 %v56, %v55
  %v70 = vpack.c.b16 %v58, %v57
  %v71 = vpack.c.b16 %v60, %v59
  %v72 = vpack.c.b16 %v62, %v61
  %v73 = vpack.c.b16 %v64, %v63
  %v74 = vpack.c.b16 %v66, %v65
  %vm75 = vcmask 64512
  %v77 = vsel %vm75, %v67, 0
  %v80 = vsel %vm75, %v68, 0
  %v83 = vsel %vm75, %v69, 0
  %v86 = vsel %vm75, %v70, 0
  %v89 = vsel %vm75, %v71, 0
  %v92 = vsel %vm75, %v72, 0
  %v95 = vsel %vm75, %v73, 0
  %v98 = vsel %vm75, %v74, 0
  %vm100 = vcmask 1043456
  %v102 = vsel %vm100, %v34, 0
  %104 = vmatprep.subr.bf16.mxu0 0
  %105 = vmatpush1.bf16.msra.mxu0 %v102
  %106 = vmatprep.subr.bf16.mxu0 0
  %107 = vmatpush1.bf16.msra.mxu0 0
  %108 = vmatprep.subr.bf16.mxu0 0
  %109 = vmatpush1.bf16.msra.mxu0 0
  %110 = vmatprep.subr.bf16.mxu0 0
  %111 = vmatpush1.bf16.msra.mxu0 0
  %112 = vmatprep.subr.bf16.mxu0 0
  %113 = vmatpush1.bf16.msra.mxu0 0
  %114 = vmatprep.subr.bf16.mxu0 0
  %115 = vmatpush1.bf16.msra.mxu0 0
  %116 = vmatprep.subr.bf16.mxu0 0
  %117 = vmatpush1.bf16.msra.mxu0 0
  %118 = vmatprep.subr.bf16.mxu0 0
  %119 = vmatpush1.bf16.msra.mxu0 0
  %120 = vmatprep.subr.bf16.mxu0 0
  %121 = vmatpush1.bf16.msra.mxu0 0
  %122 = vmatprep.subr.bf16.mxu0 0
  %123 = vmatpush1.bf16.msra.mxu0 0
  %124 = vmatprep.subr.bf16.mxu0 0
  %125 = vmatpush1.bf16.msra.mxu0 0
  %126 = vmatprep.subr.bf16.mxu0 0
  %127 = vmatpush1.bf16.msra.mxu0 0
  %128 = vmatprep.subr.bf16.mxu0 0
  %129 = vmatpush1.bf16.msra.mxu0 0
  %130 = vmatprep.subr.bf16.mxu0 0
  %131 = vmatpush1.bf16.msra.mxu0 0
  %132 = vmatprep.subr.bf16.mxu0 0
  %133 = vmatpush1.bf16.msra.mxu0 0
  %134 = vmatprep.subr.bf16.mxu0 0
  %135 = vmatpush1.bf16.msra.mxu0 0
  %136 = vmatprep.mubr.bf16.mxu0 0
  %137 = vmatmul.mubr.bf16.gmra.mrb[0].mxu0 %v77
  %v138 = vpop.f32.mrb[0].mxu0
  %v139 = vadd.f32 0.0, %v138
  %v140 = vpop.f32.mrb[0].mxu0
  %v141 = vpop.f32.mrb[0].mxu0
  %v142 = vadd.f32 0.0, %v141
  %v143 = vpop.f32.mrb[0].mxu0
  %144 = vmatprep.mubr.bf16.mxu0 0
  %145 = vmatmul.mubr.bf16.gmra.mrb[0].mxu0 %v80
  %v146 = vpop.f32.mrb[0].mxu0
  %v147 = vadd.f32 0.0, %v146
  %v148 = vpop.f32.mrb[0].mxu0
  %v149 = vpop.f32.mrb[0].mxu0
  %v150 = vadd.f32 0.0, %v149
  %v151 = vpop.f32.mrb[0].mxu0
  %152 = vmatprep.mubr.bf16.mxu0 0
  %153 = vmatmul.mubr.bf16.gmra.mrb[0].mxu0 %v83
  %v154 = vpop.f32.mrb[0].mxu0
  %v155 = vadd.f32 0.0, %v154
  %v156 = vpop.f32.mrb[0].mxu0
  %v157 = vpop.f32.mrb[0].mxu0
  %v158 = vadd.f32 0.0, %v157
  %v159 = vpop.f32.mrb[0].mxu0
  %160 = vmatprep.mubr.bf16.mxu0 0
  %161 = vmatmul.mubr.bf16.gmra.mrb[0].mxu0 %v86
  %v162 = vpop.f32.mrb[0].mxu0
  %v163 = vadd.f32 0.0, %v162
  %v164 = vpop.f32.mrb[0].mxu0
  %v165 = vpop.f32.mrb[0].mxu0
  %v166 = vadd.f32 0.0, %v165
  %v167 = vpop.f32.mrb[0].mxu0
  %168 = vmatprep.mubr.bf16.mxu0 0
  %169 = vmatmul.mubr.bf16.gmra.mrb[0].mxu0 %v89
  %v170 = vpop.f32.mrb[0].mxu0
  %v171 = vadd.f32 0.0, %v170
  %v172 = vpop.f32.mrb[0].mxu0
  %v173 = vpop.f32.mrb[0].mxu0
  %v174 = vadd.f32 0.0, %v173
  %v175 = vpop.f32.mrb[0].mxu0
  %176 = vmatprep.mubr.bf16.mxu0 0
  %177 = vmatmul.mubr.bf16.gmra.mrb[0].mxu0 %v92
  %v178 = vpop.f32.mrb[0].mxu0
  %v179 = vadd.f32 0.0, %v178
  %v180 = vpop.f32.mrb[0].mxu0
  %v181 = vpop.f32.mrb[0].mxu0
  %v182 = vadd.f32 0.0, %v181
  %v183 = vpop.f32.mrb[0].mxu0
  %184 = vmatprep.mubr.bf16.mxu0 0
  %185 = vmatmul.mubr.bf16.gmra.mrb[0].mxu0 %v95
  %v186 = vpop.f32.mrb[0].mxu0
  %v187 = vadd.f32 0.0, %v186
  %v188 = vpop.f32.mrb[0].mxu0
  %v189 = vpop.f32.mrb[0].mxu0
  %v190 = vadd.f32 0.0, %v189
  %v191 = vpop.f32.mrb[0].mxu0
  %192 = vmatprep.mubr.bf16.mxu0 0
  %193 = vmatmul.mubr.bf16.gmra.mrb[0].mxu0 %v98
  %v194 = vpop.f32.mrb[0].mxu0
  %v195 = vadd.f32 0.0, %v194
  %v196 = vpop.f32.mrb[0].mxu0
  %v197 = vpop.f32.mrb[0].mxu0
  %v198 = vadd.f32 0.0, %v197
  %v199 = vpop.f32.mrb[0].mxu0
  %200 = vdwg.mxu0
  %v201 = vld [vmem:[%s2] sm:$0x1]
  %v203 = vlaneseq
  %v204 = vshrl.u32 %v203, 7
  %v205 = vsub.s32 0, %v204
  %v206 = vrot.slane %v201, %v205
  %v208 = vadd.f32 %v139, %v206
  %v209 = vadd.f32 %v142, %v206
  %v210 = vadd.f32 %v147, %v206
  %v211 = vadd.f32 %v150, %v206
  %v212 = vadd.f32 %v155, %v206
  %v213 = vadd.f32 %v158, %v206
  %v214 = vadd.f32 %v163, %v206
  %v215 = vadd.f32 %v166, %v206
  %v216 = vadd.f32 %v171, %v206
  %v217 = vadd.f32 %v174, %v206
  %v218 = vadd.f32 %v179, %v206
  %v219 = vadd.f32 %v182, %v206
  %v220 = vadd.f32 %v187, %v206
  %v221 = vadd.f32 %v190, %v206
  %v222 = vadd.f32 %v195, %v206
  %v223 = vadd.f32 %v198, %v206
  %v224 = vld [vmem:[%s3] sm:$0xff]
  %v225 = vld [vmem:[%s3 + $0x8] sm:$0xff]
  %v226 = vld [vmem:[%s3 + $0x10] sm:$0xff]
  %v227 = vld [vmem:[%s3 + $0x18] sm:$0xff]
  %v228 = vld [vmem:[%s3 + $0x20] sm:$0xff]
  %v229 = vld [vmem:[%s3 + $0x28] sm:$0xff]
  %v230 = vld [vmem:[%s3 + $0x30] sm:$0xff]
  %v231 = vld [vmem:[%s3 + $0x38] sm:$0xff]
  %v232 = vld [vmem:[%s3 + $0x40] sm:$0xff]
  %v233 = vld [vmem:[%s3 + $0x48] sm:$0xff]
  %v234 = vld [vmem:[%s3 + $0x50] sm:$0xff]
  %v235 = vld [vmem:[%s3 + $0x58] sm:$0xff]
  %v236 = vld [vmem:[%s3 + $0x60] sm:$0xff]
  %v237 = vld [vmem:[%s3 + $0x68] sm:$0xff]
  %v238 = vld [vmem:[%s3 + $0x70] sm:$0xff]
  %v239 = vld [vmem:[%s3 + $0x78] sm:$0xff]
  %v240 = vadd.f32 %v208, %v224
  %v241 = vadd.f32 %v209, %v225
  %v242 = vadd.f32 %v210, %v226
  %v243 = vadd.f32 %v211, %v227
  %v244 = vadd.f32 %v212, %v228
  %v245 = vadd.f32 %v213, %v229
  %v246 = vadd.f32 %v214, %v230
  %v247 = vadd.f32 %v215, %v231
  %v248 = vadd.f32 %v216, %v232
  %v249 = vadd.f32 %v217, %v233
  %v250 = vadd.f32 %v218, %v234
  %v251 = vadd.f32 %v219, %v235
  %v252 = vadd.f32 %v220, %v236
  %v253 = vadd.f32 %v221, %v237
  %v254 = vadd.f32 %v222, %v238
  %v255 = vadd.f32 %v223, %v239
  %256 = vst.msk [vmem:[%s4] sm:$0xff] %vm75, %v240
  %257 = vst.msk [vmem:[%s4 + $0x8] sm:$0xff] %vm75, %v241
  %258 = vst.msk [vmem:[%s4 + $0x10] sm:$0xff] %vm75, %v242
  %259 = vst.msk [vmem:[%s4 + $0x18] sm:$0xff] %vm75, %v243
  %260 = vst.msk [vmem:[%s4 + $0x20] sm:$0xff] %vm75, %v244
  %261 = vst.msk [vmem:[%s4 + $0x28] sm:$0xff] %vm75, %v245
  %262 = vst.msk [vmem:[%s4 + $0x30] sm:$0xff] %vm75, %v246
  %263 = vst.msk [vmem:[%s4 + $0x38] sm:$0xff] %vm75, %v247
  %264 = vst.msk [vmem:[%s4 + $0x40] sm:$0xff] %vm75, %v248
  %265 = vst.msk [vmem:[%s4 + $0x48] sm:$0xff] %vm75, %v249
  %266 = vst.msk [vmem:[%s4 + $0x50] sm:$0xff] %vm75, %v250
  %267 = vst.msk [vmem:[%s4 + $0x58] sm:$0xff] %vm75, %v251
  %268 = vst.msk [vmem:[%s4 + $0x60] sm:$0xff] %vm75, %v252
  %269 = vst.msk [vmem:[%s4 + $0x68] sm:$0xff] %vm75, %v253
  %270 = vst.msk [vmem:[%s4 + $0x70] sm:$0xff] %vm75, %v254
  %271 = vst.msk [vmem:[%s4 + $0x78] sm:$0xff] %vm75, %v255
  // Predicated region
  $region18: #{cvae_forward.18} parent=0 // pred_check
    _
  $region19: #{cvae_forward.18} parent=0 // pred_check_branch
    %273 = sbr.rel (0) target = $region21
  $region20: #{cvae_forward.18} parent=0 // pred_region
    _
  $region21: #{cvae_forward.18} parent=0 // pred_fallthru
    _
  // Predicated region
  $region22: #{cvae_forward.18} parent=0 // pred_check
    _
  $region23: #{cvae_forward.18} parent=0 // pred_check_branch
    %275 = sbr.rel (0) target = $region25
  $region24: #{cvae_forward.18} parent=0 // pred_region
    _
  $region25: #{cvae_forward.18} parent=0 // pred_fallthru
    _

// kernel: cvae_forward.19
$region0: #{cvae_forward.19}
  #allocation0 [shape = 'u32[]', space=smem, size = 0x4, offset = 0x4, fixed_abs, tag = 'smem constant byte address 0x4 - core index']
  #allocation1 [shape = 'u32[144,128]{1,0:T(1,128)}', space=vmem, size = 0x12000, scoped, tag = 'internal scratch']
  %s0 = inlined_call_operand.vmem [shape: f32[1,2,512], index: 0, kind: input, shape index: {}]
  %s1 = inlined_call_operand.vmem [shape: f32[1,512,1024], index: 1, kind: input, shape index: {}]
  %s2 = inlined_call_operand.vmem [shape: f32[1,1,1024], index: 2, kind: input, shape index: {}]
  %s3 = inlined_call_operand.vmem [shape: f32[1,2,1024], index: 3, kind: output, shape index: {}]
  %s4 = sld [smem:[#allocation0]]
  $region22: #{cvae_forward.19} parent=0
    _
  %s6 = ssub.s32 1, %s4
  %s7 = scalar_select 0, %s6, %s4
  // Predicated region
  $region2: #{cvae_forward.19} parent=0 // pred_check
    _
  $region3: #{cvae_forward.19} parent=0 // pred_check_branch
    %9 = sbr.rel (0) target = $region5
  $region4: #{cvae_forward.19} parent=0 // pred_region
    _
  $region5: #{cvae_forward.19} parent=0 // pred_fallthru
    _
  // Predicated region
  $region6: #{cvae_forward.19} parent=0 // pred_check
    _
  $region7: #{cvae_forward.19} parent=0 // pred_check_branch
    %11 = sbr.rel (0) target = $region9
  $region8: #{cvae_forward.19} parent=0 // pred_region
    _
  $region9: #{cvae_forward.19} parent=0 // pred_fallthru
    _
  // Predicated region
  $region10: #{cvae_forward.19} parent=0 // pred_check
    _
  $region11: #{cvae_forward.19} parent=0 // pred_check_branch
    %13 = sbr.rel (0) target = $region13
  $region12: #{cvae_forward.19} parent=0 // pred_region
    _
  $region13: #{cvae_forward.19} parent=0 // pred_fallthru
    _
  %v14 = vld [vmem:[%s0] sm:$0xff]
  %v15 = vld [vmem:[%s1] sm:$0xff]
  %v16 = vld [vmem:[%s1 + $0x8] sm:$0xff]
  %v17 = vld [vmem:[%s1 + $0x10] sm:$0xff]
  %v18 = vld [vmem:[%s1 + $0x18] sm:$0xff]
  %v19 = vld [vmem:[%s1 + $0x20] sm:$0xff]
  %v20 = vld [vmem:[%s1 + $0x28] sm:$0xff]
  %v21 = vld [vmem:[%s1 + $0x30] sm:$0xff]
  %v22 = vld [vmem:[%s1 + $0x38] sm:$0xff]
  %v23 = vld [vmem:[%s1 + $0x40] sm:$0xff]
  %v24 = vld [vmem:[%s1 + $0x48] sm:$0xff]
  %v25 = vld [vmem:[%s1 + $0x50] sm:$0xff]
  %v26 = vld [vmem:[%s1 + $0x58] sm:$0xff]
  %v27 = vld [vmem:[%s1 + $0x60] sm:$0xff]
  %v28 = vld [vmem:[%s1 + $0x68] sm:$0xff]
  %v29 = vld [vmem:[%s1 + $0x70] sm:$0xff]
  %v30 = vld [vmem:[%s1 + $0x78] sm:$0xff]
  %v31 = vld [vmem:[%s1 + $0x80] sm:$0xff]
  %v32 = vld [vmem:[%s1 + $0x88] sm:$0xff]
  %v33 = vld [vmem:[%s1 + $0x90] sm:$0xff]
  %v34 = vld [vmem:[%s1 + $0x98] sm:$0xff]
  %v35 = vld [vmem:[%s1 + $0xa0] sm:$0xff]
  %v36 = vld [vmem:[%s1 + $0xa8] sm:$0xff]
  %v37 = vld [vmem:[%s1 + $0xb0] sm:$0xff]
  %v38 = vld [vmem:[%s1 + $0xb8] sm:$0xff]
  %v39 = vld [vmem:[%s1 + $0xc0] sm:$0xff]
  %v40 = vld [vmem:[%s1 + $0xc8] sm:$0xff]
  %v41 = vld [vmem:[%s1 + $0xd0] sm:$0xff]
  %v42 = vld [vmem:[%s1 + $0xd8] sm:$0xff]
  %v43 = vld [vmem:[%s1 + $0xe0] sm:$0xff]
  %v44 = vld [vmem:[%s1 + $0xe8] sm:$0xff]
  %v45 = vld [vmem:[%s1 + $0xf0] sm:$0xff]
  %v46 = vld [vmem:[%s1 + $0xf8] sm:$0xff]
  %v47 = vld [vmem:[%s1 + $0x100] sm:$0xff]
  %v48 = vld [vmem:[%s1 + $0x108] sm:$0xff]
  %v49 = vld [vmem:[%s1 + $0x110] sm:$0xff]
  %v50 = vld [vmem:[%s1 + $0x118] sm:$0xff]
  %v51 = vld [vmem:[%s1 + $0x120] sm:$0xff]
  %v52 = vld [vmem:[%s1 + $0x128] sm:$0xff]
  %v53 = vld [vmem:[%s1 + $0x130] sm:$0xff]
  %v54 = vld [vmem:[%s1 + $0x138] sm:$0xff]
  %v55 = vld [vmem:[%s1 + $0x140] sm:$0xff]
  %v56 = vld [vmem:[%s1 + $0x148] sm:$0xff]
  %v57 = vld [vmem:[%s1 + $0x150] sm:$0xff]
  %v58 = vld [vmem:[%s1 + $0x158] sm:$0xff]
  %v59 = vld [vmem:[%s1 + $0x160] sm:$0xff]
  %v60 = vld [vmem:[%s1 + $0x168] sm:$0xff]
  %v61 = vld [vmem:[%s1 + $0x170] sm:$0xff]
  %v62 = vld [vmem:[%s1 + $0x178] sm:$0xff]
  %v63 = vld [vmem:[%s1 + $0x180] sm:$0xff]
  %v64 = vld [vmem:[%s1 + $0x188] sm:$0xff]
  %v65 = vld [vmem:[%s1 + $0x190] sm:$0xff]
  %v66 = vld [vmem:[%s1 + $0x198] sm:$0xff]
  %v67 = vld [vmem:[%s1 + $0x1a0] sm:$0xff]
  %v68 = vld [vmem:[%s1 + $0x1a8] sm:$0xff]
  %v69 = vld [vmem:[%s1 + $0x1b0] sm:$0xff]
  %v70 = vld [vmem:[%s1 + $0x1b8] sm:$0xff]
  %v71 = vld [vmem:[%s1 + $0x1c0] sm:$0xff]
  %v72 = vld [vmem:[%s1 + $0x1c8] sm:$0xff]
  %v73 = vld [vmem:[%s1 + $0x1d0] sm:$0xff]
  %v74 = vld [vmem:[%s1 + $0x1d8] sm:$0xff]
  %v75 = vld [vmem:[%s1 + $0x1e0] sm:$0xff]
  %v76 = vld [vmem:[%s1 + $0x1e8] sm:$0xff]
  %v77 = vld [vmem:[%s1 + $0x1f0] sm:$0xff]
  %v78 = vld [vmem:[%s1 + $0x1f8] sm:$0xff]
  %v79 = vld [vmem:[%s1 + $0x200] sm:$0xff]
  %v80 = vld [vmem:[%s1 + $0x208] sm:$0xff]
  %v81 = vld [vmem:[%s1 + $0x210] sm:$0xff]
  %v82 = vld [vmem:[%s1 + $0x218] sm:$0xff]
  %v83 = vld [vmem:[%s1 + $0x220] sm:$0xff]
  %v84 = vld [vmem:[%s1 + $0x228] sm:$0xff]
  %v85 = vld [vmem:[%s1 + $0x230] sm:$0xff]
  %v86 = vld [vmem:[%s1 + $0x238] sm:$0xff]
  %v87 = vld [vmem:[%s1 + $0x240] sm:$0xff]
  %v88 = vld [vmem:[%s1 + $0x248] sm:$0xff]
  %v89 = vld [vmem:[%s1 + $0x250] sm:$0xff]
  %v90 = vld [vmem:[%s1 + $0x258] sm:$0xff]
  %v91 = vld [vmem:[%s1 + $0x260] sm:$0xff]
  %v92 = vld [vmem:[%s1 + $0x268] sm:$0xff]
  %v93 = vld [vmem:[%s1 + $0x270] sm:$0xff]
  %v94 = vld [vmem:[%s1 + $0x278] sm:$0xff]
  %v95 = vld [vmem:[%s1 + $0x280] sm:$0xff]
  %v96 = vld [vmem:[%s1 + $0x288] sm:$0xff]
  %v97 = vld [vmem:[%s1 + $0x290] sm:$0xff]
  %v98 = vld [vmem:[%s1 + $0x298] sm:$0xff]
  %v99 = vld [vmem:[%s1 + $0x2a0] sm:$0xff]
  %v100 = vld [vmem:[%s1 + $0x2a8] sm:$0xff]
  %v101 = vld [vmem:[%s1 + $0x2b0] sm:$0xff]
  %v102 = vld [vmem:[%s1 + $0x2b8] sm:$0xff]
  %v103 = vld [vmem:[%s1 + $0x2c0] sm:$0xff]
  %v104 = vld [vmem:[%s1 + $0x2c8] sm:$0xff]
  %v105 = vld [vmem:[%s1 + $0x2d0] sm:$0xff]
  %v106 = vld [vmem:[%s1 + $0x2d8] sm:$0xff]
  %v107 = vld [vmem:[%s1 + $0x2e0] sm:$0xff]
  %v108 = vld [vmem:[%s1 + $0x2e8] sm:$0xff]
  %v109 = vld [vmem:[%s1 + $0x2f0] sm:$0xff]
  %v110 = vld [vmem:[%s1 + $0x2f8] sm:$0xff]
  %v111 = vld [vmem:[%s1 + $0x300] sm:$0xff]
  %v112 = vld [vmem:[%s1 + $0x308] sm:$0xff]
  %v113 = vld [vmem:[%s1 + $0x310] sm:$0xff]
  %v114 = vld [vmem:[%s1 + $0x318] sm:$0xff]
  %v115 = vld [vmem:[%s1 + $0x320] sm:$0xff]
  %v116 = vld [vmem:[%s1 + $0x328] sm:$0xff]
  %v117 = vld [vmem:[%s1 + $0x330] sm:$0xff]
  %v118 = vld [vmem:[%s1 + $0x338] sm:$0xff]
  %v119 = vld [vmem:[%s1 + $0x340] sm:$0xff]
  %v120 = vld [vmem:[%s1 + $0x348] sm:$0xff]
  %v121 = vld [vmem:[%s1 + $0x350] sm:$0xff]
  %v122 = vld [vmem:[%s1 + $0x358] sm:$0xff]
  %v123 = vld [vmem:[%s1 + $0x360] sm:$0xff]
  %v124 = vld [vmem:[%s1 + $0x368] sm:$0xff]
  %v125 = vld [vmem:[%s1 + $0x370] sm:$0xff]
  %v126 = vld [vmem:[%s1 + $0x378] sm:$0xff]
  %v127 = vld [vmem:[%s1 + $0x380] sm:$0xff]
  %v128 = vld [vmem:[%s1 + $0x388] sm:$0xff]
  %v129 = vld [vmem:[%s1 + $0x390] sm:$0xff]
  %v130 = vld [vmem:[%s1 + $0x398] sm:$0xff]
  %v131 = vld [vmem:[%s1 + $0x3a0] sm:$0xff]
  %v132 = vld [vmem:[%s1 + $0x3a8] sm:$0xff]
  %v133 = vld [vmem:[%s1 + $0x3b0] sm:$0xff]
  %v134 = vld [vmem:[%s1 + $0x3b8] sm:$0xff]
  %v135 = vld [vmem:[%s1 + $0x3c0] sm:$0xff]
  %v136 = vld [vmem:[%s1 + $0x3c8] sm:$0xff]
  %v137 = vld [vmem:[%s1 + $0x3d0] sm:$0xff]
  %v138 = vld [vmem:[%s1 + $0x3d8] sm:$0xff]
  %v139 = vld [vmem:[%s1 + $0x3e0] sm:$0xff]
  %v140 = vld [vmem:[%s1 + $0x3e8] sm:$0xff]
  %v141 = vld [vmem:[%s1 + $0x3f0] sm:$0xff]
  %v142 = vld [vmem:[%s1 + $0x3f8] sm:$0xff]
  %v143 = vld [vmem:[%s1 + $0x400] sm:$0xff]
  %v144 = vld [vmem:[%s1 + $0x408] sm:$0xff]
  %v145 = vld [vmem:[%s1 + $0x410] sm:$0xff]
  %v146 = vld [vmem:[%s1 + $0x418] sm:$0xff]
  %v147 = vld [vmem:[%s1 + $0x420] sm:$0xff]
  %v148 = vld [vmem:[%s1 + $0x428] sm:$0xff]
  %v149 = vld [vmem:[%s1 + $0x430] sm:$0xff]
  %v150 = vld [vmem:[%s1 + $0x438] sm:$0xff]
  %v151 = vld [vmem:[%s1 + $0x440] sm:$0xff]
  %v152 = vld [vmem:[%s1 + $0x448] sm:$0xff]
  %v153 = vld [vmem:[%s1 + $0x450] sm:$0xff]
  %v154 = vld [vmem:[%s1 + $0x458] sm:$0xff]
  %v155 = vld [vmem:[%s1 + $0x460] sm:$0xff]
  %v156 = vld [vmem:[%s1 + $0x468] sm:$0xff]
  %v157 = vld [vmem:[%s1 + $0x470] sm:$0xff]
  %v158 = vld [vmem:[%s1 + $0x478] sm:$0xff]
  %v159 = vld [vmem:[%s1 + $0x480] sm:$0xff]
  %v160 = vld [vmem:[%s1 + $0x488] sm:$0xff]
  %v161 = vld [vmem:[%s1 + $0x490] sm:$0xff]
  %v162 = vld [vmem:[%s1 + $0x498] sm:$0xff]
  %v163 = vld [vmem:[%s1 + $0x4a0] sm:$0xff]
  %v164 = vld [vmem:[%s1 + $0x4a8] sm:$0xff]
  %v165 = vld [vmem:[%s1 + $0x4b0] sm:$0xff]
  %v166 = vld [vmem:[%s1 + $0x4b8] sm:$0xff]
  %v167 = vld [vmem:[%s1 + $0x4c0] sm:$0xff]
  %v168 = vld [vmem:[%s1 + $0x4c8] sm:$0xff]
  %v169 = vld [vmem:[%s1 + $0x4d0] sm:$0xff]
  %v170 = vld [vmem:[%s1 + $0x4d8] sm:$0xff]
  %v171 = vld [vmem:[%s1 + $0x4e0] sm:$0xff]
  %v172 = vld [vmem:[%s1 + $0x4e8] sm:$0xff]
  %v173 = vld [vmem:[%s1 + $0x4f0] sm:$0xff]
  %v174 = vld [vmem:[%s1 + $0x4f8] sm:$0xff]
  %v175 = vld [vmem:[%s1 + $0x500] sm:$0xff]
  %v176 = vld [vmem:[%s1 + $0x508] sm:$0xff]
  %v177 = vld [vmem:[%s1 + $0x510] sm:$0xff]
  %v178 = vld [vmem:[%s1 + $0x518] sm:$0xff]
  %v179 = vld [vmem:[%s1 + $0x520] sm:$0xff]
  %v180 = vld [vmem:[%s1 + $0x528] sm:$0xff]
  %v181 = vld [vmem:[%s1 + $0x530] sm:$0xff]
  %v182 = vld [vmem:[%s1 + $0x538] sm:$0xff]
  %v183 = vld [vmem:[%s1 + $0x540] sm:$0xff]
  %v184 = vld [vmem:[%s1 + $0x548] sm:$0xff]
  %v185 = vld [vmem:[%s1 + $0x550] sm:$0xff]
  %v186 = vld [vmem:[%s1 + $0x558] sm:$0xff]
  %v187 = vld [vmem:[%s1 + $0x560] sm:$0xff]
  %v188 = vld [vmem:[%s1 + $0x568] sm:$0xff]
  %v189 = vld [vmem:[%s1 + $0x570] sm:$0xff]
  %v190 = vld [vmem:[%s1 + $0x578] sm:$0xff]
  %v191 = vld [vmem:[%s1 + $0x580] sm:$0xff]
  %v192 = vld [vmem:[%s1 + $0x588] sm:$0xff]
  %v193 = vld [vmem:[%s1 + $0x590] sm:$0xff]
  %v194 = vld [vmem:[%s1 + $0x598] sm:$0xff]
  %v195 = vld [vmem:[%s1 + $0x5a0] sm:$0xff]
  %v196 = vld [vmem:[%s1 + $0x5a8] sm:$0xff]
  %v197 = vld [vmem:[%s1 + $0x5b0] sm:$0xff]
  %v198 = vld [vmem:[%s1 + $0x5b8] sm:$0xff]
  %v199 = vld [vmem:[%s1 + $0x5c0] sm:$0xff]
  %v200 = vld [vmem:[%s1 + $0x5c8] sm:$0xff]
  %v201 = vld [vmem:[%s1 + $0x5d0] sm:$0xff]
  %v202 = vld [vmem:[%s1 + $0x5d8] sm:$0xff]
  %v203 = vld [vmem:[%s1 + $0x5e0] sm:$0xff]
  %v204 = vld [vmem:[%s1 + $0x5e8] sm:$0xff]
  %v205 = vld [vmem:[%s1 + $0x5f0] sm:$0xff]
  %v206 = vld [vmem:[%s1 + $0x5f8] sm:$0xff]
  %v207 = vld [vmem:[%s1 + $0x600] sm:$0xff]
  %v208 = vld [vmem:[%s1 + $0x608] sm:$0xff]
  %v209 = vld [vmem:[%s1 + $0x610] sm:$0xff]
  %v210 = vld [vmem:[%s1 + $0x618] sm:$0xff]
  %v211 = vld [vmem:[%s1 + $0x620] sm:$0xff]
  %v212 = vld [vmem:[%s1 + $0x628] sm:$0xff]
  %v213 = vld [vmem:[%s1 + $0x630] sm:$0xff]
  %v214 = vld [vmem:[%s1 + $0x638] sm:$0xff]
  %v215 = vld [vmem:[%s1 + $0x640] sm:$0xff]
  %v216 = vld [vmem:[%s1 + $0x648] sm:$0xff]
  %v217 = vld [vmem:[%s1 + $0x650] sm:$0xff]
  %v218 = vld [vmem:[%s1 + $0x658] sm:$0xff]
  %v219 = vld [vmem:[%s1 + $0x660] sm:$0xff]
  %v220 = vld [vmem:[%s1 + $0x668] sm:$0xff]
  %v221 = vld [vmem:[%s1 + $0x670] sm:$0xff]
  %v222 = vld [vmem:[%s1 + $0x678] sm:$0xff]
  %v223 = vld [vmem:[%s1 + $0x680] sm:$0xff]
  %v224 = vld [vmem:[%s1 + $0x688] sm:$0xff]
  %v225 = vld [vmem:[%s1 + $0x690] sm:$0xff]
  %v226 = vld [vmem:[%s1 + $0x698] sm:$0xff]
  %v227 = vld [vmem:[%s1 + $0x6a0] sm:$0xff]
  %v228 = vld [vmem:[%s1 + $0x6a8] sm:$0xff]
  %v229 = vld [vmem:[%s1 + $0x6b0] sm:$0xff]
  %v230 = vld [vmem:[%s1 + $0x6b8] sm:$0xff]
  %v231 = vld [vmem:[%s1 + $0x6c0] sm:$0xff]
  %v232 = vld [vmem:[%s1 + $0x6c8] sm:$0xff]
  %v233 = vld [vmem:[%s1 + $0x6d0] sm:$0xff]
  %v234 = vld [vmem:[%s1 + $0x6d8] sm:$0xff]
  %v235 = vld [vmem:[%s1 + $0x6e0] sm:$0xff]
  %v236 = vld [vmem:[%s1 + $0x6e8] sm:$0xff]
  %v237 = vld [vmem:[%s1 + $0x6f0] sm:$0xff]
  %v238 = vld [vmem:[%s1 + $0x6f8] sm:$0xff]
  %v239 = vld [vmem:[%s1 + $0x700] sm:$0xff]
  %v240 = vld [vmem:[%s1 + $0x708] sm:$0xff]
  %v241 = vld [vmem:[%s1 + $0x710] sm:$0xff]
  %v242 = vld [vmem:[%s1 + $0x718] sm:$0xff]
  %v243 = vld [vmem:[%s1 + $0x720] sm:$0xff]
  %v244 = vld [vmem:[%s1 + $0x728] sm:$0xff]
  %v245 = vld [vmem:[%s1 + $0x730] sm:$0xff]
  %v246 = vld [vmem:[%s1 + $0x738] sm:$0xff]
  %v247 = vld [vmem:[%s1 + $0x740] sm:$0xff]
  %v248 = vld [vmem:[%s1 + $0x748] sm:$0xff]
  %v249 = vld [vmem:[%s1 + $0x750] sm:$0xff]
  %v250 = vld [vmem:[%s1 + $0x758] sm:$0xff]
  %v251 = vld [vmem:[%s1 + $0x760] sm:$0xff]
  %v252 = vld [vmem:[%s1 + $0x768] sm:$0xff]
  %v253 = vld [vmem:[%s1 + $0x770] sm:$0xff]
  %v254 = vld [vmem:[%s1 + $0x778] sm:$0xff]
  %v255 = vld [vmem:[%s1 + $0x780] sm:$0xff]
  %v256 = vld [vmem:[%s1 + $0x788] sm:$0xff]
  %v257 = vld [vmem:[%s1 + $0x790] sm:$0xff]
  %v258 = vld [vmem:[%s1 + $0x798] sm:$0xff]
  %v259 = vld [vmem:[%s1 + $0x7a0] sm:$0xff]
  %v260 = vld [vmem:[%s1 + $0x7a8] sm:$0xff]
  %v261 = vld [vmem:[%s1 + $0x7b0] sm:$0xff]
  %v262 = vld [vmem:[%s1 + $0x7b8] sm:$0xff]
  %v263 = vld [vmem:[%s1 + $0x7c0] sm:$0xff]
  %v264 = vld [vmem:[%s1 + $0x7c8] sm:$0xff]
  %v265 = vld [vmem:[%s1 + $0x7d0] sm:$0xff]
  %v266 = vld [vmem:[%s1 + $0x7d8] sm:$0xff]
  %v267 = vld [vmem:[%s1 + $0x7e0] sm:$0xff]
  %v268 = vld [vmem:[%s1 + $0x7e8] sm:$0xff]
  %v269 = vld [vmem:[%s1 + $0x7f0] sm:$0xff]
  %v270 = vld [vmem:[%s1 + $0x7f8] sm:$0xff]
  %v271 = vld [vmem:[%s1 + $0x800] sm:$0xff]
  %v272 = vld [vmem:[%s1 + $0x808] sm:$0xff]
  %v273 = vld [vmem:[%s1 + $0x810] sm:$0xff]
  %v274 = vld [vmem:[%s1 + $0x818] sm:$0xff]
  %v275 = vld [vmem:[%s1 + $0x820] sm:$0xff]
  %v276 = vld [vmem:[%s1 + $0x828] sm:$0xff]
  %v277 = vld [vmem:[%s1 + $0x830] sm:$0xff]
  %v278 = vld [vmem:[%s1 + $0x838] sm:$0xff]
  %v279 = vld [vmem:[%s1 + $0x840] sm:$0xff]
  %v280 = vld [vmem:[%s1 + $0x848] sm:$0xff]
  %v281 = vld [vmem:[%s1 + $0x850] sm:$0xff]
  %v282 = vld [vmem:[%s1 + $0x858] sm:$0xff]
  %v283 = vld [vmem:[%s1 + $0x860] sm:$0xff]
  %v284 = vld [vmem:[%s1 + $0x868] sm:$0xff]
  %v285 = vld [vmem:[%s1 + $0x870] sm:$0xff]
  %v286 = vld [vmem:[%s1 + $0x878] sm:$0xff]
  %v287 = vld [vmem:[%s1 + $0x880] sm:$0xff]
  %v288 = vld [vmem:[%s1 + $0x888] sm:$0xff]
  %v289 = vld [vmem:[%s1 + $0x890] sm:$0xff]
  %v290 = vld [vmem:[%s1 + $0x898] sm:$0xff]
  %v291 = vld [vmem:[%s1 + $0x8a0] sm:$0xff]
  %v292 = vld [vmem:[%s1 + $0x8a8] sm:$0xff]
  %v293 = vld [vmem:[%s1 + $0x8b0] sm:$0xff]
  %v294 = vld [vmem:[%s1 + $0x8b8] sm:$0xff]
  %v295 = vld [vmem:[%s1 + $0x8c0] sm:$0xff]
  %v296 = vld [vmem:[%s1 + $0x8c8] sm:$0xff]
  %v297 = vld [vmem:[%s1 + $0x8d0] sm:$0xff]
  %v298 = vld [vmem:[%s1 + $0x8d8] sm:$0xff]
  %v299 = vld [vmem:[%s1 + $0x8e0] sm:$0xff]
  %v300 = vld [vmem:[%s1 + $0x8e8] sm:$0xff]
  %v301 = vld [vmem:[%s1 + $0x8f0] sm:$0xff]
  %v302 = vld [vmem:[%s1 + $0x8f8] sm:$0xff]
  %v303 = vld [vmem:[%s1 + $0x900] sm:$0xff]
  %v304 = vld [vmem:[%s1 + $0x908] sm:$0xff]
  %v305 = vld [vmem:[%s1 + $0x910] sm:$0xff]
  %v306 = vld [vmem:[%s1 + $0x918] sm:$0xff]
  %v307 = vld [vmem:[%s1 + $0x920] sm:$0xff]
  %v308 = vld [vmem:[%s1 + $0x928] sm:$0xff]
  %v309 = vld [vmem:[%s1 + $0x930] sm:$0xff]
  %v310 = vld [vmem:[%s1 + $0x938] sm:$0xff]
  %v311 = vld [vmem:[%s1 + $0x940] sm:$0xff]
  %v312 = vld [vmem:[%s1 + $0x948] sm:$0xff]
  %v313 = vld [vmem:[%s1 + $0x950] sm:$0xff]
  %v314 = vld [vmem:[%s1 + $0x958] sm:$0xff]
  %v315 = vld [vmem:[%s1 + $0x960] sm:$0xff]
  %v316 = vld [vmem:[%s1 + $0x968] sm:$0xff]
  %v317 = vld [vmem:[%s1 + $0x970] sm:$0xff]
  %v318 = vld [vmem:[%s1 + $0x978] sm:$0xff]
  %v319 = vld [vmem:[%s1 + $0x980] sm:$0xff]
  %v320 = vld [vmem:[%s1 + $0x988] sm:$0xff]
  %v321 = vld [vmem:[%s1 + $0x990] sm:$0xff]
  %v322 = vld [vmem:[%s1 + $0x998] sm:$0xff]
  %v323 = vld [vmem:[%s1 + $0x9a0] sm:$0xff]
  %v324 = vld [vmem:[%s1 + $0x9a8] sm:$0xff]
  %v325 = vld [vmem:[%s1 + $0x9b0] sm:$0xff]
  %v326 = vld [vmem:[%s1 + $0x9b8] sm:$0xff]
  %v327 = vld [vmem:[%s1 + $0x9c0] sm:$0xff]
  %v328 = vld [vmem:[%s1 + $0x9c8] sm:$0xff]
  %v329 = vld [vmem:[%s1 + $0x9d0] sm:$0xff]
  %v330 = vld [vmem:[%s1 + $0x9d8] sm:$0xff]
  %v331 = vld [vmem:[%s1 + $0x9e0] sm:$0xff]
  %v332 = vld [vmem:[%s1 + $0x9e8] sm:$0xff]
  %v333 = vld [vmem:[%s1 + $0x9f0] sm:$0xff]
  %v334 = vld [vmem:[%s1 + $0x9f8] sm:$0xff]
  %v335 = vld [vmem:[%s1 + $0xa00] sm:$0xff]
  %v336 = vld [vmem:[%s1 + $0xa08] sm:$0xff]
  %v337 = vld [vmem:[%s1 + $0xa10] sm:$0xff]
  %v338 = vld [vmem:[%s1 + $0xa18] sm:$0xff]
  %v339 = vld [vmem:[%s1 + $0xa20] sm:$0xff]
  %v340 = vld [vmem:[%s1 + $0xa28] sm:$0xff]
  %v341 = vld [vmem:[%s1 + $0xa30] sm:$0xff]
  %v342 = vld [vmem:[%s1 + $0xa38] sm:$0xff]
  %v343 = vld [vmem:[%s1 + $0xa40] sm:$0xff]
  %v344 = vld [vmem:[%s1 + $0xa48] sm:$0xff]
  %v345 = vld [vmem:[%s1 + $0xa50] sm:$0xff]
  %v346 = vld [vmem:[%s1 + $0xa58] sm:$0xff]
  %v347 = vld [vmem:[%s1 + $0xa60] sm:$0xff]
  %v348 = vld [vmem:[%s1 + $0xa68] sm:$0xff]
  %v349 = vld [vmem:[%s1 + $0xa70] sm:$0xff]
  %v350 = vld [vmem:[%s1 + $0xa78] sm:$0xff]
  %v351 = vld [vmem:[%s1 + $0xa80] sm:$0xff]
  %v352 = vld [vmem:[%s1 + $0xa88] sm:$0xff]
  %v353 = vld [vmem:[%s1 + $0xa90] sm:$0xff]
  %v354 = vld [vmem:[%s1 + $0xa98] sm:$0xff]
  %v355 = vld [vmem:[%s1 + $0xaa0] sm:$0xff]
  %v356 = vld [vmem:[%s1 + $0xaa8] sm:$0xff]
  %v357 = vld [vmem:[%s1 + $0xab0] sm:$0xff]
  %v358 = vld [vmem:[%s1 + $0xab8] sm:$0xff]
  %v359 = vld [vmem:[%s1 + $0xac0] sm:$0xff]
  %v360 = vld [vmem:[%s1 + $0xac8] sm:$0xff]
  %v361 = vld [vmem:[%s1 + $0xad0] sm:$0xff]
  %v362 = vld [vmem:[%s1 + $0xad8] sm:$0xff]
  %v363 = vld [vmem:[%s1 + $0xae0] sm:$0xff]
  %v364 = vld [vmem:[%s1 + $0xae8] sm:$0xff]
  %v365 = vld [vmem:[%s1 + $0xaf0] sm:$0xff]
  %v366 = vld [vmem:[%s1 + $0xaf8] sm:$0xff]
  %v367 = vld [vmem:[%s1 + $0xb00] sm:$0xff]
  %v368 = vld [vmem:[%s1 + $0xb08] sm:$0xff]
  %v369 = vld [vmem:[%s1 + $0xb10] sm:$0xff]
  %v370 = vld [vmem:[%s1 + $0xb18] sm:$0xff]
  %v371 = vld [vmem:[%s1 + $0xb20] sm:$0xff]
  %v372 = vld [vmem:[%s1 + $0xb28] sm:$0xff]
  %v373 = vld [vmem:[%s1 + $0xb30] sm:$0xff]
  %v374 = vld [vmem:[%s1 + $0xb38] sm:$0xff]
  %v375 = vld [vmem:[%s1 + $0xb40] sm:$0xff]
  %v376 = vld [vmem:[%s1 + $0xb48] sm:$0xff]
  %v377 = vld [vmem:[%s1 + $0xb50] sm:$0xff]
  %v378 = vld [vmem:[%s1 + $0xb58] sm:$0xff]
  %v379 = vld [vmem:[%s1 + $0xb60] sm:$0xff]
  %v380 = vld [vmem:[%s1 + $0xb68] sm:$0xff]
  %v381 = vld [vmem:[%s1 + $0xb70] sm:$0xff]
  %v382 = vld [vmem:[%s1 + $0xb78] sm:$0xff]
  %v383 = vld [vmem:[%s1 + $0xb80] sm:$0xff]
  %v384 = vld [vmem:[%s1 + $0xb88] sm:$0xff]
  %v385 = vld [vmem:[%s1 + $0xb90] sm:$0xff]
  %v386 = vld [vmem:[%s1 + $0xb98] sm:$0xff]
  %v387 = vld [vmem:[%s1 + $0xba0] sm:$0xff]
  %v388 = vld [vmem:[%s1 + $0xba8] sm:$0xff]
  %v389 = vld [vmem:[%s1 + $0xbb0] sm:$0xff]
  %v390 = vld [vmem:[%s1 + $0xbb8] sm:$0xff]
  %v391 = vld [vmem:[%s1 + $0xbc0] sm:$0xff]
  %v392 = vld [vmem:[%s1 + $0xbc8] sm:$0xff]
  %v393 = vld [vmem:[%s1 + $0xbd0] sm:$0xff]
  %v394 = vld [vmem:[%s1 + $0xbd8] sm:$0xff]
  %v395 = vld [vmem:[%s1 + $0xbe0] sm:$0xff]
  %v396 = vld [vmem:[%s1 + $0xbe8] sm:$0xff]
  %v397 = vld [vmem:[%s1 + $0xbf0] sm:$0xff]
  %v398 = vld [vmem:[%s1 + $0xbf8] sm:$0xff]
  %v399 = vld [vmem:[%s1 + $0xc00] sm:$0xff]
  %v400 = vld [vmem:[%s1 + $0xc08] sm:$0xff]
  %v401 = vld [vmem:[%s1 + $0xc10] sm:$0xff]
  %v402 = vld [vmem:[%s1 + $0xc18] sm:$0xff]
  %v403 = vld [vmem:[%s1 + $0xc20] sm:$0xff]
  %v404 = vld [vmem:[%s1 + $0xc28] sm:$0xff]
  %v405 = vld [vmem:[%s1 + $0xc30] sm:$0xff]
  %v406 = vld [vmem:[%s1 + $0xc38] sm:$0xff]
  %v407 = vld [vmem:[%s1 + $0xc40] sm:$0xff]
  %v408 = vld [vmem:[%s1 + $0xc48] sm:$0xff]
  %v409 = vld [vmem:[%s1 + $0xc50] sm:$0xff]
  %v410 = vld [vmem:[%s1 + $0xc58] sm:$0xff]
  %v411 = vld [vmem:[%s1 + $0xc60] sm:$0xff]
  %v412 = vld [vmem:[%s1 + $0xc68] sm:$0xff]
  %v413 = vld [vmem:[%s1 + $0xc70] sm:$0xff]
  %v414 = vld [vmem:[%s1 + $0xc78] sm:$0xff]
  %v415 = vld [vmem:[%s1 + $0xc80] sm:$0xff]
  %v416 = vld [vmem:[%s1 + $0xc88] sm:$0xff]
  %v417 = vld [vmem:[%s1 + $0xc90] sm:$0xff]
  %v418 = vld [vmem:[%s1 + $0xc98] sm:$0xff]
  %v419 = vld [vmem:[%s1 + $0xca0] sm:$0xff]
  %v420 = vld [vmem:[%s1 + $0xca8] sm:$0xff]
  %v421 = vld [vmem:[%s1 + $0xcb0] sm:$0xff]
  %v422 = vld [vmem:[%s1 + $0xcb8] sm:$0xff]
  %v423 = vld [vmem:[%s1 + $0xcc0] sm:$0xff]
  %v424 = vld [vmem:[%s1 + $0xcc8] sm:$0xff]
  %v425 = vld [vmem:[%s1 + $0xcd0] sm:$0xff]
  %v426 = vld [vmem:[%s1 + $0xcd8] sm:$0xff]
  %v427 = vld [vmem:[%s1 + $0xce0] sm:$0xff]
  %v428 = vld [vmem:[%s1 + $0xce8] sm:$0xff]
  %v429 = vld [vmem:[%s1 + $0xcf0] sm:$0xff]
  %v430 = vld [vmem:[%s1 + $0xcf8] sm:$0xff]
  %v431 = vld [vmem:[%s1 + $0xd00] sm:$0xff]
  %v432 = vld [vmem:[%s1 + $0xd08] sm:$0xff]
  %v433 = vld [vmem:[%s1 + $0xd10] sm:$0xff]
  %v434 = vld [vmem:[%s1 + $0xd18] sm:$0xff]
  %v435 = vld [vmem:[%s1 + $0xd20] sm:$0xff]
  %v436 = vld [vmem:[%s1 + $0xd28] sm:$0xff]
  %v437 = vld [vmem:[%s1 + $0xd30] sm:$0xff]
  %v438 = vld [vmem:[%s1 + $0xd38] sm:$0xff]
  %v439 = vld [vmem:[%s1 + $0xd40] sm:$0xff]
  %v440 = vld [vmem:[%s1 + $0xd48] sm:$0xff]
  %v441 = vld [vmem:[%s1 + $0xd50] sm:$0xff]
  %v442 = vld [vmem:[%s1 + $0xd58] sm:$0xff]
  %v443 = vld [vmem:[%s1 + $0xd60] sm:$0xff]
  %v444 = vld [vmem:[%s1 + $0xd68] sm:$0xff]
  %v445 = vld [vmem:[%s1 + $0xd70] sm:$0xff]
  %v446 = vld [vmem:[%s1 + $0xd78] sm:$0xff]
  %v447 = vld [vmem:[%s1 + $0xd80] sm:$0xff]
  %v448 = vld [vmem:[%s1 + $0xd88] sm:$0xff]
  %v449 = vld [vmem:[%s1 + $0xd90] sm:$0xff]
  %v450 = vld [vmem:[%s1 + $0xd98] sm:$0xff]
  %v451 = vld [vmem:[%s1 + $0xda0] sm:$0xff]
  %v452 = vld [vmem:[%s1 + $0xda8] sm:$0xff]
  %v453 = vld [vmem:[%s1 + $0xdb0] sm:$0xff]
  %v454 = vld [vmem:[%s1 + $0xdb8] sm:$0xff]
  %v455 = vld [vmem:[%s1 + $0xdc0] sm:$0xff]
  %v456 = vld [vmem:[%s1 + $0xdc8] sm:$0xff]
  %v457 = vld [vmem:[%s1 + $0xdd0] sm:$0xff]
  %v458 = vld [vmem:[%s1 + $0xdd8] sm:$0xff]
  %v459 = vld [vmem:[%s1 + $0xde0] sm:$0xff]
  %v460 = vld [vmem:[%s1 + $0xde8] sm:$0xff]
  %v461 = vld [vmem:[%s1 + $0xdf0] sm:$0xff]
  %v462 = vld [vmem:[%s1 + $0xdf8] sm:$0xff]
  %v463 = vld [vmem:[%s1 + $0xe00] sm:$0xff]
  %v464 = vld [vmem:[%s1 + $0xe08] sm:$0xff]
  %v465 = vld [vmem:[%s1 + $0xe10] sm:$0xff]
  %v466 = vld [vmem:[%s1 + $0xe18] sm:$0xff]
  %v467 = vld [vmem:[%s1 + $0xe20] sm:$0xff]
  %v468 = vld [vmem:[%s1 + $0xe28] sm:$0xff]
  %v469 = vld [vmem:[%s1 + $0xe30] sm:$0xff]
  %v470 = vld [vmem:[%s1 + $0xe38] sm:$0xff]
  %v471 = vld [vmem:[%s1 + $0xe40] sm:$0xff]
  %v472 = vld [vmem:[%s1 + $0xe48] sm:$0xff]
  %v473 = vld [vmem:[%s1 + $0xe50] sm:$0xff]
  %v474 = vld [vmem:[%s1 + $0xe58] sm:$0xff]
  %v475 = vld [vmem:[%s1 + $0xe60] sm:$0xff]
  %v476 = vld [vmem:[%s1 + $0xe68] sm:$0xff]
  %v477 = vld [vmem:[%s1 + $0xe70] sm:$0xff]
  %v478 = vld [vmem:[%s1 + $0xe78] sm:$0xff]
  %v479 = vld [vmem:[%s1 + $0xe80] sm:$0xff]
  %v480 = vld [vmem:[%s1 + $0xe88] sm:$0xff]
  %v481 = vld [vmem:[%s1 + $0xe90] sm:$0xff]
  %v482 = vld [vmem:[%s1 + $0xe98] sm:$0xff]
  %v483 = vld [vmem:[%s1 + $0xea0] sm:$0xff]
  %v484 = vld [vmem:[%s1 + $0xea8] sm:$0xff]
  %v485 = vld [vmem:[%s1 + $0xeb0] sm:$0xff]
  %v486 = vld [vmem:[%s1 + $0xeb8] sm:$0xff]
  %v487 = vld [vmem:[%s1 + $0xec0] sm:$0xff]
  %v488 = vld [vmem:[%s1 + $0xec8] sm:$0xff]
  %v489 = vld [vmem:[%s1 + $0xed0] sm:$0xff]
  %v490 = vld [vmem:[%s1 + $0xed8] sm:$0xff]
  %v491 = vld [vmem:[%s1 + $0xee0] sm:$0xff]
  %v492 = vld [vmem:[%s1 + $0xee8] sm:$0xff]
  %v493 = vld [vmem:[%s1 + $0xef0] sm:$0xff]
  %v494 = vld [vmem:[%s1 + $0xef8] sm:$0xff]
  %v495 = vld [vmem:[%s1 + $0xf00] sm:$0xff]
  %v496 = vld [vmem:[%s1 + $0xf08] sm:$0xff]
  %v497 = vld [vmem:[%s1 + $0xf10] sm:$0xff]
  %v498 = vld [vmem:[%s1 + $0xf18] sm:$0xff]
  %v499 = vld [vmem:[%s1 + $0xf20] sm:$0xff]
  %v500 = vld [vmem:[%s1 + $0xf28] sm:$0xff]
  %v501 = vld [vmem:[%s1 + $0xf30] sm:$0xff]
  %v502 = vld [vmem:[%s1 + $0xf38] sm:$0xff]
  %v503 = vld [vmem:[%s1 + $0xf40] sm:$0xff]
  %v504 = vld [vmem:[%s1 + $0xf48] sm:$0xff]
  %v505 = vld [vmem:[%s1 + $0xf50] sm:$0xff]
  %v506 = vld [vmem:[%s1 + $0xf58] sm:$0xff]
  %v507 = vld [vmem:[%s1 + $0xf60] sm:$0xff]
  %v508 = vld [vmem:[%s1 + $0xf68] sm:$0xff]
  %v509 = vld [vmem:[%s1 + $0xf70] sm:$0xff]
  %v510 = vld [vmem:[%s1 + $0xf78] sm:$0xff]
  %v511 = vld [vmem:[%s1 + $0xf80] sm:$0xff]
  %v512 = vld [vmem:[%s1 + $0xf88] sm:$0xff]
  %v513 = vld [vmem:[%s1 + $0xf90] sm:$0xff]
  %v514 = vld [vmem:[%s1 + $0xf98] sm:$0xff]
  %v515 = vld [vmem:[%s1 + $0xfa0] sm:$0xff]
  %v516 = vld [vmem:[%s1 + $0xfa8] sm:$0xff]
  %v517 = vld [vmem:[%s1 + $0xfb0] sm:$0xff]
  %v518 = vld [vmem:[%s1 + $0xfb8] sm:$0xff]
  %v519 = vld [vmem:[%s1 + $0xfc0] sm:$0xff]
  %v520 = vld [vmem:[%s1 + $0xfc8] sm:$0xff]
  %v521 = vld [vmem:[%s1 + $0xfd0] sm:$0xff]
  %v522 = vld [vmem:[%s1 + $0xfd8] sm:$0xff]
  %v523 = vld [vmem:[%s1 + $0xfe0] sm:$0xff]
  %v524 = vld [vmem:[%s1 + $0xfe8] sm:$0xff]
  %v525 = vld [vmem:[%s1 + $0xff0] sm:$0xff]
  %v526 = vld [vmem:[%s1 + $0xff8] sm:$0xff]
  %v528 = vcombine.high %v14, %v14
  %v530 = vunpack.c.l.s4 1983009808
  %v531 = vunpack.c.0.s8 %v530
  %v532 = vlaneseq
  %v533 = vshrl.u32 %v532, 7
  %v534 = vsub.s32 %v531, %v533
  %v535 = vrot.slane %v14, %v534
  %v537 = vunpack.c.l.s4 1983009808
  %v538 = vunpack.c.0.s8 %v537
  %v539 = vlaneseq
  %v540 = vshrl.u32 %v539, 7
  %v541 = vsub.s32 %v538, %v540
  %v542 = vrot.slane %v528, %v541
  %v543 = vcombine.high %v535, %v535
  %v544 = vcombine.high %v542, %v542
  %549 = vmatprep.subr.mxu0 %v16
  %550 = vmatpush1.msra.mxu0 %v15
  %551 = vmatprep.subr.mxu0 %v24
  %552 = vmatpush1.msra.mxu0 %v23
  %553 = vmatprep.subr.mxu0 %v32
  %554 = vmatpush1.msra.mxu0 %v31
  %555 = vmatprep.subr.mxu0 %v40
  %556 = vmatpush1.msra.mxu0 %v39
  %557 = vmatprep.subr.mxu0 %v48
  %558 = vmatpush1.msra.mxu0 %v47
  %559 = vmatprep.subr.mxu0 %v56
  %560 = vmatpush1.msra.mxu0 %v55
  %561 = vmatprep.subr.mxu0 %v64
  %562 = vmatpush1.msra.mxu0 %v63
  %563 = vmatprep.subr.mxu0 %v72
  %564 = vmatpush1.msra.mxu0 %v71
  %565 = vmatprep.subr.mxu0 %v80
  %566 = vmatpush1.msra.mxu0 %v79
  %567 = vmatprep.subr.mxu0 %v88
  %568 = vmatpush1.msra.mxu0 %v87
  %569 = vmatprep.subr.mxu0 %v96
  %570 = vmatpush1.msra.mxu0 %v95
  %571 = vmatprep.subr.mxu0 %v104
  %572 = vmatpush1.msra.mxu0 %v103
  %573 = vmatprep.subr.mxu0 %v112
  %574 = vmatpush1.msra.mxu0 %v111
  %575 = vmatprep.subr.mxu0 %v120
  %576 = vmatpush1.msra.mxu0 %v119
  %577 = vmatprep.subr.mxu0 %v128
  %578 = vmatpush1.msra.mxu0 %v127
  %579 = vmatprep.subr.mxu0 %v136
  %580 = vmatpush1.msra.mxu0 %v135
  %581 = vmatprep.subr.mxu0 %v144
  %582 = vmatpush1.msra.mxu0 %v143
  %583 = vmatprep.subr.mxu0 %v152
  %584 = vmatpush1.msra.mxu0 %v151
  %585 = vmatprep.subr.mxu0 %v160
  %586 = vmatpush1.msra.mxu0 %v159
  %587 = vmatprep.subr.mxu0 %v168
  %588 = vmatpush1.msra.mxu0 %v167
  %589 = vmatprep.subr.mxu0 %v176
  %590 = vmatpush1.msra.mxu0 %v175
  %591 = vmatprep.subr.mxu0 %v184
  %592 = vmatpush1.msra.mxu0 %v183
  %593 = vmatprep.subr.mxu0 %v192
  %594 = vmatpush1.msra.mxu0 %v191
  %595 = vmatprep.subr.mxu0 %v200
  %596 = vmatpush1.msra.mxu0 %v199
  %597 = vmatprep.subr.mxu0 %v208
  %598 = vmatpush1.msra.mxu0 %v207
  %599 = vmatprep.subr.mxu0 %v216
  %600 = vmatpush1.msra.mxu0 %v215
  %601 = vmatprep.subr.mxu0 %v224
  %602 = vmatpush1.msra.mxu0 %v223
  %603 = vmatprep.subr.mxu0 %v232
  %604 = vmatpush1.msra.mxu0 %v231
  %605 = vmatprep.subr.mxu0 %v240
  %606 = vmatpush1.msra.mxu0 %v239
  %607 = vmatprep.subr.mxu0 %v248
  %608 = vmatpush1.msra.mxu0 %v247
  %609 = vmatprep.subr.mxu0 %v256
  %610 = vmatpush1.msra.mxu0 %v255
  %611 = vmatprep.subr.mxu0 %v264
  %612 = vmatpush1.msra.mxu0 %v263
  %613 = vmatprep.mubr.f32.mxu0 %v543
  %614 = vmatmul.mubr.f32.gmra.mrb[0].mxu0 %v535
  %v615 = vpop.f32.mrb[0].mxu0
  %v616 = vadd.f32 0.0, %v615
  %v617 = vpop.f32.mrb[0].mxu0
  %v618 = vadd.f32 0.0, %v617
  %619 = vdwg.mxu0
  %620 = vmatprep.subr.mxu0 %v272
  %621 = vmatpush1.msra.mxu0 %v271
  %622 = vmatprep.subr.mxu0 %v280
  %623 = vmatpush1.msra.mxu0 %v279
  %624 = vmatprep.subr.mxu0 %v288
  %625 = vmatpush1.msra.mxu0 %v287
  %626 = vmatprep.subr.mxu0 %v296
  %627 = vmatpush1.msra.mxu0 %v295
  %628 = vmatprep.subr.mxu0 %v304
  %629 = vmatpush1.msra.mxu0 %v303
  %630 = vmatprep.subr.mxu0 %v312
  %631 = vmatpush1.msra.mxu0 %v311
  %632 = vmatprep.subr.mxu0 %v320
  %633 = vmatpush1.msra.mxu0 %v319
  %634 = vmatprep.subr.mxu0 %v328
  %635 = vmatpush1.msra.mxu0 %v327
  %636 = vmatprep.subr.mxu0 %v336
  %637 = vmatpush1.msra.mxu0 %v335
  %638 = vmatprep.subr.mxu0 %v344
  %639 = vmatpush1.msra.mxu0 %v343
  %640 = vmatprep.subr.mxu0 %v352
  %641 = vmatpush1.msra.mxu0 %v351
  %642 = vmatprep.subr.mxu0 %v360
  %643 = vmatpush1.msra.mxu0 %v359
  %644 = vmatprep.subr.mxu0 %v368
  %645 = vmatpush1.msra.mxu0 %v367
  %646 = vmatprep.subr.mxu0 %v376
  %647 = vmatpush1.msra.mxu0 %v375
  %648 = vmatprep.subr.mxu0 %v384
  %649 = vmatpush1.msra.mxu0 %v383
  %650 = vmatprep.subr.mxu0 %v392
  %651 = vmatpush1.msra.mxu0 %v391
  %652 = vmatprep.subr.mxu0 %v400
  %653 = vmatpush1.msra.mxu0 %v399
  %654 = vmatprep.subr.mxu0 %v408
  %655 = vmatpush1.msra.mxu0 %v407
  %656 = vmatprep.subr.mxu0 %v416
  %657 = vmatpush1.msra.mxu0 %v415
  %658 = vmatprep.subr.mxu0 %v424
  %659 = vmatpush1.msra.mxu0 %v423
  %660 = vmatprep.subr.mxu0 %v432
  %661 = vmatpush1.msra.mxu0 %v431
  %662 = vmatprep.subr.mxu0 %v440
  %663 = vmatpush1.msra.mxu0 %v439
  %664 = vmatprep.subr.mxu0 %v448
  %665 = vmatpush1.msra.mxu0 %v447
  %666 = vmatprep.subr.mxu0 %v456
  %667 = vmatpush1.msra.mxu0 %v455
  %668 = vmatprep.subr.mxu0 %v464
  %669 = vmatpush1.msra.mxu0 %v463
  %670 = vmatprep.subr.mxu0 %v472
  %671 = vmatpush1.msra.mxu0 %v471
  %672 = vmatprep.subr.mxu0 %v480
  %673 = vmatpush1.msra.mxu0 %v479
  %674 = vmatprep.subr.mxu0 %v488
  %675 = vmatpush1.msra.mxu0 %v487
  %676 = vmatprep.subr.mxu0 %v496
  %677 = vmatpush1.msra.mxu0 %v495
  %678 = vmatprep.subr.mxu0 %v504
  %679 = vmatpush1.msra.mxu0 %v503
  %680 = vmatprep.subr.mxu0 %v512
  %681 = vmatpush1.msra.mxu0 %v511
  %682 = vmatprep.subr.mxu0 %v520
  %683 = vmatpush1.msra.mxu0 %v519
  %684 = vmatprep.mubr.f32.mxu0 %v544
  %685 = vmatmul.mubr.f32.gmra.mrb[0].mxu0 %v542
  %v686 = vpop.f32.mrb[0].mxu0
  %v687 = vadd.f32 %v616, %v686
  %v688 = vpop.f32.mrb[0].mxu0
  %v689 = vadd.f32 %v618, %v688
  %690 = vdwg.mxu0
  %691 = vmatprep.subr.mxu0 %v18
  %692 = vmatpush1.msra.mxu0 %v17
  %693 = vmatprep.subr.mxu0 %v26
  %694 = vmatpush1.msra.mxu0 %v25
  %695 = vmatprep.subr.mxu0 %v34
  %696 = vmatpush1.msra.mxu0 %v33
  %697 = vmatprep.subr.mxu0 %v42
  %698 = vmatpush1.msra.mxu0 %v41
  %699 = vmatprep.subr.mxu0 %v50
  %700 = vmatpush1.msra.mxu0 %v49
  %701 = vmatprep.subr.mxu0 %v58
  %702 = vmatpush1.msra.mxu0 %v57
  %703 = vmatprep.subr.mxu0 %v66
  %704 = vmatpush1.msra.mxu0 %v65
  %705 = vmatprep.subr.mxu0 %v74
  %706 = vmatpush1.msra.mxu0 %v73
  %707 = vmatprep.subr.mxu0 %v82
  %708 = vmatpush1.msra.mxu0 %v81
  %709 = vmatprep.subr.mxu0 %v90
  %710 = vmatpush1.msra.mxu0 %v89
  %711 = vmatprep.subr.mxu0 %v98
  %712 = vmatpush1.msra.mxu0 %v97
  %713 = vmatprep.subr.mxu0 %v106
  %714 = vmatpush1.msra.mxu0 %v105
  %715 = vmatprep.subr.mxu0 %v114
  %716 = vmatpush1.msra.mxu0 %v113
  %717 = vmatprep.subr.mxu0 %v122
  %718 = vmatpush1.msra.mxu0 %v121
  %719 = vmatprep.subr.mxu0 %v130
  %720 = vmatpush1.msra.mxu0 %v129
  %721 = vmatprep.subr.mxu0 %v138
  %722 = vmatpush1.msra.mxu0 %v137
  %723 = vmatprep.subr.mxu0 %v146
  %724 = vmatpush1.msra.mxu0 %v145
  %725 = vmatprep.subr.mxu0 %v154
  %726 = vmatpush1.msra.mxu0 %v153
  %727 = vmatprep.subr.mxu0 %v162
  %728 = vmatpush1.msra.mxu0 %v161
  %729 = vmatprep.subr.mxu0 %v170
  %730 = vmatpush1.msra.mxu0 %v169
  %731 = vmatprep.subr.mxu0 %v178
  %732 = vmatpush1.msra.mxu0 %v177
  %733 = vmatprep.subr.mxu0 %v186
  %734 = vmatpush1.msra.mxu0 %v185
  %735 = vmatprep.subr.mxu0 %v194
  %736 = vmatpush1.msra.mxu0 %v193
  %737 = vmatprep.subr.mxu0 %v202
  %738 = vmatpush1.msra.mxu0 %v201
  %739 = vmatprep.subr.mxu0 %v210
  %740 = vmatpush1.msra.mxu0 %v209
  %741 = vmatprep.subr.mxu0 %v218
  %742 = vmatpush1.msra.mxu0 %v217
  %743 = vmatprep.subr.mxu0 %v226
  %744 = vmatpush1.msra.mxu0 %v225
  %745 = vmatprep.subr.mxu0 %v234
  %746 = vmatpush1.msra.mxu0 %v233
  %747 = vmatprep.subr.mxu0 %v242
  %748 = vmatpush1.msra.mxu0 %v241
  %749 = vmatprep.subr.mxu0 %v250
  %750 = vmatpush1.msra.mxu0 %v249
  %751 = vmatprep.subr.mxu0 %v258
  %752 = vmatpush1.msra.mxu0 %v257
  %753 = vmatprep.subr.mxu0 %v266
  %754 = vmatpush1.msra.mxu0 %v265
  %755 = vmatprep.mubr.f32.mxu0 %v543
  %756 = vmatmul.mubr.f32.gmra.mrb[0].mxu0 %v535
  %v757 = vpop.f32.mrb[0].mxu0
  %v758 = vadd.f32 0.0, %v757
  %v759 = vpop.f32.mrb[0].mxu0
  %v760 = vadd.f32 0.0, %v759
  %761 = vdwg.mxu0
  %762 = vmatprep.subr.mxu0 %v274
  %763 = vmatpush1.msra.mxu0 %v273
  %764 = vmatprep.subr.mxu0 %v282
  %765 = vmatpush1.msra.mxu0 %v281
  %766 = vmatprep.subr.mxu0 %v290
  %767 = vmatpush1.msra.mxu0 %v289
  %768 = vmatprep.subr.mxu0 %v298
  %769 = vmatpush1.msra.mxu0 %v297
  %770 = vmatprep.subr.mxu0 %v306
  %771 = vmatpush1.msra.mxu0 %v305
  %772 = vmatprep.subr.mxu0 %v314
  %773 = vmatpush1.msra.mxu0 %v313
  %774 = vmatprep.subr.mxu0 %v322
  %775 = vmatpush1.msra.mxu0 %v321
  %776 = vmatprep.subr.mxu0 %v330
  %777 = vmatpush1.msra.mxu0 %v329
  %778 = vmatprep.subr.mxu0 %v338
  %779 = vmatpush1.msra.mxu0 %v337
  %780 = vmatprep.subr.mxu0 %v346
  %781 = vmatpush1.msra.mxu0 %v345
  %782 = vmatprep.subr.mxu0 %v354
  %783 = vmatpush1.msra.mxu0 %v353
  %784 = vmatprep.subr.mxu0 %v362
  %785 = vmatpush1.msra.mxu0 %v361
  %786 = vmatprep.subr.mxu0 %v370
  %787 = vmatpush1.msra.mxu0 %v369
  %788 = vmatprep.subr.mxu0 %v378
  %789 = vmatpush1.msra.mxu0 %v377
  %790 = vmatprep.subr.mxu0 %v386
  %791 = vmatpush1.msra.mxu0 %v385
  %792 = vmatprep.subr.mxu0 %v394
  %793 = vmatpush1.msra.mxu0 %v393
  %794 = vmatprep.subr.mxu0 %v402
  %795 = vmatpush1.msra.mxu0 %v401
  %796 = vmatprep.subr.mxu0 %v410
  %797 = vmatpush1.msra.mxu0 %v409
  %798 = vmatprep.subr.mxu0 %v418
  %799 = vmatpush1.msra.mxu0 %v417
  %800 = vmatprep.subr.mxu0 %v426
  %801 = vmatpush1.msra.mxu0 %v425
  %802 = vmatprep.subr.mxu0 %v434
  %803 = vmatpush1.msra.mxu0 %v433
  %804 = vmatprep.subr.mxu0 %v442
  %805 = vmatpush1.msra.mxu0 %v441
  %806 = vmatprep.subr.mxu0 %v450
  %807 = vmatpush1.msra.mxu0 %v449
  %808 = vmatprep.subr.mxu0 %v458
  %809 = vmatpush1.msra.mxu0 %v457
  %810 = vmatprep.subr.mxu0 %v466
  %811 = vmatpush1.msra.mxu0 %v465
  %812 = vmatprep.subr.mxu0 %v474
  %813 = vmatpush1.msra.mxu0 %v473
  %814 = vmatprep.subr.mxu0 %v482
  %815 = vmatpush1.msra.mxu0 %v481
  %816 = vmatprep.subr.mxu0 %v490
  %817 = vmatpush1.msra.mxu0 %v489
  %818 = vmatprep.subr.mxu0 %v498
  %819 = vmatpush1.msra.mxu0 %v497
  %820 = vmatprep.subr.mxu0 %v506
  %821 = vmatpush1.msra.mxu0 %v505
  %822 = vmatprep.subr.mxu0 %v514
  %823 = vmatpush1.msra.mxu0 %v513
  %824 = vmatprep.subr.mxu0 %v522
  %825 = vmatpush1.msra.mxu0 %v521
  %826 = vmatprep.mubr.f32.mxu0 %v544
  %827 = vmatmul.mubr.f32.gmra.mrb[0].mxu0 %v542
  %v828 = vpop.f32.mrb[0].mxu0
  %v829 = vadd.f32 %v758, %v828
  %v830 = vpop.f32.mrb[0].mxu0
  %v831 = vadd.f32 %v760, %v830
  %832 = vdwg.mxu0
  %833 = vmatprep.subr.mxu0 %v20
  %834 = vmatpush1.msra.mxu0 %v19
  %835 = vmatprep.subr.mxu0 %v28
  %836 = vmatpush1.msra.mxu0 %v27
  %837 = vmatprep.subr.mxu0 %v36
  %838 = vmatpush1.msra.mxu0 %v35
  %839 = vmatprep.subr.mxu0 %v44
  %840 = vmatpush1.msra.mxu0 %v43
  %841 = vmatprep.subr.mxu0 %v52
  %842 = vmatpush1.msra.mxu0 %v51
  %843 = vmatprep.subr.mxu0 %v60
  %844 = vmatpush1.msra.mxu0 %v59
  %845 = vmatprep.subr.mxu0 %v68
  %846 = vmatpush1.msra.mxu0 %v67
  %847 = vmatprep.subr.mxu0 %v76
  %848 = vmatpush1.msra.mxu0 %v75
  %849 = vmatprep.subr.mxu0 %v84
  %850 = vmatpush1.msra.mxu0 %v83
  %851 = vmatprep.subr.mxu0 %v92
  %852 = vmatpush1.msra.mxu0 %v91
  %853 = vmatprep.subr.mxu0 %v100
  %854 = vmatpush1.msra.mxu0 %v99
  %855 = vmatprep.subr.mxu0 %v108
  %856 = vmatpush1.msra.mxu0 %v107
  %857 = vmatprep.subr.mxu0 %v116
  %858 = vmatpush1.msra.mxu0 %v115
  %859 = vmatprep.subr.mxu0 %v124
  %860 = vmatpush1.msra.mxu0 %v123
  %861 = vmatprep.subr.mxu0 %v132
  %862 = vmatpush1.msra.mxu0 %v131
  %863 = vmatprep.subr.mxu0 %v140
  %864 = vmatpush1.msra.mxu0 %v139
  %865 = vmatprep.subr.mxu0 %v148
  %866 = vmatpush1.msra.mxu0 %v147
  %867 = vmatprep.subr.mxu0 %v156
  %868 = vmatpush1.msra.mxu0 %v155
  %869 = vmatprep.subr.mxu0 %v164
  %870 = vmatpush1.msra.mxu0 %v163
  %871 = vmatprep.subr.mxu0 %v172
  %872 = vmatpush1.msra.mxu0 %v171
  %873 = vmatprep.subr.mxu0 %v180
  %874 = vmatpush1.msra.mxu0 %v179
  %875 = vmatprep.subr.mxu0 %v188
  %876 = vmatpush1.msra.mxu0 %v187
  %877 = vmatprep.subr.mxu0 %v196
  %878 = vmatpush1.msra.mxu0 %v195
  %879 = vmatprep.subr.mxu0 %v204
  %880 = vmatpush1.msra.mxu0 %v203
  %881 = vmatprep.subr.mxu0 %v212
  %882 = vmatpush1.msra.mxu0 %v211
  %883 = vmatprep.subr.mxu0 %v220
  %884 = vmatpush1.msra.mxu0 %v219
  %885 = vmatprep.subr.mxu0 %v228
  %886 = vmatpush1.msra.mxu0 %v227
  %887 = vmatprep.subr.mxu0 %v236
  %888 = vmatpush1.msra.mxu0 %v235
  %889 = vmatprep.subr.mxu0 %v244
  %890 = vmatpush1.msra.mxu0 %v243
  %891 = vmatprep.subr.mxu0 %v252
  %892 = vmatpush1.msra.mxu0 %v251
  %893 = vmatprep.subr.mxu0 %v260
  %894 = vmatpush1.msra.mxu0 %v259
  %895 = vmatprep.subr.mxu0 %v268
  %896 = vmatpush1.msra.mxu0 %v267
  %897 = vmatprep.mubr.f32.mxu0 %v543
  %898 = vmatmul.mubr.f32.gmra.mrb[0].mxu0 %v535
  %v899 = vpop.f32.mrb[0].mxu0
  %v900 = vadd.f32 0.0, %v899
  %v901 = vpop.f32.mrb[0].mxu0
  %v902 = vadd.f32 0.0, %v901
  %903 = vdwg.mxu0
  %904 = vmatprep.subr.mxu0 %v276
  %905 = vmatpush1.msra.mxu0 %v275
  %906 = vmatprep.subr.mxu0 %v284
  %907 = vmatpush1.msra.mxu0 %v283
  %908 = vmatprep.subr.mxu0 %v292
  %909 = vmatpush1.msra.mxu0 %v291
  %910 = vmatprep.subr.mxu0 %v300
  %911 = vmatpush1.msra.mxu0 %v299
  %912 = vmatprep.subr.mxu0 %v308
  %913 = vmatpush1.msra.mxu0 %v307
  %914 = vmatprep.subr.mxu0 %v316
  %915 = vmatpush1.msra.mxu0 %v315
  %916 = vmatprep.subr.mxu0 %v324
  %917 = vmatpush1.msra.mxu0 %v323
  %918 = vmatprep.subr.mxu0 %v332
  %919 = vmatpush1.msra.mxu0 %v331
  %920 = vmatprep.subr.mxu0 %v340
  %921 = vmatpush1.msra.mxu0 %v339
  %922 = vmatprep.subr.mxu0 %v348
  %923 = vmatpush1.msra.mxu0 %v347
  %924 = vmatprep.subr.mxu0 %v356
  %925 = vmatpush1.msra.mxu0 %v355
  %926 = vmatprep.subr.mxu0 %v364
  %927 = vmatpush1.msra.mxu0 %v363
  %928 = vmatprep.subr.mxu0 %v372
  %929 = vmatpush1.msra.mxu0 %v371
  %930 = vmatprep.subr.mxu0 %v380
  %931 = vmatpush1.msra.mxu0 %v379
  %932 = vmatprep.subr.mxu0 %v388
  %933 = vmatpush1.msra.mxu0 %v387
  %934 = vmatprep.subr.mxu0 %v396
  %935 = vmatpush1.msra.mxu0 %v395
  %936 = vmatprep.subr.mxu0 %v404
  %937 = vmatpush1.msra.mxu0 %v403
  %938 = vmatprep.subr.mxu0 %v412
  %939 = vmatpush1.msra.mxu0 %v411
  %940 = vmatprep.subr.mxu0 %v420
  %941 = vmatpush1.msra.mxu0 %v419
  %942 = vmatprep.subr.mxu0 %v428
  %943 = vmatpush1.msra.mxu0 %v427
  %944 = vmatprep.subr.mxu0 %v436
  %945 = vmatpush1.msra.mxu0 %v435
  %946 = vmatprep.subr.mxu0 %v444
  %947 = vmatpush1.msra.mxu0 %v443
  %948 = vmatprep.subr.mxu0 %v452
  %949 = vmatpush1.msra.mxu0 %v451
  %950 = vmatprep.subr.mxu0 %v460
  %951 = vmatpush1.msra.mxu0 %v459
  %952 = vmatprep.subr.mxu0 %v468
  %953 = vmatpush1.msra.mxu0 %v467
  %954 = vmatprep.subr.mxu0 %v476
  %955 = vmatpush1.msra.mxu0 %v475
  %956 = vmatprep.subr.mxu0 %v484
  %957 = vmatpush1.msra.mxu0 %v483
  %958 = vmatprep.subr.mxu0 %v492
  %959 = vmatpush1.msra.mxu0 %v491
  %960 = vmatprep.subr.mxu0 %v500
  %961 = vmatpush1.msra.mxu0 %v499
  %962 = vmatprep.subr.mxu0 %v508
  %963 = vmatpush1.msra.mxu0 %v507
  %964 = vmatprep.subr.mxu0 %v516
  %965 = vmatpush1.msra.mxu0 %v515
  %966 = vmatprep.subr.mxu0 %v524
  %967 = vmatpush1.msra.mxu0 %v523
  %968 = vmatprep.mubr.f32.mxu0 %v544
  %969 = vmatmul.mubr.f32.gmra.mrb[0].mxu0 %v542
  %v970 = vpop.f32.mrb[0].mxu0
  %v971 = vadd.f32 %v900, %v970
  %v972 = vpop.f32.mrb[0].mxu0
  %v973 = vadd.f32 %v902, %v972
  %974 = vdwg.mxu0
  %975 = vmatprep.subr.mxu0 %v22
  %976 = vmatpush1.msra.mxu0 %v21
  %977 = vmatprep.subr.mxu0 %v30
  %978 = vmatpush1.msra.mxu0 %v29
  %979 = vmatprep.subr.mxu0 %v38
  %980 = vmatpush1.msra.mxu0 %v37
  %981 = vmatprep.subr.mxu0 %v46
  %982 = vmatpush1.msra.mxu0 %v45
  %983 = vmatprep.subr.mxu0 %v54
  %984 = vmatpush1.msra.mxu0 %v53
  %985 = vmatprep.subr.mxu0 %v62
  %986 = vmatpush1.msra.mxu0 %v61
  %987 = vmatprep.subr.mxu0 %v70
  %988 = vmatpush1.msra.mxu0 %v69
  %989 = vmatprep.subr.mxu0 %v78
  %990 = vmatpush1.msra.mxu0 %v77
  %991 = vmatprep.subr.mxu0 %v86
  %992 = vmatpush1.msra.mxu0 %v85
  %993 = vmatprep.subr.mxu0 %v94
  %994 = vmatpush1.msra.mxu0 %v93
  %995 = vmatprep.subr.mxu0 %v102
  %996 = vmatpush1.msra.mxu0 %v101
  %997 = vmatprep.subr.mxu0 %v110
  %998 = vmatpush1.msra.mxu0 %v109
  %999 = vmatprep.subr.mxu0 %v118
  %1000 = vmatpush1.msra.mxu0 %v117
  %1001 = vmatprep.subr.mxu0 %v126
  %1002 = vmatpush1.msra.mxu0 %v125
  %1003 = vmatprep.subr.mxu0 %v134
  %1004 = vmatpush1.msra.mxu0 %v133
  %1005 = vmatprep.subr.mxu0 %v142
  %1006 = vmatpush1.msra.mxu0 %v141
  %1007 = vmatprep.subr.mxu0 %v150
  %1008 = vmatpush1.msra.mxu0 %v149
  %1009 = vmatprep.subr.mxu0 %v158
  %1010 = vmatpush1.msra.mxu0 %v157
  %1011 = vmatprep.subr.mxu0 %v166
  %1012 = vmatpush1.msra.mxu0 %v165
  %1013 = vmatprep.subr.mxu0 %v174
  %1014 = vmatpush1.msra.mxu0 %v173
  %1015 = vmatprep.subr.mxu0 %v182
  %1016 = vmatpush1.msra.mxu0 %v181
  %1017 = vmatprep.subr.mxu0 %v190
  %1018 = vmatpush1.msra.mxu0 %v189
  %1019 = vmatprep.subr.mxu0 %v198
  %1020 = vmatpush1.msra.mxu0 %v197
  %1021 = vmatprep.subr.mxu0 %v206
  %1022 = vmatpush1.msra.mxu0 %v205
  %1023 = vmatprep.subr.mxu0 %v214
  %1024 = vmatpush1.msra.mxu0 %v213
  %1025 = vmatprep.subr.mxu0 %v222
  %1026 = vmatpush1.msra.mxu0 %v221
  %1027 = vmatprep.subr.mxu0 %v230
  %1028 = vmatpush1.msra.mxu0 %v229
  %1029 = vmatprep.subr.mxu0 %v238
  %1030 = vmatpush1.msra.mxu0 %v237
  %1031 = vmatprep.subr.mxu0 %v246
  %1032 = vmatpush1.msra.mxu0 %v245
  %1033 = vmatprep.subr.mxu0 %v254
  %1034 = vmatpush1.msra.mxu0 %v253
  %1035 = vmatprep.subr.mxu0 %v262
  %1036 = vmatpush1.msra.mxu0 %v261
  %1037 = vmatprep.subr.mxu0 %v270
  %1038 = vmatpush1.msra.mxu0 %v269
  %1039 = vmatprep.mubr.f32.mxu0 %v543
  %1040 = vmatmul.mubr.f32.gmra.mrb[0].mxu0 %v535
  %v1041 = vpop.f32.mrb[0].mxu0
  %v1042 = vadd.f32 0.0, %v1041
  %v1043 = vpop.f32.mrb[0].mxu0
  %v1044 = vadd.f32 0.0, %v1043
  %1045 = vdwg.mxu0
  %1046 = vmatprep.subr.mxu0 %v278
  %1047 = vmatpush1.msra.mxu0 %v277
  %1048 = vmatprep.subr.mxu0 %v286
  %1049 = vmatpush1.msra.mxu0 %v285
  %1050 = vmatprep.subr.mxu0 %v294
  %1051 = vmatpush1.msra.mxu0 %v293
  %1052 = vmatprep.subr.mxu0 %v302
  %1053 = vmatpush1.msra.mxu0 %v301
  %1054 = vmatprep.subr.mxu0 %v310
  %1055 = vmatpush1.msra.mxu0 %v309
  %1056 = vmatprep.subr.mxu0 %v318
  %1057 = vmatpush1.msra.mxu0 %v317
  %1058 = vmatprep.subr.mxu0 %v326
  %1059 = vmatpush1.msra.mxu0 %v325
  %1060 = vmatprep.subr.mxu0 %v334
  %1061 = vmatpush1.msra.mxu0 %v333
  %1062 = vmatprep.subr.mxu0 %v342
  %1063 = vmatpush1.msra.mxu0 %v341
  %1064 = vmatprep.subr.mxu0 %v350
  %1065 = vmatpush1.msra.mxu0 %v349
  %1066 = vmatprep.subr.mxu0 %v358
  %1067 = vmatpush1.msra.mxu0 %v357
  %1068 = vmatprep.subr.mxu0 %v366
  %1069 = vmatpush1.msra.mxu0 %v365
  %1070 = vmatprep.subr.mxu0 %v374
  %1071 = vmatpush1.msra.mxu0 %v373
  %1072 = vmatprep.subr.mxu0 %v382
  %1073 = vmatpush1.msra.mxu0 %v381
  %1074 = vmatprep.subr.mxu0 %v390
  %1075 = vmatpush1.msra.mxu0 %v389
  %1076 = vmatprep.subr.mxu0 %v398
  %1077 = vmatpush1.msra.mxu0 %v397
  %1078 = vmatprep.subr.mxu0 %v406
  %1079 = vmatpush1.msra.mxu0 %v405
  %1080 = vmatprep.subr.mxu0 %v414
  %1081 = vmatpush1.msra.mxu0 %v413
  %1082 = vmatprep.subr.mxu0 %v422
  %1083 = vmatpush1.msra.mxu0 %v421
  %1084 = vmatprep.subr.mxu0 %v430
  %1085 = vmatpush1.msra.mxu0 %v429
  %1086 = vmatprep.subr.mxu0 %v438
  %1087 = vmatpush1.msra.mxu0 %v437
  %1088 = vmatprep.subr.mxu0 %v446
  %1089 = vmatpush1.msra.mxu0 %v445
  %1090 = vmatprep.subr.mxu0 %v454
  %1091 = vmatpush1.msra.mxu0 %v453
  %1092 = vmatprep.subr.mxu0 %v462
  %1093 = vmatpush1.msra.mxu0 %v461
  %1094 = vmatprep.subr.mxu0 %v470
  %1095 = vmatpush1.msra.mxu0 %v469
  %1096 = vmatprep.subr.mxu0 %v478
  %1097 = vmatpush1.msra.mxu0 %v477
  %1098 = vmatprep.subr.mxu0 %v486
  %1099 = vmatpush1.msra.mxu0 %v485
  %1100 = vmatprep.subr.mxu0 %v494
  %1101 = vmatpush1.msra.mxu0 %v493
  %1102 = vmatprep.subr.mxu0 %v502
  %1103 = vmatpush1.msra.mxu0 %v501
  %1104 = vmatprep.subr.mxu0 %v510
  %1105 = vmatpush1.msra.mxu0 %v509
  %1106 = vmatprep.subr.mxu0 %v518
  %1107 = vmatpush1.msra.mxu0 %v517
  %1108 = vmatprep.subr.mxu0 %v526
  %1109 = vmatpush1.msra.mxu0 %v525
  %1110 = vmatprep.mubr.f32.mxu0 %v544
  %1111 = vmatmul.mubr.f32.gmra.mrb[0].mxu0 %v542
  %v1112 = vpop.f32.mrb[0].mxu0
  %v1113 = vadd.f32 %v1042, %v1112
  %v1114 = vpop.f32.mrb[0].mxu0
  %v1115 = vadd.f32 %v1044, %v1114
  %1116 = vdwg.mxu0
  %v1117 = vld [vmem:[%s2] sm:$0xff]
  %v1119 = vlaneseq
  %v1120 = vshrl.u32 %v1119, 7
  %v1121 = vsub.s32 0, %v1120
  %v1122 = vrot.slane %v1117, %v1121
  %v1123 = vlaneseq
  %v1124 = vshrl.u32 %v1123, 7
  %v1125 = vsub.s32 1, %v1124
  %v1126 = vrot.slane %v1117, %v1125
  %v1127 = vlaneseq
  %v1128 = vshrl.u32 %v1127, 7
  %v1129 = vsub.s32 2, %v1128
  %v1130 = vrot.slane %v1117, %v1129
  %v1131 = vlaneseq
  %v1132 = vshrl.u32 %v1131, 7
  %v1133 = vsub.s32 3, %v1132
  %v1134 = vrot.slane %v1117, %v1133
  %v1135 = vlaneseq
  %v1136 = vshrl.u32 %v1135, 7
  %v1137 = vsub.s32 4, %v1136
  %v1138 = vrot.slane %v1117, %v1137
  %v1139 = vlaneseq
  %v1140 = vshrl.u32 %v1139, 7
  %v1141 = vsub.s32 5, %v1140
  %v1142 = vrot.slane %v1117, %v1141
  %v1143 = vlaneseq
  %v1144 = vshrl.u32 %v1143, 7
  %v1145 = vsub.s32 6, %v1144
  %v1146 = vrot.slane %v1117, %v1145
  %v1147 = vlaneseq
  %v1148 = vshrl.u32 %v1147, 7
  %v1149 = vsub.s32 7, %v1148
  %v1150 = vrot.slane %v1117, %v1149
  %v1159 = vadd.f32 %v687, %v1122
  %v1160 = vadd.f32 %v689, %v1126
  %v1161 = vadd.f32 %v829, %v1130
  %v1162 = vadd.f32 %v831, %v1134
  %v1163 = vadd.f32 %v971, %v1138
  %v1164 = vadd.f32 %v973, %v1142
  %v1165 = vadd.f32 %v1113, %v1146
  %v1166 = vadd.f32 %v1115, %v1150
  %v1175 = vcombine.low %v1159, %v1160
  %v1176 = vcombine.low %v1161, %v1162
  %v1178 = vunpack.c.l.s4 1983009808
  %v1179 = vunpack.c.0.s8 %v1178
  %v1180 = vlaneseq
  %v1181 = vshrl.u32 %v1180, 7
  %v1182 = vsub.s32 %v1179, %v1181
  %v1183 = vrot.slane %v1175, %v1182
  %v1185 = vunpack.c.l.s4 1983009808
  %v1186 = vunpack.c.0.s8 %v1185
  %v1187 = vlaneseq
  %v1188 = vshrl.u32 %v1187, 7
  %v1189 = vsub.s32 %v1186, %v1188
  %v1190 = vrot.slane %v1176, %v1189
  %v1191 = vcombine.low %v1183, %v1190
  %v1192 = vcombine.low %v1163, %v1164
  %v1193 = vcombine.low %v1165, %v1166
  %v1195 = vunpack.c.l.s4 1983009808
  %v1196 = vunpack.c.0.s8 %v1195
  %v1197 = vlaneseq
  %v1198 = vshrl.u32 %v1197, 7
  %v1199 = vsub.s32 %v1196, %v1198
  %v1200 = vrot.slane %v1192, %v1199
  %v1202 = vunpack.c.l.s4 1983009808
  %v1203 = vunpack.c.0.s8 %v1202
  %v1204 = vlaneseq
  %v1205 = vshrl.u32 %v1204, 7
  %v1206 = vsub.s32 %v1203, %v1205
  %v1207 = vrot.slane %v1193, %v1206
  %v1208 = vcombine.low %v1200, %v1207
  %1211 = vst [vmem:[%s3] sm:$0xff] %v1191
  %1212 = vst [vmem:[%s3 + $0x8] sm:$0xff] %v1208
  // Predicated region
  $region14: #{cvae_forward.19} parent=0 // pred_check
    _
  $region15: #{cvae_forward.19} parent=0 // pred_check_branch
    %1214 = sbr.rel (0) target = $region17
  $region16: #{cvae_forward.19} parent=0 // pred_region
    _
  $region17: #{cvae_forward.19} parent=0 // pred_fallthru
    _
  // Predicated region
  $region18: #{cvae_forward.19} parent=0 // pred_check
    _
  $region19: #{cvae_forward.19} parent=0 // pred_check_branch
    %1216 = sbr.rel (0) target = $region21
  $region20: #{cvae_forward.19} parent=0 // pred_region
    _
  $region21: #{cvae_forward.19} parent=0 // pred_fallthru
    _

// kernel: cvae_forward.24
$region0: #{cvae_forward.24}
  #allocation0 [shape = 'u32[]', space=smem, size = 0x4, offset = 0x4, fixed_abs, tag = 'smem constant byte address 0x4 - core index']
  #allocation1 [shape = 'u32[144,128]{1,0:T(1,128)}', space=vmem, size = 0x12000, scoped, tag = 'internal scratch']
  %s0 = inlined_call_operand.vmem [shape: bf16[4,128,32], index: 0, kind: input, shape index: {}]
  %s1 = inlined_call_operand.vmem [shape: bf16[4,32,4], index: 1, kind: input, shape index: {}]
  %s2 = inlined_call_operand.vmem [shape: f32[1,1,4], index: 2, kind: input, shape index: {}]
  %s3 = inlined_call_operand.vmem [shape: f32[1,1,4], index: 3, kind: input, shape index: {}]
  %s4 = inlined_call_operand.vmem [shape: f32[4,128,4], index: 4, kind: output, shape index: {}]
  %s5 = sld [smem:[#allocation0]]
  $region26: #{cvae_forward.24} parent=0
    _
  %s7 = ssub.s32 1, %s5
  %s8 = scalar_select 0, %s7, %s5
  // Predicated region
  $region2: #{cvae_forward.24} parent=0 // pred_check
    _
  $region3: #{cvae_forward.24} parent=0 // pred_check_branch
    %10 = sbr.rel (0) target = $region5
  $region4: #{cvae_forward.24} parent=0 // pred_region
    _
  $region5: #{cvae_forward.24} parent=0 // pred_fallthru
    _
  // Predicated region
  $region6: #{cvae_forward.24} parent=0 // pred_check
    _
  $region7: #{cvae_forward.24} parent=0 // pred_check_branch
    %12 = sbr.rel (0) target = $region9
  $region8: #{cvae_forward.24} parent=0 // pred_region
    _
  $region9: #{cvae_forward.24} parent=0 // pred_fallthru
    _
  // Predicated region
  $region10: #{cvae_forward.24} parent=0 // pred_check
    _
  $region11: #{cvae_forward.24} parent=0 // pred_check_branch
    %14 = sbr.rel (0) target = $region13
  $region12: #{cvae_forward.24} parent=0 // pred_region
    _
  $region13: #{cvae_forward.24} parent=0 // pred_fallthru
    _
  // Predicated region
  $region14: #{cvae_forward.24} parent=0 // pred_check
    _
  $region15: #{cvae_forward.24} parent=0 // pred_check_branch
    %16 = sbr.rel (0) target = $region17
  $region16: #{cvae_forward.24} parent=0 // pred_region
    _
  $region17: #{cvae_forward.24} parent=0 // pred_fallthru
    _
  %v18 = vld [vmem:[%s0] sm:$0xf]
  %v19 = vld [vmem:[%s0 + $0x4] sm:$0xf]
  %v20 = vld [vmem:[%s0 + $0x8] sm:$0xf]
  %v21 = vld [vmem:[%s0 + $0xc] sm:$0xf]
  %v22 = vld [vmem:[%s0 + $0x10] sm:$0xf]
  %v23 = vld [vmem:[%s0 + $0x14] sm:$0xf]
  %v24 = vld [vmem:[%s0 + $0x18] sm:$0xf]
  %v25 = vld [vmem:[%s0 + $0x1c] sm:$0xf]
  %v26 = vld [vmem:[%s0 + $0x20] sm:$0xf]
  %v27 = vld [vmem:[%s0 + $0x24] sm:$0xf]
  %v28 = vld [vmem:[%s0 + $0x28] sm:$0xf]
  %v29 = vld [vmem:[%s0 + $0x2c] sm:$0xf]
  %v30 = vld [vmem:[%s0 + $0x30] sm:$0xf]
  %v31 = vld [vmem:[%s0 + $0x34] sm:$0xf]
  %v32 = vld [vmem:[%s0 + $0x38] sm:$0xf]
  %v33 = vld [vmem:[%s0 + $0x3c] sm:$0xf]
  %v34 = vld [vmem:[%s1] sm:$0xf]
  %v35 = vld [vmem:[%s1 + $0x4] sm:$0xf]
  %v36 = vld [vmem:[%s1 + $0x8] sm:$0xf]
  %v37 = vld [vmem:[%s1 + $0xc] sm:$0xf]
  %v54 = vunpack.c.l.b16 %v18
  %v55 = vunpack.c.l.b16 %v19
  %v56 = vunpack.c.l.b16 %v20
  %v57 = vunpack.c.l.b16 %v21
  %v58 = vunpack.c.l.b16 %v22
  %v59 = vunpack.c.l.b16 %v23
  %v60 = vunpack.c.l.b16 %v24
  %v61 = vunpack.c.l.b16 %v25
  %v62 = vunpack.c.l.b16 %v26
  %v63 = vunpack.c.l.b16 %v27
  %v64 = vunpack.c.l.b16 %v28
  %v65 = vunpack.c.l.b16 %v29
  %v66 = vunpack.c.l.b16 %v30
  %v67 = vunpack.c.l.b16 %v31
  %v68 = vunpack.c.l.b16 %v32
  %v69 = vunpack.c.l.b16 %v33
  %v70 = vpack.c.b16 %v55, %v54
  %v71 = vpack.c.b16 %v57, %v56
  %v72 = vpack.c.b16 %v59, %v58
  %v73 = vpack.c.b16 %v61, %v60
  %v74 = vpack.c.b16 %v63, %v62
  %v75 = vpack.c.b16 %v65, %v64
  %v76 = vpack.c.b16 %v67, %v66
  %v77 = vpack.c.b16 %v69, %v68
  %v82 = vunpack.c.l.b16 %v34
  %v83 = vunpack.c.l.b16 %v35
  %v84 = vunpack.c.l.b16 %v36
  %v85 = vunpack.c.l.b16 %v37
  %v86 = vpack.c.b16 %v83, %v82
  %v87 = vpack.c.b16 %v85, %v84
  %vm90 = vcmask 261120
  %v92 = vsel %vm90, %v70, 0
  %v95 = vsel %vm90, %v71, 0
  %v98 = vsel %vm90, %v72, 0
  %v101 = vsel %vm90, %v73, 0
  %v104 = vsel %vm90, %v74, 0
  %v107 = vsel %vm90, %v75, 0
  %v110 = vsel %vm90, %v76, 0
  %v113 = vsel %vm90, %v77, 0
  %115 = vmatprep.subr.bf16.mxu0 0
  %116 = vmatpush1.bf16.msra.mxu0 %v86
  %117 = vmatprep.subr.bf16.mxu0 0
  %118 = vmatpush1.bf16.msra.mxu0 %v87
  %119 = vmatprep.subr.bf16.mxu0 0
  %120 = vmatpush1.bf16.msra.mxu0 0
  %121 = vmatprep.subr.bf16.mxu0 0
  %122 = vmatpush1.bf16.msra.mxu0 0
  %123 = vmatprep.subr.bf16.mxu0 0
  %124 = vmatpush1.bf16.msra.mxu0 0
  %125 = vmatprep.subr.bf16.mxu0 0
  %126 = vmatpush1.bf16.msra.mxu0 0
  %127 = vmatprep.subr.bf16.mxu0 0
  %128 = vmatpush1.bf16.msra.mxu0 0
  %129 = vmatprep.subr.bf16.mxu0 0
  %130 = vmatpush1.bf16.msra.mxu0 0
  %131 = vmatprep.subr.bf16.mxu0 0
  %132 = vmatpush1.bf16.msra.mxu0 0
  %133 = vmatprep.subr.bf16.mxu0 0
  %134 = vmatpush1.bf16.msra.mxu0 0
  %135 = vmatprep.subr.bf16.mxu0 0
  %136 = vmatpush1.bf16.msra.mxu0 0
  %137 = vmatprep.subr.bf16.mxu0 0
  %138 = vmatpush1.bf16.msra.mxu0 0
  %139 = vmatprep.subr.bf16.mxu0 0
  %140 = vmatpush1.bf16.msra.mxu0 0
  %141 = vmatprep.subr.bf16.mxu0 0
  %142 = vmatpush1.bf16.msra.mxu0 0
  %143 = vmatprep.subr.bf16.mxu0 0
  %144 = vmatpush1.bf16.msra.mxu0 0
  %145 = vmatprep.subr.bf16.mxu0 0
  %146 = vmatpush1.bf16.msra.mxu0 0
  %147 = vmatprep.mubr.bf16.mxu0 0
  %148 = vmatmul.mubr.bf16.gmra.mrb[0].mxu0 %v92
  %v149 = vpop.f32.mrb[0].mxu0
  %v150 = vadd.f32 0.0, %v149
  %v151 = vpop.f32.mrb[0].mxu0
  %v152 = vpop.f32.mrb[0].mxu0
  %v153 = vadd.f32 0.0, %v152
  %v154 = vpop.f32.mrb[0].mxu0
  %155 = vmatprep.mubr.bf16.mxu0 0
  %156 = vmatmul.mubr.bf16.gmra.mrb[0].mxu0 %v95
  %v157 = vpop.f32.mrb[0].mxu0
  %v158 = vadd.f32 0.0, %v157
  %v159 = vpop.f32.mrb[0].mxu0
  %v160 = vpop.f32.mrb[0].mxu0
  %v161 = vadd.f32 0.0, %v160
  %v162 = vpop.f32.mrb[0].mxu0
  %163 = vmatprep.mubr.bf16.mxu0 0
  %164 = vmatmul.mubr.bf16.gmra.mrb[0].mxu0 %v98
  %v165 = vpop.f32.mrb[0].mxu0
  %v166 = vadd.f32 0.0, %v165
  %v167 = vpop.f32.mrb[0].mxu0
  %v168 = vpop.f32.mrb[0].mxu0
  %v169 = vadd.f32 0.0, %v168
  %v170 = vpop.f32.mrb[0].mxu0
  %171 = vmatprep.mubr.bf16.mxu0 0
  %172 = vmatmul.mubr.bf16.gmra.mrb[0].mxu0 %v101
  %v173 = vpop.f32.mrb[0].mxu0
  %v174 = vadd.f32 0.0, %v173
  %v175 = vpop.f32.mrb[0].mxu0
  %v176 = vpop.f32.mrb[0].mxu0
  %v177 = vadd.f32 0.0, %v176
  %v178 = vpop.f32.mrb[0].mxu0
  %179 = vmatprep.mubr.bf16.mxu0 0
  %180 = vmatmul.mubr.bf16.gmra.mrb[0].mxu0 %v104
  %v181 = vpop.f32.mrb[0].mxu0
  %v182 = vadd.f32 0.0, %v181
  %v183 = vpop.f32.mrb[0].mxu0
  %v184 = vpop.f32.mrb[0].mxu0
  %v185 = vadd.f32 0.0, %v184
  %v186 = vpop.f32.mrb[0].mxu0
  %187 = vmatprep.mubr.bf16.mxu0 0
  %188 = vmatmul.mubr.bf16.gmra.mrb[0].mxu0 %v107
  %v189 = vpop.f32.mrb[0].mxu0
  %v190 = vadd.f32 0.0, %v189
  %v191 = vpop.f32.mrb[0].mxu0
  %v192 = vpop.f32.mrb[0].mxu0
  %v193 = vadd.f32 0.0, %v192
  %v194 = vpop.f32.mrb[0].mxu0
  %195 = vmatprep.mubr.bf16.mxu0 0
  %196 = vmatmul.mubr.bf16.gmra.mrb[0].mxu0 %v110
  %v197 = vpop.f32.mrb[0].mxu0
  %v198 = vadd.f32 0.0, %v197
  %v199 = vpop.f32.mrb[0].mxu0
  %v200 = vpop.f32.mrb[0].mxu0
  %v201 = vadd.f32 0.0, %v200
  %v202 = vpop.f32.mrb[0].mxu0
  %203 = vmatprep.mubr.bf16.mxu0 0
  %204 = vmatmul.mubr.bf16.gmra.mrb[0].mxu0 %v113
  %v205 = vpop.f32.mrb[0].mxu0
  %v206 = vadd.f32 0.0, %v205
  %v207 = vpop.f32.mrb[0].mxu0
  %v208 = vpop.f32.mrb[0].mxu0
  %v209 = vadd.f32 0.0, %v208
  %v210 = vpop.f32.mrb[0].mxu0
  %211 = vdwg.mxu0
  %s212 = scalar_lea.vmem %s0, 64
  %v213 = vld [vmem:[%s212] sm:$0xf]
  %v214 = vld [vmem:[%s212 + $0x4] sm:$0xf]
  %v215 = vld [vmem:[%s212 + $0x8] sm:$0xf]
  %v216 = vld [vmem:[%s212 + $0xc] sm:$0xf]
  %v217 = vld [vmem:[%s212 + $0x10] sm:$0xf]
  %v218 = vld [vmem:[%s212 + $0x14] sm:$0xf]
  %v219 = vld [vmem:[%s212 + $0x18] sm:$0xf]
  %v220 = vld [vmem:[%s212 + $0x1c] sm:$0xf]
  %v221 = vld [vmem:[%s212 + $0x20] sm:$0xf]
  %v222 = vld [vmem:[%s212 + $0x24] sm:$0xf]
  %v223 = vld [vmem:[%s212 + $0x28] sm:$0xf]
  %v224 = vld [vmem:[%s212 + $0x2c] sm:$0xf]
  %v225 = vld [vmem:[%s212 + $0x30] sm:$0xf]
  %v226 = vld [vmem:[%s212 + $0x34] sm:$0xf]
  %v227 = vld [vmem:[%s212 + $0x38] sm:$0xf]
  %v228 = vld [vmem:[%s212 + $0x3c] sm:$0xf]
  %s229 = scalar_lea.vmem %s1, 16
  %v230 = vld [vmem:[%s229] sm:$0xf]
  %v231 = vld [vmem:[%s229 + $0x4] sm:$0xf]
  %v232 = vld [vmem:[%s229 + $0x8] sm:$0xf]
  %v233 = vld [vmem:[%s229 + $0xc] sm:$0xf]
  %v250 = vunpack.c.l.b16 %v213
  %v251 = vunpack.c.l.b16 %v214
  %v252 = vunpack.c.l.b16 %v215
  %v253 = vunpack.c.l.b16 %v216
  %v254 = vunpack.c.l.b16 %v217
  %v255 = vunpack.c.l.b16 %v218
  %v256 = vunpack.c.l.b16 %v219
  %v257 = vunpack.c.l.b16 %v220
  %v258 = vunpack.c.l.b16 %v221
  %v259 = vunpack.c.l.b16 %v222
  %v260 = vunpack.c.l.b16 %v223
  %v261 = vunpack.c.l.b16 %v224
  %v262 = vunpack.c.l.b16 %v225
  %v263 = vunpack.c.l.b16 %v226
  %v264 = vunpack.c.l.b16 %v227
  %v265 = vunpack.c.l.b16 %v228
  %v266 = vpack.c.b16 %v251, %v250
  %v267 = vpack.c.b16 %v253, %v252
  %v268 = vpack.c.b16 %v255, %v254
  %v269 = vpack.c.b16 %v257, %v256
  %v270 = vpack.c.b16 %v259, %v258
  %v271 = vpack.c.b16 %v261, %v260
  %v272 = vpack.c.b16 %v263, %v262
  %v273 = vpack.c.b16 %v265, %v264
  %v278 = vunpack.c.l.b16 %v230
  %v279 = vunpack.c.l.b16 %v231
  %v280 = vunpack.c.l.b16 %v232
  %v281 = vunpack.c.l.b16 %v233
  %v282 = vpack.c.b16 %v279, %v278
  %v283 = vpack.c.b16 %v281, %v280
  %v287 = vsel %vm90, %v266, 0
  %v290 = vsel %vm90, %v267, 0
  %v293 = vsel %vm90, %v268, 0
  %v296 = vsel %vm90, %v269, 0
  %v299 = vsel %vm90, %v270, 0
  %v302 = vsel %vm90, %v271, 0
  %v305 = vsel %vm90, %v272, 0
  %v308 = vsel %vm90, %v273, 0
  %310 = vmatprep.subr.bf16.mxu0 0
  %311 = vmatpush1.bf16.msra.mxu0 %v282
  %312 = vmatprep.subr.bf16.mxu0 0
  %313 = vmatpush1.bf16.msra.mxu0 %v283
  %314 = vmatprep.subr.bf16.mxu0 0
  %315 = vmatpush1.bf16.msra.mxu0 0
  %316 = vmatprep.subr.bf16.mxu0 0
  %317 = vmatpush1.bf16.msra.mxu0 0
  %318 = vmatprep.subr.bf16.mxu0 0
  %319 = vmatpush1.bf16.msra.mxu0 0
  %320 = vmatprep.subr.bf16.mxu0 0
  %321 = vmatpush1.bf16.msra.mxu0 0
  %322 = vmatprep.subr.bf16.mxu0 0
  %323 = vmatpush1.bf16.msra.mxu0 0
  %324 = vmatprep.subr.bf16.mxu0 0
  %325 = vmatpush1.bf16.msra.mxu0 0
  %326 = vmatprep.subr.bf16.mxu0 0
  %327 = vmatpush1.bf16.msra.mxu0 0
  %328 = vmatprep.subr.bf16.mxu0 0
  %329 = vmatpush1.bf16.msra.mxu0 0
  %330 = vmatprep.subr.bf16.mxu0 0
  %331 = vmatpush1.bf16.msra.mxu0 0
  %332 = vmatprep.subr.bf16.mxu0 0
  %333 = vmatpush1.bf16.msra.mxu0 0
  %334 = vmatprep.subr.bf16.mxu0 0
  %335 = vmatpush1.bf16.msra.mxu0 0
  %336 = vmatprep.subr.bf16.mxu0 0
  %337 = vmatpush1.bf16.msra.mxu0 0
  %338 = vmatprep.subr.bf16.mxu0 0
  %339 = vmatpush1.bf16.msra.mxu0 0
  %340 = vmatprep.subr.bf16.mxu0 0
  %341 = vmatpush1.bf16.msra.mxu0 0
  %342 = vmatprep.mubr.bf16.mxu0 0
  %343 = vmatmul.mubr.bf16.gmra.mrb[0].mxu0 %v287
  %v344 = vpop.f32.mrb[0].mxu0
  %v345 = vadd.f32 0.0, %v344
  %v346 = vpop.f32.mrb[0].mxu0
  %v347 = vpop.f32.mrb[0].mxu0
  %v348 = vadd.f32 0.0, %v347
  %v349 = vpop.f32.mrb[0].mxu0
  %350 = vmatprep.mubr.bf16.mxu0 0
  %351 = vmatmul.mubr.bf16.gmra.mrb[0].mxu0 %v290
  %v352 = vpop.f32.mrb[0].mxu0
  %v353 = vadd.f32 0.0, %v352
  %v354 = vpop.f32.mrb[0].mxu0
  %v355 = vpop.f32.mrb[0].mxu0
  %v356 = vadd.f32 0.0, %v355
  %v357 = vpop.f32.mrb[0].mxu0
  %358 = vmatprep.mubr.bf16.mxu0 0
  %359 = vmatmul.mubr.bf16.gmra.mrb[0].mxu0 %v293
  %v360 = vpop.f32.mrb[0].mxu0
  %v361 = vadd.f32 0.0, %v360
  %v362 = vpop.f32.mrb[0].mxu0
  %v363 = vpop.f32.mrb[0].mxu0
  %v364 = vadd.f32 0.0, %v363
  %v365 = vpop.f32.mrb[0].mxu0
  %366 = vmatprep.mubr.bf16.mxu0 0
  %367 = vmatmul.mubr.bf16.gmra.mrb[0].mxu0 %v296
  %v368 = vpop.f32.mrb[0].mxu0
  %v369 = vadd.f32 0.0, %v368
  %v370 = vpop.f32.mrb[0].mxu0
  %v371 = vpop.f32.mrb[0].mxu0
  %v372 = vadd.f32 0.0, %v371
  %v373 = vpop.f32.mrb[0].mxu0
  %374 = vmatprep.mubr.bf16.mxu0 0
  %375 = vmatmul.mubr.bf16.gmra.mrb[0].mxu0 %v299
  %v376 = vpop.f32.mrb[0].mxu0
  %v377 = vadd.f32 0.0, %v376
  %v378 = vpop.f32.mrb[0].mxu0
  %v379 = vpop.f32.mrb[0].mxu0
  %v380 = vadd.f32 0.0, %v379
  %v381 = vpop.f32.mrb[0].mxu0
  %382 = vmatprep.mubr.bf16.mxu0 0
  %383 = vmatmul.mubr.bf16.gmra.mrb[0].mxu0 %v302
  %v384 = vpop.f32.mrb[0].mxu0
  %v385 = vadd.f32 0.0, %v384
  %v386 = vpop.f32.mrb[0].mxu0
  %v387 = vpop.f32.mrb[0].mxu0
  %v388 = vadd.f32 0.0, %v387
  %v389 = vpop.f32.mrb[0].mxu0
  %390 = vmatprep.mubr.bf16.mxu0 0
  %391 = vmatmul.mubr.bf16.gmra.mrb[0].mxu0 %v305
  %v392 = vpop.f32.mrb[0].mxu0
  %v393 = vadd.f32 0.0, %v392
  %v394 = vpop.f32.mrb[0].mxu0
  %v395 = vpop.f32.mrb[0].mxu0
  %v396 = vadd.f32 0.0, %v395
  %v397 = vpop.f32.mrb[0].mxu0
  %398 = vmatprep.mubr.bf16.mxu0 0
  %399 = vmatmul.mubr.bf16.gmra.mrb[0].mxu0 %v308
  %v400 = vpop.f32.mrb[0].mxu0
  %v401 = vadd.f32 0.0, %v400
  %v402 = vpop.f32.mrb[0].mxu0
  %v403 = vpop.f32.mrb[0].mxu0
  %v404 = vadd.f32 0.0, %v403
  %v405 = vpop.f32.mrb[0].mxu0
  %406 = vdwg.mxu0
  %s407 = scalar_lea.vmem %s0, 128
  %v408 = vld [vmem:[%s407] sm:$0xf]
  %v409 = vld [vmem:[%s407 + $0x4] sm:$0xf]
  %v410 = vld [vmem:[%s407 + $0x8] sm:$0xf]
  %v411 = vld [vmem:[%s407 + $0xc] sm:$0xf]
  %v412 = vld [vmem:[%s407 + $0x10] sm:$0xf]
  %v413 = vld [vmem:[%s407 + $0x14] sm:$0xf]
  %v414 = vld [vmem:[%s407 + $0x18] sm:$0xf]
  %v415 = vld [vmem:[%s407 + $0x1c] sm:$0xf]
  %v416 = vld [vmem:[%s407 + $0x20] sm:$0xf]
  %v417 = vld [vmem:[%s407 + $0x24] sm:$0xf]
  %v418 = vld [vmem:[%s407 + $0x28] sm:$0xf]
  %v419 = vld [vmem:[%s407 + $0x2c] sm:$0xf]
  %v420 = vld [vmem:[%s407 + $0x30] sm:$0xf]
  %v421 = vld [vmem:[%s407 + $0x34] sm:$0xf]
  %v422 = vld [vmem:[%s407 + $0x38] sm:$0xf]
  %v423 = vld [vmem:[%s407 + $0x3c] sm:$0xf]
  %s424 = scalar_lea.vmem %s1, 32
  %v425 = vld [vmem:[%s424] sm:$0xf]
  %v426 = vld [vmem:[%s424 + $0x4] sm:$0xf]
  %v427 = vld [vmem:[%s424 + $0x8] sm:$0xf]
  %v428 = vld [vmem:[%s424 + $0xc] sm:$0xf]
  %v445 = vunpack.c.l.b16 %v408
  %v446 = vunpack.c.l.b16 %v409
  %v447 = vunpack.c.l.b16 %v410
  %v448 = vunpack.c.l.b16 %v411
  %v449 = vunpack.c.l.b16 %v412
  %v450 = vunpack.c.l.b16 %v413
  %v451 = vunpack.c.l.b16 %v414
  %v452 = vunpack.c.l.b16 %v415
  %v453 = vunpack.c.l.b16 %v416
  %v454 = vunpack.c.l.b16 %v417
  %v455 = vunpack.c.l.b16 %v418
  %v456 = vunpack.c.l.b16 %v419
  %v457 = vunpack.c.l.b16 %v420
  %v458 = vunpack.c.l.b16 %v421
  %v459 = vunpack.c.l.b16 %v422
  %v460 = vunpack.c.l.b16 %v423
  %v461 = vpack.c.b16 %v446, %v445
  %v462 = vpack.c.b16 %v448, %v447
  %v463 = vpack.c.b16 %v450, %v449
  %v464 = vpack.c.b16 %v452, %v451
  %v465 = vpack.c.b16 %v454, %v453
  %v466 = vpack.c.b16 %v456, %v455
  %v467 = vpack.c.b16 %v458, %v457
  %v468 = vpack.c.b16 %v460, %v459
  %v473 = vunpack.c.l.b16 %v425
  %v474 = vunpack.c.l.b16 %v426
  %v475 = vunpack.c.l.b16 %v427
  %v476 = vunpack.c.l.b16 %v428
  %v477 = vpack.c.b16 %v474, %v473
  %v478 = vpack.c.b16 %v476, %v475
  %v482 = vsel %vm90, %v461, 0
  %v485 = vsel %vm90, %v462, 0
  %v488 = vsel %vm90, %v463, 0
  %v491 = vsel %vm90, %v464, 0
  %v494 = vsel %vm90, %v465, 0
  %v497 = vsel %vm90, %v466, 0
  %v500 = vsel %vm90, %v467, 0
  %v503 = vsel %vm90, %v468, 0
  %505 = vmatprep.subr.bf16.mxu0 0
  %506 = vmatpush1.bf16.msra.mxu0 %v477
  %507 = vmatprep.subr.bf16.mxu0 0
  %508 = vmatpush1.bf16.msra.mxu0 %v478
  %509 = vmatprep.subr.bf16.mxu0 0
  %510 = vmatpush1.bf16.msra.mxu0 0
  %511 = vmatprep.subr.bf16.mxu0 0
  %512 = vmatpush1.bf16.msra.mxu0 0
  %513 = vmatprep.subr.bf16.mxu0 0
  %514 = vmatpush1.bf16.msra.mxu0 0
  %515 = vmatprep.subr.bf16.mxu0 0
  %516 = vmatpush1.bf16.msra.mxu0 0
  %517 = vmatprep.subr.bf16.mxu0 0
  %518 = vmatpush1.bf16.msra.mxu0 0
  %519 = vmatprep.subr.bf16.mxu0 0
  %520 = vmatpush1.bf16.msra.mxu0 0
  %521 = vmatprep.subr.bf16.mxu0 0
  %522 = vmatpush1.bf16.msra.mxu0 0
  %523 = vmatprep.subr.bf16.mxu0 0
  %524 = vmatpush1.bf16.msra.mxu0 0
  %525 = vmatprep.subr.bf16.mxu0 0
  %526 = vmatpush1.bf16.msra.mxu0 0
  %527 = vmatprep.subr.bf16.mxu0 0
  %528 = vmatpush1.bf16.msra.mxu0 0
  %529 = vmatprep.subr.bf16.mxu0 0
  %530 = vmatpush1.bf16.msra.mxu0 0
  %531 = vmatprep.subr.bf16.mxu0 0
  %532 = vmatpush1.bf16.msra.mxu0 0
  %533 = vmatprep.subr.bf16.mxu0 0
  %534 = vmatpush1.bf16.msra.mxu0 0
  %535 = vmatprep.subr.bf16.mxu0 0
  %536 = vmatpush1.bf16.msra.mxu0 0
  %537 = vmatprep.mubr.bf16.mxu0 0
  %538 = vmatmul.mubr.bf16.gmra.mrb[0].mxu0 %v482
  %v539 = vpop.f32.mrb[0].mxu0
  %v540 = vadd.f32 0.0, %v539
  %v541 = vpop.f32.mrb[0].mxu0
  %v542 = vpop.f32.mrb[0].mxu0
  %v543 = vadd.f32 0.0, %v542
  %v544 = vpop.f32.mrb[0].mxu0
  %545 = vmatprep.mubr.bf16.mxu0 0
  %546 = vmatmul.mubr.bf16.gmra.mrb[0].mxu0 %v485
  %v547 = vpop.f32.mrb[0].mxu0
  %v548 = vadd.f32 0.0, %v547
  %v549 = vpop.f32.mrb[0].mxu0
  %v550 = vpop.f32.mrb[0].mxu0
  %v551 = vadd.f32 0.0, %v550
  %v552 = vpop.f32.mrb[0].mxu0
  %553 = vmatprep.mubr.bf16.mxu0 0
  %554 = vmatmul.mubr.bf16.gmra.mrb[0].mxu0 %v488
  %v555 = vpop.f32.mrb[0].mxu0
  %v556 = vadd.f32 0.0, %v555
  %v557 = vpop.f32.mrb[0].mxu0
  %v558 = vpop.f32.mrb[0].mxu0
  %v559 = vadd.f32 0.0, %v558
  %v560 = vpop.f32.mrb[0].mxu0
  %561 = vmatprep.mubr.bf16.mxu0 0
  %562 = vmatmul.mubr.bf16.gmra.mrb[0].mxu0 %v491
  %v563 = vpop.f32.mrb[0].mxu0
  %v564 = vadd.f32 0.0, %v563
  %v565 = vpop.f32.mrb[0].mxu0
  %v566 = vpop.f32.mrb[0].mxu0
  %v567 = vadd.f32 0.0, %v566
  %v568 = vpop.f32.mrb[0].mxu0
  %569 = vmatprep.mubr.bf16.mxu0 0
  %570 = vmatmul.mubr.bf16.gmra.mrb[0].mxu0 %v494
  %v571 = vpop.f32.mrb[0].mxu0
  %v572 = vadd.f32 0.0, %v571
  %v573 = vpop.f32.mrb[0].mxu0
  %v574 = vpop.f32.mrb[0].mxu0
  %v575 = vadd.f32 0.0, %v574
  %v576 = vpop.f32.mrb[0].mxu0
  %577 = vmatprep.mubr.bf16.mxu0 0
  %578 = vmatmul.mubr.bf16.gmra.mrb[0].mxu0 %v497
  %v579 = vpop.f32.mrb[0].mxu0
  %v580 = vadd.f32 0.0, %v579
  %v581 = vpop.f32.mrb[0].mxu0
  %v582 = vpop.f32.mrb[0].mxu0
  %v583 = vadd.f32 0.0, %v582
  %v584 = vpop.f32.mrb[0].mxu0
  %585 = vmatprep.mubr.bf16.mxu0 0
  %586 = vmatmul.mubr.bf16.gmra.mrb[0].mxu0 %v500
  %v587 = vpop.f32.mrb[0].mxu0
  %v588 = vadd.f32 0.0, %v587
  %v589 = vpop.f32.mrb[0].mxu0
  %v590 = vpop.f32.mrb[0].mxu0
  %v591 = vadd.f32 0.0, %v590
  %v592 = vpop.f32.mrb[0].mxu0
  %593 = vmatprep.mubr.bf16.mxu0 0
  %594 = vmatmul.mubr.bf16.gmra.mrb[0].mxu0 %v503
  %v595 = vpop.f32.mrb[0].mxu0
  %v596 = vadd.f32 0.0, %v595
  %v597 = vpop.f32.mrb[0].mxu0
  %v598 = vpop.f32.mrb[0].mxu0
  %v599 = vadd.f32 0.0, %v598
  %v600 = vpop.f32.mrb[0].mxu0
  %601 = vdwg.mxu0
  %s602 = scalar_lea.vmem %s0, 192
  %v603 = vld [vmem:[%s602] sm:$0xf]
  %v604 = vld [vmem:[%s602 + $0x4] sm:$0xf]
  %v605 = vld [vmem:[%s602 + $0x8] sm:$0xf]
  %v606 = vld [vmem:[%s602 + $0xc] sm:$0xf]
  %v607 = vld [vmem:[%s602 + $0x10] sm:$0xf]
  %v608 = vld [vmem:[%s602 + $0x14] sm:$0xf]
  %v609 = vld [vmem:[%s602 + $0x18] sm:$0xf]
  %v610 = vld [vmem:[%s602 + $0x1c] sm:$0xf]
  %v611 = vld [vmem:[%s602 + $0x20] sm:$0xf]
  %v612 = vld [vmem:[%s602 + $0x24] sm:$0xf]
  %v613 = vld [vmem:[%s602 + $0x28] sm:$0xf]
  %v614 = vld [vmem:[%s602 + $0x2c] sm:$0xf]
  %v615 = vld [vmem:[%s602 + $0x30] sm:$0xf]
  %v616 = vld [vmem:[%s602 + $0x34] sm:$0xf]
  %v617 = vld [vmem:[%s602 + $0x38] sm:$0xf]
  %v618 = vld [vmem:[%s602 + $0x3c] sm:$0xf]
  %s619 = scalar_lea.vmem %s1, 48
  %v620 = vld [vmem:[%s619] sm:$0xf]
  %v621 = vld [vmem:[%s619 + $0x4] sm:$0xf]
  %v622 = vld [vmem:[%s619 + $0x8] sm:$0xf]
  %v623 = vld [vmem:[%s619 + $0xc] sm:$0xf]
  %v640 = vunpack.c.l.b16 %v603
  %v641 = vunpack.c.l.b16 %v604
  %v642 = vunpack.c.l.b16 %v605
  %v643 = vunpack.c.l.b16 %v606
  %v644 = vunpack.c.l.b16 %v607
  %v645 = vunpack.c.l.b16 %v608
  %v646 = vunpack.c.l.b16 %v609
  %v647 = vunpack.c.l.b16 %v610
  %v648 = vunpack.c.l.b16 %v611
  %v649 = vunpack.c.l.b16 %v612
  %v650 = vunpack.c.l.b16 %v613
  %v651 = vunpack.c.l.b16 %v614
  %v652 = vunpack.c.l.b16 %v615
  %v653 = vunpack.c.l.b16 %v616
  %v654 = vunpack.c.l.b16 %v617
  %v655 = vunpack.c.l.b16 %v618
  %v656 = vpack.c.b16 %v641, %v640
  %v657 = vpack.c.b16 %v643, %v642
  %v658 = vpack.c.b16 %v645, %v644
  %v659 = vpack.c.b16 %v647, %v646
  %v660 = vpack.c.b16 %v649, %v648
  %v661 = vpack.c.b16 %v651, %v650
  %v662 = vpack.c.b16 %v653, %v652
  %v663 = vpack.c.b16 %v655, %v654
  %v668 = vunpack.c.l.b16 %v620
  %v669 = vunpack.c.l.b16 %v621
  %v670 = vunpack.c.l.b16 %v622
  %v671 = vunpack.c.l.b16 %v623
  %v672 = vpack.c.b16 %v669, %v668
  %v673 = vpack.c.b16 %v671, %v670
  %v677 = vsel %vm90, %v656, 0
  %v680 = vsel %vm90, %v657, 0
  %v683 = vsel %vm90, %v658, 0
  %v686 = vsel %vm90, %v659, 0
  %v689 = vsel %vm90, %v660, 0
  %v692 = vsel %vm90, %v661, 0
  %v695 = vsel %vm90, %v662, 0
  %v698 = vsel %vm90, %v663, 0
  %700 = vmatprep.subr.bf16.mxu0 0
  %701 = vmatpush1.bf16.msra.mxu0 %v672
  %702 = vmatprep.subr.bf16.mxu0 0
  %703 = vmatpush1.bf16.msra.mxu0 %v673
  %704 = vmatprep.subr.bf16.mxu0 0
  %705 = vmatpush1.bf16.msra.mxu0 0
  %706 = vmatprep.subr.bf16.mxu0 0
  %707 = vmatpush1.bf16.msra.mxu0 0
  %708 = vmatprep.subr.bf16.mxu0 0
  %709 = vmatpush1.bf16.msra.mxu0 0
  %710 = vmatprep.subr.bf16.mxu0 0
  %711 = vmatpush1.bf16.msra.mxu0 0
  %712 = vmatprep.subr.bf16.mxu0 0
  %713 = vmatpush1.bf16.msra.mxu0 0
  %714 = vmatprep.subr.bf16.mxu0 0
  %715 = vmatpush1.bf16.msra.mxu0 0
  %716 = vmatprep.subr.bf16.mxu0 0
  %717 = vmatpush1.bf16.msra.mxu0 0
  %718 = vmatprep.subr.bf16.mxu0 0
  %719 = vmatpush1.bf16.msra.mxu0 0
  %720 = vmatprep.subr.bf16.mxu0 0
  %721 = vmatpush1.bf16.msra.mxu0 0
  %722 = vmatprep.subr.bf16.mxu0 0
  %723 = vmatpush1.bf16.msra.mxu0 0
  %724 = vmatprep.subr.bf16.mxu0 0
  %725 = vmatpush1.bf16.msra.mxu0 0
  %726 = vmatprep.subr.bf16.mxu0 0
  %727 = vmatpush1.bf16.msra.mxu0 0
  %728 = vmatprep.subr.bf16.mxu0 0
  %729 = vmatpush1.bf16.msra.mxu0 0
  %730 = vmatprep.subr.bf16.mxu0 0
  %731 = vmatpush1.bf16.msra.mxu0 0
  %732 = vmatprep.mubr.bf16.mxu0 0
  %733 = vmatmul.mubr.bf16.gmra.mrb[0].mxu0 %v677
  %v734 = vpop.f32.mrb[0].mxu0
  %v735 = vadd.f32 0.0, %v734
  %v736 = vpop.f32.mrb[0].mxu0
  %v737 = vpop.f32.mrb[0].mxu0
  %v738 = vadd.f32 0.0, %v737
  %v739 = vpop.f32.mrb[0].mxu0
  %740 = vmatprep.mubr.bf16.mxu0 0
  %741 = vmatmul.mubr.bf16.gmra.mrb[0].mxu0 %v680
  %v742 = vpop.f32.mrb[0].mxu0
  %v743 = vadd.f32 0.0, %v742
  %v744 = vpop.f32.mrb[0].mxu0
  %v745 = vpop.f32.mrb[0].mxu0
  %v746 = vadd.f32 0.0, %v745
  %v747 = vpop.f32.mrb[0].mxu0
  %748 = vmatprep.mubr.bf16.mxu0 0
  %749 = vmatmul.mubr.bf16.gmra.mrb[0].mxu0 %v683
  %v750 = vpop.f32.mrb[0].mxu0
  %v751 = vadd.f32 0.0, %v750
  %v752 = vpop.f32.mrb[0].mxu0
  %v753 = vpop.f32.mrb[0].mxu0
  %v754 = vadd.f32 0.0, %v753
  %v755 = vpop.f32.mrb[0].mxu0
  %756 = vmatprep.mubr.bf16.mxu0 0
  %757 = vmatmul.mubr.bf16.gmra.mrb[0].mxu0 %v686
  %v758 = vpop.f32.mrb[0].mxu0
  %v759 = vadd.f32 0.0, %v758
  %v760 = vpop.f32.mrb[0].mxu0
  %v761 = vpop.f32.mrb[0].mxu0
  %v762 = vadd.f32 0.0, %v761
  %v763 = vpop.f32.mrb[0].mxu0
  %764 = vmatprep.mubr.bf16.mxu0 0
  %765 = vmatmul.mubr.bf16.gmra.mrb[0].mxu0 %v689
  %v766 = vpop.f32.mrb[0].mxu0
  %v767 = vadd.f32 0.0, %v766
  %v768 = vpop.f32.mrb[0].mxu0
  %v769 = vpop.f32.mrb[0].mxu0
  %v770 = vadd.f32 0.0, %v769
  %v771 = vpop.f32.mrb[0].mxu0
  %772 = vmatprep.mubr.bf16.mxu0 0
  %773 = vmatmul.mubr.bf16.gmra.mrb[0].mxu0 %v692
  %v774 = vpop.f32.mrb[0].mxu0
  %v775 = vadd.f32 0.0, %v774
  %v776 = vpop.f32.mrb[0].mxu0
  %v777 = vpop.f32.mrb[0].mxu0
  %v778 = vadd.f32 0.0, %v777
  %v779 = vpop.f32.mrb[0].mxu0
  %780 = vmatprep.mubr.bf16.mxu0 0
  %781 = vmatmul.mubr.bf16.gmra.mrb[0].mxu0 %v695
  %v782 = vpop.f32.mrb[0].mxu0
  %v783 = vadd.f32 0.0, %v782
  %v784 = vpop.f32.mrb[0].mxu0
  %v785 = vpop.f32.mrb[0].mxu0
  %v786 = vadd.f32 0.0, %v785
  %v787 = vpop.f32.mrb[0].mxu0
  %788 = vmatprep.mubr.bf16.mxu0 0
  %789 = vmatmul.mubr.bf16.gmra.mrb[0].mxu0 %v698
  %v790 = vpop.f32.mrb[0].mxu0
  %v791 = vadd.f32 0.0, %v790
  %v792 = vpop.f32.mrb[0].mxu0
  %v793 = vpop.f32.mrb[0].mxu0
  %v794 = vadd.f32 0.0, %v793
  %v795 = vpop.f32.mrb[0].mxu0
  %796 = vdwg.mxu0
  %vm797 = vcmask 31744
  %v798 = vsel %vm797, %v150, 0.0
  %v799 = vsel %vm797, %v153, 0.0
  %v800 = vadd.f32 %v798, %v799
  %v801 = vsel %vm797, %v158, 0.0
  %v802 = vadd.f32 %v800, %v801
  %v803 = vsel %vm797, %v161, 0.0
  %v804 = vadd.f32 %v802, %v803
  %v805 = vsel %vm797, %v166, 0.0
  %v806 = vadd.f32 %v804, %v805
  %v807 = vsel %vm797, %v169, 0.0
  %v808 = vadd.f32 %v806, %v807
  %v809 = vsel %vm797, %v174, 0.0
  %v810 = vadd.f32 %v808, %v809
  %v811 = vsel %vm797, %v177, 0.0
  %v812 = vadd.f32 %v810, %v811
  %v813 = vsel %vm797, %v182, 0.0
  %v814 = vadd.f32 %v812, %v813
  %v815 = vsel %vm797, %v185, 0.0
  %v816 = vadd.f32 %v814, %v815
  %v817 = vsel %vm797, %v190, 0.0
  %v818 = vadd.f32 %v816, %v817
  %v819 = vsel %vm797, %v193, 0.0
  %v820 = vadd.f32 %v818, %v819
  %v821 = vsel %vm797, %v198, 0.0
  %v822 = vadd.f32 %v820, %v821
  %v823 = vsel %vm797, %v201, 0.0
  %v824 = vadd.f32 %v822, %v823
  %v825 = vsel %vm797, %v206, 0.0
  %v826 = vadd.f32 %v824, %v825
  %v827 = vsel %vm797, %v209, 0.0
  %v828 = vadd.f32 %v826, %v827
  %v829 = vrot.slane %v828, 4
  %v830 = vadd.f32 %v828, %v829
  %v831 = vrot.slane %v830, 2
  %v832 = vadd.f32 %v830, %v831
  %v833 = vrot.slane %v832, 1
  %v834 = vadd.f32 %v832, %v833
  %v835 = vsel %vm797, %v345, 0.0
  %v836 = vsel %vm797, %v348, 0.0
  %v837 = vadd.f32 %v835, %v836
  %v838 = vsel %vm797, %v353, 0.0
  %v839 = vadd.f32 %v837, %v838
  %v840 = vsel %vm797, %v356, 0.0
  %v841 = vadd.f32 %v839, %v840
  %v842 = vsel %vm797, %v361, 0.0
  %v843 = vadd.f32 %v841, %v842
  %v844 = vsel %vm797, %v364, 0.0
  %v845 = vadd.f32 %v843, %v844
  %v846 = vsel %vm797, %v369, 0.0
  %v847 = vadd.f32 %v845, %v846
  %v848 = vsel %vm797, %v372, 0.0
  %v849 = vadd.f32 %v847, %v848
  %v850 = vsel %vm797, %v377, 0.0
  %v851 = vadd.f32 %v849, %v850
  %v852 = vsel %vm797, %v380, 0.0
  %v853 = vadd.f32 %v851, %v852
  %v854 = vsel %vm797, %v385, 0.0
  %v855 = vadd.f32 %v853, %v854
  %v856 = vsel %vm797, %v388, 0.0
  %v857 = vadd.f32 %v855, %v856
  %v858 = vsel %vm797, %v393, 0.0
  %v859 = vadd.f32 %v857, %v858
  %v860 = vsel %vm797, %v396, 0.0
  %v861 = vadd.f32 %v859, %v860
  %v862 = vsel %vm797, %v401, 0.0
  %v863 = vadd.f32 %v861, %v862
  %v864 = vsel %vm797, %v404, 0.0
  %v865 = vadd.f32 %v863, %v864
  %v866 = vrot.slane %v865, 4
  %v867 = vadd.f32 %v865, %v866
  %v868 = vrot.slane %v867, 2
  %v869 = vadd.f32 %v867, %v868
  %v870 = vrot.slane %v869, 1
  %v871 = vadd.f32 %v869, %v870
  %v872 = vsel %vm797, %v540, 0.0
  %v873 = vsel %vm797, %v543, 0.0
  %v874 = vadd.f32 %v872, %v873
  %v875 = vsel %vm797, %v548, 0.0
  %v876 = vadd.f32 %v874, %v875
  %v877 = vsel %vm797, %v551, 0.0
  %v878 = vadd.f32 %v876, %v877
  %v879 = vsel %vm797, %v556, 0.0
  %v880 = vadd.f32 %v878, %v879
  %v881 = vsel %vm797, %v559, 0.0
  %v882 = vadd.f32 %v880, %v881
  %v883 = vsel %vm797, %v564, 0.0
  %v884 = vadd.f32 %v882, %v883
  %v885 = vsel %vm797, %v567, 0.0
  %v886 = vadd.f32 %v884, %v885
  %v887 = vsel %vm797, %v572, 0.0
  %v888 = vadd.f32 %v886, %v887
  %v889 = vsel %vm797, %v575, 0.0
  %v890 = vadd.f32 %v888, %v889
  %v891 = vsel %vm797, %v580, 0.0
  %v892 = vadd.f32 %v890, %v891
  %v893 = vsel %vm797, %v583, 0.0
  %v894 = vadd.f32 %v892, %v893
  %v895 = vsel %vm797, %v588, 0.0
  %v896 = vadd.f32 %v894, %v895
  %v897 = vsel %vm797, %v591, 0.0
  %v898 = vadd.f32 %v896, %v897
  %v899 = vsel %vm797, %v596, 0.0
  %v900 = vadd.f32 %v898, %v899
  %v901 = vsel %vm797, %v599, 0.0
  %v902 = vadd.f32 %v900, %v901
  %v903 = vrot.slane %v902, 4
  %v904 = vadd.f32 %v902, %v903
  %v905 = vrot.slane %v904, 2
  %v906 = vadd.f32 %v904, %v905
  %v907 = vrot.slane %v906, 1
  %v908 = vadd.f32 %v906, %v907
  %v909 = vsel %vm797, %v735, 0.0
  %v910 = vsel %vm797, %v738, 0.0
  %v911 = vadd.f32 %v909, %v910
  %v912 = vsel %vm797, %v743, 0.0
  %v913 = vadd.f32 %v911, %v912
  %v914 = vsel %vm797, %v746, 0.0
  %v915 = vadd.f32 %v913, %v914
  %v916 = vsel %vm797, %v751, 0.0
  %v917 = vadd.f32 %v915, %v916
  %v918 = vsel %vm797, %v754, 0.0
  %v919 = vadd.f32 %v917, %v918
  %v920 = vsel %vm797, %v759, 0.0
  %v921 = vadd.f32 %v919, %v920
  %v922 = vsel %vm797, %v762, 0.0
  %v923 = vadd.f32 %v921, %v922
  %v924 = vsel %vm797, %v767, 0.0
  %v925 = vadd.f32 %v923, %v924
  %v926 = vsel %vm797, %v770, 0.0
  %v927 = vadd.f32 %v925, %v926
  %v928 = vsel %vm797, %v775, 0.0
  %v929 = vadd.f32 %v927, %v928
  %v930 = vsel %vm797, %v778, 0.0
  %v931 = vadd.f32 %v929, %v930
  %v932 = vsel %vm797, %v783, 0.0
  %v933 = vadd.f32 %v931, %v932
  %v934 = vsel %vm797, %v786, 0.0
  %v935 = vadd.f32 %v933, %v934
  %v936 = vsel %vm797, %v791, 0.0
  %v937 = vadd.f32 %v935, %v936
  %v938 = vsel %vm797, %v794, 0.0
  %v939 = vadd.f32 %v937, %v938
  %v940 = vrot.slane %v939, 4
  %v941 = vadd.f32 %v939, %v940
  %v942 = vrot.slane %v941, 2
  %v943 = vadd.f32 %v941, %v942
  %v944 = vrot.slane %v943, 1
  %v945 = vadd.f32 %v943, %v944
  %v946 = vsel %vm797, %v834, 0.0
  %v947 = vsel %vm797, %v871, 0.0
  %v948 = vadd.f32 %v946, %v947
  %v949 = vsel %vm797, %v908, 0.0
  %v950 = vadd.f32 %v948, %v949
  %v951 = vsel %vm797, %v945, 0.0
  %v952 = vadd.f32 %v950, %v951
  %v953 = vmul.f32 %v952, 0.001953125
  %v954 = vsub.f32 %v150, %v953
  %v955 = vsub.f32 %v153, %v953
  %v956 = vsub.f32 %v158, %v953
  %v957 = vsub.f32 %v161, %v953
  %v958 = vsub.f32 %v166, %v953
  %v959 = vsub.f32 %v169, %v953
  %v960 = vsub.f32 %v174, %v953
  %v961 = vsub.f32 %v177, %v953
  %v962 = vsub.f32 %v182, %v953
  %v963 = vsub.f32 %v185, %v953
  %v964 = vsub.f32 %v190, %v953
  %v965 = vsub.f32 %v193, %v953
  %v966 = vsub.f32 %v198, %v953
  %v967 = vsub.f32 %v201, %v953
  %v968 = vsub.f32 %v206, %v953
  %v969 = vsub.f32 %v209, %v953
  %v970 = vsub.f32 %v345, %v953
  %v971 = vsub.f32 %v348, %v953
  %v972 = vsub.f32 %v353, %v953
  %v973 = vsub.f32 %v356, %v953
  %v974 = vsub.f32 %v361, %v953
  %v975 = vsub.f32 %v364, %v953
  %v976 = vsub.f32 %v369, %v953
  %v977 = vsub.f32 %v372, %v953
  %v978 = vsub.f32 %v377, %v953
  %v979 = vsub.f32 %v380, %v953
  %v980 = vsub.f32 %v385, %v953
  %v981 = vsub.f32 %v388, %v953
  %v982 = vsub.f32 %v393, %v953
  %v983 = vsub.f32 %v396, %v953
  %v984 = vsub.f32 %v401, %v953
  %v985 = vsub.f32 %v404, %v953
  %v986 = vsub.f32 %v540, %v953
  %v987 = vsub.f32 %v543, %v953
  %v988 = vsub.f32 %v548, %v953
  %v989 = vsub.f32 %v551, %v953
  %v990 = vsub.f32 %v556, %v953
  %v991 = vsub.f32 %v559, %v953
  %v992 = vsub.f32 %v564, %v953
  %v993 = vsub.f32 %v567, %v953
  %v994 = vsub.f32 %v572, %v953
  %v995 = vsub.f32 %v575, %v953
  %v996 = vsub.f32 %v580, %v953
  %v997 = vsub.f32 %v583, %v953
  %v998 = vsub.f32 %v588, %v953
  %v999 = vsub.f32 %v591, %v953
  %v1000 = vsub.f32 %v596, %v953
  %v1001 = vsub.f32 %v599, %v953
  %v1002 = vsub.f32 %v735, %v953
  %v1003 = vsub.f32 %v738, %v953
  %v1004 = vsub.f32 %v743, %v953
  %v1005 = vsub.f32 %v746, %v953
  %v1006 = vsub.f32 %v751, %v953
  %v1007 = vsub.f32 %v754, %v953
  %v1008 = vsub.f32 %v759, %v953
  %v1009 = vsub.f32 %v762, %v953
  %v1010 = vsub.f32 %v767, %v953
  %v1011 = vsub.f32 %v770, %v953
  %v1012 = vsub.f32 %v775, %v953
  %v1013 = vsub.f32 %v778, %v953
  %v1014 = vsub.f32 %v783, %v953
  %v1015 = vsub.f32 %v786, %v953
  %v1016 = vsub.f32 %v791, %v953
  %v1017 = vsub.f32 %v794, %v953
  %v1018 = vmul.f32 %v954, %v954
  %v1019 = vmul.f32 %v955, %v955
  %v1020 = vmul.f32 %v956, %v956
  %v1021 = vmul.f32 %v957, %v957
  %v1022 = vmul.f32 %v958, %v958
  %v1023 = vmul.f32 %v959, %v959
  %v1024 = vmul.f32 %v960, %v960
  %v1025 = vmul.f32 %v961, %v961
  %v1026 = vmul.f32 %v962, %v962
  %v1027 = vmul.f32 %v963, %v963
  %v1028 = vmul.f32 %v964, %v964
  %v1029 = vmul.f32 %v965, %v965
  %v1030 = vmul.f32 %v966, %v966
  %v1031 = vmul.f32 %v967, %v967
  %v1032 = vmul.f32 %v968, %v968
  %v1033 = vmul.f32 %v969, %v969
  %v1034 = vmul.f32 %v970, %v970
  %v1035 = vmul.f32 %v971, %v971
  %v1036 = vmul.f32 %v972, %v972
  %v1037 = vmul.f32 %v973, %v973
  %v1038 = vmul.f32 %v974, %v974
  %v1039 = vmul.f32 %v975, %v975
  %v1040 = vmul.f32 %v976, %v976
  %v1041 = vmul.f32 %v977, %v977
  %v1042 = vmul.f32 %v978, %v978
  %v1043 = vmul.f32 %v979, %v979
  %v1044 = vmul.f32 %v980, %v980
  %v1045 = vmul.f32 %v981, %v981
  %v1046 = vmul.f32 %v982, %v982
  %v1047 = vmul.f32 %v983, %v983
  %v1048 = vmul.f32 %v984, %v984
  %v1049 = vmul.f32 %v985, %v985
  %v1050 = vmul.f32 %v986, %v986
  %v1051 = vmul.f32 %v987, %v987
  %v1052 = vmul.f32 %v988, %v988
  %v1053 = vmul.f32 %v989, %v989
  %v1054 = vmul.f32 %v990, %v990
  %v1055 = vmul.f32 %v991, %v991
  %v1056 = vmul.f32 %v992, %v992
  %v1057 = vmul.f32 %v993, %v993
  %v1058 = vmul.f32 %v994, %v994
  %v1059 = vmul.f32 %v995, %v995
  %v1060 = vmul.f32 %v996, %v996
  %v1061 = vmul.f32 %v997, %v997
  %v1062 = vmul.f32 %v998, %v998
  %v1063 = vmul.f32 %v999, %v999
  %v1064 = vmul.f32 %v1000, %v1000
  %v1065 = vmul.f32 %v1001, %v1001
  %v1066 = vmul.f32 %v1002, %v1002
  %v1067 = vmul.f32 %v1003, %v1003
  %v1068 = vmul.f32 %v1004, %v1004
  %v1069 = vmul.f32 %v1005, %v1005
  %v1070 = vmul.f32 %v1006, %v1006
  %v1071 = vmul.f32 %v1007, %v1007
  %v1072 = vmul.f32 %v1008, %v1008
  %v1073 = vmul.f32 %v1009, %v1009
  %v1074 = vmul.f32 %v1010, %v1010
  %v1075 = vmul.f32 %v1011, %v1011
  %v1076 = vmul.f32 %v1012, %v1012
  %v1077 = vmul.f32 %v1013, %v1013
  %v1078 = vmul.f32 %v1014, %v1014
  %v1079 = vmul.f32 %v1015, %v1015
  %v1080 = vmul.f32 %v1016, %v1016
  %v1081 = vmul.f32 %v1017, %v1017
  %v1082 = vsel %vm797, %v1018, 0.0
  %v1083 = vsel %vm797, %v1019, 0.0
  %v1084 = vadd.f32 %v1082, %v1083
  %v1085 = vsel %vm797, %v1020, 0.0
  %v1086 = vadd.f32 %v1084, %v1085
  %v1087 = vsel %vm797, %v1021, 0.0
  %v1088 = vadd.f32 %v1086, %v1087
  %v1089 = vsel %vm797, %v1022, 0.0
  %v1090 = vadd.f32 %v1088, %v1089
  %v1091 = vsel %vm797, %v1023, 0.0
  %v1092 = vadd.f32 %v1090, %v1091
  %v1093 = vsel %vm797, %v1024, 0.0
  %v1094 = vadd.f32 %v1092, %v1093
  %v1095 = vsel %vm797, %v1025, 0.0
  %v1096 = vadd.f32 %v1094, %v1095
  %v1097 = vsel %vm797, %v1026, 0.0
  %v1098 = vadd.f32 %v1096, %v1097
  %v1099 = vsel %vm797, %v1027, 0.0
  %v1100 = vadd.f32 %v1098, %v1099
  %v1101 = vsel %vm797, %v1028, 0.0
  %v1102 = vadd.f32 %v1100, %v1101
  %v1103 = vsel %vm797, %v1029, 0.0
  %v1104 = vadd.f32 %v1102, %v1103
  %v1105 = vsel %vm797, %v1030, 0.0
  %v1106 = vadd.f32 %v1104, %v1105
  %v1107 = vsel %vm797, %v1031, 0.0
  %v1108 = vadd.f32 %v1106, %v1107
  %v1109 = vsel %vm797, %v1032, 0.0
  %v1110 = vadd.f32 %v1108, %v1109
  %v1111 = vsel %vm797, %v1033, 0.0
  %v1112 = vadd.f32 %v1110, %v1111
  %v1113 = vrot.slane %v1112, 4
  %v1114 = vadd.f32 %v1112, %v1113
  %v1115 = vrot.slane %v1114, 2
  %v1116 = vadd.f32 %v1114, %v1115
  %v1117 = vrot.slane %v1116, 1
  %v1118 = vadd.f32 %v1116, %v1117
  %v1119 = vsel %vm797, %v1034, 0.0
  %v1120 = vsel %vm797, %v1035, 0.0
  %v1121 = vadd.f32 %v1119, %v1120
  %v1122 = vsel %vm797, %v1036, 0.0
  %v1123 = vadd.f32 %v1121, %v1122
  %v1124 = vsel %vm797, %v1037, 0.0
  %v1125 = vadd.f32 %v1123, %v1124
  %v1126 = vsel %vm797, %v1038, 0.0
  %v1127 = vadd.f32 %v1125, %v1126
  %v1128 = vsel %vm797, %v1039, 0.0
  %v1129 = vadd.f32 %v1127, %v1128
  %v1130 = vsel %vm797, %v1040, 0.0
  %v1131 = vadd.f32 %v1129, %v1130
  %v1132 = vsel %vm797, %v1041, 0.0
  %v1133 = vadd.f32 %v1131, %v1132
  %v1134 = vsel %vm797, %v1042, 0.0
  %v1135 = vadd.f32 %v1133, %v1134
  %v1136 = vsel %vm797, %v1043, 0.0
  %v1137 = vadd.f32 %v1135, %v1136
  %v1138 = vsel %vm797, %v1044, 0.0
  %v1139 = vadd.f32 %v1137, %v1138
  %v1140 = vsel %vm797, %v1045, 0.0
  %v1141 = vadd.f32 %v1139, %v1140
  %v1142 = vsel %vm797, %v1046, 0.0
  %v1143 = vadd.f32 %v1141, %v1142
  %v1144 = vsel %vm797, %v1047, 0.0
  %v1145 = vadd.f32 %v1143, %v1144
  %v1146 = vsel %vm797, %v1048, 0.0
  %v1147 = vadd.f32 %v1145, %v1146
  %v1148 = vsel %vm797, %v1049, 0.0
  %v1149 = vadd.f32 %v1147, %v1148
  %v1150 = vrot.slane %v1149, 4
  %v1151 = vadd.f32 %v1149, %v1150
  %v1152 = vrot.slane %v1151, 2
  %v1153 = vadd.f32 %v1151, %v1152
  %v1154 = vrot.slane %v1153, 1
  %v1155 = vadd.f32 %v1153, %v1154
  %v1156 = vsel %vm797, %v1050, 0.0
  %v1157 = vsel %vm797, %v1051, 0.0
  %v1158 = vadd.f32 %v1156, %v1157
  %v1159 = vsel %vm797, %v1052, 0.0
  %v1160 = vadd.f32 %v1158, %v1159
  %v1161 = vsel %vm797, %v1053, 0.0
  %v1162 = vadd.f32 %v1160, %v1161
  %v1163 = vsel %vm797, %v1054, 0.0
  %v1164 = vadd.f32 %v1162, %v1163
  %v1165 = vsel %vm797, %v1055, 0.0
  %v1166 = vadd.f32 %v1164, %v1165
  %v1167 = vsel %vm797, %v1056, 0.0
  %v1168 = vadd.f32 %v1166, %v1167
  %v1169 = vsel %vm797, %v1057, 0.0
  %v1170 = vadd.f32 %v1168, %v1169
  %v1171 = vsel %vm797, %v1058, 0.0
  %v1172 = vadd.f32 %v1170, %v1171
  %v1173 = vsel %vm797, %v1059, 0.0
  %v1174 = vadd.f32 %v1172, %v1173
  %v1175 = vsel %vm797, %v1060, 0.0
  %v1176 = vadd.f32 %v1174, %v1175
  %v1177 = vsel %vm797, %v1061, 0.0
  %v1178 = vadd.f32 %v1176, %v1177
  %v1179 = vsel %vm797, %v1062, 0.0
  %v1180 = vadd.f32 %v1178, %v1179
  %v1181 = vsel %vm797, %v1063, 0.0
  %v1182 = vadd.f32 %v1180, %v1181
  %v1183 = vsel %vm797, %v1064, 0.0
  %v1184 = vadd.f32 %v1182, %v1183
  %v1185 = vsel %vm797, %v1065, 0.0
  %v1186 = vadd.f32 %v1184, %v1185
  %v1187 = vrot.slane %v1186, 4
  %v1188 = vadd.f32 %v1186, %v1187
  %v1189 = vrot.slane %v1188, 2
  %v1190 = vadd.f32 %v1188, %v1189
  %v1191 = vrot.slane %v1190, 1
  %v1192 = vadd.f32 %v1190, %v1191
  %v1193 = vsel %vm797, %v1066, 0.0
  %v1194 = vsel %vm797, %v1067, 0.0
  %v1195 = vadd.f32 %v1193, %v1194
  %v1196 = vsel %vm797, %v1068, 0.0
  %v1197 = vadd.f32 %v1195, %v1196
  %v1198 = vsel %vm797, %v1069, 0.0
  %v1199 = vadd.f32 %v1197, %v1198
  %v1200 = vsel %vm797, %v1070, 0.0
  %v1201 = vadd.f32 %v1199, %v1200
  %v1202 = vsel %vm797, %v1071, 0.0
  %v1203 = vadd.f32 %v1201, %v1202
  %v1204 = vsel %vm797, %v1072, 0.0
  %v1205 = vadd.f32 %v1203, %v1204
  %v1206 = vsel %vm797, %v1073, 0.0
  %v1207 = vadd.f32 %v1205, %v1206
  %v1208 = vsel %vm797, %v1074, 0.0
  %v1209 = vadd.f32 %v1207, %v1208
  %v1210 = vsel %vm797, %v1075, 0.0
  %v1211 = vadd.f32 %v1209, %v1210
  %v1212 = vsel %vm797, %v1076, 0.0
  %v1213 = vadd.f32 %v1211, %v1212
  %v1214 = vsel %vm797, %v1077, 0.0
  %v1215 = vadd.f32 %v1213, %v1214
  %v1216 = vsel %vm797, %v1078, 0.0
  %v1217 = vadd.f32 %v1215, %v1216
  %v1218 = vsel %vm797, %v1079, 0.0
  %v1219 = vadd.f32 %v1217, %v1218
  %v1220 = vsel %vm797, %v1080, 0.0
  %v1221 = vadd.f32 %v1219, %v1220
  %v1222 = vsel %vm797, %v1081, 0.0
  %v1223 = vadd.f32 %v1221, %v1222
  %v1224 = vrot.slane %v1223, 4
  %v1225 = vadd.f32 %v1223, %v1224
  %v1226 = vrot.slane %v1225, 2
  %v1227 = vadd.f32 %v1225, %v1226
  %v1228 = vrot.slane %v1227, 1
  %v1229 = vadd.f32 %v1227, %v1228
  %v1230 = vsel %vm797, %v1118, 0.0
  %v1231 = vsel %vm797, %v1155, 0.0
  %v1232 = vadd.f32 %v1230, %v1231
  %v1233 = vsel %vm797, %v1192, 0.0
  %v1234 = vadd.f32 %v1232, %v1233
  %v1235 = vsel %vm797, %v1229, 0.0
  %v1236 = vadd.f32 %v1234, %v1235
  %v1237 = vmul.f32 %v1236, 0.001953125
  %v1238 = vld [vmem:[%s2] sm:$0x1]
  %v1239 = vadd.f32 %v1237, 1e-05
  %v1240 = vrsqrt.pop %v1239
  %v1241 = vmul.f32 %v1238, %v1240
  %v1243 = vlaneseq
  %v1244 = vshrl.u32 %v1243, 7
  %v1245 = vsub.s32 0, %v1244
  %v1246 = vrot.slane %v1241, %v1245
  %v1248 = vmul.f32 %v954, %v1246
  %v1249 = vmul.f32 %v955, %v1246
  %v1250 = vmul.f32 %v956, %v1246
  %v1251 = vmul.f32 %v957, %v1246
  %v1252 = vmul.f32 %v958, %v1246
  %v1253 = vmul.f32 %v959, %v1246
  %v1254 = vmul.f32 %v960, %v1246
  %v1255 = vmul.f32 %v961, %v1246
  %v1256 = vmul.f32 %v962, %v1246
  %v1257 = vmul.f32 %v963, %v1246
  %v1258 = vmul.f32 %v964, %v1246
  %v1259 = vmul.f32 %v965, %v1246
  %v1260 = vmul.f32 %v966, %v1246
  %v1261 = vmul.f32 %v967, %v1246
  %v1262 = vmul.f32 %v968, %v1246
  %v1263 = vmul.f32 %v969, %v1246
  %v1264 = vmul.f32 %v970, %v1246
  %v1265 = vmul.f32 %v971, %v1246
  %v1266 = vmul.f32 %v972, %v1246
  %v1267 = vmul.f32 %v973, %v1246
  %v1268 = vmul.f32 %v974, %v1246
  %v1269 = vmul.f32 %v975, %v1246
  %v1270 = vmul.f32 %v976, %v1246
  %v1271 = vmul.f32 %v977, %v1246
  %v1272 = vmul.f32 %v978, %v1246
  %v1273 = vmul.f32 %v979, %v1246
  %v1274 = vmul.f32 %v980, %v1246
  %v1275 = vmul.f32 %v981, %v1246
  %v1276 = vmul.f32 %v982, %v1246
  %v1277 = vmul.f32 %v983, %v1246
  %v1278 = vmul.f32 %v984, %v1246
  %v1279 = vmul.f32 %v985, %v1246
  %v1280 = vmul.f32 %v986, %v1246
  %v1281 = vmul.f32 %v987, %v1246
  %v1282 = vmul.f32 %v988, %v1246
  %v1283 = vmul.f32 %v989, %v1246
  %v1284 = vmul.f32 %v990, %v1246
  %v1285 = vmul.f32 %v991, %v1246
  %v1286 = vmul.f32 %v992, %v1246
  %v1287 = vmul.f32 %v993, %v1246
  %v1288 = vmul.f32 %v994, %v1246
  %v1289 = vmul.f32 %v995, %v1246
  %v1290 = vmul.f32 %v996, %v1246
  %v1291 = vmul.f32 %v997, %v1246
  %v1292 = vmul.f32 %v998, %v1246
  %v1293 = vmul.f32 %v999, %v1246
  %v1294 = vmul.f32 %v1000, %v1246
  %v1295 = vmul.f32 %v1001, %v1246
  %v1296 = vmul.f32 %v1002, %v1246
  %v1297 = vmul.f32 %v1003, %v1246
  %v1298 = vmul.f32 %v1004, %v1246
  %v1299 = vmul.f32 %v1005, %v1246
  %v1300 = vmul.f32 %v1006, %v1246
  %v1301 = vmul.f32 %v1007, %v1246
  %v1302 = vmul.f32 %v1008, %v1246
  %v1303 = vmul.f32 %v1009, %v1246
  %v1304 = vmul.f32 %v1010, %v1246
  %v1305 = vmul.f32 %v1011, %v1246
  %v1306 = vmul.f32 %v1012, %v1246
  %v1307 = vmul.f32 %v1013, %v1246
  %v1308 = vmul.f32 %v1014, %v1246
  %v1309 = vmul.f32 %v1015, %v1246
  %v1310 = vmul.f32 %v1016, %v1246
  %v1311 = vmul.f32 %v1017, %v1246
  %v1312 = vld [vmem:[%s3] sm:$0x1]
  %v1314 = vlaneseq
  %v1315 = vshrl.u32 %v1314, 7
  %v1316 = vsub.s32 0, %v1315
  %v1317 = vrot.slane %v1312, %v1316
  %v1319 = vadd.f32 %v1248, %v1317
  %v1320 = vadd.f32 %v1249, %v1317
  %v1321 = vadd.f32 %v1250, %v1317
  %v1322 = vadd.f32 %v1251, %v1317
  %v1323 = vadd.f32 %v1252, %v1317
  %v1324 = vadd.f32 %v1253, %v1317
  %v1325 = vadd.f32 %v1254, %v1317
  %v1326 = vadd.f32 %v1255, %v1317
  %v1327 = vadd.f32 %v1256, %v1317
  %v1328 = vadd.f32 %v1257, %v1317
  %v1329 = vadd.f32 %v1258, %v1317
  %v1330 = vadd.f32 %v1259, %v1317
  %v1331 = vadd.f32 %v1260, %v1317
  %v1332 = vadd.f32 %v1261, %v1317
  %v1333 = vadd.f32 %v1262, %v1317
  %v1334 = vadd.f32 %v1263, %v1317
  %v1335 = vadd.f32 %v1264, %v1317
  %v1336 = vadd.f32 %v1265, %v1317
  %v1337 = vadd.f32 %v1266, %v1317
  %v1338 = vadd.f32 %v1267, %v1317
  %v1339 = vadd.f32 %v1268, %v1317
  %v1340 = vadd.f32 %v1269, %v1317
  %v1341 = vadd.f32 %v1270, %v1317
  %v1342 = vadd.f32 %v1271, %v1317
  %v1343 = vadd.f32 %v1272, %v1317
  %v1344 = vadd.f32 %v1273, %v1317
  %v1345 = vadd.f32 %v1274, %v1317
  %v1346 = vadd.f32 %v1275, %v1317
  %v1347 = vadd.f32 %v1276, %v1317
  %v1348 = vadd.f32 %v1277, %v1317
  %v1349 = vadd.f32 %v1278, %v1317
  %v1350 = vadd.f32 %v1279, %v1317
  %v1351 = vadd.f32 %v1280, %v1317
  %v1352 = vadd.f32 %v1281, %v1317
  %v1353 = vadd.f32 %v1282, %v1317
  %v1354 = vadd.f32 %v1283, %v1317
  %v1355 = vadd.f32 %v1284, %v1317
  %v1356 = vadd.f32 %v1285, %v1317
  %v1357 = vadd.f32 %v1286, %v1317
  %v1358 = vadd.f32 %v1287, %v1317
  %v1359 = vadd.f32 %v1288, %v1317
  %v1360 = vadd.f32 %v1289, %v1317
  %v1361 = vadd.f32 %v1290, %v1317
  %v1362 = vadd.f32 %v1291, %v1317
  %v1363 = vadd.f32 %v1292, %v1317
  %v1364 = vadd.f32 %v1293, %v1317
  %v1365 = vadd.f32 %v1294, %v1317
  %v1366 = vadd.f32 %v1295, %v1317
  %v1367 = vadd.f32 %v1296, %v1317
  %v1368 = vadd.f32 %v1297, %v1317
  %v1369 = vadd.f32 %v1298, %v1317
  %v1370 = vadd.f32 %v1299, %v1317
  %v1371 = vadd.f32 %v1300, %v1317
  %v1372 = vadd.f32 %v1301, %v1317
  %v1373 = vadd.f32 %v1302, %v1317
  %v1374 = vadd.f32 %v1303, %v1317
  %v1375 = vadd.f32 %v1304, %v1317
  %v1376 = vadd.f32 %v1305, %v1317
  %v1377 = vadd.f32 %v1306, %v1317
  %v1378 = vadd.f32 %v1307, %v1317
  %v1379 = vadd.f32 %v1308, %v1317
  %v1380 = vadd.f32 %v1309, %v1317
  %v1381 = vadd.f32 %v1310, %v1317
  %v1382 = vadd.f32 %v1311, %v1317
  %v1383 = vmax.f32 %v1319, 0.0
  %v1384 = vmax.f32 %v1320, 0.0
  %v1385 = vmax.f32 %v1321, 0.0
  %v1386 = vmax.f32 %v1322, 0.0
  %v1387 = vmax.f32 %v1323, 0.0
  %v1388 = vmax.f32 %v1324, 0.0
  %v1389 = vmax.f32 %v1325, 0.0
  %v1390 = vmax.f32 %v1326, 0.0
  %v1391 = vmax.f32 %v1327, 0.0
  %v1392 = vmax.f32 %v1328, 0.0
  %v1393 = vmax.f32 %v1329, 0.0
  %v1394 = vmax.f32 %v1330, 0.0
  %v1395 = vmax.f32 %v1331, 0.0
  %v1396 = vmax.f32 %v1332, 0.0
  %v1397 = vmax.f32 %v1333, 0.0
  %v1398 = vmax.f32 %v1334, 0.0
  %v1399 = vmax.f32 %v1335, 0.0
  %v1400 = vmax.f32 %v1336, 0.0
  %v1401 = vmax.f32 %v1337, 0.0
  %v1402 = vmax.f32 %v1338, 0.0
  %v1403 = vmax.f32 %v1339, 0.0
  %v1404 = vmax.f32 %v1340, 0.0
  %v1405 = vmax.f32 %v1341, 0.0
  %v1406 = vmax.f32 %v1342, 0.0
  %v1407 = vmax.f32 %v1343, 0.0
  %v1408 = vmax.f32 %v1344, 0.0
  %v1409 = vmax.f32 %v1345, 0.0
  %v1410 = vmax.f32 %v1346, 0.0
  %v1411 = vmax.f32 %v1347, 0.0
  %v1412 = vmax.f32 %v1348, 0.0
  %v1413 = vmax.f32 %v1349, 0.0
  %v1414 = vmax.f32 %v1350, 0.0
  %v1415 = vmax.f32 %v1351, 0.0
  %v1416 = vmax.f32 %v1352, 0.0
  %v1417 = vmax.f32 %v1353, 0.0
  %v1418 = vmax.f32 %v1354, 0.0
  %v1419 = vmax.f32 %v1355, 0.0
  %v1420 = vmax.f32 %v1356, 0.0
  %v1421 = vmax.f32 %v1357, 0.0
  %v1422 = vmax.f32 %v1358, 0.0
  %v1423 = vmax.f32 %v1359, 0.0
  %v1424 = vmax.f32 %v1360, 0.0
  %v1425 = vmax.f32 %v1361, 0.0
  %v1426 = vmax.f32 %v1362, 0.0
  %v1427 = vmax.f32 %v1363, 0.0
  %v1428 = vmax.f32 %v1364, 0.0
  %v1429 = vmax.f32 %v1365, 0.0
  %v1430 = vmax.f32 %v1366, 0.0
  %v1431 = vmax.f32 %v1367, 0.0
  %v1432 = vmax.f32 %v1368, 0.0
  %v1433 = vmax.f32 %v1369, 0.0
  %v1434 = vmax.f32 %v1370, 0.0
  %v1435 = vmax.f32 %v1371, 0.0
  %v1436 = vmax.f32 %v1372, 0.0
  %v1437 = vmax.f32 %v1373, 0.0
  %v1438 = vmax.f32 %v1374, 0.0
  %v1439 = vmax.f32 %v1375, 0.0
  %v1440 = vmax.f32 %v1376, 0.0
  %v1441 = vmax.f32 %v1377, 0.0
  %v1442 = vmax.f32 %v1378, 0.0
  %v1443 = vmax.f32 %v1379, 0.0
  %v1444 = vmax.f32 %v1380, 0.0
  %v1445 = vmax.f32 %v1381, 0.0
  %v1446 = vmax.f32 %v1382, 0.0
  %1447 = vst.msk [vmem:[%s4] sm:$0xff] %vm797, %v1383
  %1448 = vst.msk [vmem:[%s4 + $0x8] sm:$0xff] %vm797, %v1384
  %1449 = vst.msk [vmem:[%s4 + $0x10] sm:$0xff] %vm797, %v1385
  %1450 = vst.msk [vmem:[%s4 + $0x18] sm:$0xff] %vm797, %v1386
  %1451 = vst.msk [vmem:[%s4 + $0x20] sm:$0xff] %vm797, %v1387
  %1452 = vst.msk [vmem:[%s4 + $0x28] sm:$0xff] %vm797, %v1388
  %1453 = vst.msk [vmem:[%s4 + $0x30] sm:$0xff] %vm797, %v1389
  %1454 = vst.msk [vmem:[%s4 + $0x38] sm:$0xff] %vm797, %v1390
  %1455 = vst.msk [vmem:[%s4 + $0x40] sm:$0xff] %vm797, %v1391
  %1456 = vst.msk [vmem:[%s4 + $0x48] sm:$0xff] %vm797, %v1392
  %1457 = vst.msk [vmem:[%s4 + $0x50] sm:$0xff] %vm797, %v1393
  %1458 = vst.msk [vmem:[%s4 + $0x58] sm:$0xff] %vm797, %v1394
  %1459 = vst.msk [vmem:[%s4 + $0x60] sm:$0xff] %vm797, %v1395
  %1460 = vst.msk [vmem:[%s4 + $0x68] sm:$0xff] %vm797, %v1396
  %1461 = vst.msk [vmem:[%s4 + $0x70] sm:$0xff] %vm797, %v1397
  %1462 = vst.msk [vmem:[%s4 + $0x78] sm:$0xff] %vm797, %v1398
  %1463 = vst.msk [vmem:[%s4 + $0x80] sm:$0xff] %vm797, %v1399
  %1464 = vst.msk [vmem:[%s4 + $0x88] sm:$0xff] %vm797, %v1400
  %1465 = vst.msk [vmem:[%s4 + $0x90] sm:$0xff] %vm797, %v1401
  %1466 = vst.msk [vmem:[%s4 + $0x98] sm:$0xff] %vm797, %v1402
  %1467 = vst.msk [vmem:[%s4 + $0xa0] sm:$0xff] %vm797, %v1403
  %1468 = vst.msk [vmem:[%s4 + $0xa8] sm:$0xff] %vm797, %v1404
  %1469 = vst.msk [vmem:[%s4 + $0xb0] sm:$0xff] %vm797, %v1405
  %1470 = vst.msk [vmem:[%s4 + $0xb8] sm:$0xff] %vm797, %v1406
  %1471 = vst.msk [vmem:[%s4 + $0xc0] sm:$0xff] %vm797, %v1407
  %1472 = vst.msk [vmem:[%s4 + $0xc8] sm:$0xff] %vm797, %v1408
  %1473 = vst.msk [vmem:[%s4 + $0xd0] sm:$0xff] %vm797, %v1409
  %1474 = vst.msk [vmem:[%s4 + $0xd8] sm:$0xff] %vm797, %v1410
  %1475 = vst.msk [vmem:[%s4 + $0xe0] sm:$0xff] %vm797, %v1411
  %1476 = vst.msk [vmem:[%s4 + $0xe8] sm:$0xff] %vm797, %v1412
  %1477 = vst.msk [vmem:[%s4 + $0xf0] sm:$0xff] %vm797, %v1413
  %1478 = vst.msk [vmem:[%s4 + $0xf8] sm:$0xff] %vm797, %v1414
  %1479 = vst.msk [vmem:[%s4 + $0x100] sm:$0xff] %vm797, %v1415
  %1480 = vst.msk [vmem:[%s4 + $0x108] sm:$0xff] %vm797, %v1416
  %1481 = vst.msk [vmem:[%s4 + $0x110] sm:$0xff] %vm797, %v1417
  %1482 = vst.msk [vmem:[%s4 + $0x118] sm:$0xff] %vm797, %v1418
  %1483 = vst.msk [vmem:[%s4 + $0x120] sm:$0xff] %vm797, %v1419
  %1484 = vst.msk [vmem:[%s4 + $0x128] sm:$0xff] %vm797, %v1420
  %1485 = vst.msk [vmem:[%s4 + $0x130] sm:$0xff] %vm797, %v1421
  %1486 = vst.msk [vmem:[%s4 + $0x138] sm:$0xff] %vm797, %v1422
  %1487 = vst.msk [vmem:[%s4 + $0x140] sm:$0xff] %vm797, %v1423
  %1488 = vst.msk [vmem:[%s4 + $0x148] sm:$0xff] %vm797, %v1424
  %1489 = vst.msk [vmem:[%s4 + $0x150] sm:$0xff] %vm797, %v1425
  %1490 = vst.msk [vmem:[%s4 + $0x158] sm:$0xff] %vm797, %v1426
  %1491 = vst.msk [vmem:[%s4 + $0x160] sm:$0xff] %vm797, %v1427
  %1492 = vst.msk [vmem:[%s4 + $0x168] sm:$0xff] %vm797, %v1428
  %1493 = vst.msk [vmem:[%s4 + $0x170] sm:$0xff] %vm797, %v1429
  %1494 = vst.msk [vmem:[%s4 + $0x178] sm:$0xff] %vm797, %v1430
  %1495 = vst.msk [vmem:[%s4 + $0x180] sm:$0xff] %vm797, %v1431
  %1496 = vst.msk [vmem:[%s4 + $0x188] sm:$0xff] %vm797, %v1432
  %1497 = vst.msk [vmem:[%s4 + $0x190] sm:$0xff] %vm797, %v1433
  %1498 = vst.msk [vmem:[%s4 + $0x198] sm:$0xff] %vm797, %v1434
  %1499 = vst.msk [vmem:[%s4 + $0x1a0] sm:$0xff] %vm797, %v1435
  %1500 = vst.msk [vmem:[%s4 + $0x1a8] sm:$0xff] %vm797, %v1436
  %1501 = vst.msk [vmem:[%s4 + $0x1b0] sm:$0xff] %vm797, %v1437
  %1502 = vst.msk [vmem:[%s4 + $0x1b8] sm:$0xff] %vm797, %v1438
  %1503 = vst.msk [vmem:[%s4 + $0x1c0] sm:$0xff] %vm797, %v1439
  %1504 = vst.msk [vmem:[%s4 + $0x1c8] sm:$0xff] %vm797, %v1440
  %1505 = vst.msk [vmem:[%s4 + $0x1d0] sm:$0xff] %vm797, %v1441
  %1506 = vst.msk [vmem:[%s4 + $0x1d8] sm:$0xff] %vm797, %v1442
  %1507 = vst.msk [vmem:[%s4 + $0x1e0] sm:$0xff] %vm797, %v1443
  %1508 = vst.msk [vmem:[%s4 + $0x1e8] sm:$0xff] %vm797, %v1444
  %1509 = vst.msk [vmem:[%s4 + $0x1f0] sm:$0xff] %vm797, %v1445
  %1510 = vst.msk [vmem:[%s4 + $0x1f8] sm:$0xff] %vm797, %v1446
  // Predicated region
  $region18: #{cvae_forward.24} parent=0 // pred_check
    _
  $region19: #{cvae_forward.24} parent=0 // pred_check_branch
    %1512 = sbr.rel (0) target = $region21
  $region20: #{cvae_forward.24} parent=0 // pred_region
    _
  $region21: #{cvae_forward.24} parent=0 // pred_fallthru
    _
  // Predicated region
  $region22: #{cvae_forward.24} parent=0 // pred_check
    _
  $region23: #{cvae_forward.24} parent=0 // pred_check_branch
    %1514 = sbr.rel (0) target = $region25
  $region24: #{cvae_forward.24} parent=0 // pred_region
    _
  $region25: #{cvae_forward.24} parent=0 // pred_fallthru
    _

// kernel: cvae_forward.25
$region0: #{cvae_forward.25}
  #allocation0 [shape = 'u32[]', space=smem, size = 0x4, offset = 0x4, fixed_abs, tag = 'smem constant byte address 0x4 - core index']
  #allocation1 [shape = 'u32[144,128]{1,0:T(1,128)}', space=vmem, size = 0x12000, scoped, tag = 'internal scratch']
  %s0 = inlined_call_operand.vmem [shape: bf16[4,512,16], index: 0, kind: input, shape index: {}]
  %s1 = inlined_call_operand.vmem [shape: bf16[4,16,3], index: 1, kind: input, shape index: {}]
  %s2 = inlined_call_operand.vmem [shape: f32[4,512,3], index: 2, kind: output, shape index: {}]
  %s3 = sld [smem:[#allocation0]]
  $region18: #{cvae_forward.25} parent=0
    _
  %s5 = ssub.s32 1, %s3
  %s6 = scalar_select 0, %s5, %s3
  // Predicated region
  $region2: #{cvae_forward.25} parent=0 // pred_check
    _
  $region3: #{cvae_forward.25} parent=0 // pred_check_branch
    %8 = sbr.rel (0) target = $region5
  $region4: #{cvae_forward.25} parent=0 // pred_region
    _
  $region5: #{cvae_forward.25} parent=0 // pred_fallthru
    _
  // Predicated region
  $region6: #{cvae_forward.25} parent=0 // pred_check
    _
  $region7: #{cvae_forward.25} parent=0 // pred_check_branch
    %10 = sbr.rel (0) target = $region9
  $region8: #{cvae_forward.25} parent=0 // pred_region
    _
  $region9: #{cvae_forward.25} parent=0 // pred_fallthru
    _
  %v12 = vld [vmem:[%s0] sm:$0xf]
  %v13 = vld [vmem:[%s0 + $0x4] sm:$0xf]
  %v14 = vld [vmem:[%s0 + $0x8] sm:$0xf]
  %v15 = vld [vmem:[%s0 + $0xc] sm:$0xf]
  %v16 = vld [vmem:[%s0 + $0x10] sm:$0xf]
  %v17 = vld [vmem:[%s0 + $0x14] sm:$0xf]
  %v18 = vld [vmem:[%s0 + $0x18] sm:$0xf]
  %v19 = vld [vmem:[%s0 + $0x1c] sm:$0xf]
  %v20 = vld [vmem:[%s0 + $0x20] sm:$0xf]
  %v21 = vld [vmem:[%s0 + $0x24] sm:$0xf]
  %v22 = vld [vmem:[%s0 + $0x28] sm:$0xf]
  %v23 = vld [vmem:[%s0 + $0x2c] sm:$0xf]
  %v24 = vld [vmem:[%s0 + $0x30] sm:$0xf]
  %v25 = vld [vmem:[%s0 + $0x34] sm:$0xf]
  %v26 = vld [vmem:[%s0 + $0x38] sm:$0xf]
  %v27 = vld [vmem:[%s0 + $0x3c] sm:$0xf]
  %v28 = vld [vmem:[%s0 + $0x40] sm:$0xf]
  %v29 = vld [vmem:[%s0 + $0x44] sm:$0xf]
  %v30 = vld [vmem:[%s0 + $0x48] sm:$0xf]
  %v31 = vld [vmem:[%s0 + $0x4c] sm:$0xf]
  %v32 = vld [vmem:[%s0 + $0x50] sm:$0xf]
  %v33 = vld [vmem:[%s0 + $0x54] sm:$0xf]
  %v34 = vld [vmem:[%s0 + $0x58] sm:$0xf]
  %v35 = vld [vmem:[%s0 + $0x5c] sm:$0xf]
  %v36 = vld [vmem:[%s0 + $0x60] sm:$0xf]
  %v37 = vld [vmem:[%s0 + $0x64] sm:$0xf]
  %v38 = vld [vmem:[%s0 + $0x68] sm:$0xf]
  %v39 = vld [vmem:[%s0 + $0x6c] sm:$0xf]
  %v40 = vld [vmem:[%s0 + $0x70] sm:$0xf]
  %v41 = vld [vmem:[%s0 + $0x74] sm:$0xf]
  %v42 = vld [vmem:[%s0 + $0x78] sm:$0xf]
  %v43 = vld [vmem:[%s0 + $0x7c] sm:$0xf]
  %v44 = vld [vmem:[%s0 + $0x80] sm:$0xf]
  %v45 = vld [vmem:[%s0 + $0x84] sm:$0xf]
  %v46 = vld [vmem:[%s0 + $0x88] sm:$0xf]
  %v47 = vld [vmem:[%s0 + $0x8c] sm:$0xf]
  %v48 = vld [vmem:[%s0 + $0x90] sm:$0xf]
  %v49 = vld [vmem:[%s0 + $0x94] sm:$0xf]
  %v50 = vld [vmem:[%s0 + $0x98] sm:$0xf]
  %v51 = vld [vmem:[%s0 + $0x9c] sm:$0xf]
  %v52 = vld [vmem:[%s0 + $0xa0] sm:$0xf]
  %v53 = vld [vmem:[%s0 + $0xa4] sm:$0xf]
  %v54 = vld [vmem:[%s0 + $0xa8] sm:$0xf]
  %v55 = vld [vmem:[%s0 + $0xac] sm:$0xf]
  %v56 = vld [vmem:[%s0 + $0xb0] sm:$0xf]
  %v57 = vld [vmem:[%s0 + $0xb4] sm:$0xf]
  %v58 = vld [vmem:[%s0 + $0xb8] sm:$0xf]
  %v59 = vld [vmem:[%s0 + $0xbc] sm:$0xf]
  %v60 = vld [vmem:[%s0 + $0xc0] sm:$0xf]
  %v61 = vld [vmem:[%s0 + $0xc4] sm:$0xf]
  %v62 = vld [vmem:[%s0 + $0xc8] sm:$0xf]
  %v63 = vld [vmem:[%s0 + $0xcc] sm:$0xf]
  %v64 = vld [vmem:[%s0 + $0xd0] sm:$0xf]
  %v65 = vld [vmem:[%s0 + $0xd4] sm:$0xf]
  %v66 = vld [vmem:[%s0 + $0xd8] sm:$0xf]
  %v67 = vld [vmem:[%s0 + $0xdc] sm:$0xf]
  %v68 = vld [vmem:[%s0 + $0xe0] sm:$0xf]
  %v69 = vld [vmem:[%s0 + $0xe4] sm:$0xf]
  %v70 = vld [vmem:[%s0 + $0xe8] sm:$0xf]
  %v71 = vld [vmem:[%s0 + $0xec] sm:$0xf]
  %v72 = vld [vmem:[%s0 + $0xf0] sm:$0xf]
  %v73 = vld [vmem:[%s0 + $0xf4] sm:$0xf]
  %v74 = vld [vmem:[%s0 + $0xf8] sm:$0xf]
  %v75 = vld [vmem:[%s0 + $0xfc] sm:$0xf]
  %v76 = vld [vmem:[%s1] sm:$0xf]
  %v77 = vld [vmem:[%s1 + $0x4] sm:$0xf]
  %v142 = vunpack.c.l.b16 %v12
  %v143 = vunpack.c.l.b16 %v13
  %v144 = vunpack.c.l.b16 %v14
  %v145 = vunpack.c.l.b16 %v15
  %v146 = vunpack.c.l.b16 %v16
  %v147 = vunpack.c.l.b16 %v17
  %v148 = vunpack.c.l.b16 %v18
  %v149 = vunpack.c.l.b16 %v19
  %v150 = vunpack.c.l.b16 %v20
  %v151 = vunpack.c.l.b16 %v21
  %v152 = vunpack.c.l.b16 %v22
  %v153 = vunpack.c.l.b16 %v23
  %v154 = vunpack.c.l.b16 %v24
  %v155 = vunpack.c.l.b16 %v25
  %v156 = vunpack.c.l.b16 %v26
  %v157 = vunpack.c.l.b16 %v27
  %v158 = vunpack.c.l.b16 %v28
  %v159 = vunpack.c.l.b16 %v29
  %v160 = vunpack.c.l.b16 %v30
  %v161 = vunpack.c.l.b16 %v31
  %v162 = vunpack.c.l.b16 %v32
  %v163 = vunpack.c.l.b16 %v33
  %v164 = vunpack.c.l.b16 %v34
  %v165 = vunpack.c.l.b16 %v35
  %v166 = vunpack.c.l.b16 %v36
  %v167 = vunpack.c.l.b16 %v37
  %v168 = vunpack.c.l.b16 %v38
  %v169 = vunpack.c.l.b16 %v39
  %v170 = vunpack.c.l.b16 %v40
  %v171 = vunpack.c.l.b16 %v41
  %v172 = vunpack.c.l.b16 %v42
  %v173 = vunpack.c.l.b16 %v43
  %v174 = vunpack.c.l.b16 %v44
  %v175 = vunpack.c.l.b16 %v45
  %v176 = vunpack.c.l.b16 %v46
  %v177 = vunpack.c.l.b16 %v47
  %v178 = vunpack.c.l.b16 %v48
  %v179 = vunpack.c.l.b16 %v49
  %v180 = vunpack.c.l.b16 %v50
  %v181 = vunpack.c.l.b16 %v51
  %v182 = vunpack.c.l.b16 %v52
  %v183 = vunpack.c.l.b16 %v53
  %v184 = vunpack.c.l.b16 %v54
  %v185 = vunpack.c.l.b16 %v55
  %v186 = vunpack.c.l.b16 %v56
  %v187 = vunpack.c.l.b16 %v57
  %v188 = vunpack.c.l.b16 %v58
  %v189 = vunpack.c.l.b16 %v59
  %v190 = vunpack.c.l.b16 %v60
  %v191 = vunpack.c.l.b16 %v61
  %v192 = vunpack.c.l.b16 %v62
  %v193 = vunpack.c.l.b16 %v63
  %v194 = vunpack.c.l.b16 %v64
  %v195 = vunpack.c.l.b16 %v65
  %v196 = vunpack.c.l.b16 %v66
  %v197 = vunpack.c.l.b16 %v67
  %v198 = vunpack.c.l.b16 %v68
  %v199 = vunpack.c.l.b16 %v69
  %v200 = vunpack.c.l.b16 %v70
  %v201 = vunpack.c.l.b16 %v71
  %v202 = vunpack.c.l.b16 %v72
  %v203 = vunpack.c.l.b16 %v73
  %v204 = vunpack.c.l.b16 %v74
  %v205 = vunpack.c.l.b16 %v75
  %v206 = vpack.c.b16 %v143, %v142
  %v207 = vpack.c.b16 %v145, %v144
  %v208 = vpack.c.b16 %v147, %v146
  %v209 = vpack.c.b16 %v149, %v148
  %v210 = vpack.c.b16 %v151, %v150
  %v211 = vpack.c.b16 %v153, %v152
  %v212 = vpack.c.b16 %v155, %v154
  %v213 = vpack.c.b16 %v157, %v156
  %v214 = vpack.c.b16 %v159, %v158
  %v215 = vpack.c.b16 %v161, %v160
  %v216 = vpack.c.b16 %v163, %v162
  %v217 = vpack.c.b16 %v165, %v164
  %v218 = vpack.c.b16 %v167, %v166
  %v219 = vpack.c.b16 %v169, %v168
  %v220 = vpack.c.b16 %v171, %v170
  %v221 = vpack.c.b16 %v173, %v172
  %v222 = vpack.c.b16 %v175, %v174
  %v223 = vpack.c.b16 %v177, %v176
  %v224 = vpack.c.b16 %v179, %v178
  %v225 = vpack.c.b16 %v181, %v180
  %v226 = vpack.c.b16 %v183, %v182
  %v227 = vpack.c.b16 %v185, %v184
  %v228 = vpack.c.b16 %v187, %v186
  %v229 = vpack.c.b16 %v189, %v188
  %v230 = vpack.c.b16 %v191, %v190
  %v231 = vpack.c.b16 %v193, %v192
  %v232 = vpack.c.b16 %v195, %v194
  %v233 = vpack.c.b16 %v197, %v196
  %v234 = vpack.c.b16 %v199, %v198
  %v235 = vpack.c.b16 %v201, %v200
  %v236 = vpack.c.b16 %v203, %v202
  %v237 = vpack.c.b16 %v205, %v204
  %v240 = vunpack.c.l.b16 %v76
  %v241 = vunpack.c.l.b16 %v77
  %v242 = vpack.c.b16 %v241, %v240
  %vm244 = vcmask 130048
  %v246 = vsel %vm244, %v206, 0
  %v249 = vsel %vm244, %v207, 0
  %v252 = vsel %vm244, %v208, 0
  %v255 = vsel %vm244, %v209, 0
  %v258 = vsel %vm244, %v210, 0
  %v261 = vsel %vm244, %v211, 0
  %v264 = vsel %vm244, %v212, 0
  %v267 = vsel %vm244, %v213, 0
  %v270 = vsel %vm244, %v214, 0
  %v273 = vsel %vm244, %v215, 0
  %v276 = vsel %vm244, %v216, 0
  %v279 = vsel %vm244, %v217, 0
  %v282 = vsel %vm244, %v218, 0
  %v285 = vsel %vm244, %v219, 0
  %v288 = vsel %vm244, %v220, 0
  %v291 = vsel %vm244, %v221, 0
  %v294 = vsel %vm244, %v222, 0
  %v297 = vsel %vm244, %v223, 0
  %v300 = vsel %vm244, %v224, 0
  %v303 = vsel %vm244, %v225, 0
  %v306 = vsel %vm244, %v226, 0
  %v309 = vsel %vm244, %v227, 0
  %v312 = vsel %vm244, %v228, 0
  %v315 = vsel %vm244, %v229, 0
  %v318 = vsel %vm244, %v230, 0
  %v321 = vsel %vm244, %v231, 0
  %v324 = vsel %vm244, %v232, 0
  %v327 = vsel %vm244, %v233, 0
  %v330 = vsel %vm244, %v234, 0
  %v333 = vsel %vm244, %v235, 0
  %v336 = vsel %vm244, %v236, 0
  %v339 = vsel %vm244, %v237, 0
  %341 = vmatprep.subr.bf16.mxu0 0
  %342 = vmatpush1.bf16.msra.mxu0 %v242
  %343 = vmatprep.subr.bf16.mxu0 0
  %344 = vmatpush1.bf16.msra.mxu0 0
  %345 = vmatprep.subr.bf16.mxu0 0
  %346 = vmatpush1.bf16.msra.mxu0 0
  %347 = vmatprep.subr.bf16.mxu0 0
  %348 = vmatpush1.bf16.msra.mxu0 0
  %349 = vmatprep.subr.bf16.mxu0 0
  %350 = vmatpush1.bf16.msra.mxu0 0
  %351 = vmatprep.subr.bf16.mxu0 0
  %352 = vmatpush1.bf16.msra.mxu0 0
  %353 = vmatprep.subr.bf16.mxu0 0
  %354 = vmatpush1.bf16.msra.mxu0 0
  %355 = vmatprep.subr.bf16.mxu0 0
  %356 = vmatpush1.bf16.msra.mxu0 0
  %357 = vmatprep.subr.bf16.mxu0 0
  %358 = vmatpush1.bf16.msra.mxu0 0
  %359 = vmatprep.subr.bf16.mxu0 0
  %360 = vmatpush1.bf16.msra.mxu0 0
  %361 = vmatprep.subr.bf16.mxu0 0
  %362 = vmatpush1.bf16.msra.mxu0 0
  %363 = vmatprep.subr.bf16.mxu0 0
  %364 = vmatpush1.bf16.msra.mxu0 0
  %365 = vmatprep.subr.bf16.mxu0 0
  %366 = vmatpush1.bf16.msra.mxu0 0
  %367 = vmatprep.subr.bf16.mxu0 0
  %368 = vmatpush1.bf16.msra.mxu0 0
  %369 = vmatprep.subr.bf16.mxu0 0
  %370 = vmatpush1.bf16.msra.mxu0 0
  %371 = vmatprep.subr.bf16.mxu0 0
  %372 = vmatpush1.bf16.msra.mxu0 0
  %373 = vmatprep.mubr.bf16.mxu0 0
  %374 = vmatmul.mubr.bf16.gmra.mrb[0].mxu0 %v246
  %v375 = vpop.f32.mrb[0].mxu0
  %v376 = vadd.f32 0.0, %v375
  %v377 = vpop.f32.mrb[0].mxu0
  %v378 = vpop.f32.mrb[0].mxu0
  %v379 = vadd.f32 0.0, %v378
  %v380 = vpop.f32.mrb[0].mxu0
  %381 = vmatprep.mubr.bf16.mxu0 0
  %382 = vmatmul.mubr.bf16.gmra.mrb[0].mxu0 %v249
  %v383 = vpop.f32.mrb[0].mxu0
  %v384 = vadd.f32 0.0, %v383
  %v385 = vpop.f32.mrb[0].mxu0
  %v386 = vpop.f32.mrb[0].mxu0
  %v387 = vadd.f32 0.0, %v386
  %v388 = vpop.f32.mrb[0].mxu0
  %389 = vmatprep.mubr.bf16.mxu0 0
  %390 = vmatmul.mubr.bf16.gmra.mrb[0].mxu0 %v252
  %v391 = vpop.f32.mrb[0].mxu0
  %v392 = vadd.f32 0.0, %v391
  %v393 = vpop.f32.mrb[0].mxu0
  %v394 = vpop.f32.mrb[0].mxu0
  %v395 = vadd.f32 0.0, %v394
  %v396 = vpop.f32.mrb[0].mxu0
  %397 = vmatprep.mubr.bf16.mxu0 0
  %398 = vmatmul.mubr.bf16.gmra.mrb[0].mxu0 %v255
  %v399 = vpop.f32.mrb[0].mxu0
  %v400 = vadd.f32 0.0, %v399
  %v401 = vpop.f32.mrb[0].mxu0
  %v402 = vpop.f32.mrb[0].mxu0
  %v403 = vadd.f32 0.0, %v402
  %v404 = vpop.f32.mrb[0].mxu0
  %405 = vmatprep.mubr.bf16.mxu0 0
  %406 = vmatmul.mubr.bf16.gmra.mrb[0].mxu0 %v258
  %v407 = vpop.f32.mrb[0].mxu0
  %v408 = vadd.f32 0.0, %v407
  %v409 = vpop.f32.mrb[0].mxu0
  %v410 = vpop.f32.mrb[0].mxu0
  %v411 = vadd.f32 0.0, %v410
  %v412 = vpop.f32.mrb[0].mxu0
  %413 = vmatprep.mubr.bf16.mxu0 0
  %414 = vmatmul.mubr.bf16.gmra.mrb[0].mxu0 %v261
  %v415 = vpop.f32.mrb[0].mxu0
  %v416 = vadd.f32 0.0, %v415
  %v417 = vpop.f32.mrb[0].mxu0
  %v418 = vpop.f32.mrb[0].mxu0
  %v419 = vadd.f32 0.0, %v418
  %v420 = vpop.f32.mrb[0].mxu0
  %421 = vmatprep.mubr.bf16.mxu0 0
  %422 = vmatmul.mubr.bf16.gmra.mrb[0].mxu0 %v264
  %v423 = vpop.f32.mrb[0].mxu0
  %v424 = vadd.f32 0.0, %v423
  %v425 = vpop.f32.mrb[0].mxu0
  %v426 = vpop.f32.mrb[0].mxu0
  %v427 = vadd.f32 0.0, %v426
  %v428 = vpop.f32.mrb[0].mxu0
  %429 = vmatprep.mubr.bf16.mxu0 0
  %430 = vmatmul.mubr.bf16.gmra.mrb[0].mxu0 %v267
  %v431 = vpop.f32.mrb[0].mxu0
  %v432 = vadd.f32 0.0, %v431
  %v433 = vpop.f32.mrb[0].mxu0
  %v434 = vpop.f32.mrb[0].mxu0
  %v435 = vadd.f32 0.0, %v434
  %v436 = vpop.f32.mrb[0].mxu0
  %437 = vmatprep.mubr.bf16.mxu0 0
  %438 = vmatmul.mubr.bf16.gmra.mrb[0].mxu0 %v270
  %v439 = vpop.f32.mrb[0].mxu0
  %v440 = vadd.f32 0.0, %v439
  %v441 = vpop.f32.mrb[0].mxu0
  %v442 = vpop.f32.mrb[0].mxu0
  %v443 = vadd.f32 0.0, %v442
  %v444 = vpop.f32.mrb[0].mxu0
  %445 = vmatprep.mubr.bf16.mxu0 0
  %446 = vmatmul.mubr.bf16.gmra.mrb[0].mxu0 %v273
  %v447 = vpop.f32.mrb[0].mxu0
  %v448 = vadd.f32 0.0, %v447
  %v449 = vpop.f32.mrb[0].mxu0
  %v450 = vpop.f32.mrb[0].mxu0
  %v451 = vadd.f32 0.0, %v450
  %v452 = vpop.f32.mrb[0].mxu0
  %453 = vmatprep.mubr.bf16.mxu0 0
  %454 = vmatmul.mubr.bf16.gmra.mrb[0].mxu0 %v276
  %v455 = vpop.f32.mrb[0].mxu0
  %v456 = vadd.f32 0.0, %v455
  %v457 = vpop.f32.mrb[0].mxu0
  %v458 = vpop.f32.mrb[0].mxu0
  %v459 = vadd.f32 0.0, %v458
  %v460 = vpop.f32.mrb[0].mxu0
  %461 = vmatprep.mubr.bf16.mxu0 0
  %462 = vmatmul.mubr.bf16.gmra.mrb[0].mxu0 %v279
  %v463 = vpop.f32.mrb[0].mxu0
  %v464 = vadd.f32 0.0, %v463
  %v465 = vpop.f32.mrb[0].mxu0
  %v466 = vpop.f32.mrb[0].mxu0
  %v467 = vadd.f32 0.0, %v466
  %v468 = vpop.f32.mrb[0].mxu0
  %469 = vmatprep.mubr.bf16.mxu0 0
  %470 = vmatmul.mubr.bf16.gmra.mrb[0].mxu0 %v282
  %v471 = vpop.f32.mrb[0].mxu0
  %v472 = vadd.f32 0.0, %v471
  %v473 = vpop.f32.mrb[0].mxu0
  %v474 = vpop.f32.mrb[0].mxu0
  %v475 = vadd.f32 0.0, %v474
  %v476 = vpop.f32.mrb[0].mxu0
  %477 = vmatprep.mubr.bf16.mxu0 0
  %478 = vmatmul.mubr.bf16.gmra.mrb[0].mxu0 %v285
  %v479 = vpop.f32.mrb[0].mxu0
  %v480 = vadd.f32 0.0, %v479
  %v481 = vpop.f32.mrb[0].mxu0
  %v482 = vpop.f32.mrb[0].mxu0
  %v483 = vadd.f32 0.0, %v482
  %v484 = vpop.f32.mrb[0].mxu0
  %485 = vmatprep.mubr.bf16.mxu0 0
  %486 = vmatmul.mubr.bf16.gmra.mrb[0].mxu0 %v288
  %v487 = vpop.f32.mrb[0].mxu0
  %v488 = vadd.f32 0.0, %v487
  %v489 = vpop.f32.mrb[0].mxu0
  %v490 = vpop.f32.mrb[0].mxu0
  %v491 = vadd.f32 0.0, %v490
  %v492 = vpop.f32.mrb[0].mxu0
  %493 = vmatprep.mubr.bf16.mxu0 0
  %494 = vmatmul.mubr.bf16.gmra.mrb[0].mxu0 %v291
  %v495 = vpop.f32.mrb[0].mxu0
  %v496 = vadd.f32 0.0, %v495
  %v497 = vpop.f32.mrb[0].mxu0
  %v498 = vpop.f32.mrb[0].mxu0
  %v499 = vadd.f32 0.0, %v498
  %v500 = vpop.f32.mrb[0].mxu0
  %501 = vmatprep.mubr.bf16.mxu0 0
  %502 = vmatmul.mubr.bf16.gmra.mrb[0].mxu0 %v294
  %v503 = vpop.f32.mrb[0].mxu0
  %v504 = vadd.f32 0.0, %v503
  %v505 = vpop.f32.mrb[0].mxu0
  %v506 = vpop.f32.mrb[0].mxu0
  %v507 = vadd.f32 0.0, %v506
  %v508 = vpop.f32.mrb[0].mxu0
  %509 = vmatprep.mubr.bf16.mxu0 0
  %510 = vmatmul.mubr.bf16.gmra.mrb[0].mxu0 %v297
  %v511 = vpop.f32.mrb[0].mxu0
  %v512 = vadd.f32 0.0, %v511
  %v513 = vpop.f32.mrb[0].mxu0
  %v514 = vpop.f32.mrb[0].mxu0
  %v515 = vadd.f32 0.0, %v514
  %v516 = vpop.f32.mrb[0].mxu0
  %517 = vmatprep.mubr.bf16.mxu0 0
  %518 = vmatmul.mubr.bf16.gmra.mrb[0].mxu0 %v300
  %v519 = vpop.f32.mrb[0].mxu0
  %v520 = vadd.f32 0.0, %v519
  %v521 = vpop.f32.mrb[0].mxu0
  %v522 = vpop.f32.mrb[0].mxu0
  %v523 = vadd.f32 0.0, %v522
  %v524 = vpop.f32.mrb[0].mxu0
  %525 = vmatprep.mubr.bf16.mxu0 0
  %526 = vmatmul.mubr.bf16.gmra.mrb[0].mxu0 %v303
  %v527 = vpop.f32.mrb[0].mxu0
  %v528 = vadd.f32 0.0, %v527
  %v529 = vpop.f32.mrb[0].mxu0
  %v530 = vpop.f32.mrb[0].mxu0
  %v531 = vadd.f32 0.0, %v530
  %v532 = vpop.f32.mrb[0].mxu0
  %533 = vmatprep.mubr.bf16.mxu0 0
  %534 = vmatmul.mubr.bf16.gmra.mrb[0].mxu0 %v306
  %v535 = vpop.f32.mrb[0].mxu0
  %v536 = vadd.f32 0.0, %v535
  %v537 = vpop.f32.mrb[0].mxu0
  %v538 = vpop.f32.mrb[0].mxu0
  %v539 = vadd.f32 0.0, %v538
  %v540 = vpop.f32.mrb[0].mxu0
  %541 = vmatprep.mubr.bf16.mxu0 0
  %542 = vmatmul.mubr.bf16.gmra.mrb[0].mxu0 %v309
  %v543 = vpop.f32.mrb[0].mxu0
  %v544 = vadd.f32 0.0, %v543
  %v545 = vpop.f32.mrb[0].mxu0
  %v546 = vpop.f32.mrb[0].mxu0
  %v547 = vadd.f32 0.0, %v546
  %v548 = vpop.f32.mrb[0].mxu0
  %549 = vmatprep.mubr.bf16.mxu0 0
  %550 = vmatmul.mubr.bf16.gmra.mrb[0].mxu0 %v312
  %v551 = vpop.f32.mrb[0].mxu0
  %v552 = vadd.f32 0.0, %v551
  %v553 = vpop.f32.mrb[0].mxu0
  %v554 = vpop.f32.mrb[0].mxu0
  %v555 = vadd.f32 0.0, %v554
  %v556 = vpop.f32.mrb[0].mxu0
  %557 = vmatprep.mubr.bf16.mxu0 0
  %558 = vmatmul.mubr.bf16.gmra.mrb[0].mxu0 %v315
  %v559 = vpop.f32.mrb[0].mxu0
  %v560 = vadd.f32 0.0, %v559
  %v561 = vpop.f32.mrb[0].mxu0
  %v562 = vpop.f32.mrb[0].mxu0
  %v563 = vadd.f32 0.0, %v562
  %v564 = vpop.f32.mrb[0].mxu0
  %565 = vmatprep.mubr.bf16.mxu0 0
  %566 = vmatmul.mubr.bf16.gmra.mrb[0].mxu0 %v318
  %v567 = vpop.f32.mrb[0].mxu0
  %v568 = vadd.f32 0.0, %v567
  %v569 = vpop.f32.mrb[0].mxu0
  %v570 = vpop.f32.mrb[0].mxu0
  %v571 = vadd.f32 0.0, %v570
  %v572 = vpop.f32.mrb[0].mxu0
  %573 = vmatprep.mubr.bf16.mxu0 0
  %574 = vmatmul.mubr.bf16.gmra.mrb[0].mxu0 %v321
  %v575 = vpop.f32.mrb[0].mxu0
  %v576 = vadd.f32 0.0, %v575
  %v577 = vpop.f32.mrb[0].mxu0
  %v578 = vpop.f32.mrb[0].mxu0
  %v579 = vadd.f32 0.0, %v578
  %v580 = vpop.f32.mrb[0].mxu0
  %581 = vmatprep.mubr.bf16.mxu0 0
  %582 = vmatmul.mubr.bf16.gmra.mrb[0].mxu0 %v324
  %v583 = vpop.f32.mrb[0].mxu0
  %v584 = vadd.f32 0.0, %v583
  %v585 = vpop.f32.mrb[0].mxu0
  %v586 = vpop.f32.mrb[0].mxu0
  %v587 = vadd.f32 0.0, %v586
  %v588 = vpop.f32.mrb[0].mxu0
  %589 = vmatprep.mubr.bf16.mxu0 0
  %590 = vmatmul.mubr.bf16.gmra.mrb[0].mxu0 %v327
  %v591 = vpop.f32.mrb[0].mxu0
  %v592 = vadd.f32 0.0, %v591
  %v593 = vpop.f32.mrb[0].mxu0
  %v594 = vpop.f32.mrb[0].mxu0
  %v595 = vadd.f32 0.0, %v594
  %v596 = vpop.f32.mrb[0].mxu0
  %597 = vmatprep.mubr.bf16.mxu0 0
  %598 = vmatmul.mubr.bf16.gmra.mrb[0].mxu0 %v330
  %v599 = vpop.f32.mrb[0].mxu0
  %v600 = vadd.f32 0.0, %v599
  %v601 = vpop.f32.mrb[0].mxu0
  %v602 = vpop.f32.mrb[0].mxu0
  %v603 = vadd.f32 0.0, %v602
  %v604 = vpop.f32.mrb[0].mxu0
  %605 = vmatprep.mubr.bf16.mxu0 0
  %606 = vmatmul.mubr.bf16.gmra.mrb[0].mxu0 %v333
  %v607 = vpop.f32.mrb[0].mxu0
  %v608 = vadd.f32 0.0, %v607
  %v609 = vpop.f32.mrb[0].mxu0
  %v610 = vpop.f32.mrb[0].mxu0
  %v611 = vadd.f32 0.0, %v610
  %v612 = vpop.f32.mrb[0].mxu0
  %613 = vmatprep.mubr.bf16.mxu0 0
  %614 = vmatmul.mubr.bf16.gmra.mrb[0].mxu0 %v336
  %v615 = vpop.f32.mrb[0].mxu0
  %v616 = vadd.f32 0.0, %v615
  %v617 = vpop.f32.mrb[0].mxu0
  %v618 = vpop.f32.mrb[0].mxu0
  %v619 = vadd.f32 0.0, %v618
  %v620 = vpop.f32.mrb[0].mxu0
  %621 = vmatprep.mubr.bf16.mxu0 0
  %622 = vmatmul.mubr.bf16.gmra.mrb[0].mxu0 %v339
  %v623 = vpop.f32.mrb[0].mxu0
  %v624 = vadd.f32 0.0, %v623
  %v625 = vpop.f32.mrb[0].mxu0
  %v626 = vpop.f32.mrb[0].mxu0
  %v627 = vadd.f32 0.0, %v626
  %v628 = vpop.f32.mrb[0].mxu0
  %629 = vdwg.mxu0
  %s630 = scalar_lea.vmem %s0, 256
  %v631 = vld [vmem:[%s630] sm:$0xf]
  %v632 = vld [vmem:[%s630 + $0x4] sm:$0xf]
  %v633 = vld [vmem:[%s630 + $0x8] sm:$0xf]
  %v634 = vld [vmem:[%s630 + $0xc] sm:$0xf]
  %v635 = vld [vmem:[%s630 + $0x10] sm:$0xf]
  %v636 = vld [vmem:[%s630 + $0x14] sm:$0xf]
  %v637 = vld [vmem:[%s630 + $0x18] sm:$0xf]
  %v638 = vld [vmem:[%s630 + $0x1c] sm:$0xf]
  %v639 = vld [vmem:[%s630 + $0x20] sm:$0xf]
  %v640 = vld [vmem:[%s630 + $0x24] sm:$0xf]
  %v641 = vld [vmem:[%s630 + $0x28] sm:$0xf]
  %v642 = vld [vmem:[%s630 + $0x2c] sm:$0xf]
  %v643 = vld [vmem:[%s630 + $0x30] sm:$0xf]
  %v644 = vld [vmem:[%s630 + $0x34] sm:$0xf]
  %v645 = vld [vmem:[%s630 + $0x38] sm:$0xf]
  %v646 = vld [vmem:[%s630 + $0x3c] sm:$0xf]
  %v647 = vld [vmem:[%s630 + $0x40] sm:$0xf]
  %v648 = vld [vmem:[%s630 + $0x44] sm:$0xf]
  %v649 = vld [vmem:[%s630 + $0x48] sm:$0xf]
  %v650 = vld [vmem:[%s630 + $0x4c] sm:$0xf]
  %v651 = vld [vmem:[%s630 + $0x50] sm:$0xf]
  %v652 = vld [vmem:[%s630 + $0x54] sm:$0xf]
  %v653 = vld [vmem:[%s630 + $0x58] sm:$0xf]
  %v654 = vld [vmem:[%s630 + $0x5c] sm:$0xf]
  %v655 = vld [vmem:[%s630 + $0x60] sm:$0xf]
  %v656 = vld [vmem:[%s630 + $0x64] sm:$0xf]
  %v657 = vld [vmem:[%s630 + $0x68] sm:$0xf]
  %v658 = vld [vmem:[%s630 + $0x6c] sm:$0xf]
  %v659 = vld [vmem:[%s630 + $0x70] sm:$0xf]
  %v660 = vld [vmem:[%s630 + $0x74] sm:$0xf]
  %v661 = vld [vmem:[%s630 + $0x78] sm:$0xf]
  %v662 = vld [vmem:[%s630 + $0x7c] sm:$0xf]
  %v663 = vld [vmem:[%s630 + $0x80] sm:$0xf]
  %v664 = vld [vmem:[%s630 + $0x84] sm:$0xf]
  %v665 = vld [vmem:[%s630 + $0x88] sm:$0xf]
  %v666 = vld [vmem:[%s630 + $0x8c] sm:$0xf]
  %v667 = vld [vmem:[%s630 + $0x90] sm:$0xf]
  %v668 = vld [vmem:[%s630 + $0x94] sm:$0xf]
  %v669 = vld [vmem:[%s630 + $0x98] sm:$0xf]
  %v670 = vld [vmem:[%s630 + $0x9c] sm:$0xf]
  %v671 = vld [vmem:[%s630 + $0xa0] sm:$0xf]
  %v672 = vld [vmem:[%s630 + $0xa4] sm:$0xf]
  %v673 = vld [vmem:[%s630 + $0xa8] sm:$0xf]
  %v674 = vld [vmem:[%s630 + $0xac] sm:$0xf]
  %v675 = vld [vmem:[%s630 + $0xb0] sm:$0xf]
  %v676 = vld [vmem:[%s630 + $0xb4] sm:$0xf]
  %v677 = vld [vmem:[%s630 + $0xb8] sm:$0xf]
  %v678 = vld [vmem:[%s630 + $0xbc] sm:$0xf]
  %v679 = vld [vmem:[%s630 + $0xc0] sm:$0xf]
  %v680 = vld [vmem:[%s630 + $0xc4] sm:$0xf]
  %v681 = vld [vmem:[%s630 + $0xc8] sm:$0xf]
  %v682 = vld [vmem:[%s630 + $0xcc] sm:$0xf]
  %v683 = vld [vmem:[%s630 + $0xd0] sm:$0xf]
  %v684 = vld [vmem:[%s630 + $0xd4] sm:$0xf]
  %v685 = vld [vmem:[%s630 + $0xd8] sm:$0xf]
  %v686 = vld [vmem:[%s630 + $0xdc] sm:$0xf]
  %v687 = vld [vmem:[%s630 + $0xe0] sm:$0xf]
  %v688 = vld [vmem:[%s630 + $0xe4] sm:$0xf]
  %v689 = vld [vmem:[%s630 + $0xe8] sm:$0xf]
  %v690 = vld [vmem:[%s630 + $0xec] sm:$0xf]
  %v691 = vld [vmem:[%s630 + $0xf0] sm:$0xf]
  %v692 = vld [vmem:[%s630 + $0xf4] sm:$0xf]
  %v693 = vld [vmem:[%s630 + $0xf8] sm:$0xf]
  %v694 = vld [vmem:[%s630 + $0xfc] sm:$0xf]
  %s695 = scalar_lea.vmem %s1, 8
  %v696 = vld [vmem:[%s695] sm:$0xf]
  %v697 = vld [vmem:[%s695 + $0x4] sm:$0xf]
  %v762 = vunpack.c.l.b16 %v631
  %v763 = vunpack.c.l.b16 %v632
  %v764 = vunpack.c.l.b16 %v633
  %v765 = vunpack.c.l.b16 %v634
  %v766 = vunpack.c.l.b16 %v635
  %v767 = vunpack.c.l.b16 %v636
  %v768 = vunpack.c.l.b16 %v637
  %v769 = vunpack.c.l.b16 %v638
  %v770 = vunpack.c.l.b16 %v639
  %v771 = vunpack.c.l.b16 %v640
  %v772 = vunpack.c.l.b16 %v641
  %v773 = vunpack.c.l.b16 %v642
  %v774 = vunpack.c.l.b16 %v643
  %v775 = vunpack.c.l.b16 %v644
  %v776 = vunpack.c.l.b16 %v645
  %v777 = vunpack.c.l.b16 %v646
  %v778 = vunpack.c.l.b16 %v647
  %v779 = vunpack.c.l.b16 %v648
  %v780 = vunpack.c.l.b16 %v649
  %v781 = vunpack.c.l.b16 %v650
  %v782 = vunpack.c.l.b16 %v651
  %v783 = vunpack.c.l.b16 %v652
  %v784 = vunpack.c.l.b16 %v653
  %v785 = vunpack.c.l.b16 %v654
  %v786 = vunpack.c.l.b16 %v655
  %v787 = vunpack.c.l.b16 %v656
  %v788 = vunpack.c.l.b16 %v657
  %v789 = vunpack.c.l.b16 %v658
  %v790 = vunpack.c.l.b16 %v659
  %v791 = vunpack.c.l.b16 %v660
  %v792 = vunpack.c.l.b16 %v661
  %v793 = vunpack.c.l.b16 %v662
  %v794 = vunpack.c.l.b16 %v663
  %v795 = vunpack.c.l.b16 %v664
  %v796 = vunpack.c.l.b16 %v665
  %v797 = vunpack.c.l.b16 %v666
  %v798 = vunpack.c.l.b16 %v667
  %v799 = vunpack.c.l.b16 %v668
  %v800 = vunpack.c.l.b16 %v669
  %v801 = vunpack.c.l.b16 %v670
  %v802 = vunpack.c.l.b16 %v671
  %v803 = vunpack.c.l.b16 %v672
  %v804 = vunpack.c.l.b16 %v673
  %v805 = vunpack.c.l.b16 %v674
  %v806 = vunpack.c.l.b16 %v675
  %v807 = vunpack.c.l.b16 %v676
  %v808 = vunpack.c.l.b16 %v677
  %v809 = vunpack.c.l.b16 %v678
  %v810 = vunpack.c.l.b16 %v679
  %v811 = vunpack.c.l.b16 %v680
  %v812 = vunpack.c.l.b16 %v681
  %v813 = vunpack.c.l.b16 %v682
  %v814 = vunpack.c.l.b16 %v683
  %v815 = vunpack.c.l.b16 %v684
  %v816 = vunpack.c.l.b16 %v685
  %v817 = vunpack.c.l.b16 %v686
  %v818 = vunpack.c.l.b16 %v687
  %v819 = vunpack.c.l.b16 %v688
  %v820 = vunpack.c.l.b16 %v689
  %v821 = vunpack.c.l.b16 %v690
  %v822 = vunpack.c.l.b16 %v691
  %v823 = vunpack.c.l.b16 %v692
  %v824 = vunpack.c.l.b16 %v693
  %v825 = vunpack.c.l.b16 %v694
  %v826 = vpack.c.b16 %v763, %v762
  %v827 = vpack.c.b16 %v765, %v764
  %v828 = vpack.c.b16 %v767, %v766
  %v829 = vpack.c.b16 %v769, %v768
  %v830 = vpack.c.b16 %v771, %v770
  %v831 = vpack.c.b16 %v773, %v772
  %v832 = vpack.c.b16 %v775, %v774
  %v833 = vpack.c.b16 %v777, %v776
  %v834 = vpack.c.b16 %v779, %v778
  %v835 = vpack.c.b16 %v781, %v780
  %v836 = vpack.c.b16 %v783, %v782
  %v837 = vpack.c.b16 %v785, %v784
  %v838 = vpack.c.b16 %v787, %v786
  %v839 = vpack.c.b16 %v789, %v788
  %v840 = vpack.c.b16 %v791, %v790
  %v841 = vpack.c.b16 %v793, %v792
  %v842 = vpack.c.b16 %v795, %v794
  %v843 = vpack.c.b16 %v797, %v796
  %v844 = vpack.c.b16 %v799, %v798
  %v845 = vpack.c.b16 %v801, %v800
  %v846 = vpack.c.b16 %v803, %v802
  %v847 = vpack.c.b16 %v805, %v804
  %v848 = vpack.c.b16 %v807, %v806
  %v849 = vpack.c.b16 %v809, %v808
  %v850 = vpack.c.b16 %v811, %v810
  %v851 = vpack.c.b16 %v813, %v812
  %v852 = vpack.c.b16 %v815, %v814
  %v853 = vpack.c.b16 %v817, %v816
  %v854 = vpack.c.b16 %v819, %v818
  %v855 = vpack.c.b16 %v821, %v820
  %v856 = vpack.c.b16 %v823, %v822
  %v857 = vpack.c.b16 %v825, %v824
  %v860 = vunpack.c.l.b16 %v696
  %v861 = vunpack.c.l.b16 %v697
  %v862 = vpack.c.b16 %v861, %v860
  %v865 = vsel %vm244, %v826, 0
  %v868 = vsel %vm244, %v827, 0
  %v871 = vsel %vm244, %v828, 0
  %v874 = vsel %vm244, %v829, 0
  %v877 = vsel %vm244, %v830, 0
  %v880 = vsel %vm244, %v831, 0
  %v883 = vsel %vm244, %v832, 0
  %v886 = vsel %vm244, %v833, 0
  %v889 = vsel %vm244, %v834, 0
  %v892 = vsel %vm244, %v835, 0
  %v895 = vsel %vm244, %v836, 0
  %v898 = vsel %vm244, %v837, 0
  %v901 = vsel %vm244, %v838, 0
  %v904 = vsel %vm244, %v839, 0
  %v907 = vsel %vm244, %v840, 0
  %v910 = vsel %vm244, %v841, 0
  %v913 = vsel %vm244, %v842, 0
  %v916 = vsel %vm244, %v843, 0
  %v919 = vsel %vm244, %v844, 0
  %v922 = vsel %vm244, %v845, 0
  %v925 = vsel %vm244, %v846, 0
  %v928 = vsel %vm244, %v847, 0
  %v931 = vsel %vm244, %v848, 0
  %v934 = vsel %vm244, %v849, 0
  %v937 = vsel %vm244, %v850, 0
  %v940 = vsel %vm244, %v851, 0
  %v943 = vsel %vm244, %v852, 0
  %v946 = vsel %vm244, %v853, 0
  %v949 = vsel %vm244, %v854, 0
  %v952 = vsel %vm244, %v855, 0
  %v955 = vsel %vm244, %v856, 0
  %v958 = vsel %vm244, %v857, 0
  %960 = vmatprep.subr.bf16.mxu0 0
  %961 = vmatpush1.bf16.msra.mxu0 %v862
  %962 = vmatprep.subr.bf16.mxu0 0
  %963 = vmatpush1.bf16.msra.mxu0 0
  %964 = vmatprep.subr.bf16.mxu0 0
  %965 = vmatpush1.bf16.msra.mxu0 0
  %966 = vmatprep.subr.bf16.mxu0 0
  %967 = vmatpush1.bf16.msra.mxu0 0
  %968 = vmatprep.subr.bf16.mxu0 0
  %969 = vmatpush1.bf16.msra.mxu0 0
  %970 = vmatprep.subr.bf16.mxu0 0
  %971 = vmatpush1.bf16.msra.mxu0 0
  %972 = vmatprep.subr.bf16.mxu0 0
  %973 = vmatpush1.bf16.msra.mxu0 0
  %974 = vmatprep.subr.bf16.mxu0 0
  %975 = vmatpush1.bf16.msra.mxu0 0
  %976 = vmatprep.subr.bf16.mxu0 0
  %977 = vmatpush1.bf16.msra.mxu0 0
  %978 = vmatprep.subr.bf16.mxu0 0
  %979 = vmatpush1.bf16.msra.mxu0 0
  %980 = vmatprep.subr.bf16.mxu0 0
  %981 = vmatpush1.bf16.msra.mxu0 0
  %982 = vmatprep.subr.bf16.mxu0 0
  %983 = vmatpush1.bf16.msra.mxu0 0
  %984 = vmatprep.subr.bf16.mxu0 0
  %985 = vmatpush1.bf16.msra.mxu0 0
  %986 = vmatprep.subr.bf16.mxu0 0
  %987 = vmatpush1.bf16.msra.mxu0 0
  %988 = vmatprep.subr.bf16.mxu0 0
  %989 = vmatpush1.bf16.msra.mxu0 0
  %990 = vmatprep.subr.bf16.mxu0 0
  %991 = vmatpush1.bf16.msra.mxu0 0
  %992 = vmatprep.mubr.bf16.mxu0 0
  %993 = vmatmul.mubr.bf16.gmra.mrb[0].mxu0 %v865
  %v994 = vpop.f32.mrb[0].mxu0
  %v995 = vadd.f32 0.0, %v994
  %v996 = vpop.f32.mrb[0].mxu0
  %v997 = vpop.f32.mrb[0].mxu0
  %v998 = vadd.f32 0.0, %v997
  %v999 = vpop.f32.mrb[0].mxu0
  %1000 = vmatprep.mubr.bf16.mxu0 0
  %1001 = vmatmul.mubr.bf16.gmra.mrb[0].mxu0 %v868
  %v1002 = vpop.f32.mrb[0].mxu0
  %v1003 = vadd.f32 0.0, %v1002
  %v1004 = vpop.f32.mrb[0].mxu0
  %v1005 = vpop.f32.mrb[0].mxu0
  %v1006 = vadd.f32 0.0, %v1005
  %v1007 = vpop.f32.mrb[0].mxu0
  %1008 = vmatprep.mubr.bf16.mxu0 0
  %1009 = vmatmul.mubr.bf16.gmra.mrb[0].mxu0 %v871
  %v1010 = vpop.f32.mrb[0].mxu0
  %v1011 = vadd.f32 0.0, %v1010
  %v1012 = vpop.f32.mrb[0].mxu0
  %v1013 = vpop.f32.mrb[0].mxu0
  %v1014 = vadd.f32 0.0, %v1013
  %v1015 = vpop.f32.mrb[0].mxu0
  %1016 = vmatprep.mubr.bf16.mxu0 0
  %1017 = vmatmul.mubr.bf16.gmra.mrb[0].mxu0 %v874
  %v1018 = vpop.f32.mrb[0].mxu0
  %v1019 = vadd.f32 0.0, %v1018
  %v1020 = vpop.f32.mrb[0].mxu0
  %v1021 = vpop.f32.mrb[0].mxu0
  %v1022 = vadd.f32 0.0, %v1021
  %v1023 = vpop.f32.mrb[0].mxu0
  %1024 = vmatprep.mubr.bf16.mxu0 0
  %1025 = vmatmul.mubr.bf16.gmra.mrb[0].mxu0 %v877
  %v1026 = vpop.f32.mrb[0].mxu0
  %v1027 = vadd.f32 0.0, %v1026
  %v1028 = vpop.f32.mrb[0].mxu0
  %v1029 = vpop.f32.mrb[0].mxu0
  %v1030 = vadd.f32 0.0, %v1029
  %v1031 = vpop.f32.mrb[0].mxu0
  %1032 = vmatprep.mubr.bf16.mxu0 0
  %1033 = vmatmul.mubr.bf16.gmra.mrb[0].mxu0 %v880
  %v1034 = vpop.f32.mrb[0].mxu0
  %v1035 = vadd.f32 0.0, %v1034
  %v1036 = vpop.f32.mrb[0].mxu0
  %v1037 = vpop.f32.mrb[0].mxu0
  %v1038 = vadd.f32 0.0, %v1037
  %v1039 = vpop.f32.mrb[0].mxu0
  %1040 = vmatprep.mubr.bf16.mxu0 0
  %1041 = vmatmul.mubr.bf16.gmra.mrb[0].mxu0 %v883
  %v1042 = vpop.f32.mrb[0].mxu0
  %v1043 = vadd.f32 0.0, %v1042
  %v1044 = vpop.f32.mrb[0].mxu0
  %v1045 = vpop.f32.mrb[0].mxu0
  %v1046 = vadd.f32 0.0, %v1045
  %v1047 = vpop.f32.mrb[0].mxu0
  %1048 = vmatprep.mubr.bf16.mxu0 0
  %1049 = vmatmul.mubr.bf16.gmra.mrb[0].mxu0 %v886
  %v1050 = vpop.f32.mrb[0].mxu0
  %v1051 = vadd.f32 0.0, %v1050
  %v1052 = vpop.f32.mrb[0].mxu0
  %v1053 = vpop.f32.mrb[0].mxu0
  %v1054 = vadd.f32 0.0, %v1053
  %v1055 = vpop.f32.mrb[0].mxu0
  %1056 = vmatprep.mubr.bf16.mxu0 0
  %1057 = vmatmul.mubr.bf16.gmra.mrb[0].mxu0 %v889
  %v1058 = vpop.f32.mrb[0].mxu0
  %v1059 = vadd.f32 0.0, %v1058
  %v1060 = vpop.f32.mrb[0].mxu0
  %v1061 = vpop.f32.mrb[0].mxu0
  %v1062 = vadd.f32 0.0, %v1061
  %v1063 = vpop.f32.mrb[0].mxu0
  %1064 = vmatprep.mubr.bf16.mxu0 0
  %1065 = vmatmul.mubr.bf16.gmra.mrb[0].mxu0 %v892
  %v1066 = vpop.f32.mrb[0].mxu0
  %v1067 = vadd.f32 0.0, %v1066
  %v1068 = vpop.f32.mrb[0].mxu0
  %v1069 = vpop.f32.mrb[0].mxu0
  %v1070 = vadd.f32 0.0, %v1069
  %v1071 = vpop.f32.mrb[0].mxu0
  %1072 = vmatprep.mubr.bf16.mxu0 0
  %1073 = vmatmul.mubr.bf16.gmra.mrb[0].mxu0 %v895
  %v1074 = vpop.f32.mrb[0].mxu0
  %v1075 = vadd.f32 0.0, %v1074
  %v1076 = vpop.f32.mrb[0].mxu0
  %v1077 = vpop.f32.mrb[0].mxu0
  %v1078 = vadd.f32 0.0, %v1077
  %v1079 = vpop.f32.mrb[0].mxu0
  %1080 = vmatprep.mubr.bf16.mxu0 0
  %1081 = vmatmul.mubr.bf16.gmra.mrb[0].mxu0 %v898
  %v1082 = vpop.f32.mrb[0].mxu0
  %v1083 = vadd.f32 0.0, %v1082
  %v1084 = vpop.f32.mrb[0].mxu0
  %v1085 = vpop.f32.mrb[0].mxu0
  %v1086 = vadd.f32 0.0, %v1085
  %v1087 = vpop.f32.mrb[0].mxu0
  %1088 = vmatprep.mubr.bf16.mxu0 0
  %1089 = vmatmul.mubr.bf16.gmra.mrb[0].mxu0 %v901
  %v1090 = vpop.f32.mrb[0].mxu0
  %v1091 = vadd.f32 0.0, %v1090
  %v1092 = vpop.f32.mrb[0].mxu0
  %v1093 = vpop.f32.mrb[0].mxu0
  %v1094 = vadd.f32 0.0, %v1093
  %v1095 = vpop.f32.mrb[0].mxu0
  %1096 = vmatprep.mubr.bf16.mxu0 0
  %1097 = vmatmul.mubr.bf16.gmra.mrb[0].mxu0 %v904
  %v1098 = vpop.f32.mrb[0].mxu0
  %v1099 = vadd.f32 0.0, %v1098
  %v1100 = vpop.f32.mrb[0].mxu0
  %v1101 = vpop.f32.mrb[0].mxu0
  %v1102 = vadd.f32 0.0, %v1101
  %v1103 = vpop.f32.mrb[0].mxu0
  %1104 = vmatprep.mubr.bf16.mxu0 0
  %1105 = vmatmul.mubr.bf16.gmra.mrb[0].mxu0 %v907
  %v1106 = vpop.f32.mrb[0].mxu0
  %v1107 = vadd.f32 0.0, %v1106
  %v1108 = vpop.f32.mrb[0].mxu0
  %v1109 = vpop.f32.mrb[0].mxu0
  %v1110 = vadd.f32 0.0, %v1109
  %v1111 = vpop.f32.mrb[0].mxu0
  %1112 = vmatprep.mubr.bf16.mxu0 0
  %1113 = vmatmul.mubr.bf16.gmra.mrb[0].mxu0 %v910
  %v1114 = vpop.f32.mrb[0].mxu0
  %v1115 = vadd.f32 0.0, %v1114
  %v1116 = vpop.f32.mrb[0].mxu0
  %v1117 = vpop.f32.mrb[0].mxu0
  %v1118 = vadd.f32 0.0, %v1117
  %v1119 = vpop.f32.mrb[0].mxu0
  %1120 = vmatprep.mubr.bf16.mxu0 0
  %1121 = vmatmul.mubr.bf16.gmra.mrb[0].mxu0 %v913
  %v1122 = vpop.f32.mrb[0].mxu0
  %v1123 = vadd.f32 0.0, %v1122
  %v1124 = vpop.f32.mrb[0].mxu0
  %v1125 = vpop.f32.mrb[0].mxu0
  %v1126 = vadd.f32 0.0, %v1125
  %v1127 = vpop.f32.mrb[0].mxu0
  %1128 = vmatprep.mubr.bf16.mxu0 0
  %1129 = vmatmul.mubr.bf16.gmra.mrb[0].mxu0 %v916
  %v1130 = vpop.f32.mrb[0].mxu0
  %v1131 = vadd.f32 0.0, %v1130
  %v1132 = vpop.f32.mrb[0].mxu0
  %v1133 = vpop.f32.mrb[0].mxu0
  %v1134 = vadd.f32 0.0, %v1133
  %v1135 = vpop.f32.mrb[0].mxu0
  %1136 = vmatprep.mubr.bf16.mxu0 0
  %1137 = vmatmul.mubr.bf16.gmra.mrb[0].mxu0 %v919
  %v1138 = vpop.f32.mrb[0].mxu0
  %v1139 = vadd.f32 0.0, %v1138
  %v1140 = vpop.f32.mrb[0].mxu0
  %v1141 = vpop.f32.mrb[0].mxu0
  %v1142 = vadd.f32 0.0, %v1141
  %v1143 = vpop.f32.mrb[0].mxu0
  %1144 = vmatprep.mubr.bf16.mxu0 0
  %1145 = vmatmul.mubr.bf16.gmra.mrb[0].mxu0 %v922
  %v1146 = vpop.f32.mrb[0].mxu0
  %v1147 = vadd.f32 0.0, %v1146
  %v1148 = vpop.f32.mrb[0].mxu0
  %v1149 = vpop.f32.mrb[0].mxu0
  %v1150 = vadd.f32 0.0, %v1149
  %v1151 = vpop.f32.mrb[0].mxu0
  %1152 = vmatprep.mubr.bf16.mxu0 0
  %1153 = vmatmul.mubr.bf16.gmra.mrb[0].mxu0 %v925
  %v1154 = vpop.f32.mrb[0].mxu0
  %v1155 = vadd.f32 0.0, %v1154
  %v1156 = vpop.f32.mrb[0].mxu0
  %v1157 = vpop.f32.mrb[0].mxu0
  %v1158 = vadd.f32 0.0, %v1157
  %v1159 = vpop.f32.mrb[0].mxu0
  %1160 = vmatprep.mubr.bf16.mxu0 0
  %1161 = vmatmul.mubr.bf16.gmra.mrb[0].mxu0 %v928
  %v1162 = vpop.f32.mrb[0].mxu0
  %v1163 = vadd.f32 0.0, %v1162
  %v1164 = vpop.f32.mrb[0].mxu0
  %v1165 = vpop.f32.mrb[0].mxu0
  %v1166 = vadd.f32 0.0, %v1165
  %v1167 = vpop.f32.mrb[0].mxu0
  %1168 = vmatprep.mubr.bf16.mxu0 0
  %1169 = vmatmul.mubr.bf16.gmra.mrb[0].mxu0 %v931
  %v1170 = vpop.f32.mrb[0].mxu0
  %v1171 = vadd.f32 0.0, %v1170
  %v1172 = vpop.f32.mrb[0].mxu0
  %v1173 = vpop.f32.mrb[0].mxu0
  %v1174 = vadd.f32 0.0, %v1173
  %v1175 = vpop.f32.mrb[0].mxu0
  %1176 = vmatprep.mubr.bf16.mxu0 0
  %1177 = vmatmul.mubr.bf16.gmra.mrb[0].mxu0 %v934
  %v1178 = vpop.f32.mrb[0].mxu0
  %v1179 = vadd.f32 0.0, %v1178
  %v1180 = vpop.f32.mrb[0].mxu0
  %v1181 = vpop.f32.mrb[0].mxu0
  %v1182 = vadd.f32 0.0, %v1181
  %v1183 = vpop.f32.mrb[0].mxu0
  %1184 = vmatprep.mubr.bf16.mxu0 0
  %1185 = vmatmul.mubr.bf16.gmra.mrb[0].mxu0 %v937
  %v1186 = vpop.f32.mrb[0].mxu0
  %v1187 = vadd.f32 0.0, %v1186
  %v1188 = vpop.f32.mrb[0].mxu0
  %v1189 = vpop.f32.mrb[0].mxu0
  %v1190 = vadd.f32 0.0, %v1189
  %v1191 = vpop.f32.mrb[0].mxu0
  %1192 = vmatprep.mubr.bf16.mxu0 0
  %1193 = vmatmul.mubr.bf16.gmra.mrb[0].mxu0 %v940
  %v1194 = vpop.f32.mrb[0].mxu0
  %v1195 = vadd.f32 0.0, %v1194
  %v1196 = vpop.f32.mrb[0].mxu0
  %v1197 = vpop.f32.mrb[0].mxu0
  %v1198 = vadd.f32 0.0, %v1197
  %v1199 = vpop.f32.mrb[0].mxu0
  %1200 = vmatprep.mubr.bf16.mxu0 0
  %1201 = vmatmul.mubr.bf16.gmra.mrb[0].mxu0 %v943
  %v1202 = vpop.f32.mrb[0].mxu0
  %v1203 = vadd.f32 0.0, %v1202
  %v1204 = vpop.f32.mrb[0].mxu0
  %v1205 = vpop.f32.mrb[0].mxu0
  %v1206 = vadd.f32 0.0, %v1205
  %v1207 = vpop.f32.mrb[0].mxu0
  %1208 = vmatprep.mubr.bf16.mxu0 0
  %1209 = vmatmul.mubr.bf16.gmra.mrb[0].mxu0 %v946
  %v1210 = vpop.f32.mrb[0].mxu0
  %v1211 = vadd.f32 0.0, %v1210
  %v1212 = vpop.f32.mrb[0].mxu0
  %v1213 = vpop.f32.mrb[0].mxu0
  %v1214 = vadd.f32 0.0, %v1213
  %v1215 = vpop.f32.mrb[0].mxu0
  %1216 = vmatprep.mubr.bf16.mxu0 0
  %1217 = vmatmul.mubr.bf16.gmra.mrb[0].mxu0 %v949
  %v1218 = vpop.f32.mrb[0].mxu0
  %v1219 = vadd.f32 0.0, %v1218
  %v1220 = vpop.f32.mrb[0].mxu0
  %v1221 = vpop.f32.mrb[0].mxu0
  %v1222 = vadd.f32 0.0, %v1221
  %v1223 = vpop.f32.mrb[0].mxu0
  %1224 = vmatprep.mubr.bf16.mxu0 0
  %1225 = vmatmul.mubr.bf16.gmra.mrb[0].mxu0 %v952
  %v1226 = vpop.f32.mrb[0].mxu0
  %v1227 = vadd.f32 0.0, %v1226
  %v1228 = vpop.f32.mrb[0].mxu0
  %v1229 = vpop.f32.mrb[0].mxu0
  %v1230 = vadd.f32 0.0, %v1229
  %v1231 = vpop.f32.mrb[0].mxu0
  %1232 = vmatprep.mubr.bf16.mxu0 0
  %1233 = vmatmul.mubr.bf16.gmra.mrb[0].mxu0 %v955
  %v1234 = vpop.f32.mrb[0].mxu0
  %v1235 = vadd.f32 0.0, %v1234
  %v1236 = vpop.f32.mrb[0].mxu0
  %v1237 = vpop.f32.mrb[0].mxu0
  %v1238 = vadd.f32 0.0, %v1237
  %v1239 = vpop.f32.mrb[0].mxu0
  %1240 = vmatprep.mubr.bf16.mxu0 0
  %1241 = vmatmul.mubr.bf16.gmra.mrb[0].mxu0 %v958
  %v1242 = vpop.f32.mrb[0].mxu0
  %v1243 = vadd.f32 0.0, %v1242
  %v1244 = vpop.f32.mrb[0].mxu0
  %v1245 = vpop.f32.mrb[0].mxu0
  %v1246 = vadd.f32 0.0, %v1245
  %v1247 = vpop.f32.mrb[0].mxu0
  %1248 = vdwg.mxu0
  %s1249 = scalar_lea.vmem %s0, 512
  %v1250 = vld [vmem:[%s1249] sm:$0xf]
  %v1251 = vld [vmem:[%s1249 + $0x4] sm:$0xf]
  %v1252 = vld [vmem:[%s1249 + $0x8] sm:$0xf]
  %v1253 = vld [vmem:[%s1249 + $0xc] sm:$0xf]
  %v1254 = vld [vmem:[%s1249 + $0x10] sm:$0xf]
  %v1255 = vld [vmem:[%s1249 + $0x14] sm:$0xf]
  %v1256 = vld [vmem:[%s1249 + $0x18] sm:$0xf]
  %v1257 = vld [vmem:[%s1249 + $0x1c] sm:$0xf]
  %v1258 = vld [vmem:[%s1249 + $0x20] sm:$0xf]
  %v1259 = vld [vmem:[%s1249 + $0x24] sm:$0xf]
  %v1260 = vld [vmem:[%s1249 + $0x28] sm:$0xf]
  %v1261 = vld [vmem:[%s1249 + $0x2c] sm:$0xf]
  %v1262 = vld [vmem:[%s1249 + $0x30] sm:$0xf]
  %v1263 = vld [vmem:[%s1249 + $0x34] sm:$0xf]
  %v1264 = vld [vmem:[%s1249 + $0x38] sm:$0xf]
  %v1265 = vld [vmem:[%s1249 + $0x3c] sm:$0xf]
  %v1266 = vld [vmem:[%s1249 + $0x40] sm:$0xf]
  %v1267 = vld [vmem:[%s1249 + $0x44] sm:$0xf]
  %v1268 = vld [vmem:[%s1249 + $0x48] sm:$0xf]
  %v1269 = vld [vmem:[%s1249 + $0x4c] sm:$0xf]
  %v1270 = vld [vmem:[%s1249 + $0x50] sm:$0xf]
  %v1271 = vld [vmem:[%s1249 + $0x54] sm:$0xf]
  %v1272 = vld [vmem:[%s1249 + $0x58] sm:$0xf]
  %v1273 = vld [vmem:[%s1249 + $0x5c] sm:$0xf]
  %v1274 = vld [vmem:[%s1249 + $0x60] sm:$0xf]
  %v1275 = vld [vmem:[%s1249 + $0x64] sm:$0xf]
  %v1276 = vld [vmem:[%s1249 + $0x68] sm:$0xf]
  %v1277 = vld [vmem:[%s1249 + $0x6c] sm:$0xf]
  %v1278 = vld [vmem:[%s1249 + $0x70] sm:$0xf]
  %v1279 = vld [vmem:[%s1249 + $0x74] sm:$0xf]
  %v1280 = vld [vmem:[%s1249 + $0x78] sm:$0xf]
  %v1281 = vld [vmem:[%s1249 + $0x7c] sm:$0xf]
  %v1282 = vld [vmem:[%s1249 + $0x80] sm:$0xf]
  %v1283 = vld [vmem:[%s1249 + $0x84] sm:$0xf]
  %v1284 = vld [vmem:[%s1249 + $0x88] sm:$0xf]
  %v1285 = vld [vmem:[%s1249 + $0x8c] sm:$0xf]
  %v1286 = vld [vmem:[%s1249 + $0x90] sm:$0xf]
  %v1287 = vld [vmem:[%s1249 + $0x94] sm:$0xf]
  %v1288 = vld [vmem:[%s1249 + $0x98] sm:$0xf]
  %v1289 = vld [vmem:[%s1249 + $0x9c] sm:$0xf]
  %v1290 = vld [vmem:[%s1249 + $0xa0] sm:$0xf]
  %v1291 = vld [vmem:[%s1249 + $0xa4] sm:$0xf]
  %v1292 = vld [vmem:[%s1249 + $0xa8] sm:$0xf]
  %v1293 = vld [vmem:[%s1249 + $0xac] sm:$0xf]
  %v1294 = vld [vmem:[%s1249 + $0xb0] sm:$0xf]
  %v1295 = vld [vmem:[%s1249 + $0xb4] sm:$0xf]
  %v1296 = vld [vmem:[%s1249 + $0xb8] sm:$0xf]
  %v1297 = vld [vmem:[%s1249 + $0xbc] sm:$0xf]
  %v1298 = vld [vmem:[%s1249 + $0xc0] sm:$0xf]
  %v1299 = vld [vmem:[%s1249 + $0xc4] sm:$0xf]
  %v1300 = vld [vmem:[%s1249 + $0xc8] sm:$0xf]
  %v1301 = vld [vmem:[%s1249 + $0xcc] sm:$0xf]
  %v1302 = vld [vmem:[%s1249 + $0xd0] sm:$0xf]
  %v1303 = vld [vmem:[%s1249 + $0xd4] sm:$0xf]
  %v1304 = vld [vmem:[%s1249 + $0xd8] sm:$0xf]
  %v1305 = vld [vmem:[%s1249 + $0xdc] sm:$0xf]
  %v1306 = vld [vmem:[%s1249 + $0xe0] sm:$0xf]
  %v1307 = vld [vmem:[%s1249 + $0xe4] sm:$0xf]
  %v1308 = vld [vmem:[%s1249 + $0xe8] sm:$0xf]
  %v1309 = vld [vmem:[%s1249 + $0xec] sm:$0xf]
  %v1310 = vld [vmem:[%s1249 + $0xf0] sm:$0xf]
  %v1311 = vld [vmem:[%s1249 + $0xf4] sm:$0xf]
  %v1312 = vld [vmem:[%s1249 + $0xf8] sm:$0xf]
  %v1313 = vld [vmem:[%s1249 + $0xfc] sm:$0xf]
  %s1314 = scalar_lea.vmem %s1, 16
  %v1315 = vld [vmem:[%s1314] sm:$0xf]
  %v1316 = vld [vmem:[%s1314 + $0x4] sm:$0xf]
  %v1381 = vunpack.c.l.b16 %v1250
  %v1382 = vunpack.c.l.b16 %v1251
  %v1383 = vunpack.c.l.b16 %v1252
  %v1384 = vunpack.c.l.b16 %v1253
  %v1385 = vunpack.c.l.b16 %v1254
  %v1386 = vunpack.c.l.b16 %v1255
  %v1387 = vunpack.c.l.b16 %v1256
  %v1388 = vunpack.c.l.b16 %v1257
  %v1389 = vunpack.c.l.b16 %v1258
  %v1390 = vunpack.c.l.b16 %v1259
  %v1391 = vunpack.c.l.b16 %v1260
  %v1392 = vunpack.c.l.b16 %v1261
  %v1393 = vunpack.c.l.b16 %v1262
  %v1394 = vunpack.c.l.b16 %v1263
  %v1395 = vunpack.c.l.b16 %v1264
  %v1396 = vunpack.c.l.b16 %v1265
  %v1397 = vunpack.c.l.b16 %v1266
  %v1398 = vunpack.c.l.b16 %v1267
  %v1399 = vunpack.c.l.b16 %v1268
  %v1400 = vunpack.c.l.b16 %v1269
  %v1401 = vunpack.c.l.b16 %v1270
  %v1402 = vunpack.c.l.b16 %v1271
  %v1403 = vunpack.c.l.b16 %v1272
  %v1404 = vunpack.c.l.b16 %v1273
  %v1405 = vunpack.c.l.b16 %v1274
  %v1406 = vunpack.c.l.b16 %v1275
  %v1407 = vunpack.c.l.b16 %v1276
  %v1408 = vunpack.c.l.b16 %v1277
  %v1409 = vunpack.c.l.b16 %v1278
  %v1410 = vunpack.c.l.b16 %v1279
  %v1411 = vunpack.c.l.b16 %v1280
  %v1412 = vunpack.c.l.b16 %v1281
  %v1413 = vunpack.c.l.b16 %v1282
  %v1414 = vunpack.c.l.b16 %v1283
  %v1415 = vunpack.c.l.b16 %v1284
  %v1416 = vunpack.c.l.b16 %v1285
  %v1417 = vunpack.c.l.b16 %v1286
  %v1418 = vunpack.c.l.b16 %v1287
  %v1419 = vunpack.c.l.b16 %v1288
  %v1420 = vunpack.c.l.b16 %v1289
  %v1421 = vunpack.c.l.b16 %v1290
  %v1422 = vunpack.c.l.b16 %v1291
  %v1423 = vunpack.c.l.b16 %v1292
  %v1424 = vunpack.c.l.b16 %v1293
  %v1425 = vunpack.c.l.b16 %v1294
  %v1426 = vunpack.c.l.b16 %v1295
  %v1427 = vunpack.c.l.b16 %v1296
  %v1428 = vunpack.c.l.b16 %v1297
  %v1429 = vunpack.c.l.b16 %v1298
  %v1430 = vunpack.c.l.b16 %v1299
  %v1431 = vunpack.c.l.b16 %v1300
  %v1432 = vunpack.c.l.b16 %v1301
  %v1433 = vunpack.c.l.b16 %v1302
  %v1434 = vunpack.c.l.b16 %v1303
  %v1435 = vunpack.c.l.b16 %v1304
  %v1436 = vunpack.c.l.b16 %v1305
  %v1437 = vunpack.c.l.b16 %v1306
  %v1438 = vunpack.c.l.b16 %v1307
  %v1439 = vunpack.c.l.b16 %v1308
  %v1440 = vunpack.c.l.b16 %v1309
  %v1441 = vunpack.c.l.b16 %v1310
  %v1442 = vunpack.c.l.b16 %v1311
  %v1443 = vunpack.c.l.b16 %v1312
  %v1444 = vunpack.c.l.b16 %v1313
  %v1445 = vpack.c.b16 %v1382, %v1381
  %v1446 = vpack.c.b16 %v1384, %v1383
  %v1447 = vpack.c.b16 %v1386, %v1385
  %v1448 = vpack.c.b16 %v1388, %v1387
  %v1449 = vpack.c.b16 %v1390, %v1389
  %v1450 = vpack.c.b16 %v1392, %v1391
  %v1451 = vpack.c.b16 %v1394, %v1393
  %v1452 = vpack.c.b16 %v1396, %v1395
  %v1453 = vpack.c.b16 %v1398, %v1397
  %v1454 = vpack.c.b16 %v1400, %v1399
  %v1455 = vpack.c.b16 %v1402, %v1401
  %v1456 = vpack.c.b16 %v1404, %v1403
  %v1457 = vpack.c.b16 %v1406, %v1405
  %v1458 = vpack.c.b16 %v1408, %v1407
  %v1459 = vpack.c.b16 %v1410, %v1409
  %v1460 = vpack.c.b16 %v1412, %v1411
  %v1461 = vpack.c.b16 %v1414, %v1413
  %v1462 = vpack.c.b16 %v1416, %v1415
  %v1463 = vpack.c.b16 %v1418, %v1417
  %v1464 = vpack.c.b16 %v1420, %v1419
  %v1465 = vpack.c.b16 %v1422, %v1421
  %v1466 = vpack.c.b16 %v1424, %v1423
  %v1467 = vpack.c.b16 %v1426, %v1425
  %v1468 = vpack.c.b16 %v1428, %v1427
  %v1469 = vpack.c.b16 %v1430, %v1429
  %v1470 = vpack.c.b16 %v1432, %v1431
  %v1471 = vpack.c.b16 %v1434, %v1433
  %v1472 = vpack.c.b16 %v1436, %v1435
  %v1473 = vpack.c.b16 %v1438, %v1437
  %v1474 = vpack.c.b16 %v1440, %v1439
  %v1475 = vpack.c.b16 %v1442, %v1441
  %v1476 = vpack.c.b16 %v1444, %v1443
  %v1479 = vunpack.c.l.b16 %v1315
  %v1480 = vunpack.c.l.b16 %v1316
  %v1481 = vpack.c.b16 %v1480, %v1479
  %v1484 = vsel %vm244, %v1445, 0
  %v1487 = vsel %vm244, %v1446, 0
  %v1490 = vsel %vm244, %v1447, 0
  %v1493 = vsel %vm244, %v1448, 0
  %v1496 = vsel %vm244, %v1449, 0
  %v1499 = vsel %vm244, %v1450, 0
  %v1502 = vsel %vm244, %v1451, 0
  %v1505 = vsel %vm244, %v1452, 0
  %v1508 = vsel %vm244, %v1453, 0
  %v1511 = vsel %vm244, %v1454, 0
  %v1514 = vsel %vm244, %v1455, 0
  %v1517 = vsel %vm244, %v1456, 0
  %v1520 = vsel %vm244, %v1457, 0
  %v1523 = vsel %vm244, %v1458, 0
  %v1526 = vsel %vm244, %v1459, 0
  %v1529 = vsel %vm244, %v1460, 0
  %v1532 = vsel %vm244, %v1461, 0
  %v1535 = vsel %vm244, %v1462, 0
  %v1538 = vsel %vm244, %v1463, 0
  %v1541 = vsel %vm244, %v1464, 0
  %v1544 = vsel %vm244, %v1465, 0
  %v1547 = vsel %vm244, %v1466, 0
  %v1550 = vsel %vm244, %v1467, 0
  %v1553 = vsel %vm244, %v1468, 0
  %v1556 = vsel %vm244, %v1469, 0
  %v1559 = vsel %vm244, %v1470, 0
  %v1562 = vsel %vm244, %v1471, 0
  %v1565 = vsel %vm244, %v1472, 0
  %v1568 = vsel %vm244, %v1473, 0
  %v1571 = vsel %vm244, %v1474, 0
  %v1574 = vsel %vm244, %v1475, 0
  %v1577 = vsel %vm244, %v1476, 0
  %1579 = vmatprep.subr.bf16.mxu0 0
  %1580 = vmatpush1.bf16.msra.mxu0 %v1481
  %1581 = vmatprep.subr.bf16.mxu0 0
  %1582 = vmatpush1.bf16.msra.mxu0 0
  %1583 = vmatprep.subr.bf16.mxu0 0
  %1584 = vmatpush1.bf16.msra.mxu0 0
  %1585 = vmatprep.subr.bf16.mxu0 0
  %1586 = vmatpush1.bf16.msra.mxu0 0
  %1587 = vmatprep.subr.bf16.mxu0 0
  %1588 = vmatpush1.bf16.msra.mxu0 0
  %1589 = vmatprep.subr.bf16.mxu0 0
  %1590 = vmatpush1.bf16.msra.mxu0 0
  %1591 = vmatprep.subr.bf16.mxu0 0
  %1592 = vmatpush1.bf16.msra.mxu0 0
  %1593 = vmatprep.subr.bf16.mxu0 0
  %1594 = vmatpush1.bf16.msra.mxu0 0
  %1595 = vmatprep.subr.bf16.mxu0 0
  %1596 = vmatpush1.bf16.msra.mxu0 0
  %1597 = vmatprep.subr.bf16.mxu0 0
  %1598 = vmatpush1.bf16.msra.mxu0 0
  %1599 = vmatprep.subr.bf16.mxu0 0
  %1600 = vmatpush1.bf16.msra.mxu0 0
  %1601 = vmatprep.subr.bf16.mxu0 0
  %1602 = vmatpush1.bf16.msra.mxu0 0
  %1603 = vmatprep.subr.bf16.mxu0 0
  %1604 = vmatpush1.bf16.msra.mxu0 0
  %1605 = vmatprep.subr.bf16.mxu0 0
  %1606 = vmatpush1.bf16.msra.mxu0 0
  %1607 = vmatprep.subr.bf16.mxu0 0
  %1608 = vmatpush1.bf16.msra.mxu0 0
  %1609 = vmatprep.subr.bf16.mxu0 0
  %1610 = vmatpush1.bf16.msra.mxu0 0
  %1611 = vmatprep.mubr.bf16.mxu0 0
  %1612 = vmatmul.mubr.bf16.gmra.mrb[0].mxu0 %v1484
  %v1613 = vpop.f32.mrb[0].mxu0
  %v1614 = vadd.f32 0.0, %v1613
  %v1615 = vpop.f32.mrb[0].mxu0
  %v1616 = vpop.f32.mrb[0].mxu0
  %v1617 = vadd.f32 0.0, %v1616
  %v1618 = vpop.f32.mrb[0].mxu0
  %1619 = vmatprep.mubr.bf16.mxu0 0
  %1620 = vmatmul.mubr.bf16.gmra.mrb[0].mxu0 %v1487
  %v1621 = vpop.f32.mrb[0].mxu0
  %v1622 = vadd.f32 0.0, %v1621
  %v1623 = vpop.f32.mrb[0].mxu0
  %v1624 = vpop.f32.mrb[0].mxu0
  %v1625 = vadd.f32 0.0, %v1624
  %v1626 = vpop.f32.mrb[0].mxu0
  %1627 = vmatprep.mubr.bf16.mxu0 0
  %1628 = vmatmul.mubr.bf16.gmra.mrb[0].mxu0 %v1490
  %v1629 = vpop.f32.mrb[0].mxu0
  %v1630 = vadd.f32 0.0, %v1629
  %v1631 = vpop.f32.mrb[0].mxu0
  %v1632 = vpop.f32.mrb[0].mxu0
  %v1633 = vadd.f32 0.0, %v1632
  %v1634 = vpop.f32.mrb[0].mxu0
  %1635 = vmatprep.mubr.bf16.mxu0 0
  %1636 = vmatmul.mubr.bf16.gmra.mrb[0].mxu0 %v1493
  %v1637 = vpop.f32.mrb[0].mxu0
  %v1638 = vadd.f32 0.0, %v1637
  %v1639 = vpop.f32.mrb[0].mxu0
  %v1640 = vpop.f32.mrb[0].mxu0
  %v1641 = vadd.f32 0.0, %v1640
  %v1642 = vpop.f32.mrb[0].mxu0
  %1643 = vmatprep.mubr.bf16.mxu0 0
  %1644 = vmatmul.mubr.bf16.gmra.mrb[0].mxu0 %v1496
  %v1645 = vpop.f32.mrb[0].mxu0
  %v1646 = vadd.f32 0.0, %v1645
  %v1647 = vpop.f32.mrb[0].mxu0
  %v1648 = vpop.f32.mrb[0].mxu0
  %v1649 = vadd.f32 0.0, %v1648
  %v1650 = vpop.f32.mrb[0].mxu0
  %1651 = vmatprep.mubr.bf16.mxu0 0
  %1652 = vmatmul.mubr.bf16.gmra.mrb[0].mxu0 %v1499
  %v1653 = vpop.f32.mrb[0].mxu0
  %v1654 = vadd.f32 0.0, %v1653
  %v1655 = vpop.f32.mrb[0].mxu0
  %v1656 = vpop.f32.mrb[0].mxu0
  %v1657 = vadd.f32 0.0, %v1656
  %v1658 = vpop.f32.mrb[0].mxu0
  %1659 = vmatprep.mubr.bf16.mxu0 0
  %1660 = vmatmul.mubr.bf16.gmra.mrb[0].mxu0 %v1502
  %v1661 = vpop.f32.mrb[0].mxu0
  %v1662 = vadd.f32 0.0, %v1661
  %v1663 = vpop.f32.mrb[0].mxu0
  %v1664 = vpop.f32.mrb[0].mxu0
  %v1665 = vadd.f32 0.0, %v1664
  %v1666 = vpop.f32.mrb[0].mxu0
  %1667 = vmatprep.mubr.bf16.mxu0 0
  %1668 = vmatmul.mubr.bf16.gmra.mrb[0].mxu0 %v1505
  %v1669 = vpop.f32.mrb[0].mxu0
  %v1670 = vadd.f32 0.0, %v1669
  %v1671 = vpop.f32.mrb[0].mxu0
  %v1672 = vpop.f32.mrb[0].mxu0
  %v1673 = vadd.f32 0.0, %v1672
  %v1674 = vpop.f32.mrb[0].mxu0
  %1675 = vmatprep.mubr.bf16.mxu0 0
  %1676 = vmatmul.mubr.bf16.gmra.mrb[0].mxu0 %v1508
  %v1677 = vpop.f32.mrb[0].mxu0
  %v1678 = vadd.f32 0.0, %v1677
  %v1679 = vpop.f32.mrb[0].mxu0
  %v1680 = vpop.f32.mrb[0].mxu0
  %v1681 = vadd.f32 0.0, %v1680
  %v1682 = vpop.f32.mrb[0].mxu0
  %1683 = vmatprep.mubr.bf16.mxu0 0
  %1684 = vmatmul.mubr.bf16.gmra.mrb[0].mxu0 %v1511
  %v1685 = vpop.f32.mrb[0].mxu0
  %v1686 = vadd.f32 0.0, %v1685
  %v1687 = vpop.f32.mrb[0].mxu0
  %v1688 = vpop.f32.mrb[0].mxu0
  %v1689 = vadd.f32 0.0, %v1688
  %v1690 = vpop.f32.mrb[0].mxu0
  %1691 = vmatprep.mubr.bf16.mxu0 0
  %1692 = vmatmul.mubr.bf16.gmra.mrb[0].mxu0 %v1514
  %v1693 = vpop.f32.mrb[0].mxu0
  %v1694 = vadd.f32 0.0, %v1693
  %v1695 = vpop.f32.mrb[0].mxu0
  %v1696 = vpop.f32.mrb[0].mxu0
  %v1697 = vadd.f32 0.0, %v1696
  %v1698 = vpop.f32.mrb[0].mxu0
  %1699 = vmatprep.mubr.bf16.mxu0 0
  %1700 = vmatmul.mubr.bf16.gmra.mrb[0].mxu0 %v1517
  %v1701 = vpop.f32.mrb[0].mxu0
  %v1702 = vadd.f32 0.0, %v1701
  %v1703 = vpop.f32.mrb[0].mxu0
  %v1704 = vpop.f32.mrb[0].mxu0
  %v1705 = vadd.f32 0.0, %v1704
  %v1706 = vpop.f32.mrb[0].mxu0
  %1707 = vmatprep.mubr.bf16.mxu0 0
  %1708 = vmatmul.mubr.bf16.gmra.mrb[0].mxu0 %v1520
  %v1709 = vpop.f32.mrb[0].mxu0
  %v1710 = vadd.f32 0.0, %v1709
  %v1711 = vpop.f32.mrb[0].mxu0
  %v1712 = vpop.f32.mrb[0].mxu0
  %v1713 = vadd.f32 0.0, %v1712
  %v1714 = vpop.f32.mrb[0].mxu0
  %1715 = vmatprep.mubr.bf16.mxu0 0
  %1716 = vmatmul.mubr.bf16.gmra.mrb[0].mxu0 %v1523
  %v1717 = vpop.f32.mrb[0].mxu0
  %v1718 = vadd.f32 0.0, %v1717
  %v1719 = vpop.f32.mrb[0].mxu0
  %v1720 = vpop.f32.mrb[0].mxu0
  %v1721 = vadd.f32 0.0, %v1720
  %v1722 = vpop.f32.mrb[0].mxu0
  %1723 = vmatprep.mubr.bf16.mxu0 0
  %1724 = vmatmul.mubr.bf16.gmra.mrb[0].mxu0 %v1526
  %v1725 = vpop.f32.mrb[0].mxu0
  %v1726 = vadd.f32 0.0, %v1725
  %v1727 = vpop.f32.mrb[0].mxu0
  %v1728 = vpop.f32.mrb[0].mxu0
  %v1729 = vadd.f32 0.0, %v1728
  %v1730 = vpop.f32.mrb[0].mxu0
  %1731 = vmatprep.mubr.bf16.mxu0 0
  %1732 = vmatmul.mubr.bf16.gmra.mrb[0].mxu0 %v1529
  %v1733 = vpop.f32.mrb[0].mxu0
  %v1734 = vadd.f32 0.0, %v1733
  %v1735 = vpop.f32.mrb[0].mxu0
  %v1736 = vpop.f32.mrb[0].mxu0
  %v1737 = vadd.f32 0.0, %v1736
  %v1738 = vpop.f32.mrb[0].mxu0
  %1739 = vmatprep.mubr.bf16.mxu0 0
  %1740 = vmatmul.mubr.bf16.gmra.mrb[0].mxu0 %v1532
  %v1741 = vpop.f32.mrb[0].mxu0
  %v1742 = vadd.f32 0.0, %v1741
  %v1743 = vpop.f32.mrb[0].mxu0
  %v1744 = vpop.f32.mrb[0].mxu0
  %v1745 = vadd.f32 0.0, %v1744
  %v1746 = vpop.f32.mrb[0].mxu0
  %1747 = vmatprep.mubr.bf16.mxu0 0
  %1748 = vmatmul.mubr.bf16.gmra.mrb[0].mxu0 %v1535
  %v1749 = vpop.f32.mrb[0].mxu0
  %v1750 = vadd.f32 0.0, %v1749
  %v1751 = vpop.f32.mrb[0].mxu0
  %v1752 = vpop.f32.mrb[0].mxu0
  %v1753 = vadd.f32 0.0, %v1752
  %v1754 = vpop.f32.mrb[0].mxu0
  %1755 = vmatprep.mubr.bf16.mxu0 0
  %1756 = vmatmul.mubr.bf16.gmra.mrb[0].mxu0 %v1538
  %v1757 = vpop.f32.mrb[0].mxu0
  %v1758 = vadd.f32 0.0, %v1757
  %v1759 = vpop.f32.mrb[0].mxu0
  %v1760 = vpop.f32.mrb[0].mxu0
  %v1761 = vadd.f32 0.0, %v1760
  %v1762 = vpop.f32.mrb[0].mxu0
  %1763 = vmatprep.mubr.bf16.mxu0 0
  %1764 = vmatmul.mubr.bf16.gmra.mrb[0].mxu0 %v1541
  %v1765 = vpop.f32.mrb[0].mxu0
  %v1766 = vadd.f32 0.0, %v1765
  %v1767 = vpop.f32.mrb[0].mxu0
  %v1768 = vpop.f32.mrb[0].mxu0
  %v1769 = vadd.f32 0.0, %v1768
  %v1770 = vpop.f32.mrb[0].mxu0
  %1771 = vmatprep.mubr.bf16.mxu0 0
  %1772 = vmatmul.mubr.bf16.gmra.mrb[0].mxu0 %v1544
  %v1773 = vpop.f32.mrb[0].mxu0
  %v1774 = vadd.f32 0.0, %v1773
  %v1775 = vpop.f32.mrb[0].mxu0
  %v1776 = vpop.f32.mrb[0].mxu0
  %v1777 = vadd.f32 0.0, %v1776
  %v1778 = vpop.f32.mrb[0].mxu0
  %1779 = vmatprep.mubr.bf16.mxu0 0
  %1780 = vmatmul.mubr.bf16.gmra.mrb[0].mxu0 %v1547
  %v1781 = vpop.f32.mrb[0].mxu0
  %v1782 = vadd.f32 0.0, %v1781
  %v1783 = vpop.f32.mrb[0].mxu0
  %v1784 = vpop.f32.mrb[0].mxu0
  %v1785 = vadd.f32 0.0, %v1784
  %v1786 = vpop.f32.mrb[0].mxu0
  %1787 = vmatprep.mubr.bf16.mxu0 0
  %1788 = vmatmul.mubr.bf16.gmra.mrb[0].mxu0 %v1550
  %v1789 = vpop.f32.mrb[0].mxu0
  %v1790 = vadd.f32 0.0, %v1789
  %v1791 = vpop.f32.mrb[0].mxu0
  %v1792 = vpop.f32.mrb[0].mxu0
  %v1793 = vadd.f32 0.0, %v1792
  %v1794 = vpop.f32.mrb[0].mxu0
  %1795 = vmatprep.mubr.bf16.mxu0 0
  %1796 = vmatmul.mubr.bf16.gmra.mrb[0].mxu0 %v1553
  %v1797 = vpop.f32.mrb[0].mxu0
  %v1798 = vadd.f32 0.0, %v1797
  %v1799 = vpop.f32.mrb[0].mxu0
  %v1800 = vpop.f32.mrb[0].mxu0
  %v1801 = vadd.f32 0.0, %v1800
  %v1802 = vpop.f32.mrb[0].mxu0
  %1803 = vmatprep.mubr.bf16.mxu0 0
  %1804 = vmatmul.mubr.bf16.gmra.mrb[0].mxu0 %v1556
  %v1805 = vpop.f32.mrb[0].mxu0
  %v1806 = vadd.f32 0.0, %v1805
  %v1807 = vpop.f32.mrb[0].mxu0
  %v1808 = vpop.f32.mrb[0].mxu0
  %v1809 = vadd.f32 0.0, %v1808
  %v1810 = vpop.f32.mrb[0].mxu0
  %1811 = vmatprep.mubr.bf16.mxu0 0
  %1812 = vmatmul.mubr.bf16.gmra.mrb[0].mxu0 %v1559
  %v1813 = vpop.f32.mrb[0].mxu0
  %v1814 = vadd.f32 0.0, %v1813
  %v1815 = vpop.f32.mrb[0].mxu0
  %v1816 = vpop.f32.mrb[0].mxu0
  %v1817 = vadd.f32 0.0, %v1816
  %v1818 = vpop.f32.mrb[0].mxu0
  %1819 = vmatprep.mubr.bf16.mxu0 0
  %1820 = vmatmul.mubr.bf16.gmra.mrb[0].mxu0 %v1562
  %v1821 = vpop.f32.mrb[0].mxu0
  %v1822 = vadd.f32 0.0, %v1821
  %v1823 = vpop.f32.mrb[0].mxu0
  %v1824 = vpop.f32.mrb[0].mxu0
  %v1825 = vadd.f32 0.0, %v1824
  %v1826 = vpop.f32.mrb[0].mxu0
  %1827 = vmatprep.mubr.bf16.mxu0 0
  %1828 = vmatmul.mubr.bf16.gmra.mrb[0].mxu0 %v1565
  %v1829 = vpop.f32.mrb[0].mxu0
  %v1830 = vadd.f32 0.0, %v1829
  %v1831 = vpop.f32.mrb[0].mxu0
  %v1832 = vpop.f32.mrb[0].mxu0
  %v1833 = vadd.f32 0.0, %v1832
  %v1834 = vpop.f32.mrb[0].mxu0
  %1835 = vmatprep.mubr.bf16.mxu0 0
  %1836 = vmatmul.mubr.bf16.gmra.mrb[0].mxu0 %v1568
  %v1837 = vpop.f32.mrb[0].mxu0
  %v1838 = vadd.f32 0.0, %v1837
  %v1839 = vpop.f32.mrb[0].mxu0
  %v1840 = vpop.f32.mrb[0].mxu0
  %v1841 = vadd.f32 0.0, %v1840
  %v1842 = vpop.f32.mrb[0].mxu0
  %1843 = vmatprep.mubr.bf16.mxu0 0
  %1844 = vmatmul.mubr.bf16.gmra.mrb[0].mxu0 %v1571
  %v1845 = vpop.f32.mrb[0].mxu0
  %v1846 = vadd.f32 0.0, %v1845
  %v1847 = vpop.f32.mrb[0].mxu0
  %v1848 = vpop.f32.mrb[0].mxu0
  %v1849 = vadd.f32 0.0, %v1848
  %v1850 = vpop.f32.mrb[0].mxu0
  %1851 = vmatprep.mubr.bf16.mxu0 0
  %1852 = vmatmul.mubr.bf16.gmra.mrb[0].mxu0 %v1574
  %v1853 = vpop.f32.mrb[0].mxu0
  %v1854 = vadd.f32 0.0, %v1853
  %v1855 = vpop.f32.mrb[0].mxu0
  %v1856 = vpop.f32.mrb[0].mxu0
  %v1857 = vadd.f32 0.0, %v1856
  %v1858 = vpop.f32.mrb[0].mxu0
  %1859 = vmatprep.mubr.bf16.mxu0 0
  %1860 = vmatmul.mubr.bf16.gmra.mrb[0].mxu0 %v1577
  %v1861 = vpop.f32.mrb[0].mxu0
  %v1862 = vadd.f32 0.0, %v1861
  %v1863 = vpop.f32.mrb[0].mxu0
  %v1864 = vpop.f32.mrb[0].mxu0
  %v1865 = vadd.f32 0.0, %v1864
  %v1866 = vpop.f32.mrb[0].mxu0
  %1867 = vdwg.mxu0
  %s1868 = scalar_lea.vmem %s0, 768
  %v1869 = vld [vmem:[%s1868] sm:$0xf]
  %v1870 = vld [vmem:[%s1868 + $0x4] sm:$0xf]
  %v1871 = vld [vmem:[%s1868 + $0x8] sm:$0xf]
  %v1872 = vld [vmem:[%s1868 + $0xc] sm:$0xf]
  %v1873 = vld [vmem:[%s1868 + $0x10] sm:$0xf]
  %v1874 = vld [vmem:[%s1868 + $0x14] sm:$0xf]
  %v1875 = vld [vmem:[%s1868 + $0x18] sm:$0xf]
  %v1876 = vld [vmem:[%s1868 + $0x1c] sm:$0xf]
  %v1877 = vld [vmem:[%s1868 + $0x20] sm:$0xf]
  %v1878 = vld [vmem:[%s1868 + $0x24] sm:$0xf]
  %v1879 = vld [vmem:[%s1868 + $0x28] sm:$0xf]
  %v1880 = vld [vmem:[%s1868 + $0x2c] sm:$0xf]
  %v1881 = vld [vmem:[%s1868 + $0x30] sm:$0xf]
  %v1882 = vld [vmem:[%s1868 + $0x34] sm:$0xf]
  %v1883 = vld [vmem:[%s1868 + $0x38] sm:$0xf]
  %v1884 = vld [vmem:[%s1868 + $0x3c] sm:$0xf]
  %v1885 = vld [vmem:[%s1868 + $0x40] sm:$0xf]
  %v1886 = vld [vmem:[%s1868 + $0x44] sm:$0xf]
  %v1887 = vld [vmem:[%s1868 + $0x48] sm:$0xf]
  %v1888 = vld [vmem:[%s1868 + $0x4c] sm:$0xf]
  %v1889 = vld [vmem:[%s1868 + $0x50] sm:$0xf]
  %v1890 = vld [vmem:[%s1868 + $0x54] sm:$0xf]
  %v1891 = vld [vmem:[%s1868 + $0x58] sm:$0xf]
  %v1892 = vld [vmem:[%s1868 + $0x5c] sm:$0xf]
  %v1893 = vld [vmem:[%s1868 + $0x60] sm:$0xf]
  %v1894 = vld [vmem:[%s1868 + $0x64] sm:$0xf]
  %v1895 = vld [vmem:[%s1868 + $0x68] sm:$0xf]
  %v1896 = vld [vmem:[%s1868 + $0x6c] sm:$0xf]
  %v1897 = vld [vmem:[%s1868 + $0x70] sm:$0xf]
  %v1898 = vld [vmem:[%s1868 + $0x74] sm:$0xf]
  %v1899 = vld [vmem:[%s1868 + $0x78] sm:$0xf]
  %v1900 = vld [vmem:[%s1868 + $0x7c] sm:$0xf]
  %v1901 = vld [vmem:[%s1868 + $0x80] sm:$0xf]
  %v1902 = vld [vmem:[%s1868 + $0x84] sm:$0xf]
  %v1903 = vld [vmem:[%s1868 + $0x88] sm:$0xf]
  %v1904 = vld [vmem:[%s1868 + $0x8c] sm:$0xf]
  %v1905 = vld [vmem:[%s1868 + $0x90] sm:$0xf]
  %v1906 = vld [vmem:[%s1868 + $0x94] sm:$0xf]
  %v1907 = vld [vmem:[%s1868 + $0x98] sm:$0xf]
  %v1908 = vld [vmem:[%s1868 + $0x9c] sm:$0xf]
  %v1909 = vld [vmem:[%s1868 + $0xa0] sm:$0xf]
  %v1910 = vld [vmem:[%s1868 + $0xa4] sm:$0xf]
  %v1911 = vld [vmem:[%s1868 + $0xa8] sm:$0xf]
  %v1912 = vld [vmem:[%s1868 + $0xac] sm:$0xf]
  %v1913 = vld [vmem:[%s1868 + $0xb0] sm:$0xf]
  %v1914 = vld [vmem:[%s1868 + $0xb4] sm:$0xf]
  %v1915 = vld [vmem:[%s1868 + $0xb8] sm:$0xf]
  %v1916 = vld [vmem:[%s1868 + $0xbc] sm:$0xf]
  %v1917 = vld [vmem:[%s1868 + $0xc0] sm:$0xf]
  %v1918 = vld [vmem:[%s1868 + $0xc4] sm:$0xf]
  %v1919 = vld [vmem:[%s1868 + $0xc8] sm:$0xf]
  %v1920 = vld [vmem:[%s1868 + $0xcc] sm:$0xf]
  %v1921 = vld [vmem:[%s1868 + $0xd0] sm:$0xf]
  %v1922 = vld [vmem:[%s1868 + $0xd4] sm:$0xf]
  %v1923 = vld [vmem:[%s1868 + $0xd8] sm:$0xf]
  %v1924 = vld [vmem:[%s1868 + $0xdc] sm:$0xf]
  %v1925 = vld [vmem:[%s1868 + $0xe0] sm:$0xf]
  %v1926 = vld [vmem:[%s1868 + $0xe4] sm:$0xf]
  %v1927 = vld [vmem:[%s1868 + $0xe8] sm:$0xf]
  %v1928 = vld [vmem:[%s1868 + $0xec] sm:$0xf]
  %v1929 = vld [vmem:[%s1868 + $0xf0] sm:$0xf]
  %v1930 = vld [vmem:[%s1868 + $0xf4] sm:$0xf]
  %v1931 = vld [vmem:[%s1868 + $0xf8] sm:$0xf]
  %v1932 = vld [vmem:[%s1868 + $0xfc] sm:$0xf]
  %s1933 = scalar_lea.vmem %s1, 24
  %v1934 = vld [vmem:[%s1933] sm:$0xf]
  %v1935 = vld [vmem:[%s1933 + $0x4] sm:$0xf]
  %v2000 = vunpack.c.l.b16 %v1869
  %v2001 = vunpack.c.l.b16 %v1870
  %v2002 = vunpack.c.l.b16 %v1871
  %v2003 = vunpack.c.l.b16 %v1872
  %v2004 = vunpack.c.l.b16 %v1873
  %v2005 = vunpack.c.l.b16 %v1874
  %v2006 = vunpack.c.l.b16 %v1875
  %v2007 = vunpack.c.l.b16 %v1876
  %v2008 = vunpack.c.l.b16 %v1877
  %v2009 = vunpack.c.l.b16 %v1878
  %v2010 = vunpack.c.l.b16 %v1879
  %v2011 = vunpack.c.l.b16 %v1880
  %v2012 = vunpack.c.l.b16 %v1881
  %v2013 = vunpack.c.l.b16 %v1882
  %v2014 = vunpack.c.l.b16 %v1883
  %v2015 = vunpack.c.l.b16 %v1884
  %v2016 = vunpack.c.l.b16 %v1885
  %v2017 = vunpack.c.l.b16 %v1886
  %v2018 = vunpack.c.l.b16 %v1887
  %v2019 = vunpack.c.l.b16 %v1888
  %v2020 = vunpack.c.l.b16 %v1889
  %v2021 = vunpack.c.l.b16 %v1890
  %v2022 = vunpack.c.l.b16 %v1891
  %v2023 = vunpack.c.l.b16 %v1892
  %v2024 = vunpack.c.l.b16 %v1893
  %v2025 = vunpack.c.l.b16 %v1894
  %v2026 = vunpack.c.l.b16 %v1895
  %v2027 = vunpack.c.l.b16 %v1896
  %v2028 = vunpack.c.l.b16 %v1897
  %v2029 = vunpack.c.l.b16 %v1898
  %v2030 = vunpack.c.l.b16 %v1899
  %v2031 = vunpack.c.l.b16 %v1900
  %v2032 = vunpack.c.l.b16 %v1901
  %v2033 = vunpack.c.l.b16 %v1902
  %v2034 = vunpack.c.l.b16 %v1903
  %v2035 = vunpack.c.l.b16 %v1904
  %v2036 = vunpack.c.l.b16 %v1905
  %v2037 = vunpack.c.l.b16 %v1906
  %v2038 = vunpack.c.l.b16 %v1907
  %v2039 = vunpack.c.l.b16 %v1908
  %v2040 = vunpack.c.l.b16 %v1909
  %v2041 = vunpack.c.l.b16 %v1910
  %v2042 = vunpack.c.l.b16 %v1911
  %v2043 = vunpack.c.l.b16 %v1912
  %v2044 = vunpack.c.l.b16 %v1913
  %v2045 = vunpack.c.l.b16 %v1914
  %v2046 = vunpack.c.l.b16 %v1915
  %v2047 = vunpack.c.l.b16 %v1916
  %v2048 = vunpack.c.l.b16 %v1917
  %v2049 = vunpack.c.l.b16 %v1918
  %v2050 = vunpack.c.l.b16 %v1919
  %v2051 = vunpack.c.l.b16 %v1920
  %v2052 = vunpack.c.l.b16 %v1921
  %v2053 = vunpack.c.l.b16 %v1922
  %v2054 = vunpack.c.l.b16 %v1923
  %v2055 = vunpack.c.l.b16 %v1924
  %v2056 = vunpack.c.l.b16 %v1925
  %v2057 = vunpack.c.l.b16 %v1926
  %v2058 = vunpack.c.l.b16 %v1927
  %v2059 = vunpack.c.l.b16 %v1928
  %v2060 = vunpack.c.l.b16 %v1929
  %v2061 = vunpack.c.l.b16 %v1930
  %v2062 = vunpack.c.l.b16 %v1931
  %v2063 = vunpack.c.l.b16 %v1932
  %v2064 = vpack.c.b16 %v2001, %v2000
  %v2065 = vpack.c.b16 %v2003, %v2002
  %v2066 = vpack.c.b16 %v2005, %v2004
  %v2067 = vpack.c.b16 %v2007, %v2006
  %v2068 = vpack.c.b16 %v2009, %v2008
  %v2069 = vpack.c.b16 %v2011, %v2010
  %v2070 = vpack.c.b16 %v2013, %v2012
  %v2071 = vpack.c.b16 %v2015, %v2014
  %v2072 = vpack.c.b16 %v2017, %v2016
  %v2073 = vpack.c.b16 %v2019, %v2018
  %v2074 = vpack.c.b16 %v2021, %v2020
  %v2075 = vpack.c.b16 %v2023, %v2022
  %v2076 = vpack.c.b16 %v2025, %v2024
  %v2077 = vpack.c.b16 %v2027, %v2026
  %v2078 = vpack.c.b16 %v2029, %v2028
  %v2079 = vpack.c.b16 %v2031, %v2030
  %v2080 = vpack.c.b16 %v2033, %v2032
  %v2081 = vpack.c.b16 %v2035, %v2034
  %v2082 = vpack.c.b16 %v2037, %v2036
  %v2083 = vpack.c.b16 %v2039, %v2038
  %v2084 = vpack.c.b16 %v2041, %v2040
  %v2085 = vpack.c.b16 %v2043, %v2042
  %v2086 = vpack.c.b16 %v2045, %v2044
  %v2087 = vpack.c.b16 %v2047, %v2046
  %v2088 = vpack.c.b16 %v2049, %v2048
  %v2089 = vpack.c.b16 %v2051, %v2050
  %v2090 = vpack.c.b16 %v2053, %v2052
  %v2091 = vpack.c.b16 %v2055, %v2054
  %v2092 = vpack.c.b16 %v2057, %v2056
  %v2093 = vpack.c.b16 %v2059, %v2058
  %v2094 = vpack.c.b16 %v2061, %v2060
  %v2095 = vpack.c.b16 %v2063, %v2062
  %v2098 = vunpack.c.l.b16 %v1934
  %v2099 = vunpack.c.l.b16 %v1935
  %v2100 = vpack.c.b16 %v2099, %v2098
  %v2103 = vsel %vm244, %v2064, 0
  %v2106 = vsel %vm244, %v2065, 0
  %v2109 = vsel %vm244, %v2066, 0
  %v2112 = vsel %vm244, %v2067, 0
  %v2115 = vsel %vm244, %v2068, 0
  %v2118 = vsel %vm244, %v2069, 0
  %v2121 = vsel %vm244, %v2070, 0
  %v2124 = vsel %vm244, %v2071, 0
  %v2127 = vsel %vm244, %v2072, 0
  %v2130 = vsel %vm244, %v2073, 0
  %v2133 = vsel %vm244, %v2074, 0
  %v2136 = vsel %vm244, %v2075, 0
  %v2139 = vsel %vm244, %v2076, 0
  %v2142 = vsel %vm244, %v2077, 0
  %v2145 = vsel %vm244, %v2078, 0
  %v2148 = vsel %vm244, %v2079, 0
  %v2151 = vsel %vm244, %v2080, 0
  %v2154 = vsel %vm244, %v2081, 0
  %v2157 = vsel %vm244, %v2082, 0
  %v2160 = vsel %vm244, %v2083, 0
  %v2163 = vsel %vm244, %v2084, 0
  %v2166 = vsel %vm244, %v2085, 0
  %v2169 = vsel %vm244, %v2086, 0
  %v2172 = vsel %vm244, %v2087, 0
  %v2175 = vsel %vm244, %v2088, 0
  %v2178 = vsel %vm244, %v2089, 0
  %v2181 = vsel %vm244, %v2090, 0
  %v2184 = vsel %vm244, %v2091, 0
  %v2187 = vsel %vm244, %v2092, 0
  %v2190 = vsel %vm244, %v2093, 0
  %v2193 = vsel %vm244, %v2094, 0
  %v2196 = vsel %vm244, %v2095, 0
  %2198 = vmatprep.subr.bf16.mxu0 0
  %2199 = vmatpush1.bf16.msra.mxu0 %v2100
  %2200 = vmatprep.subr.bf16.mxu0 0
  %2201 = vmatpush1.bf16.msra.mxu0 0
  %2202 = vmatprep.subr.bf16.mxu0 0
  %2203 = vmatpush1.bf16.msra.mxu0 0
  %2204 = vmatprep.subr.bf16.mxu0 0
  %2205 = vmatpush1.bf16.msra.mxu0 0
  %2206 = vmatprep.subr.bf16.mxu0 0
  %2207 = vmatpush1.bf16.msra.mxu0 0
  %2208 = vmatprep.subr.bf16.mxu0 0
  %2209 = vmatpush1.bf16.msra.mxu0 0
  %2210 = vmatprep.subr.bf16.mxu0 0
  %2211 = vmatpush1.bf16.msra.mxu0 0
  %2212 = vmatprep.subr.bf16.mxu0 0
  %2213 = vmatpush1.bf16.msra.mxu0 0
  %2214 = vmatprep.subr.bf16.mxu0 0
  %2215 = vmatpush1.bf16.msra.mxu0 0
  %2216 = vmatprep.subr.bf16.mxu0 0
  %2217 = vmatpush1.bf16.msra.mxu0 0
  %2218 = vmatprep.subr.bf16.mxu0 0
  %2219 = vmatpush1.bf16.msra.mxu0 0
  %2220 = vmatprep.subr.bf16.mxu0 0
  %2221 = vmatpush1.bf16.msra.mxu0 0
  %2222 = vmatprep.subr.bf16.mxu0 0
  %2223 = vmatpush1.bf16.msra.mxu0 0
  %2224 = vmatprep.subr.bf16.mxu0 0
  %2225 = vmatpush1.bf16.msra.mxu0 0
  %2226 = vmatprep.subr.bf16.mxu0 0
  %2227 = vmatpush1.bf16.msra.mxu0 0
  %2228 = vmatprep.subr.bf16.mxu0 0
  %2229 = vmatpush1.bf16.msra.mxu0 0
  %2230 = vmatprep.mubr.bf16.mxu0 0
  %2231 = vmatmul.mubr.bf16.gmra.mrb[0].mxu0 %v2103
  %v2232 = vpop.f32.mrb[0].mxu0
  %v2233 = vadd.f32 0.0, %v2232
  %v2234 = vpop.f32.mrb[0].mxu0
  %v2235 = vpop.f32.mrb[0].mxu0
  %v2236 = vadd.f32 0.0, %v2235
  %v2237 = vpop.f32.mrb[0].mxu0
  %2238 = vmatprep.mubr.bf16.mxu0 0
  %2239 = vmatmul.mubr.bf16.gmra.mrb[0].mxu0 %v2106
  %v2240 = vpop.f32.mrb[0].mxu0
  %v2241 = vadd.f32 0.0, %v2240
  %v2242 = vpop.f32.mrb[0].mxu0
  %v2243 = vpop.f32.mrb[0].mxu0
  %v2244 = vadd.f32 0.0, %v2243
  %v2245 = vpop.f32.mrb[0].mxu0
  %2246 = vmatprep.mubr.bf16.mxu0 0
  %2247 = vmatmul.mubr.bf16.gmra.mrb[0].mxu0 %v2109
  %v2248 = vpop.f32.mrb[0].mxu0
  %v2249 = vadd.f32 0.0, %v2248
  %v2250 = vpop.f32.mrb[0].mxu0
  %v2251 = vpop.f32.mrb[0].mxu0
  %v2252 = vadd.f32 0.0, %v2251
  %v2253 = vpop.f32.mrb[0].mxu0
  %2254 = vmatprep.mubr.bf16.mxu0 0
  %2255 = vmatmul.mubr.bf16.gmra.mrb[0].mxu0 %v2112
  %v2256 = vpop.f32.mrb[0].mxu0
  %v2257 = vadd.f32 0.0, %v2256
  %v2258 = vpop.f32.mrb[0].mxu0
  %v2259 = vpop.f32.mrb[0].mxu0
  %v2260 = vadd.f32 0.0, %v2259
  %v2261 = vpop.f32.mrb[0].mxu0
  %2262 = vmatprep.mubr.bf16.mxu0 0
  %2263 = vmatmul.mubr.bf16.gmra.mrb[0].mxu0 %v2115
  %v2264 = vpop.f32.mrb[0].mxu0
  %v2265 = vadd.f32 0.0, %v2264
  %v2266 = vpop.f32.mrb[0].mxu0
  %v2267 = vpop.f32.mrb[0].mxu0
  %v2268 = vadd.f32 0.0, %v2267
  %v2269 = vpop.f32.mrb[0].mxu0
  %2270 = vmatprep.mubr.bf16.mxu0 0
  %2271 = vmatmul.mubr.bf16.gmra.mrb[0].mxu0 %v2118
  %v2272 = vpop.f32.mrb[0].mxu0
  %v2273 = vadd.f32 0.0, %v2272
  %v2274 = vpop.f32.mrb[0].mxu0
  %v2275 = vpop.f32.mrb[0].mxu0
  %v2276 = vadd.f32 0.0, %v2275
  %v2277 = vpop.f32.mrb[0].mxu0
  %2278 = vmatprep.mubr.bf16.mxu0 0
  %2279 = vmatmul.mubr.bf16.gmra.mrb[0].mxu0 %v2121
  %v2280 = vpop.f32.mrb[0].mxu0
  %v2281 = vadd.f32 0.0, %v2280
  %v2282 = vpop.f32.mrb[0].mxu0
  %v2283 = vpop.f32.mrb[0].mxu0
  %v2284 = vadd.f32 0.0, %v2283
  %v2285 = vpop.f32.mrb[0].mxu0
  %2286 = vmatprep.mubr.bf16.mxu0 0
  %2287 = vmatmul.mubr.bf16.gmra.mrb[0].mxu0 %v2124
  %v2288 = vpop.f32.mrb[0].mxu0
  %v2289 = vadd.f32 0.0, %v2288
  %v2290 = vpop.f32.mrb[0].mxu0
  %v2291 = vpop.f32.mrb[0].mxu0
  %v2292 = vadd.f32 0.0, %v2291
  %v2293 = vpop.f32.mrb[0].mxu0
  %2294 = vmatprep.mubr.bf16.mxu0 0
  %2295 = vmatmul.mubr.bf16.gmra.mrb[0].mxu0 %v2127
  %v2296 = vpop.f32.mrb[0].mxu0
  %v2297 = vadd.f32 0.0, %v2296
  %v2298 = vpop.f32.mrb[0].mxu0
  %v2299 = vpop.f32.mrb[0].mxu0
  %v2300 = vadd.f32 0.0, %v2299
  %v2301 = vpop.f32.mrb[0].mxu0
  %2302 = vmatprep.mubr.bf16.mxu0 0
  %2303 = vmatmul.mubr.bf16.gmra.mrb[0].mxu0 %v2130
  %v2304 = vpop.f32.mrb[0].mxu0
  %v2305 = vadd.f32 0.0, %v2304
  %v2306 = vpop.f32.mrb[0].mxu0
  %v2307 = vpop.f32.mrb[0].mxu0
  %v2308 = vadd.f32 0.0, %v2307
  %v2309 = vpop.f32.mrb[0].mxu0
  %2310 = vmatprep.mubr.bf16.mxu0 0
  %2311 = vmatmul.mubr.bf16.gmra.mrb[0].mxu0 %v2133
  %v2312 = vpop.f32.mrb[0].mxu0
  %v2313 = vadd.f32 0.0, %v2312
  %v2314 = vpop.f32.mrb[0].mxu0
  %v2315 = vpop.f32.mrb[0].mxu0
  %v2316 = vadd.f32 0.0, %v2315
  %v2317 = vpop.f32.mrb[0].mxu0
  %2318 = vmatprep.mubr.bf16.mxu0 0
  %2319 = vmatmul.mubr.bf16.gmra.mrb[0].mxu0 %v2136
  %v2320 = vpop.f32.mrb[0].mxu0
  %v2321 = vadd.f32 0.0, %v2320
  %v2322 = vpop.f32.mrb[0].mxu0
  %v2323 = vpop.f32.mrb[0].mxu0
  %v2324 = vadd.f32 0.0, %v2323
  %v2325 = vpop.f32.mrb[0].mxu0
  %2326 = vmatprep.mubr.bf16.mxu0 0
  %2327 = vmatmul.mubr.bf16.gmra.mrb[0].mxu0 %v2139
  %v2328 = vpop.f32.mrb[0].mxu0
  %v2329 = vadd.f32 0.0, %v2328
  %v2330 = vpop.f32.mrb[0].mxu0
  %v2331 = vpop.f32.mrb[0].mxu0
  %v2332 = vadd.f32 0.0, %v2331
  %v2333 = vpop.f32.mrb[0].mxu0
  %2334 = vmatprep.mubr.bf16.mxu0 0
  %2335 = vmatmul.mubr.bf16.gmra.mrb[0].mxu0 %v2142
  %v2336 = vpop.f32.mrb[0].mxu0
  %v2337 = vadd.f32 0.0, %v2336
  %v2338 = vpop.f32.mrb[0].mxu0
  %v2339 = vpop.f32.mrb[0].mxu0
  %v2340 = vadd.f32 0.0, %v2339
  %v2341 = vpop.f32.mrb[0].mxu0
  %2342 = vmatprep.mubr.bf16.mxu0 0
  %2343 = vmatmul.mubr.bf16.gmra.mrb[0].mxu0 %v2145
  %v2344 = vpop.f32.mrb[0].mxu0
  %v2345 = vadd.f32 0.0, %v2344
  %v2346 = vpop.f32.mrb[0].mxu0
  %v2347 = vpop.f32.mrb[0].mxu0
  %v2348 = vadd.f32 0.0, %v2347
  %v2349 = vpop.f32.mrb[0].mxu0
  %2350 = vmatprep.mubr.bf16.mxu0 0
  %2351 = vmatmul.mubr.bf16.gmra.mrb[0].mxu0 %v2148
  %v2352 = vpop.f32.mrb[0].mxu0
  %v2353 = vadd.f32 0.0, %v2352
  %v2354 = vpop.f32.mrb[0].mxu0
  %v2355 = vpop.f32.mrb[0].mxu0
  %v2356 = vadd.f32 0.0, %v2355
  %v2357 = vpop.f32.mrb[0].mxu0
  %2358 = vmatprep.mubr.bf16.mxu0 0
  %2359 = vmatmul.mubr.bf16.gmra.mrb[0].mxu0 %v2151
  %v2360 = vpop.f32.mrb[0].mxu0
  %v2361 = vadd.f32 0.0, %v2360
  %v2362 = vpop.f32.mrb[0].mxu0
  %v2363 = vpop.f32.mrb[0].mxu0
  %v2364 = vadd.f32 0.0, %v2363
  %v2365 = vpop.f32.mrb[0].mxu0
  %2366 = vmatprep.mubr.bf16.mxu0 0
  %2367 = vmatmul.mubr.bf16.gmra.mrb[0].mxu0 %v2154
  %v2368 = vpop.f32.mrb[0].mxu0
  %v2369 = vadd.f32 0.0, %v2368
  %v2370 = vpop.f32.mrb[0].mxu0
  %v2371 = vpop.f32.mrb[0].mxu0
  %v2372 = vadd.f32 0.0, %v2371
  %v2373 = vpop.f32.mrb[0].mxu0
  %2374 = vmatprep.mubr.bf16.mxu0 0
  %2375 = vmatmul.mubr.bf16.gmra.mrb[0].mxu0 %v2157
  %v2376 = vpop.f32.mrb[0].mxu0
  %v2377 = vadd.f32 0.0, %v2376
  %v2378 = vpop.f32.mrb[0].mxu0
  %v2379 = vpop.f32.mrb[0].mxu0
  %v2380 = vadd.f32 0.0, %v2379
  %v2381 = vpop.f32.mrb[0].mxu0
  %2382 = vmatprep.mubr.bf16.mxu0 0
  %2383 = vmatmul.mubr.bf16.gmra.mrb[0].mxu0 %v2160
  %v2384 = vpop.f32.mrb[0].mxu0
  %v2385 = vadd.f32 0.0, %v2384
  %v2386 = vpop.f32.mrb[0].mxu0
  %v2387 = vpop.f32.mrb[0].mxu0
  %v2388 = vadd.f32 0.0, %v2387
  %v2389 = vpop.f32.mrb[0].mxu0
  %2390 = vmatprep.mubr.bf16.mxu0 0
  %2391 = vmatmul.mubr.bf16.gmra.mrb[0].mxu0 %v2163
  %v2392 = vpop.f32.mrb[0].mxu0
  %v2393 = vadd.f32 0.0, %v2392
  %v2394 = vpop.f32.mrb[0].mxu0
  %v2395 = vpop.f32.mrb[0].mxu0
  %v2396 = vadd.f32 0.0, %v2395
  %v2397 = vpop.f32.mrb[0].mxu0
  %2398 = vmatprep.mubr.bf16.mxu0 0
  %2399 = vmatmul.mubr.bf16.gmra.mrb[0].mxu0 %v2166
  %v2400 = vpop.f32.mrb[0].mxu0
  %v2401 = vadd.f32 0.0, %v2400
  %v2402 = vpop.f32.mrb[0].mxu0
  %v2403 = vpop.f32.mrb[0].mxu0
  %v2404 = vadd.f32 0.0, %v2403
  %v2405 = vpop.f32.mrb[0].mxu0
  %2406 = vmatprep.mubr.bf16.mxu0 0
  %2407 = vmatmul.mubr.bf16.gmra.mrb[0].mxu0 %v2169
  %v2408 = vpop.f32.mrb[0].mxu0
  %v2409 = vadd.f32 0.0, %v2408
  %v2410 = vpop.f32.mrb[0].mxu0
  %v2411 = vpop.f32.mrb[0].mxu0
  %v2412 = vadd.f32 0.0, %v2411
  %v2413 = vpop.f32.mrb[0].mxu0
  %2414 = vmatprep.mubr.bf16.mxu0 0
  %2415 = vmatmul.mubr.bf16.gmra.mrb[0].mxu0 %v2172
  %v2416 = vpop.f32.mrb[0].mxu0
  %v2417 = vadd.f32 0.0, %v2416
  %v2418 = vpop.f32.mrb[0].mxu0
  %v2419 = vpop.f32.mrb[0].mxu0
  %v2420 = vadd.f32 0.0, %v2419
  %v2421 = vpop.f32.mrb[0].mxu0
  %2422 = vmatprep.mubr.bf16.mxu0 0
  %2423 = vmatmul.mubr.bf16.gmra.mrb[0].mxu0 %v2175
  %v2424 = vpop.f32.mrb[0].mxu0
  %v2425 = vadd.f32 0.0, %v2424
  %v2426 = vpop.f32.mrb[0].mxu0
  %v2427 = vpop.f32.mrb[0].mxu0
  %v2428 = vadd.f32 0.0, %v2427
  %v2429 = vpop.f32.mrb[0].mxu0
  %2430 = vmatprep.mubr.bf16.mxu0 0
  %2431 = vmatmul.mubr.bf16.gmra.mrb[0].mxu0 %v2178
  %v2432 = vpop.f32.mrb[0].mxu0
  %v2433 = vadd.f32 0.0, %v2432
  %v2434 = vpop.f32.mrb[0].mxu0
  %v2435 = vpop.f32.mrb[0].mxu0
  %v2436 = vadd.f32 0.0, %v2435
  %v2437 = vpop.f32.mrb[0].mxu0
  %2438 = vmatprep.mubr.bf16.mxu0 0
  %2439 = vmatmul.mubr.bf16.gmra.mrb[0].mxu0 %v2181
  %v2440 = vpop.f32.mrb[0].mxu0
  %v2441 = vadd.f32 0.0, %v2440
  %v2442 = vpop.f32.mrb[0].mxu0
  %v2443 = vpop.f32.mrb[0].mxu0
  %v2444 = vadd.f32 0.0, %v2443
  %v2445 = vpop.f32.mrb[0].mxu0
  %2446 = vmatprep.mubr.bf16.mxu0 0
  %2447 = vmatmul.mubr.bf16.gmra.mrb[0].mxu0 %v2184
  %v2448 = vpop.f32.mrb[0].mxu0
  %v2449 = vadd.f32 0.0, %v2448
  %v2450 = vpop.f32.mrb[0].mxu0
  %v2451 = vpop.f32.mrb[0].mxu0
  %v2452 = vadd.f32 0.0, %v2451
  %v2453 = vpop.f32.mrb[0].mxu0
  %2454 = vmatprep.mubr.bf16.mxu0 0
  %2455 = vmatmul.mubr.bf16.gmra.mrb[0].mxu0 %v2187
  %v2456 = vpop.f32.mrb[0].mxu0
  %v2457 = vadd.f32 0.0, %v2456
  %v2458 = vpop.f32.mrb[0].mxu0
  %v2459 = vpop.f32.mrb[0].mxu0
  %v2460 = vadd.f32 0.0, %v2459
  %v2461 = vpop.f32.mrb[0].mxu0
  %2462 = vmatprep.mubr.bf16.mxu0 0
  %2463 = vmatmul.mubr.bf16.gmra.mrb[0].mxu0 %v2190
  %v2464 = vpop.f32.mrb[0].mxu0
  %v2465 = vadd.f32 0.0, %v2464
  %v2466 = vpop.f32.mrb[0].mxu0
  %v2467 = vpop.f32.mrb[0].mxu0
  %v2468 = vadd.f32 0.0, %v2467
  %v2469 = vpop.f32.mrb[0].mxu0
  %2470 = vmatprep.mubr.bf16.mxu0 0
  %2471 = vmatmul.mubr.bf16.gmra.mrb[0].mxu0 %v2193
  %v2472 = vpop.f32.mrb[0].mxu0
  %v2473 = vadd.f32 0.0, %v2472
  %v2474 = vpop.f32.mrb[0].mxu0
  %v2475 = vpop.f32.mrb[0].mxu0
  %v2476 = vadd.f32 0.0, %v2475
  %v2477 = vpop.f32.mrb[0].mxu0
  %2478 = vmatprep.mubr.bf16.mxu0 0
  %2479 = vmatmul.mubr.bf16.gmra.mrb[0].mxu0 %v2196
  %v2480 = vpop.f32.mrb[0].mxu0
  %v2481 = vadd.f32 0.0, %v2480
  %v2482 = vpop.f32.mrb[0].mxu0
  %v2483 = vpop.f32.mrb[0].mxu0
  %v2484 = vadd.f32 0.0, %v2483
  %v2485 = vpop.f32.mrb[0].mxu0
  %2486 = vdwg.mxu0
  %v2487 = vtanh.pop %v376
  %v2488 = vtanh.pop %v379
  %v2489 = vtanh.pop %v384
  %v2490 = vtanh.pop %v387
  %v2491 = vtanh.pop %v392
  %v2492 = vtanh.pop %v395
  %v2493 = vtanh.pop %v400
  %v2494 = vtanh.pop %v403
  %v2495 = vtanh.pop %v408
  %v2496 = vtanh.pop %v411
  %v2497 = vtanh.pop %v416
  %v2498 = vtanh.pop %v419
  %v2499 = vtanh.pop %v424
  %v2500 = vtanh.pop %v427
  %v2501 = vtanh.pop %v432
  %v2502 = vtanh.pop %v435
  %v2503 = vtanh.pop %v440
  %v2504 = vtanh.pop %v443
  %v2505 = vtanh.pop %v448
  %v2506 = vtanh.pop %v451
  %v2507 = vtanh.pop %v456
  %v2508 = vtanh.pop %v459
  %v2509 = vtanh.pop %v464
  %v2510 = vtanh.pop %v467
  %v2511 = vtanh.pop %v472
  %v2512 = vtanh.pop %v475
  %v2513 = vtanh.pop %v480
  %v2514 = vtanh.pop %v483
  %v2515 = vtanh.pop %v488
  %v2516 = vtanh.pop %v491
  %v2517 = vtanh.pop %v496
  %v2518 = vtanh.pop %v499
  %v2519 = vtanh.pop %v504
  %v2520 = vtanh.pop %v507
  %v2521 = vtanh.pop %v512
  %v2522 = vtanh.pop %v515
  %v2523 = vtanh.pop %v520
  %v2524 = vtanh.pop %v523
  %v2525 = vtanh.pop %v528
  %v2526 = vtanh.pop %v531
  %v2527 = vtanh.pop %v536
  %v2528 = vtanh.pop %v539
  %v2529 = vtanh.pop %v544
  %v2530 = vtanh.pop %v547
  %v2531 = vtanh.pop %v552
  %v2532 = vtanh.pop %v555
  %v2533 = vtanh.pop %v560
  %v2534 = vtanh.pop %v563
  %v2535 = vtanh.pop %v568
  %v2536 = vtanh.pop %v571
  %v2537 = vtanh.pop %v576
  %v2538 = vtanh.pop %v579
  %v2539 = vtanh.pop %v584
  %v2540 = vtanh.pop %v587
  %v2541 = vtanh.pop %v592
  %v2542 = vtanh.pop %v595
  %v2543 = vtanh.pop %v600
  %v2544 = vtanh.pop %v603
  %v2545 = vtanh.pop %v608
  %v2546 = vtanh.pop %v611
  %v2547 = vtanh.pop %v616
  %v2548 = vtanh.pop %v619
  %v2549 = vtanh.pop %v624
  %v2550 = vtanh.pop %v627
  %v2551 = vtanh.pop %v995
  %v2552 = vtanh.pop %v998
  %v2553 = vtanh.pop %v1003
  %v2554 = vtanh.pop %v1006
  %v2555 = vtanh.pop %v1011
  %v2556 = vtanh.pop %v1014
  %v2557 = vtanh.pop %v1019
  %v2558 = vtanh.pop %v1022
  %v2559 = vtanh.pop %v1027
  %v2560 = vtanh.pop %v1030
  %v2561 = vtanh.pop %v1035
  %v2562 = vtanh.pop %v1038
  %v2563 = vtanh.pop %v1043
  %v2564 = vtanh.pop %v1046
  %v2565 = vtanh.pop %v1051
  %v2566 = vtanh.pop %v1054
  %v2567 = vtanh.pop %v1059
  %v2568 = vtanh.pop %v1062
  %v2569 = vtanh.pop %v1067
  %v2570 = vtanh.pop %v1070
  %v2571 = vtanh.pop %v1075
  %v2572 = vtanh.pop %v1078
  %v2573 = vtanh.pop %v1083
  %v2574 = vtanh.pop %v1086
  %v2575 = vtanh.pop %v1091
  %v2576 = vtanh.pop %v1094
  %v2577 = vtanh.pop %v1099
  %v2578 = vtanh.pop %v1102
  %v2579 = vtanh.pop %v1107
  %v2580 = vtanh.pop %v1110
  %v2581 = vtanh.pop %v1115
  %v2582 = vtanh.pop %v1118
  %v2583 = vtanh.pop %v1123
  %v2584 = vtanh.pop %v1126
  %v2585 = vtanh.pop %v1131
  %v2586 = vtanh.pop %v1134
  %v2587 = vtanh.pop %v1139
  %v2588 = vtanh.pop %v1142
  %v2589 = vtanh.pop %v1147
  %v2590 = vtanh.pop %v1150
  %v2591 = vtanh.pop %v1155
  %v2592 = vtanh.pop %v1158
  %v2593 = vtanh.pop %v1163
  %v2594 = vtanh.pop %v1166
  %v2595 = vtanh.pop %v1171
  %v2596 = vtanh.pop %v1174
  %v2597 = vtanh.pop %v1179
  %v2598 = vtanh.pop %v1182
  %v2599 = vtanh.pop %v1187
  %v2600 = vtanh.pop %v1190
  %v2601 = vtanh.pop %v1195
  %v2602 = vtanh.pop %v1198
  %v2603 = vtanh.pop %v1203
  %v2604 = vtanh.pop %v1206
  %v2605 = vtanh.pop %v1211
  %v2606 = vtanh.pop %v1214
  %v2607 = vtanh.pop %v1219
  %v2608 = vtanh.pop %v1222
  %v2609 = vtanh.pop %v1227
  %v2610 = vtanh.pop %v1230
  %v2611 = vtanh.pop %v1235
  %v2612 = vtanh.pop %v1238
  %v2613 = vtanh.pop %v1243
  %v2614 = vtanh.pop %v1246
  %v2615 = vtanh.pop %v1614
  %v2616 = vtanh.pop %v1617
  %v2617 = vtanh.pop %v1622
  %v2618 = vtanh.pop %v1625
  %v2619 = vtanh.pop %v1630
  %v2620 = vtanh.pop %v1633
  %v2621 = vtanh.pop %v1638
  %v2622 = vtanh.pop %v1641
  %v2623 = vtanh.pop %v1646
  %v2624 = vtanh.pop %v1649
  %v2625 = vtanh.pop %v1654
  %v2626 = vtanh.pop %v1657
  %v2627 = vtanh.pop %v1662
  %v2628 = vtanh.pop %v1665
  %v2629 = vtanh.pop %v1670
  %v2630 = vtanh.pop %v1673
  %v2631 = vtanh.pop %v1678
  %v2632 = vtanh.pop %v1681
  %v2633 = vtanh.pop %v1686
  %v2634 = vtanh.pop %v1689
  %v2635 = vtanh.pop %v1694
  %v2636 = vtanh.pop %v1697
  %v2637 = vtanh.pop %v1702
  %v2638 = vtanh.pop %v1705
  %v2639 = vtanh.pop %v1710
  %v2640 = vtanh.pop %v1713
  %v2641 = vtanh.pop %v1718
  %v2642 = vtanh.pop %v1721
  %v2643 = vtanh.pop %v1726
  %v2644 = vtanh.pop %v1729
  %v2645 = vtanh.pop %v1734
  %v2646 = vtanh.pop %v1737
  %v2647 = vtanh.pop %v1742
  %v2648 = vtanh.pop %v1745
  %v2649 = vtanh.pop %v1750
  %v2650 = vtanh.pop %v1753
  %v2651 = vtanh.pop %v1758
  %v2652 = vtanh.pop %v1761
  %v2653 = vtanh.pop %v1766
  %v2654 = vtanh.pop %v1769
  %v2655 = vtanh.pop %v1774
  %v2656 = vtanh.pop %v1777
  %v2657 = vtanh.pop %v1782
  %v2658 = vtanh.pop %v1785
  %v2659 = vtanh.pop %v1790
  %v2660 = vtanh.pop %v1793
  %v2661 = vtanh.pop %v1798
  %v2662 = vtanh.pop %v1801
  %v2663 = vtanh.pop %v1806
  %v2664 = vtanh.pop %v1809
  %v2665 = vtanh.pop %v1814
  %v2666 = vtanh.pop %v1817
  %v2667 = vtanh.pop %v1822
  %v2668 = vtanh.pop %v1825
  %v2669 = vtanh.pop %v1830
  %v2670 = vtanh.pop %v1833
  %v2671 = vtanh.pop %v1838
  %v2672 = vtanh.pop %v1841
  %v2673 = vtanh.pop %v1846
  %v2674 = vtanh.pop %v1849
  %v2675 = vtanh.pop %v1854
  %v2676 = vtanh.pop %v1857
  %v2677 = vtanh.pop %v1862
  %v2678 = vtanh.pop %v1865
  %v2679 = vtanh.pop %v2233
  %v2680 = vtanh.pop %v2236
  %v2681 = vtanh.pop %v2241
  %v2682 = vtanh.pop %v2244
  %v2683 = vtanh.pop %v2249
  %v2684 = vtanh.pop %v2252
  %v2685 = vtanh.pop %v2257
  %v2686 = vtanh.pop %v2260
  %v2687 = vtanh.pop %v2265
  %v2688 = vtanh.pop %v2268
  %v2689 = vtanh.pop %v2273
  %v2690 = vtanh.pop %v2276
  %v2691 = vtanh.pop %v2281
  %v2692 = vtanh.pop %v2284
  %v2693 = vtanh.pop %v2289
  %v2694 = vtanh.pop %v2292
  %v2695 = vtanh.pop %v2297
  %v2696 = vtanh.pop %v2300
  %v2697 = vtanh.pop %v2305
  %v2698 = vtanh.pop %v2308
  %v2699 = vtanh.pop %v2313
  %v2700 = vtanh.pop %v2316
  %v2701 = vtanh.pop %v2321
  %v2702 = vtanh.pop %v2324
  %v2703 = vtanh.pop %v2329
  %v2704 = vtanh.pop %v2332
  %v2705 = vtanh.pop %v2337
  %v2706 = vtanh.pop %v2340
  %v2707 = vtanh.pop %v2345
  %v2708 = vtanh.pop %v2348
  %v2709 = vtanh.pop %v2353
  %v2710 = vtanh.pop %v2356
  %v2711 = vtanh.pop %v2361
  %v2712 = vtanh.pop %v2364
  %v2713 = vtanh.pop %v2369
  %v2714 = vtanh.pop %v2372
  %v2715 = vtanh.pop %v2377
  %v2716 = vtanh.pop %v2380
  %v2717 = vtanh.pop %v2385
  %v2718 = vtanh.pop %v2388
  %v2719 = vtanh.pop %v2393
  %v2720 = vtanh.pop %v2396
  %v2721 = vtanh.pop %v2401
  %v2722 = vtanh.pop %v2404
  %v2723 = vtanh.pop %v2409
  %v2724 = vtanh.pop %v2412
  %v2725 = vtanh.pop %v2417
  %v2726 = vtanh.pop %v2420
  %v2727 = vtanh.pop %v2425
  %v2728 = vtanh.pop %v2428
  %v2729 = vtanh.pop %v2433
  %v2730 = vtanh.pop %v2436
  %v2731 = vtanh.pop %v2441
  %v2732 = vtanh.pop %v2444
  %v2733 = vtanh.pop %v2449
  %v2734 = vtanh.pop %v2452
  %v2735 = vtanh.pop %v2457
  %v2736 = vtanh.pop %v2460
  %v2737 = vtanh.pop %v2465
  %v2738 = vtanh.pop %v2468
  %v2739 = vtanh.pop %v2473
  %v2740 = vtanh.pop %v2476
  %v2741 = vtanh.pop %v2481
  %v2742 = vtanh.pop %v2484
  %vm2743 = vcmask 23552
  %2744 = vst.msk [vmem:[%s2] sm:$0xff] %vm2743, %v2487
  %2745 = vst.msk [vmem:[%s2 + $0x8] sm:$0xff] %vm2743, %v2488
  %2746 = vst.msk [vmem:[%s2 + $0x10] sm:$0xff] %vm2743, %v2489
  %2747 = vst.msk [vmem:[%s2 + $0x18] sm:$0xff] %vm2743, %v2490
  %2748 = vst.msk [vmem:[%s2 + $0x20] sm:$0xff] %vm2743, %v2491
  %2749 = vst.msk [vmem:[%s2 + $0x28] sm:$0xff] %vm2743, %v2492
  %2750 = vst.msk [vmem:[%s2 + $0x30] sm:$0xff] %vm2743, %v2493
  %2751 = vst.msk [vmem:[%s2 + $0x38] sm:$0xff] %vm2743, %v2494
  %2752 = vst.msk [vmem:[%s2 + $0x40] sm:$0xff] %vm2743, %v2495
  %2753 = vst.msk [vmem:[%s2 + $0x48] sm:$0xff] %vm2743, %v2496
  %2754 = vst.msk [vmem:[%s2 + $0x50] sm:$0xff] %vm2743, %v2497
  %2755 = vst.msk [vmem:[%s2 + $0x58] sm:$0xff] %vm2743, %v2498
  %2756 = vst.msk [vmem:[%s2 + $0x60] sm:$0xff] %vm2743, %v2499
  %2757 = vst.msk [vmem:[%s2 + $0x68] sm:$0xff] %vm2743, %v2500
  %2758 = vst.msk [vmem:[%s2 + $0x70] sm:$0xff] %vm2743, %v2501
  %2759 = vst.msk [vmem:[%s2 + $0x78] sm:$0xff] %vm2743, %v2502
  %2760 = vst.msk [vmem:[%s2 + $0x80] sm:$0xff] %vm2743, %v2503
  %2761 = vst.msk [vmem:[%s2 + $0x88] sm:$0xff] %vm2743, %v2504
  %2762 = vst.msk [vmem:[%s2 + $0x90] sm:$0xff] %vm2743, %v2505
  %2763 = vst.msk [vmem:[%s2 + $0x98] sm:$0xff] %vm2743, %v2506
  %2764 = vst.msk [vmem:[%s2 + $0xa0] sm:$0xff] %vm2743, %v2507
  %2765 = vst.msk [vmem:[%s2 + $0xa8] sm:$0xff] %vm2743, %v2508
  %2766 = vst.msk [vmem:[%s2 + $0xb0] sm:$0xff] %vm2743, %v2509
  %2767 = vst.msk [vmem:[%s2 + $0xb8] sm:$0xff] %vm2743, %v2510
  %2768 = vst.msk [vmem:[%s2 + $0xc0] sm:$0xff] %vm2743, %v2511
  %2769 = vst.msk [vmem:[%s2 + $0xc8] sm:$0xff] %vm2743, %v2512
  %2770 = vst.msk [vmem:[%s2 + $0xd0] sm:$0xff] %vm2743, %v2513
  %2771 = vst.msk [vmem:[%s2 + $0xd8] sm:$0xff] %vm2743, %v2514
  %2772 = vst.msk [vmem:[%s2 + $0xe0] sm:$0xff] %vm2743, %v2515
  %2773 = vst.msk [vmem:[%s2 + $0xe8] sm:$0xff] %vm2743, %v2516
  %2774 = vst.msk [vmem:[%s2 + $0xf0] sm:$0xff] %vm2743, %v2517
  %2775 = vst.msk [vmem:[%s2 + $0xf8] sm:$0xff] %vm2743, %v2518
  %2776 = vst.msk [vmem:[%s2 + $0x100] sm:$0xff] %vm2743, %v2519
  %2777 = vst.msk [vmem:[%s2 + $0x108] sm:$0xff] %vm2743, %v2520
  %2778 = vst.msk [vmem:[%s2 + $0x110] sm:$0xff] %vm2743, %v2521
  %2779 = vst.msk [vmem:[%s2 + $0x118] sm:$0xff] %vm2743, %v2522
  %2780 = vst.msk [vmem:[%s2 + $0x120] sm:$0xff] %vm2743, %v2523
  %2781 = vst.msk [vmem:[%s2 + $0x128] sm:$0xff] %vm2743, %v2524
  %2782 = vst.msk [vmem:[%s2 + $0x130] sm:$0xff] %vm2743, %v2525
  %2783 = vst.msk [vmem:[%s2 + $0x138] sm:$0xff] %vm2743, %v2526
  %2784 = vst.msk [vmem:[%s2 + $0x140] sm:$0xff] %vm2743, %v2527
  %2785 = vst.msk [vmem:[%s2 + $0x148] sm:$0xff] %vm2743, %v2528
  %2786 = vst.msk [vmem:[%s2 + $0x150] sm:$0xff] %vm2743, %v2529
  %2787 = vst.msk [vmem:[%s2 + $0x158] sm:$0xff] %vm2743, %v2530
  %2788 = vst.msk [vmem:[%s2 + $0x160] sm:$0xff] %vm2743, %v2531
  %2789 = vst.msk [vmem:[%s2 + $0x168] sm:$0xff] %vm2743, %v2532
  %2790 = vst.msk [vmem:[%s2 + $0x170] sm:$0xff] %vm2743, %v2533
  %2791 = vst.msk [vmem:[%s2 + $0x178] sm:$0xff] %vm2743, %v2534
  %2792 = vst.msk [vmem:[%s2 + $0x180] sm:$0xff] %vm2743, %v2535
  %2793 = vst.msk [vmem:[%s2 + $0x188] sm:$0xff] %vm2743, %v2536
  %2794 = vst.msk [vmem:[%s2 + $0x190] sm:$0xff] %vm2743, %v2537
  %2795 = vst.msk [vmem:[%s2 + $0x198] sm:$0xff] %vm2743, %v2538
  %2796 = vst.msk [vmem:[%s2 + $0x1a0] sm:$0xff] %vm2743, %v2539
  %2797 = vst.msk [vmem:[%s2 + $0x1a8] sm:$0xff] %vm2743, %v2540
  %2798 = vst.msk [vmem:[%s2 + $0x1b0] sm:$0xff] %vm2743, %v2541
  %2799 = vst.msk [vmem:[%s2 + $0x1b8] sm:$0xff] %vm2743, %v2542
  %2800 = vst.msk [vmem:[%s2 + $0x1c0] sm:$0xff] %vm2743, %v2543
  %2801 = vst.msk [vmem:[%s2 + $0x1c8] sm:$0xff] %vm2743, %v2544
  %2802 = vst.msk [vmem:[%s2 + $0x1d0] sm:$0xff] %vm2743, %v2545
  %2803 = vst.msk [vmem:[%s2 + $0x1d8] sm:$0xff] %vm2743, %v2546
  %2804 = vst.msk [vmem:[%s2 + $0x1e0] sm:$0xff] %vm2743, %v2547
  %2805 = vst.msk [vmem:[%s2 + $0x1e8] sm:$0xff] %vm2743, %v2548
  %2806 = vst.msk [vmem:[%s2 + $0x1f0] sm:$0xff] %vm2743, %v2549
  %2807 = vst.msk [vmem:[%s2 + $0x1f8] sm:$0xff] %vm2743, %v2550
  %2808 = vst.msk [vmem:[%s2 + $0x200] sm:$0xff] %vm2743, %v2551
  %2809 = vst.msk [vmem:[%s2 + $0x208] sm:$0xff] %vm2743, %v2552
  %2810 = vst.msk [vmem:[%s2 + $0x210] sm:$0xff] %vm2743, %v2553
  %2811 = vst.msk [vmem:[%s2 + $0x218] sm:$0xff] %vm2743, %v2554
  %2812 = vst.msk [vmem:[%s2 + $0x220] sm:$0xff] %vm2743, %v2555
  %2813 = vst.msk [vmem:[%s2 + $0x228] sm:$0xff] %vm2743, %v2556
  %2814 = vst.msk [vmem:[%s2 + $0x230] sm:$0xff] %vm2743, %v2557
  %2815 = vst.msk [vmem:[%s2 + $0x238] sm:$0xff] %vm2743, %v2558
  %2816 = vst.msk [vmem:[%s2 + $0x240] sm:$0xff] %vm2743, %v2559
  %2817 = vst.msk [vmem:[%s2 + $0x248] sm:$0xff] %vm2743, %v2560
  %2818 = vst.msk [vmem:[%s2 + $0x250] sm:$0xff] %vm2743, %v2561
  %2819 = vst.msk [vmem:[%s2 + $0x258] sm:$0xff] %vm2743, %v2562
  %2820 = vst.msk [vmem:[%s2 + $0x260] sm:$0xff] %vm2743, %v2563
  %2821 = vst.msk [vmem:[%s2 + $0x268] sm:$0xff] %vm2743, %v2564
  %2822 = vst.msk [vmem:[%s2 + $0x270] sm:$0xff] %vm2743, %v2565
  %2823 = vst.msk [vmem:[%s2 + $0x278] sm:$0xff] %vm2743, %v2566
  %2824 = vst.msk [vmem:[%s2 + $0x280] sm:$0xff] %vm2743, %v2567
  %2825 = vst.msk [vmem:[%s2 + $0x288] sm:$0xff] %vm2743, %v2568
  %2826 = vst.msk [vmem:[%s2 + $0x290] sm:$0xff] %vm2743, %v2569
  %2827 = vst.msk [vmem:[%s2 + $0x298] sm:$0xff] %vm2743, %v2570
  %2828 = vst.msk [vmem:[%s2 + $0x2a0] sm:$0xff] %vm2743, %v2571
  %2829 = vst.msk [vmem:[%s2 + $0x2a8] sm:$0xff] %vm2743, %v2572
  %2830 = vst.msk [vmem:[%s2 + $0x2b0] sm:$0xff] %vm2743, %v2573
  %2831 = vst.msk [vmem:[%s2 + $0x2b8] sm:$0xff] %vm2743, %v2574
  %2832 = vst.msk [vmem:[%s2 + $0x2c0] sm:$0xff] %vm2743, %v2575
  %2833 = vst.msk [vmem:[%s2 + $0x2c8] sm:$0xff] %vm2743, %v2576
  %2834 = vst.msk [vmem:[%s2 + $0x2d0] sm:$0xff] %vm2743, %v2577
  %2835 = vst.msk [vmem:[%s2 + $0x2d8] sm:$0xff] %vm2743, %v2578
  %2836 = vst.msk [vmem:[%s2 + $0x2e0] sm:$0xff] %vm2743, %v2579
  %2837 = vst.msk [vmem:[%s2 + $0x2e8] sm:$0xff] %vm2743, %v2580
  %2838 = vst.msk [vmem:[%s2 + $0x2f0] sm:$0xff] %vm2743, %v2581
  %2839 = vst.msk [vmem:[%s2 + $0x2f8] sm:$0xff] %vm2743, %v2582
  %2840 = vst.msk [vmem:[%s2 + $0x300] sm:$0xff] %vm2743, %v2583
  %2841 = vst.msk [vmem:[%s2 + $0x308] sm:$0xff] %vm2743, %v2584
  %2842 = vst.msk [vmem:[%s2 + $0x310] sm:$0xff] %vm2743, %v2585
  %2843 = vst.msk [vmem:[%s2 + $0x318] sm:$0xff] %vm2743, %v2586
  %2844 = vst.msk [vmem:[%s2 + $0x320] sm:$0xff] %vm2743, %v2587
  %2845 = vst.msk [vmem:[%s2 + $0x328] sm:$0xff] %vm2743, %v2588
  %2846 = vst.msk [vmem:[%s2 + $0x330] sm:$0xff] %vm2743, %v2589
  %2847 = vst.msk [vmem:[%s2 + $0x338] sm:$0xff] %vm2743, %v2590
  %2848 = vst.msk [vmem:[%s2 + $0x340] sm:$0xff] %vm2743, %v2591
  %2849 = vst.msk [vmem:[%s2 + $0x348] sm:$0xff] %vm2743, %v2592
  %2850 = vst.msk [vmem:[%s2 + $0x350] sm:$0xff] %vm2743, %v2593
  %2851 = vst.msk [vmem:[%s2 + $0x358] sm:$0xff] %vm2743, %v2594
  %2852 = vst.msk [vmem:[%s2 + $0x360] sm:$0xff] %vm2743, %v2595
  %2853 = vst.msk [vmem:[%s2 + $0x368] sm:$0xff] %vm2743, %v2596
  %2854 = vst.msk [vmem:[%s2 + $0x370] sm:$0xff] %vm2743, %v2597
  %2855 = vst.msk [vmem:[%s2 + $0x378] sm:$0xff] %vm2743, %v2598
  %2856 = vst.msk [vmem:[%s2 + $0x380] sm:$0xff] %vm2743, %v2599
  %2857 = vst.msk [vmem:[%s2 + $0x388] sm:$0xff] %vm2743, %v2600
  %2858 = vst.msk [vmem:[%s2 + $0x390] sm:$0xff] %vm2743, %v2601
  %2859 = vst.msk [vmem:[%s2 + $0x398] sm:$0xff] %vm2743, %v2602
  %2860 = vst.msk [vmem:[%s2 + $0x3a0] sm:$0xff] %vm2743, %v2603
  %2861 = vst.msk [vmem:[%s2 + $0x3a8] sm:$0xff] %vm2743, %v2604
  %2862 = vst.msk [vmem:[%s2 + $0x3b0] sm:$0xff] %vm2743, %v2605
  %2863 = vst.msk [vmem:[%s2 + $0x3b8] sm:$0xff] %vm2743, %v2606
  %2864 = vst.msk [vmem:[%s2 + $0x3c0] sm:$0xff] %vm2743, %v2607
  %2865 = vst.msk [vmem:[%s2 + $0x3c8] sm:$0xff] %vm2743, %v2608
  %2866 = vst.msk [vmem:[%s2 + $0x3d0] sm:$0xff] %vm2743, %v2609
  %2867 = vst.msk [vmem:[%s2 + $0x3d8] sm:$0xff] %vm2743, %v2610
  %2868 = vst.msk [vmem:[%s2 + $0x3e0] sm:$0xff] %vm2743, %v2611
  %2869 = vst.msk [vmem:[%s2 + $0x3e8] sm:$0xff] %vm2743, %v2612
  %2870 = vst.msk [vmem:[%s2 + $0x3f0] sm:$0xff] %vm2743, %v2613
  %2871 = vst.msk [vmem:[%s2 + $0x3f8] sm:$0xff] %vm2743, %v2614
  %2872 = vst.msk [vmem:[%s2 + $0x400] sm:$0xff] %vm2743, %v2615
  %2873 = vst.msk [vmem:[%s2 + $0x408] sm:$0xff] %vm2743, %v2616
  %2874 = vst.msk [vmem:[%s2 + $0x410] sm:$0xff] %vm2743, %v2617
  %2875 = vst.msk [vmem:[%s2 + $0x418] sm:$0xff] %vm2743, %v2618
  %2876 = vst.msk [vmem:[%s2 + $0x420] sm:$0xff] %vm2743, %v2619
  %2877 = vst.msk [vmem:[%s2 + $0x428] sm:$0xff] %vm2743, %v2620
  %2878 = vst.msk [vmem:[%s2 + $0x430] sm:$0xff] %vm2743, %v2621
  %2879 = vst.msk [vmem:[%s2 + $0x438] sm:$0xff] %vm2743, %v2622
  %2880 = vst.msk [vmem:[%s2 + $0x440] sm:$0xff] %vm2743, %v2623
  %2881 = vst.msk [vmem:[%s2 + $0x448] sm:$0xff] %vm2743, %v2624
  %2882 = vst.msk [vmem:[%s2 + $0x450] sm:$0xff] %vm2743, %v2625
  %2883 = vst.msk [vmem:[%s2 + $0x458] sm:$0xff] %vm2743, %v2626
  %2884 = vst.msk [vmem:[%s2 + $0x460] sm:$0xff] %vm2743, %v2627
  %2885 = vst.msk [vmem:[%s2 + $0x468] sm:$0xff] %vm2743, %v2628
  %2886 = vst.msk [vmem:[%s2 + $0x470] sm:$0xff] %vm2743, %v2629
  %2887 = vst.msk [vmem:[%s2 + $0x478] sm:$0xff] %vm2743, %v2630
  %2888 = vst.msk [vmem:[%s2 + $0x480] sm:$0xff] %vm2743, %v2631
  %2889 = vst.msk [vmem:[%s2 + $0x488] sm:$0xff] %vm2743, %v2632
  %2890 = vst.msk [vmem:[%s2 + $0x490] sm:$0xff] %vm2743, %v2633
  %2891 = vst.msk [vmem:[%s2 + $0x498] sm:$0xff] %vm2743, %v2634
  %2892 = vst.msk [vmem:[%s2 + $0x4a0] sm:$0xff] %vm2743, %v2635
  %2893 = vst.msk [vmem:[%s2 + $0x4a8] sm:$0xff] %vm2743, %v2636
  %2894 = vst.msk [vmem:[%s2 + $0x4b0] sm:$0xff] %vm2743, %v2637
  %2895 = vst.msk [vmem:[%s2 + $0x4b8] sm:$0xff] %vm2743, %v2638
  %2896 = vst.msk [vmem:[%s2 + $0x4c0] sm:$0xff] %vm2743, %v2639
  %2897 = vst.msk [vmem:[%s2 + $0x4c8] sm:$0xff] %vm2743, %v2640
  %2898 = vst.msk [vmem:[%s2 + $0x4d0] sm:$0xff] %vm2743, %v2641
  %2899 = vst.msk [vmem:[%s2 + $0x4d8] sm:$0xff] %vm2743, %v2642
  %2900 = vst.msk [vmem:[%s2 + $0x4e0] sm:$0xff] %vm2743, %v2643
  %2901 = vst.msk [vmem:[%s2 + $0x4e8] sm:$0xff] %vm2743, %v2644
  %2902 = vst.msk [vmem:[%s2 + $0x4f0] sm:$0xff] %vm2743, %v2645
  %2903 = vst.msk [vmem:[%s2 + $0x4f8] sm:$0xff] %vm2743, %v2646
  %2904 = vst.msk [vmem:[%s2 + $0x500] sm:$0xff] %vm2743, %v2647
  %2905 = vst.msk [vmem:[%s2 + $0x508] sm:$0xff] %vm2743, %v2648
  %2906 = vst.msk [vmem:[%s2 + $0x510] sm:$0xff] %vm2743, %v2649
  %2907 = vst.msk [vmem:[%s2 + $0x518] sm:$0xff] %vm2743, %v2650
  %2908 = vst.msk [vmem:[%s2 + $0x520] sm:$0xff] %vm2743, %v2651
  %2909 = vst.msk [vmem:[%s2 + $0x528] sm:$0xff] %vm2743, %v2652
  %2910 = vst.msk [vmem:[%s2 + $0x530] sm:$0xff] %vm2743, %v2653
  %2911 = vst.msk [vmem:[%s2 + $0x538] sm:$0xff] %vm2743, %v2654
  %2912 = vst.msk [vmem:[%s2 + $0x540] sm:$0xff] %vm2743, %v2655
  %2913 = vst.msk [vmem:[%s2 + $0x548] sm:$0xff] %vm2743, %v2656
  %2914 = vst.msk [vmem:[%s2 + $0x550] sm:$0xff] %vm2743, %v2657
  %2915 = vst.msk [vmem:[%s2 + $0x558] sm:$0xff] %vm2743, %v2658
  %2916 = vst.msk [vmem:[%s2 + $0x560] sm:$0xff] %vm2743, %v2659
  %2917 = vst.msk [vmem:[%s2 + $0x568] sm:$0xff] %vm2743, %v2660
  %2918 = vst.msk [vmem:[%s2 + $0x570] sm:$0xff] %vm2743, %v2661
  %2919 = vst.msk [vmem:[%s2 + $0x578] sm:$0xff] %vm2743, %v2662
  %2920 = vst.msk [vmem:[%s2 + $0x580] sm:$0xff] %vm2743, %v2663
  %2921 = vst.msk [vmem:[%s2 + $0x588] sm:$0xff] %vm2743, %v2664
  %2922 = vst.msk [vmem:[%s2 + $0x590] sm:$0xff] %vm2743, %v2665
  %2923 = vst.msk [vmem:[%s2 + $0x598] sm:$0xff] %vm2743, %v2666
  %2924 = vst.msk [vmem:[%s2 + $0x5a0] sm:$0xff] %vm2743, %v2667
  %2925 = vst.msk [vmem:[%s2 + $0x5a8] sm:$0xff] %vm2743, %v2668
  %2926 = vst.msk [vmem:[%s2 + $0x5b0] sm:$0xff] %vm2743, %v2669
  %2927 = vst.msk [vmem:[%s2 + $0x5b8] sm:$0xff] %vm2743, %v2670
  %2928 = vst.msk [vmem:[%s2 + $0x5c0] sm:$0xff] %vm2743, %v2671
  %2929 = vst.msk [vmem:[%s2 + $0x5c8] sm:$0xff] %vm2743, %v2672
  %2930 = vst.msk [vmem:[%s2 + $0x5d0] sm:$0xff] %vm2743, %v2673
  %2931 = vst.msk [vmem:[%s2 + $0x5d8] sm:$0xff] %vm2743, %v2674
  %2932 = vst.msk [vmem:[%s2 + $0x5e0] sm:$0xff] %vm2743, %v2675
  %2933 = vst.msk [vmem:[%s2 + $0x5e8] sm:$0xff] %vm2743, %v2676
  %2934 = vst.msk [vmem:[%s2 + $0x5f0] sm:$0xff] %vm2743, %v2677
  %2935 = vst.msk [vmem:[%s2 + $0x5f8] sm:$0xff] %vm2743, %v2678
  %2936 = vst.msk [vmem:[%s2 + $0x600] sm:$0xff] %vm2743, %v2679
  %2937 = vst.msk [vmem:[%s2 + $0x608] sm:$0xff] %vm2743, %v2680
  %2938 = vst.msk [vmem:[%s2 + $0x610] sm:$0xff] %vm2743, %v2681
  %2939 = vst.msk [vmem:[%s2 + $0x618] sm:$0xff] %vm2743, %v2682
  %2940 = vst.msk [vmem:[%s2 + $0x620] sm:$0xff] %vm2743, %v2683
  %2941 = vst.msk [vmem:[%s2 + $0x628] sm:$0xff] %vm2743, %v2684
  %2942 = vst.msk [vmem:[%s2 + $0x630] sm:$0xff] %vm2743, %v2685
  %2943 = vst.msk [vmem:[%s2 + $0x638] sm:$0xff] %vm2743, %v2686
  %2944 = vst.msk [vmem:[%s2 + $0x640] sm:$0xff] %vm2743, %v2687
  %2945 = vst.msk [vmem:[%s2 + $0x648] sm:$0xff] %vm2743, %v2688
  %2946 = vst.msk [vmem:[%s2 + $0x650] sm:$0xff] %vm2743, %v2689
  %2947 = vst.msk [vmem:[%s2 + $0x658] sm:$0xff] %vm2743, %v2690
  %2948 = vst.msk [vmem:[%s2 + $0x660] sm:$0xff] %vm2743, %v2691
  %2949 = vst.msk [vmem:[%s2 + $0x668] sm:$0xff] %vm2743, %v2692
  %2950 = vst.msk [vmem:[%s2 + $0x670] sm:$0xff] %vm2743, %v2693
  %2951 = vst.msk [vmem:[%s2 + $0x678] sm:$0xff] %vm2743, %v2694
  %2952 = vst.msk [vmem:[%s2 + $0x680] sm:$0xff] %vm2743, %v2695
  %2953 = vst.msk [vmem:[%s2 + $0x688] sm:$0xff] %vm2743, %v2696
  %2954 = vst.msk [vmem:[%s2 + $0x690] sm:$0xff] %vm2743, %v2697
  %2955 = vst.msk [vmem:[%s2 + $0x698] sm:$0xff] %vm2743, %v2698
  %2956 = vst.msk [vmem:[%s2 + $0x6a0] sm:$0xff] %vm2743, %v2699
  %2957 = vst.msk [vmem:[%s2 + $0x6a8] sm:$0xff] %vm2743, %v2700
  %2958 = vst.msk [vmem:[%s2 + $0x6b0] sm:$0xff] %vm2743, %v2701
  %2959 = vst.msk [vmem:[%s2 + $0x6b8] sm:$0xff] %vm2743, %v2702
  %2960 = vst.msk [vmem:[%s2 + $0x6c0] sm:$0xff] %vm2743, %v2703
  %2961 = vst.msk [vmem:[%s2 + $0x6c8] sm:$0xff] %vm2743, %v2704
  %2962 = vst.msk [vmem:[%s2 + $0x6d0] sm:$0xff] %vm2743, %v2705
  %2963 = vst.msk [vmem:[%s2 + $0x6d8] sm:$0xff] %vm2743, %v2706
  %2964 = vst.msk [vmem:[%s2 + $0x6e0] sm:$0xff] %vm2743, %v2707
  %2965 = vst.msk [vmem:[%s2 + $0x6e8] sm:$0xff] %vm2743, %v2708
  %2966 = vst.msk [vmem:[%s2 + $0x6f0] sm:$0xff] %vm2743, %v2709
  %2967 = vst.msk [vmem:[%s2 + $0x6f8] sm:$0xff] %vm2743, %v2710
  %2968 = vst.msk [vmem:[%s2 + $0x700] sm:$0xff] %vm2743, %v2711
  %2969 = vst.msk [vmem:[%s2 + $0x708] sm:$0xff] %vm2743, %v2712
  %2970 = vst.msk [vmem:[%s2 + $0x710] sm:$0xff] %vm2743, %v2713
  %2971 = vst.msk [vmem:[%s2 + $0x718] sm:$0xff] %vm2743, %v2714
  %2972 = vst.msk [vmem:[%s2 + $0x720] sm:$0xff] %vm2743, %v2715
  %2973 = vst.msk [vmem:[%s2 + $0x728] sm:$0xff] %vm2743, %v2716
  %2974 = vst.msk [vmem:[%s2 + $0x730] sm:$0xff] %vm2743, %v2717
  %2975 = vst.msk [vmem:[%s2 + $0x738] sm:$0xff] %vm2743, %v2718
  %2976 = vst.msk [vmem:[%s2 + $0x740] sm:$0xff] %vm2743, %v2719
  %2977 = vst.msk [vmem:[%s2 + $0x748] sm:$0xff] %vm2743, %v2720
  %2978 = vst.msk [vmem:[%s2 + $0x750] sm:$0xff] %vm2743, %v2721
  %2979 = vst.msk [vmem:[%s2 + $0x758] sm:$0xff] %vm2743, %v2722
  %2980 = vst.msk [vmem:[%s2 + $0x760] sm:$0xff] %vm2743, %v2723
  %2981 = vst.msk [vmem:[%s2 + $0x768] sm:$0xff] %vm2743, %v2724
  %2982 = vst.msk [vmem:[%s2 + $0x770] sm:$0xff] %vm2743, %v2725
  %2983 = vst.msk [vmem:[%s2 + $0x778] sm:$0xff] %vm2743, %v2726
  %2984 = vst.msk [vmem:[%s2 + $0x780] sm:$0xff] %vm2743, %v2727
  %2985 = vst.msk [vmem:[%s2 + $0x788] sm:$0xff] %vm2743, %v2728
  %2986 = vst.msk [vmem:[%s2 + $0x790] sm:$0xff] %vm2743, %v2729
  %2987 = vst.msk [vmem:[%s2 + $0x798] sm:$0xff] %vm2743, %v2730
  %2988 = vst.msk [vmem:[%s2 + $0x7a0] sm:$0xff] %vm2743, %v2731
  %2989 = vst.msk [vmem:[%s2 + $0x7a8] sm:$0xff] %vm2743, %v2732
  %2990 = vst.msk [vmem:[%s2 + $0x7b0] sm:$0xff] %vm2743, %v2733
  %2991 = vst.msk [vmem:[%s2 + $0x7b8] sm:$0xff] %vm2743, %v2734
  %2992 = vst.msk [vmem:[%s2 + $0x7c0] sm:$0xff] %vm2743, %v2735
  %2993 = vst.msk [vmem:[%s2 + $0x7c8] sm:$0xff] %vm2743, %v2736
  %2994 = vst.msk [vmem:[%s2 + $0x7d0] sm:$0xff] %vm2743, %v2737
  %2995 = vst.msk [vmem:[%s2 + $0x7d8] sm:$0xff] %vm2743, %v2738
  %2996 = vst.msk [vmem:[%s2 + $0x7e0] sm:$0xff] %vm2743, %v2739
  %2997 = vst.msk [vmem:[%s2 + $0x7e8] sm:$0xff] %vm2743, %v2740
  %2998 = vst.msk [vmem:[%s2 + $0x7f0] sm:$0xff] %vm2743, %v2741
  %2999 = vst.msk [vmem:[%s2 + $0x7f8] sm:$0xff] %vm2743, %v2742
  // Predicated region
  $region10: #{cvae_forward.25} parent=0 // pred_check
    _
  $region11: #{cvae_forward.25} parent=0 // pred_check_branch
    %3001 = sbr.rel (0) target = $region13
  $region12: #{cvae_forward.25} parent=0 // pred_region
    _
  $region13: #{cvae_forward.25} parent=0 // pred_fallthru
    _
  // Predicated region
  $region14: #{cvae_forward.25} parent=0 // pred_check
    _
  $region15: #{cvae_forward.25} parent=0 // pred_check_branch
    %3003 = sbr.rel (0) target = $region17
  $region16: #{cvae_forward.25} parent=0 // pred_region
    _
  $region17: #{cvae_forward.25} parent=0 // pred_fallthru
    _

</llo_original>
